<compile_context>
chip_gen: v7x
topology: tpu7x:2x2x1
jax: 0.10.0
libtpu: 0.0.40
codegen_flags: <defaults>
</compile_context>

<pallas_src>
import functools
import math

import jax
import jax.numpy as jnp
from jax.experimental import pallas as pl
from jax.experimental.pallas import tpu as pltpu


# ---------------------------------------------------------------------------
# Small in-kernel helpers
# ---------------------------------------------------------------------------
def _rd(ref, index, name):
    off, r, c = index[name]
    return ref[off:off + r, 0:c]


def _bf16_dot(a, b):
    # a @ b with bf16 MXU inputs, f32 accumulation.
    return jnp.dot(a.astype(jnp.bfloat16), b.astype(jnp.bfloat16),
                   preferred_element_type=jnp.float32)


def _bf16_dot_t(a, b):
    # a @ b.T with bf16 MXU inputs, f32 accumulation.
    return jax.lax.dot_general(a.astype(jnp.bfloat16), b.astype(jnp.bfloat16),
                               (((1,), (1,)), ((), ())),
                               preferred_element_type=jnp.float32)


def _layer_norm(x, g, b):
    mu = jnp.mean(x, axis=-1, keepdims=True)
    xc = x - mu
    var = jnp.mean(xc * xc, axis=-1, keepdims=True)
    return xc * jax.lax.rsqrt(var + 1e-5) * g + b


def _ffn(x, w1, b1, w2, b2):
    h = jnp.maximum(_bf16_dot(x, w1) + b1, 0.0)
    return _bf16_dot(h, w2) + b2


def _mha(q_in, kv_in, w_qkv, b_qkv, w_o, b_o, bmask, nhead, is_self):
    # q_in, kv_in: (N, d).  Batch separation via additive bmask.
    d = b_o.shape[1]
    hd = d // nhead
    scale = 1.0 / math.sqrt(hd)

    if is_self:
        qkv_q = _bf16_dot(q_in, w_qkv) + b_qkv          # (N, 3d)
        qkv_kv = qkv_q
    else:
        # One stacked input projection for query + memory rows.
        both = _bf16_dot(jnp.concatenate([q_in, kv_in], axis=0), w_qkv) + b_qkv
        nrows = q_in.shape[0]
        qkv_q = both[0:nrows, :]
        qkv_kv = both[nrows:2 * nrows, :]

    q = qkv_q[:, 0:d] * scale                           # fold 1/sqrt(hd) into q
    k = qkv_kv[:, d:2 * d]
    v = qkv_kv[:, 2 * d:3 * d]

    heads = []
    for h in range(nhead):
        lo, hi = h * hd, (h + 1) * hd
        s = _bf16_dot_t(q[:, lo:hi], k[:, lo:hi]) + bmask          # (N, N)
        m = jnp.max(s, axis=-1, keepdims=True)
        e = jnp.exp(s - m)
        p = e * pl.reciprocal(jnp.sum(e, axis=-1, keepdims=True), approx=True)
        heads.append(_bf16_dot(p, v[:, lo:hi]))                     # (N, hd)
    hv = jnp.concatenate(heads, axis=-1)                            # (N, d)
    return _bf16_dot(hv, w_o) + b_o                                 # one full-K out-proj


def _bilstm_layer(x_seq, w_ih, w_hh, b, h0, c0, sel, *, seq, bsz, hidden):
    # Fused forward/backward LSTM layer.
    #   x_seq: (N, Din); w_ih: (Din, 8H) interleaved [i_f,i_b,f_f,f_b,g_f,g_b,o_f,o_b]
    #   w_hh: (2H, 8H) block structure; b: (1, 8H); h0/c0: (B, 2H) = [fwd|bwd]
    #   sel:  (1, 8H) 1.0 on forward-direction gate lanes.
    H = hidden
    gx = _bf16_dot(x_seq, w_ih) + b                      # (N, 8H)
    fwd_lane = sel > 0.5
    h, c = h0, c0                                        # (B, 2H)
    ys_f = [None] * seq
    ys_b = [None] * seq
    for s in range(seq):
        tf = s
        tb = seq - 1 - s
        g_in = jnp.where(fwd_lane,
                         gx[tf * bsz:(tf + 1) * bsz, :],
                         gx[tb * bsz:(tb + 1) * bsz, :])             # (B, 8H)
        g = g_in + _bf16_dot(h, w_hh)                    # one MXU push / step
        i_g = jax.nn.sigmoid(g[:, 0:2 * H])
        f_g = jax.nn.sigmoid(g[:, 2 * H:4 * H])
        g_g = jnp.tanh(g[:, 4 * H:6 * H])
        o_g = jax.nn.sigmoid(g[:, 6 * H:8 * H])
        c = f_g * c + i_g * g_g
        h = o_g * jnp.tanh(c)
        ys_f[tf] = h[:, 0:H]
        ys_b[tb] = h[:, H:2 * H]
    out_f = jnp.concatenate(ys_f, axis=0)                # (N, H)
    out_b = jnp.concatenate(ys_b, axis=0)                # (N, H)
    return jnp.concatenate([out_f, out_b], axis=-1)      # (N, 2H)


def _lstm_layer(x_seq, w_ih, w_hh, b, h0, c0, *, seq, bsz, hidden):
    # Unidirectional LSTM layer; recurrent term on the VPU (broadcast-FMA).
    H = hidden
    gx = _bf16_dot(x_seq, w_ih) + b                      # (N, 4H)
    w_rows = [w_hh[k:k + 1, :] for k in range(H)]        # hoisted (1, 4H) rows
    h, c = h0, c0                                        # (B, H)
    ys = [None] * seq
    for t in range(seq):
        rec = h[:, 0:1] * w_rows[0]
        for k in range(1, H):
            rec = rec + h[:, k:k + 1] * w_rows[k]        # (B, 4H) on VPU
        g = gx[t * bsz:(t + 1) * bsz, :] + rec
        i_g = jax.nn.sigmoid(g[:, 0:H])
        f_g = jax.nn.sigmoid(g[:, H:2 * H])
        g_g = jnp.tanh(g[:, 2 * H:3 * H])
        o_g = jax.nn.sigmoid(g[:, 3 * H:4 * H])
        c = f_g * c + i_g * g_g
        h = o_g * jnp.tanh(c)
        ys[t] = h
    return jnp.concatenate(ys, axis=0)                   # (N, H)


# ---------------------------------------------------------------------------
# The fused kernel: whole TLcell_sp forward in one pallas_call
# ---------------------------------------------------------------------------
def _tlcell_kernel(x_ref, w_ref, v_ref, s_ref, o_ref, *,
                   widx, vidx, sidx, seq, bsz, nhead, hidden,
                   n_enc_layers, n_dec_layers, n_lstm_en, n_lstm_de):
    n = seq * bsz
    H = hidden

    def W(name):
        return _rd(w_ref, widx, name)

    def V(name):
        return _rd(v_ref, vidx, name)

    def S(name):
        return _rd(s_ref, sidx, name)

    x = x_ref[...]                                        # (N, d_enc) f32

    # Cross-batch additive attention mask built in-kernel (no O(N^2) input).
    r_i = jax.lax.broadcasted_iota(jnp.int32, (n, n), 0)
    c_i = jax.lax.broadcasted_iota(jnp.int32, (n, n), 1)
    bmask = jnp.where((r_i % bsz) == (c_i % bsz),
                      jnp.float32(0.0), jnp.float32(-1e30))

    # ---- Transformer encoder (post-norm, ReLU FFN, eval) -------------------
    mem = x
    for i in range(n_enc_layers):
        a = _mha(mem, mem, W(f"enc{i}_wqkv"), V(f"enc{i}_bqkv"),
                 W(f"enc{i}_wo"), V(f"enc{i}_bo"), bmask, nhead, True)
        mem = _layer_norm(mem + a, V(f"enc{i}_ln1g"), V(f"enc{i}_ln1b"))
        f = _ffn(mem, W(f"enc{i}_w1"), V(f"enc{i}_b1"),
                 W(f"enc{i}_w2"), V(f"enc{i}_b2"))
        mem = _layer_norm(mem + f, V(f"enc{i}_ln2g"), V(f"enc{i}_ln2b"))

    # ---- 2-layer bidirectional LSTM over the encoder memory ----------------
    sel = V("bilstm_sel")
    seq_en = mem
    for l in range(n_lstm_en):
        seq_en = _bilstm_layer(seq_en, W(f"len{l}_wih"), W(f"len{l}_whh"),
                               V(f"len{l}_b"), S(f"len{l}_h0"), S(f"len{l}_c0"),
                               sel, seq=seq, bsz=bsz, hidden=H)

    # ---- encoder_rn = Linear_en(x) ------------------------------------------
    dec = _bf16_dot(x, W("lin_en_w")) + V("lin_en_b")

    # ---- Transformer decoder (memory = seq_en) ------------------------------
    for i in range(n_dec_layers):
        a = _mha(dec, dec, W(f"dec{i}_sa_wqkv"), V(f"dec{i}_sa_bqkv"),
                 W(f"dec{i}_sa_wo"), V(f"dec{i}_sa_bo"), bmask, nhead, True)
        dec = _layer_norm(dec + a, V(f"dec{i}_ln1g"), V(f"dec{i}_ln1b"))
        a = _mha(dec, seq_en, W(f"dec{i}_ca_wqkv"), V(f"dec{i}_ca_bqkv"),
                 W(f"dec{i}_ca_wo"), V(f"dec{i}_ca_bo"), bmask, nhead, False)
        dec = _layer_norm(dec + a, V(f"dec{i}_ln2g"), V(f"dec{i}_ln2b"))
        f = _ffn(dec, W(f"dec{i}_w1"), V(f"dec{i}_b1"),
                 W(f"dec{i}_w2"), V(f"dec{i}_b2"))
        dec = _layer_norm(dec + f, V(f"dec{i}_ln3g"), V(f"dec{i}_ln3b"))

    # ---- 2-layer unidirectional LSTM decoder --------------------------------
    seq_de = dec
    for l in range(n_lstm_de):
        seq_de = _lstm_layer(seq_de, W(f"lde{l}_wih"), V(f"lde{l}_whh"),
                             V(f"lde{l}_b"), S(f"lde{l}_h0"), S(f"lde{l}_c0"),
                             seq=seq, bsz=bsz, hidden=H)

    # ---- final residual + Linear_de ------------------------------------------
    o_ref[...] = _bf16_dot(seq_de + x, W("lin_de_w")) + V("lin_de_b")


# ---------------------------------------------------------------------------
# Host-side slab packing
# ---------------------------------------------------------------------------
class _SlabPacker:
    """Packs many small tensors into one (rows, lanes) slab.

    Each entry starts at a row offset aligned to `row_align` and at lane 0,
    so in-kernel reads are static, tile-aligned ref slices."""

    def __init__(self, lanes, dtype, row_align):
        self.lanes = lanes
        self.dtype = dtype
        self.row_align = row_align
        self.chunks = []
        self.index = {}
        self.offset = 0

    def add(self, name, arr):
        arr = jnp.asarray(arr, jnp.float32)
        if arr.ndim == 1:
            arr = arr.reshape(1, -1)
        r, c = arr.shape
        assert c <= self.lanes, (name, arr.shape)
        rp = ((r + self.row_align - 1) // self.row_align) * self.row_align
        buf = jnp.zeros((rp, self.lanes), jnp.float32).at[:r, :c].set(arr)
        self.chunks.append(buf.astype(self.dtype))
        self.index[name] = (self.offset, r, c)
        self.offset += rp

    def finalize(self):
        return jnp.concatenate(self.chunks, axis=0), self.index


def _interleave_gate_cols(a_f, a_b, H):
    # a_f, a_b: (R, 4H) in PyTorch gate order [i,f,g,o].
    # Returns (R, 8H) with layout [i_f,i_b,f_f,f_b,g_f,g_b,o_f,o_b].
    cols = []
    for g in range(4):
        cols.append(a_f[:, g * H:(g + 1) * H])
        cols.append(a_b[:, g * H:(g + 1) * H])
    return jnp.concatenate(cols, axis=1)


def pack_params(params):
    """Pack static weights into W (bf16, MXU) and V (f32, biases/LN/VPU) slabs."""
    H = params["lstm_en"][0]["w_hh"].shape[1]
    wp = _SlabPacker(128, jnp.bfloat16, 16)
    vp = _SlabPacker(128, jnp.float32, 8)

    for i, lp in enumerate(params["enc"]):
        wp.add(f"enc{i}_wqkv", lp["sa"]["in_w"].T)
        wp.add(f"enc{i}_wo", lp["sa"]["out_w"].T)
        wp.add(f"enc{i}_w1", lp["ff_w1"].T)
        wp.add(f"enc{i}_w2", lp["ff_w2"].T)
        vp.add(f"enc{i}_bqkv", lp["sa"]["in_b"])
        vp.add(f"enc{i}_bo", lp["sa"]["out_b"])
        vp.add(f"enc{i}_b1", lp["ff_b1"])
        vp.add(f"enc{i}_b2", lp["ff_b2"])
        vp.add(f"enc{i}_ln1g", lp["ln1_g"])
        vp.add(f"enc{i}_ln1b", lp["ln1_b"])
        vp.add(f"enc{i}_ln2g", lp["ln2_g"])
        vp.add(f"enc{i}_ln2b", lp["ln2_b"])

    for i, lp in enumerate(params["dec"]):
        wp.add(f"dec{i}_sa_wqkv", lp["sa"]["in_w"].T)
        wp.add(f"dec{i}_sa_wo", lp["sa"]["out_w"].T)
        wp.add(f"dec{i}_ca_wqkv", lp["ca"]["in_w"].T)
        wp.add(f"dec{i}_ca_wo", lp["ca"]["out_w"].T)
        wp.add(f"dec{i}_w1", lp["ff_w1"].T)
        wp.add(f"dec{i}_w2", lp["ff_w2"].T)
        vp.add(f"dec{i}_sa_bqkv", lp["sa"]["in_b"])
        vp.add(f"dec{i}_sa_bo", lp["sa"]["out_b"])
        vp.add(f"dec{i}_ca_bqkv", lp["ca"]["in_b"])
        vp.add(f"dec{i}_ca_bo", lp["ca"]["out_b"])
        vp.add(f"dec{i}_b1", lp["ff_b1"])
        vp.add(f"dec{i}_b2", lp["ff_b2"])
        vp.add(f"dec{i}_ln1g", lp["ln1_g"])
        vp.add(f"dec{i}_ln1b", lp["ln1_b"])
        vp.add(f"dec{i}_ln2g", lp["ln2_g"])
        vp.add(f"dec{i}_ln2b", lp["ln2_b"])
        vp.add(f"dec{i}_ln3g", lp["ln3_g"])
        vp.add(f"dec{i}_ln3b", lp["ln3_b"])

    # Bidirectional encoder LSTM: fuse fwd/bwd per layer (interleaved gates).
    n_len = len(params["lstm_en"]) // 2
    for l in range(n_len):
        cf = params["lstm_en"][2 * l]
        cb = params["lstm_en"][2 * l + 1]
        wih = _interleave_gate_cols(cf["w_ih"].T, cb["w_ih"].T, H)     # (Din, 8H)
        whh = jnp.concatenate(
            [_interleave_gate_cols(cf["w_hh"].T, jnp.zeros_like(cb["w_hh"].T), H),
             _interleave_gate_cols(jnp.zeros_like(cf["w_hh"].T), cb["w_hh"].T, H)],
            axis=0)                                                     # (2H, 8H)
        bias = _interleave_gate_cols((cf["b_ih"] + cf["b_hh"]).reshape(1, -1),
                                     (cb["b_ih"] + cb["b_hh"]).reshape(1, -1), H)
        wp.add(f"len{l}_wih", wih)
        wp.add(f"len{l}_whh", whh)
        vp.add(f"len{l}_b", bias)

    # Unidirectional decoder LSTM (recurrent weight stays f32 for the VPU path).
    for l, c in enumerate(params["lstm_de"]):
        wp.add(f"lde{l}_wih", c["w_ih"].T)
        vp.add(f"lde{l}_whh", c["w_hh"].T)
        vp.add(f"lde{l}_b", (c["b_ih"] + c["b_hh"]).reshape(1, -1))

    wp.add("lin_en_w", params["lin_en_w"].T)
    vp.add("lin_en_b", params["lin_en_b"])
    wp.add("lin_de_w", params["lin_de_w"].T)
    vp.add("lin_de_b", params["lin_de_b"])

    # 0/1 selector over the 8H interleaved gate lanes (1.0 on forward lanes).
    lane = jnp.arange(8 * H)
    vp.add("bilstm_sel", ((lane // H) % 2 == 0).astype(jnp.float32).reshape(1, -1))

    w_slab, widx = wp.finalize()
    v_slab, vidx = vp.finalize()
    return w_slab, v_slab, widx, vidx


def pack_states(h0_en, c0_en, h0_de, c0_de):
    """Pack per-call LSTM initial states into one small f32 slab."""
    hidden = h0_en.shape[-1]
    sp = _SlabPacker(2 * hidden, jnp.float32, 8)
    for l in range(h0_en.shape[0] // 2):
        sp.add(f"len{l}_h0", jnp.concatenate([h0_en[2 * l], h0_en[2 * l + 1]], axis=1))
        sp.add(f"len{l}_c0", jnp.concatenate([c0_en[2 * l], c0_en[2 * l + 1]], axis=1))
    for l in range(h0_de.shape[0]):
        sp.add(f"lde{l}_h0", h0_de[l])
        sp.add(f"lde{l}_c0", c0_de[l])
    return sp.finalize()


def make_tlcell_forward(widx, vidx, sidx, *, seq, bsz, d_enc, hidden, nhead,
                        n_enc, n_dec, n_len, n_lde):
    n = seq * bsz
    kernel = functools.partial(
        _tlcell_kernel, widx=widx, vidx=vidx, sidx=sidx,
        seq=seq, bsz=bsz, nhead=nhead, hidden=hidden,
        n_enc_layers=n_enc, n_dec_layers=n_dec,
        n_lstm_en=n_len, n_lstm_de=n_lde)
    call = pl.pallas_call(
        kernel,
        out_shape=jax.ShapeDtypeStruct((n, d_enc), jnp.float32),
        compiler_params=pltpu.CompilerParams(vmem_limit_bytes=32 * 1024 * 1024),
    )

    def forward(x, w_slab, v_slab, s_slab):
        out2d = call(x.reshape(n, d_enc), w_slab, v_slab, s_slab)
        return out2d.reshape(seq, bsz, d_enc)

    return forward


# ---------------------------------------------------------------------------
# Deterministic parameter init (shapes match the PyTorch module __init__)
# ---------------------------------------------------------------------------
def init_params(key, encoder_order=6, ff=128, enc_layers=2, dec_layers=2,
                lstm_layers_en=2, lstm_layers_de=2):
    d_enc = encoder_order
    d_dec = encoder_order * 2
    keys = iter(jax.random.split(key, 256))

    def u(shape, fan_in):
        k = 1.0 / math.sqrt(fan_in)
        return jax.random.uniform(next(keys), shape, jnp.float32, -k, k)

    def mha(d):
        return dict(in_w=u((3 * d, d), d), in_b=u((1, 3 * d), d),
                    out_w=u((d, d), d), out_b=u((1, d), d))

    def enc_layer(d):
        return dict(
            sa=mha(d),
            ln1_g=jnp.ones((1, d), jnp.float32),
            ln1_b=jnp.zeros((1, d), jnp.float32),
            ff_w1=u((ff, d), d), ff_b1=u((1, ff), d),
            ff_w2=u((d, ff), ff), ff_b2=u((1, d), ff),
            ln2_g=jnp.ones((1, d), jnp.float32),
            ln2_b=jnp.zeros((1, d), jnp.float32))

    def dec_layer(d):
        lp = enc_layer(d)
        lp["ca"] = mha(d)
        lp["ln3_g"] = jnp.ones((1, d), jnp.float32)
        lp["ln3_b"] = jnp.zeros((1, d), jnp.float32)
        return lp

    def lstm(input_size, hidden, num_layers, num_dirs):
        cells = []
        for layer in range(num_layers):
            in_sz = input_size if layer == 0 else hidden * num_dirs
            for _d in range(num_dirs):
                cells.append(dict(
                    w_ih=u((4 * hidden, in_sz), hidden),
                    w_hh=u((4 * hidden, hidden), hidden),
                    b_ih=u((4 * hidden,), hidden),
                    b_hh=u((4 * hidden,), hidden)))
        return cells

    return dict(
        enc=[enc_layer(d_enc) for _ in range(enc_layers)],
        dec=[dec_layer(d_dec) for _ in range(dec_layers)],
        lstm_en=lstm(d_enc, encoder_order, lstm_layers_en, 2),
        lstm_de=lstm(d_dec, encoder_order, lstm_layers_de, 1),
        lin_en_w=u((d_dec, d_enc), d_enc), lin_en_b=u((1, d_dec), d_enc),
        lin_de_w=u((d_enc, d_enc), d_enc), lin_de_b=u((1, d_enc), d_enc),
    )


if __name__ == "__main__":
    S, B, D = 8, 2, 6               # seq=8, batchsize=2, EncoderOrder=6
    key = jax.random.PRNGKey(0)
    kx, kp, kh1, kc1, kh2, kc2 = jax.random.split(key, 6)

    x = jax.random.normal(kx, (S, B, D), jnp.float32)
    params = init_params(kp)

    # LSTM initial states (PyTorch draws torch.randn each forward call).
    h0_en = jax.random.normal(kh1, (2 * 2, B, D), jnp.float32)
    c0_en = jax.random.normal(kc1, (2 * 2, B, D), jnp.float32)
    h0_de = jax.random.normal(kh2, (2, B, D), jnp.float32)
    c0_de = jax.random.normal(kc2, (2, B, D), jnp.float32)

    w_slab, v_slab, widx = None, None, None
    w_slab, v_slab, widx, vidx = pack_params(params)
    s_slab, sidx = pack_states(h0_en, c0_en, h0_de, c0_de)

    fwd = jax.jit(make_tlcell_forward(
        widx, vidx, sidx, seq=S, bsz=B, d_enc=D, hidden=D, nhead=3,
        n_enc=len(params["enc"]), n_dec=len(params["dec"]),
        n_len=len(params["lstm_en"]) // 2, n_lde=len(params["lstm_de"])))

    out = fwd(x, w_slab, v_slab, s_slab)
    jax.block_until_ready(out)
    assert out.shape == (S, B, D) and out.dtype == jnp.float32
    assert bool(jnp.all(jnp.isfinite(out)))
    print("KERNEL_OK")
</pallas_src>

<mosaic_0001>
module attributes {stable_mosaic.version = 11 : i64} {
  func.func @_tlcell_kernel(%arg0: memref<16x6xf32, #tpu.memory_space<vmem>>, %arg1: memref<896x128xbf16, #tpu.memory_space<vmem>>, %arg2: memref<392x128xf32, #tpu.memory_space<vmem>>, %arg3: memref<64x12xf32, #tpu.memory_space<vmem>>, %arg4: memref<16x6xf32, #tpu.memory_space<vmem>>) attributes {dimension_semantics = [], scalar_prefetch = 0 : i64, scratch_operands = 0 : i64, tpu.core_type = #tpu.core_type<tc>} {
    %c0 = arith.constant 0 : index
    %c0_0 = arith.constant 0 : index
    %0 = vector.load %arg0[%c0, %c0_0] : memref<16x6xf32, #tpu.memory_space<vmem>>, vector<16x6xf32>
    %1 = tpu.iota {dimensions = array<i32: 0>} : vector<16x16xi32>
    %2 = tpu.iota {dimensions = array<i32: 1>} : vector<16x16xi32>
    %c2_i32 = arith.constant 2 : i32
    %c0_i32 = arith.constant 0 : i32
    %3 = arith.cmpi eq, %c2_i32, %c0_i32 : i32
    %c1_i32 = arith.constant 1 : i32
    %4 = arith.select %3, %c1_i32, %c2_i32 : i32
    %5 = vector.broadcast %4 : i32 to vector<16x16xi32>
    %6 = arith.remsi %1, %5 : vector<16x16xi32>
    %c0_i32_1 = arith.constant 0 : i32
    %7 = vector.broadcast %c0_i32_1 : i32 to vector<16x16xi32>
    %8 = arith.cmpi ne, %6, %7 : vector<16x16xi32>
    %c0_i32_2 = arith.constant 0 : i32
    %9 = vector.broadcast %c0_i32_2 : i32 to vector<16x16xi32>
    %10 = arith.cmpi slt, %6, %9 : vector<16x16xi32>
    %c0_i32_3 = arith.constant 0 : i32
    %11 = arith.cmpi slt, %4, %c0_i32_3 : i32
    %12 = vector.broadcast %11 : i1 to vector<16x16xi1>
    %13 = vector.broadcast %12 : vector<16x16xi1> to vector<16x16xi1>
    %14 = arith.xori %10, %13 : vector<16x16xi1>
    %15 = arith.andi %14, %8 : vector<16x16xi1>
    %16 = vector.broadcast %4 : i32 to vector<16x16xi32>
    %17 = arith.addi %6, %16 : vector<16x16xi32>
    %18 = arith.select %15, %17, %6 : vector<16x16xi1>, vector<16x16xi32>
    %c2_i32_4 = arith.constant 2 : i32
    %c0_i32_5 = arith.constant 0 : i32
    %19 = arith.cmpi eq, %c2_i32_4, %c0_i32_5 : i32
    %c1_i32_6 = arith.constant 1 : i32
    %20 = arith.select %19, %c1_i32_6, %c2_i32_4 : i32
    %21 = vector.broadcast %20 : i32 to vector<16x16xi32>
    %22 = arith.remsi %2, %21 : vector<16x16xi32>
    %c0_i32_7 = arith.constant 0 : i32
    %23 = vector.broadcast %c0_i32_7 : i32 to vector<16x16xi32>
    %24 = arith.cmpi ne, %22, %23 : vector<16x16xi32>
    %c0_i32_8 = arith.constant 0 : i32
    %25 = vector.broadcast %c0_i32_8 : i32 to vector<16x16xi32>
    %26 = arith.cmpi slt, %22, %25 : vector<16x16xi32>
    %c0_i32_9 = arith.constant 0 : i32
    %27 = arith.cmpi slt, %20, %c0_i32_9 : i32
    %28 = vector.broadcast %27 : i1 to vector<16x16xi1>
    %29 = vector.broadcast %28 : vector<16x16xi1> to vector<16x16xi1>
    %30 = arith.xori %26, %29 : vector<16x16xi1>
    %31 = arith.andi %30, %24 : vector<16x16xi1>
    %32 = vector.broadcast %20 : i32 to vector<16x16xi32>
    %33 = arith.addi %22, %32 : vector<16x16xi32>
    %34 = arith.select %31, %33, %22 : vector<16x16xi1>, vector<16x16xi32>
    %35 = arith.cmpi eq, %18, %34 : vector<16x16xi32>
    %cst = arith.constant 0.000000e+00 : f32
    %cst_10 = arith.constant -1.000000e+30 : f32
    %36 = vector.broadcast %cst : f32 to vector<16x16xf32>
    %37 = vector.broadcast %cst_10 : f32 to vector<16x16xf32>
    %38 = arith.select %35, %36, %37 : vector<16x16xi1>, vector<16x16xf32>
    %c0_11 = arith.constant 0 : index
    %c0_12 = arith.constant 0 : index
    %39 = vector.load %arg1[%c0_11, %c0_12] : memref<896x128xbf16, #tpu.memory_space<vmem>>, vector<6x18xbf16>
    %c0_13 = arith.constant 0 : index
    %c0_14 = arith.constant 0 : index
    %40 = vector.load %arg2[%c0_13, %c0_14] : memref<392x128xf32, #tpu.memory_space<vmem>>, vector<1x18xf32>
    %c16 = arith.constant 16 : index
    %c0_15 = arith.constant 0 : index
    %41 = vector.load %arg1[%c16, %c0_15] : memref<896x128xbf16, #tpu.memory_space<vmem>>, vector<6x6xbf16>
    %c8 = arith.constant 8 : index
    %c0_16 = arith.constant 0 : index
    %42 = vector.load %arg2[%c8, %c0_16] : memref<392x128xf32, #tpu.memory_space<vmem>>, vector<1x6xf32>
    %43 = arith.truncf %0 : vector<16x6xf32> to vector<16x6xbf16>
    %cst_17 = arith.constant dense<0.000000e+00> : vector<16x18xf32>
    %44 = tpu.matmul %43, %39, %cst_17 {dimension_numbers = #tpu.dot_dimension_numbers<[1], [0], [0], [1], [0, 0, 1, 1], [], []>} : vector<16x6xbf16>, vector<6x18xbf16>, vector<16x18xf32> -> vector<16x18xf32>
    %45 = vector.broadcast %40 : vector<1x18xf32> to vector<16x18xf32>
    %46 = arith.addf %44, %45 : vector<16x18xf32>
    %47 = vector.extract_strided_slice %46 {offsets = [0, 0], sizes = [16, 6], strides = [1, 1]} : vector<16x18xf32> to vector<16x6xf32>
    %cst_18 = arith.constant 0.707106769 : f32
    %48 = vector.broadcast %cst_18 : f32 to vector<16x6xf32>
    %49 = arith.mulf %47, %48 : vector<16x6xf32>
    %50 = vector.extract_strided_slice %46 {offsets = [0, 6], sizes = [16, 6], strides = [1, 1]} : vector<16x18xf32> to vector<16x6xf32>
    %51 = vector.extract_strided_slice %46 {offsets = [0, 12], sizes = [16, 6], strides = [1, 1]} : vector<16x18xf32> to vector<16x6xf32>
    %52 = vector.extract_strided_slice %49 {offsets = [0, 0], sizes = [16, 2], strides = [1, 1]} : vector<16x6xf32> to vector<16x2xf32>
    %53 = vector.extract_strided_slice %50 {offsets = [0, 0], sizes = [16, 2], strides = [1, 1]} : vector<16x6xf32> to vector<16x2xf32>
    %54 = arith.truncf %52 : vector<16x2xf32> to vector<16x2xbf16>
    %55 = arith.truncf %53 : vector<16x2xf32> to vector<16x2xbf16>
    %cst_19 = arith.constant dense<0.000000e+00> : vector<16x16xf32>
    %56 = tpu.matmul %54, %55, %cst_19 {dimension_numbers = #tpu.dot_dimension_numbers<[1], [1], [0], [0], [0, 0, 1, 0], [], []>} : vector<16x2xbf16>, vector<16x2xbf16>, vector<16x16xf32> -> vector<16x16xf32>
    %57 = arith.addf %56, %38 : vector<16x16xf32>
    %cst_20 = arith.constant dense<0xFF800000> : vector<16xf32>
    %58 = vector.multi_reduction <maximumf>, %57, %cst_20 [1] : vector<16x16xf32> to vector<16xf32>
    %59 = vector.shape_cast %58 : vector<16xf32> to vector<16x1xf32>
    %60 = vector.broadcast %59 : vector<16x1xf32> to vector<16x16xf32>
    %61 = arith.subf %57, %60 : vector<16x16xf32>
    %62 = math.exp %61 : vector<16x16xf32>
    %cst_21 = arith.constant dense<0.000000e+00> : vector<16xf32>
    %63 = vector.multi_reduction <add>, %62, %cst_21 [1] : vector<16x16xf32> to vector<16xf32>
    %64 = vector.shape_cast %63 : vector<16xf32> to vector<16x1xf32>
    %65 = tpu.reciprocal %64 {approx = true} : vector<16x1xf32> -> vector<16x1xf32>
    %66 = vector.broadcast %65 : vector<16x1xf32> to vector<16x16xf32>
    %67 = arith.mulf %62, %66 : vector<16x16xf32>
    %68 = vector.extract_strided_slice %51 {offsets = [0, 0], sizes = [16, 2], strides = [1, 1]} : vector<16x6xf32> to vector<16x2xf32>
    %69 = arith.truncf %67 : vector<16x16xf32> to vector<16x16xbf16>
    %70 = arith.truncf %68 : vector<16x2xf32> to vector<16x2xbf16>
    %cst_22 = arith.constant dense<0.000000e+00> : vector<16x2xf32>
    %71 = tpu.matmul %69, %70, %cst_22 {dimension_numbers = #tpu.dot_dimension_numbers<[1], [0], [0], [1], [0, 0, 1, 1], [], []>} : vector<16x16xbf16>, vector<16x2xbf16>, vector<16x2xf32> -> vector<16x2xf32>
    %72 = vector.extract_strided_slice %49 {offsets = [0, 2], sizes = [16, 2], strides = [1, 1]} : vector<16x6xf32> to vector<16x2xf32>
    %73 = vector.extract_strided_slice %50 {offsets = [0, 2], sizes = [16, 2], strides = [1, 1]} : vector<16x6xf32> to vector<16x2xf32>
    %74 = arith.truncf %72 : vector<16x2xf32> to vector<16x2xbf16>
    %75 = arith.truncf %73 : vector<16x2xf32> to vector<16x2xbf16>
    %cst_23 = arith.constant dense<0.000000e+00> : vector<16x16xf32>
    %76 = tpu.matmul %74, %75, %cst_23 {dimension_numbers = #tpu.dot_dimension_numbers<[1], [1], [0], [0], [0, 0, 1, 0], [], []>} : vector<16x2xbf16>, vector<16x2xbf16>, vector<16x16xf32> -> vector<16x16xf32>
    %77 = arith.addf %76, %38 : vector<16x16xf32>
    %cst_24 = arith.constant dense<0xFF800000> : vector<16xf32>
    %78 = vector.multi_reduction <maximumf>, %77, %cst_24 [1] : vector<16x16xf32> to vector<16xf32>
    %79 = vector.shape_cast %78 : vector<16xf32> to vector<16x1xf32>
    %80 = vector.broadcast %79 : vector<16x1xf32> to vector<16x16xf32>
    %81 = arith.subf %77, %80 : vector<16x16xf32>
    %82 = math.exp %81 : vector<16x16xf32>
    %cst_25 = arith.constant dense<0.000000e+00> : vector<16xf32>
    %83 = vector.multi_reduction <add>, %82, %cst_25 [1] : vector<16x16xf32> to vector<16xf32>
    %84 = vector.shape_cast %83 : vector<16xf32> to vector<16x1xf32>
    %85 = tpu.reciprocal %84 {approx = true} : vector<16x1xf32> -> vector<16x1xf32>
    %86 = vector.broadcast %85 : vector<16x1xf32> to vector<16x16xf32>
    %87 = arith.mulf %82, %86 : vector<16x16xf32>
    %88 = vector.extract_strided_slice %51 {offsets = [0, 2], sizes = [16, 2], strides = [1, 1]} : vector<16x6xf32> to vector<16x2xf32>
    %89 = arith.truncf %87 : vector<16x16xf32> to vector<16x16xbf16>
    %90 = arith.truncf %88 : vector<16x2xf32> to vector<16x2xbf16>
    %cst_26 = arith.constant dense<0.000000e+00> : vector<16x2xf32>
    %91 = tpu.matmul %89, %90, %cst_26 {dimension_numbers = #tpu.dot_dimension_numbers<[1], [0], [0], [1], [0, 0, 1, 1], [], []>} : vector<16x16xbf16>, vector<16x2xbf16>, vector<16x2xf32> -> vector<16x2xf32>
    %92 = vector.extract_strided_slice %49 {offsets = [0, 4], sizes = [16, 2], strides = [1, 1]} : vector<16x6xf32> to vector<16x2xf32>
    %93 = vector.extract_strided_slice %50 {offsets = [0, 4], sizes = [16, 2], strides = [1, 1]} : vector<16x6xf32> to vector<16x2xf32>
    %94 = arith.truncf %92 : vector<16x2xf32> to vector<16x2xbf16>
    %95 = arith.truncf %93 : vector<16x2xf32> to vector<16x2xbf16>
    %cst_27 = arith.constant dense<0.000000e+00> : vector<16x16xf32>
    %96 = tpu.matmul %94, %95, %cst_27 {dimension_numbers = #tpu.dot_dimension_numbers<[1], [1], [0], [0], [0, 0, 1, 0], [], []>} : vector<16x2xbf16>, vector<16x2xbf16>, vector<16x16xf32> -> vector<16x16xf32>
    %97 = arith.addf %96, %38 : vector<16x16xf32>
    %cst_28 = arith.constant dense<0xFF800000> : vector<16xf32>
    %98 = vector.multi_reduction <maximumf>, %97, %cst_28 [1] : vector<16x16xf32> to vector<16xf32>
    %99 = vector.shape_cast %98 : vector<16xf32> to vector<16x1xf32>
    %100 = vector.broadcast %99 : vector<16x1xf32> to vector<16x16xf32>
    %101 = arith.subf %97, %100 : vector<16x16xf32>
    %102 = math.exp %101 : vector<16x16xf32>
    %cst_29 = arith.constant dense<0.000000e+00> : vector<16xf32>
    %103 = vector.multi_reduction <add>, %102, %cst_29 [1] : vector<16x16xf32> to vector<16xf32>
    %104 = vector.shape_cast %103 : vector<16xf32> to vector<16x1xf32>
    %105 = tpu.reciprocal %104 {approx = true} : vector<16x1xf32> -> vector<16x1xf32>
    %106 = vector.broadcast %105 : vector<16x1xf32> to vector<16x16xf32>
    %107 = arith.mulf %102, %106 : vector<16x16xf32>
    %108 = vector.extract_strided_slice %51 {offsets = [0, 4], sizes = [16, 2], strides = [1, 1]} : vector<16x6xf32> to vector<16x2xf32>
    %109 = arith.truncf %107 : vector<16x16xf32> to vector<16x16xbf16>
    %110 = arith.truncf %108 : vector<16x2xf32> to vector<16x2xbf16>
    %cst_30 = arith.constant dense<0.000000e+00> : vector<16x2xf32>
    %111 = tpu.matmul %109, %110, %cst_30 {dimension_numbers = #tpu.dot_dimension_numbers<[1], [0], [0], [1], [0, 0, 1, 1], [], []>} : vector<16x16xbf16>, vector<16x2xbf16>, vector<16x2xf32> -> vector<16x2xf32>
    %112 = tpu.concatenate %71, %91, %111 in 1 : vector<16x2xf32>, vector<16x2xf32>, vector<16x2xf32> -> vector<16x6xf32>
    %113 = arith.truncf %112 : vector<16x6xf32> to vector<16x6xbf16>
    %cst_31 = arith.constant dense<0.000000e+00> : vector<16x6xf32>
    %114 = tpu.matmul %113, %41, %cst_31 {dimension_numbers = #tpu.dot_dimension_numbers<[1], [0], [0], [1], [0, 0, 1, 1], [], []>} : vector<16x6xbf16>, vector<6x6xbf16>, vector<16x6xf32> -> vector<16x6xf32>
    %115 = vector.broadcast %42 : vector<1x6xf32> to vector<16x6xf32>
    %116 = arith.addf %114, %115 : vector<16x6xf32>
    %117 = arith.addf %0, %116 : vector<16x6xf32>
    %c32 = arith.constant 32 : index
    %c0_32 = arith.constant 0 : index
    %118 = vector.load %arg2[%c32, %c0_32] : memref<392x128xf32, #tpu.memory_space<vmem>>, vector<1x6xf32>
    %c40 = arith.constant 40 : index
    %c0_33 = arith.constant 0 : index
    %119 = vector.load %arg2[%c40, %c0_33] : memref<392x128xf32, #tpu.memory_space<vmem>>, vector<1x6xf32>
    %cst_34 = arith.constant dense<0.000000e+00> : vector<16xf32>
    %120 = vector.multi_reduction <add>, %117, %cst_34 [1] : vector<16x6xf32> to vector<16xf32>
    %121 = vector.shape_cast %120 : vector<16xf32> to vector<16x1xf32>
    %cst_35 = arith.constant 6.000000e+00 : f32
    %122 = vector.broadcast %cst_35 : f32 to vector<16x1xf32>
    %123 = arith.divf %121, %122 : vector<16x1xf32>
    %124 = vector.broadcast %123 : vector<16x1xf32> to vector<16x6xf32>
    %125 = arith.subf %117, %124 : vector<16x6xf32>
    %126 = arith.mulf %125, %125 : vector<16x6xf32>
    %cst_36 = arith.constant dense<0.000000e+00> : vector<16xf32>
    %127 = vector.multi_reduction <add>, %126, %cst_36 [1] : vector<16x6xf32> to vector<16xf32>
    %128 = vector.shape_cast %127 : vector<16xf32> to vector<16x1xf32>
    %cst_37 = arith.constant 6.000000e+00 : f32
    %129 = vector.broadcast %cst_37 : f32 to vector<16x1xf32>
    %130 = arith.divf %128, %129 : vector<16x1xf32>
    %cst_38 = arith.constant 9.99999974E-6 : f32
    %131 = vector.broadcast %cst_38 : f32 to vector<16x1xf32>
    %132 = arith.addf %130, %131 : vector<16x1xf32>
    %133 = math.rsqrt %132 : vector<16x1xf32>
    %134 = vector.broadcast %133 : vector<16x1xf32> to vector<16x6xf32>
    %135 = arith.mulf %125, %134 : vector<16x6xf32>
    %136 = vector.broadcast %118 : vector<1x6xf32> to vector<16x6xf32>
    %137 = arith.mulf %135, %136 : vector<16x6xf32>
    %138 = vector.broadcast %119 : vector<1x6xf32> to vector<16x6xf32>
    %139 = arith.addf %137, %138 : vector<16x6xf32>
    %c32_39 = arith.constant 32 : index
    %c0_40 = arith.constant 0 : index
    %140 = vector.load %arg1[%c32_39, %c0_40] : memref<896x128xbf16, #tpu.memory_space<vmem>>, vector<6x128xbf16>
    %c16_41 = arith.constant 16 : index
    %c0_42 = arith.constant 0 : index
    %141 = vector.load %arg2[%c16_41, %c0_42] : memref<392x128xf32, #tpu.memory_space<vmem>>, vector<1x128xf32>
    %c48 = arith.constant 48 : index
    %c0_43 = arith.constant 0 : index
    %142 = vector.load %arg1[%c48, %c0_43] : memref<896x128xbf16, #tpu.memory_space<vmem>>, vector<128x6xbf16>
    %c24 = arith.constant 24 : index
    %c0_44 = arith.constant 0 : index
    %143 = vector.load %arg2[%c24, %c0_44] : memref<392x128xf32, #tpu.memory_space<vmem>>, vector<1x6xf32>
    %144 = arith.truncf %139 : vector<16x6xf32> to vector<16x6xbf16>
    %cst_45 = arith.constant dense<0.000000e+00> : vector<16x128xf32>
    %145 = tpu.matmul %144, %140, %cst_45 {dimension_numbers = #tpu.dot_dimension_numbers<[1], [0], [0], [1], [0, 0, 1, 1], [], []>} : vector<16x6xbf16>, vector<6x128xbf16>, vector<16x128xf32> -> vector<16x128xf32>
    %146 = vector.broadcast %141 : vector<1x128xf32> to vector<16x128xf32>
    %147 = arith.addf %145, %146 : vector<16x128xf32>
    %cst_46 = arith.constant 0.000000e+00 : f32
    %148 = vector.broadcast %cst_46 : f32 to vector<16x128xf32>
    %149 = arith.maximumf %147, %148 : vector<16x128xf32>
    %150 = arith.truncf %149 : vector<16x128xf32> to vector<16x128xbf16>
    %cst_47 = arith.constant dense<0.000000e+00> : vector<16x6xf32>
    %151 = tpu.matmul %150, %142, %cst_47 {dimension_numbers = #tpu.dot_dimension_numbers<[1], [0], [0], [1], [0, 0, 1, 1], [], []>} : vector<16x128xbf16>, vector<128x6xbf16>, vector<16x6xf32> -> vector<16x6xf32>
    %152 = vector.broadcast %143 : vector<1x6xf32> to vector<16x6xf32>
    %153 = arith.addf %151, %152 : vector<16x6xf32>
    %154 = arith.addf %139, %153 : vector<16x6xf32>
    %c48_48 = arith.constant 48 : index
    %c0_49 = arith.constant 0 : index
    %155 = vector.load %arg2[%c48_48, %c0_49] : memref<392x128xf32, #tpu.memory_space<vmem>>, vector<1x6xf32>
    %c56 = arith.constant 56 : index
    %c0_50 = arith.constant 0 : index
    %156 = vector.load %arg2[%c56, %c0_50] : memref<392x128xf32, #tpu.memory_space<vmem>>, vector<1x6xf32>
    %cst_51 = arith.constant dense<0.000000e+00> : vector<16xf32>
    %157 = vector.multi_reduction <add>, %154, %cst_51 [1] : vector<16x6xf32> to vector<16xf32>
    %158 = vector.shape_cast %157 : vector<16xf32> to vector<16x1xf32>
    %cst_52 = arith.constant 6.000000e+00 : f32
    %159 = vector.broadcast %cst_52 : f32 to vector<16x1xf32>
    %160 = arith.divf %158, %159 : vector<16x1xf32>
    %161 = vector.broadcast %160 : vector<16x1xf32> to vector<16x6xf32>
    %162 = arith.subf %154, %161 : vector<16x6xf32>
    %163 = arith.mulf %162, %162 : vector<16x6xf32>
    %cst_53 = arith.constant dense<0.000000e+00> : vector<16xf32>
    %164 = vector.multi_reduction <add>, %163, %cst_53 [1] : vector<16x6xf32> to vector<16xf32>
    %165 = vector.shape_cast %164 : vector<16xf32> to vector<16x1xf32>
    %cst_54 = arith.constant 6.000000e+00 : f32
    %166 = vector.broadcast %cst_54 : f32 to vector<16x1xf32>
    %167 = arith.divf %165, %166 : vector<16x1xf32>
    %cst_55 = arith.constant 9.99999974E-6 : f32
    %168 = vector.broadcast %cst_55 : f32 to vector<16x1xf32>
    %169 = arith.addf %167, %168 : vector<16x1xf32>
    %170 = math.rsqrt %169 : vector<16x1xf32>
    %171 = vector.broadcast %170 : vector<16x1xf32> to vector<16x6xf32>
    %172 = arith.mulf %162, %171 : vector<16x6xf32>
    %173 = vector.broadcast %155 : vector<1x6xf32> to vector<16x6xf32>
    %174 = arith.mulf %172, %173 : vector<16x6xf32>
    %175 = vector.broadcast %156 : vector<1x6xf32> to vector<16x6xf32>
    %176 = arith.addf %174, %175 : vector<16x6xf32>
    %c176 = arith.constant 176 : index
    %c0_56 = arith.constant 0 : index
    %177 = vector.load %arg1[%c176, %c0_56] : memref<896x128xbf16, #tpu.memory_space<vmem>>, vector<6x18xbf16>
    %c64 = arith.constant 64 : index
    %c0_57 = arith.constant 0 : index
    %178 = vector.load %arg2[%c64, %c0_57] : memref<392x128xf32, #tpu.memory_space<vmem>>, vector<1x18xf32>
    %c192 = arith.constant 192 : index
    %c0_58 = arith.constant 0 : index
    %179 = vector.load %arg1[%c192, %c0_58] : memref<896x128xbf16, #tpu.memory_space<vmem>>, vector<6x6xbf16>
    %c72 = arith.constant 72 : index
    %c0_59 = arith.constant 0 : index
    %180 = vector.load %arg2[%c72, %c0_59] : memref<392x128xf32, #tpu.memory_space<vmem>>, vector<1x6xf32>
    %181 = arith.truncf %176 : vector<16x6xf32> to vector<16x6xbf16>
    %cst_60 = arith.constant dense<0.000000e+00> : vector<16x18xf32>
    %182 = tpu.matmul %181, %177, %cst_60 {dimension_numbers = #tpu.dot_dimension_numbers<[1], [0], [0], [1], [0, 0, 1, 1], [], []>} : vector<16x6xbf16>, vector<6x18xbf16>, vector<16x18xf32> -> vector<16x18xf32>
    %183 = vector.broadcast %178 : vector<1x18xf32> to vector<16x18xf32>
    %184 = arith.addf %182, %183 : vector<16x18xf32>
    %185 = vector.extract_strided_slice %184 {offsets = [0, 0], sizes = [16, 6], strides = [1, 1]} : vector<16x18xf32> to vector<16x6xf32>
    %cst_61 = arith.constant 0.707106769 : f32
    %186 = vector.broadcast %cst_61 : f32 to vector<16x6xf32>
    %187 = arith.mulf %185, %186 : vector<16x6xf32>
    %188 = vector.extract_strided_slice %184 {offsets = [0, 6], sizes = [16, 6], strides = [1, 1]} : vector<16x18xf32> to vector<16x6xf32>
    %189 = vector.extract_strided_slice %184 {offsets = [0, 12], sizes = [16, 6], strides = [1, 1]} : vector<16x18xf32> to vector<16x6xf32>
    %190 = vector.extract_strided_slice %187 {offsets = [0, 0], sizes = [16, 2], strides = [1, 1]} : vector<16x6xf32> to vector<16x2xf32>
    %191 = vector.extract_strided_slice %188 {offsets = [0, 0], sizes = [16, 2], strides = [1, 1]} : vector<16x6xf32> to vector<16x2xf32>
    %192 = arith.truncf %190 : vector<16x2xf32> to vector<16x2xbf16>
    %193 = arith.truncf %191 : vector<16x2xf32> to vector<16x2xbf16>
    %cst_62 = arith.constant dense<0.000000e+00> : vector<16x16xf32>
    %194 = tpu.matmul %192, %193, %cst_62 {dimension_numbers = #tpu.dot_dimension_numbers<[1], [1], [0], [0], [0, 0, 1, 0], [], []>} : vector<16x2xbf16>, vector<16x2xbf16>, vector<16x16xf32> -> vector<16x16xf32>
    %195 = arith.addf %194, %38 : vector<16x16xf32>
    %cst_63 = arith.constant dense<0xFF800000> : vector<16xf32>
    %196 = vector.multi_reduction <maximumf>, %195, %cst_63 [1] : vector<16x16xf32> to vector<16xf32>
    %197 = vector.shape_cast %196 : vector<16xf32> to vector<16x1xf32>
    %198 = vector.broadcast %197 : vector<16x1xf32> to vector<16x16xf32>
    %199 = arith.subf %195, %198 : vector<16x16xf32>
    %200 = math.exp %199 : vector<16x16xf32>
    %cst_64 = arith.constant dense<0.000000e+00> : vector<16xf32>
    %201 = vector.multi_reduction <add>, %200, %cst_64 [1] : vector<16x16xf32> to vector<16xf32>
    %202 = vector.shape_cast %201 : vector<16xf32> to vector<16x1xf32>
    %203 = tpu.reciprocal %202 {approx = true} : vector<16x1xf32> -> vector<16x1xf32>
    %204 = vector.broadcast %203 : vector<16x1xf32> to vector<16x16xf32>
    %205 = arith.mulf %200, %204 : vector<16x16xf32>
    %206 = vector.extract_strided_slice %189 {offsets = [0, 0], sizes = [16, 2], strides = [1, 1]} : vector<16x6xf32> to vector<16x2xf32>
    %207 = arith.truncf %205 : vector<16x16xf32> to vector<16x16xbf16>
    %208 = arith.truncf %206 : vector<16x2xf32> to vector<16x2xbf16>
    %cst_65 = arith.constant dense<0.000000e+00> : vector<16x2xf32>
    %209 = tpu.matmul %207, %208, %cst_65 {dimension_numbers = #tpu.dot_dimension_numbers<[1], [0], [0], [1], [0, 0, 1, 1], [], []>} : vector<16x16xbf16>, vector<16x2xbf16>, vector<16x2xf32> -> vector<16x2xf32>
    %210 = vector.extract_strided_slice %187 {offsets = [0, 2], sizes = [16, 2], strides = [1, 1]} : vector<16x6xf32> to vector<16x2xf32>
    %211 = vector.extract_strided_slice %188 {offsets = [0, 2], sizes = [16, 2], strides = [1, 1]} : vector<16x6xf32> to vector<16x2xf32>
    %212 = arith.truncf %210 : vector<16x2xf32> to vector<16x2xbf16>
    %213 = arith.truncf %211 : vector<16x2xf32> to vector<16x2xbf16>
    %cst_66 = arith.constant dense<0.000000e+00> : vector<16x16xf32>
    %214 = tpu.matmul %212, %213, %cst_66 {dimension_numbers = #tpu.dot_dimension_numbers<[1], [1], [0], [0], [0, 0, 1, 0], [], []>} : vector<16x2xbf16>, vector<16x2xbf16>, vector<16x16xf32> -> vector<16x16xf32>
    %215 = arith.addf %214, %38 : vector<16x16xf32>
    %cst_67 = arith.constant dense<0xFF800000> : vector<16xf32>
    %216 = vector.multi_reduction <maximumf>, %215, %cst_67 [1] : vector<16x16xf32> to vector<16xf32>
    %217 = vector.shape_cast %216 : vector<16xf32> to vector<16x1xf32>
    %218 = vector.broadcast %217 : vector<16x1xf32> to vector<16x16xf32>
    %219 = arith.subf %215, %218 : vector<16x16xf32>
    %220 = math.exp %219 : vector<16x16xf32>
    %cst_68 = arith.constant dense<0.000000e+00> : vector<16xf32>
    %221 = vector.multi_reduction <add>, %220, %cst_68 [1] : vector<16x16xf32> to vector<16xf32>
    %222 = vector.shape_cast %221 : vector<16xf32> to vector<16x1xf32>
    %223 = tpu.reciprocal %222 {approx = true} : vector<16x1xf32> -> vector<16x1xf32>
    %224 = vector.broadcast %223 : vector<16x1xf32> to vector<16x16xf32>
    %225 = arith.mulf %220, %224 : vector<16x16xf32>
    %226 = vector.extract_strided_slice %189 {offsets = [0, 2], sizes = [16, 2], strides = [1, 1]} : vector<16x6xf32> to vector<16x2xf32>
    %227 = arith.truncf %225 : vector<16x16xf32> to vector<16x16xbf16>
    %228 = arith.truncf %226 : vector<16x2xf32> to vector<16x2xbf16>
    %cst_69 = arith.constant dense<0.000000e+00> : vector<16x2xf32>
    %229 = tpu.matmul %227, %228, %cst_69 {dimension_numbers = #tpu.dot_dimension_numbers<[1], [0], [0], [1], [0, 0, 1, 1], [], []>} : vector<16x16xbf16>, vector<16x2xbf16>, vector<16x2xf32> -> vector<16x2xf32>
    %230 = vector.extract_strided_slice %187 {offsets = [0, 4], sizes = [16, 2], strides = [1, 1]} : vector<16x6xf32> to vector<16x2xf32>
    %231 = vector.extract_strided_slice %188 {offsets = [0, 4], sizes = [16, 2], strides = [1, 1]} : vector<16x6xf32> to vector<16x2xf32>
    %232 = arith.truncf %230 : vector<16x2xf32> to vector<16x2xbf16>
    %233 = arith.truncf %231 : vector<16x2xf32> to vector<16x2xbf16>
    %cst_70 = arith.constant dense<0.000000e+00> : vector<16x16xf32>
    %234 = tpu.matmul %232, %233, %cst_70 {dimension_numbers = #tpu.dot_dimension_numbers<[1], [1], [0], [0], [0, 0, 1, 0], [], []>} : vector<16x2xbf16>, vector<16x2xbf16>, vector<16x16xf32> -> vector<16x16xf32>
    %235 = arith.addf %234, %38 : vector<16x16xf32>
    %cst_71 = arith.constant dense<0xFF800000> : vector<16xf32>
    %236 = vector.multi_reduction <maximumf>, %235, %cst_71 [1] : vector<16x16xf32> to vector<16xf32>
    %237 = vector.shape_cast %236 : vector<16xf32> to vector<16x1xf32>
    %238 = vector.broadcast %237 : vector<16x1xf32> to vector<16x16xf32>
    %239 = arith.subf %235, %238 : vector<16x16xf32>
    %240 = math.exp %239 : vector<16x16xf32>
    %cst_72 = arith.constant dense<0.000000e+00> : vector<16xf32>
    %241 = vector.multi_reduction <add>, %240, %cst_72 [1] : vector<16x16xf32> to vector<16xf32>
    %242 = vector.shape_cast %241 : vector<16xf32> to vector<16x1xf32>
    %243 = tpu.reciprocal %242 {approx = true} : vector<16x1xf32> -> vector<16x1xf32>
    %244 = vector.broadcast %243 : vector<16x1xf32> to vector<16x16xf32>
    %245 = arith.mulf %240, %244 : vector<16x16xf32>
    %246 = vector.extract_strided_slice %189 {offsets = [0, 4], sizes = [16, 2], strides = [1, 1]} : vector<16x6xf32> to vector<16x2xf32>
    %247 = arith.truncf %245 : vector<16x16xf32> to vector<16x16xbf16>
    %248 = arith.truncf %246 : vector<16x2xf32> to vector<16x2xbf16>
    %cst_73 = arith.constant dense<0.000000e+00> : vector<16x2xf32>
    %249 = tpu.matmul %247, %248, %cst_73 {dimension_numbers = #tpu.dot_dimension_numbers<[1], [0], [0], [1], [0, 0, 1, 1], [], []>} : vector<16x16xbf16>, vector<16x2xbf16>, vector<16x2xf32> -> vector<16x2xf32>
    %250 = tpu.concatenate %209, %229, %249 in 1 : vector<16x2xf32>, vector<16x2xf32>, vector<16x2xf32> -> vector<16x6xf32>
    %251 = arith.truncf %250 : vector<16x6xf32> to vector<16x6xbf16>
    %cst_74 = arith.constant dense<0.000000e+00> : vector<16x6xf32>
    %252 = tpu.matmul %251, %179, %cst_74 {dimension_numbers = #tpu.dot_dimension_numbers<[1], [0], [0], [1], [0, 0, 1, 1], [], []>} : vector<16x6xbf16>, vector<6x6xbf16>, vector<16x6xf32> -> vector<16x6xf32>
    %253 = vector.broadcast %180 : vector<1x6xf32> to vector<16x6xf32>
    %254 = arith.addf %252, %253 : vector<16x6xf32>
    %255 = arith.addf %176, %254 : vector<16x6xf32>
    %c96 = arith.constant 96 : index
    %c0_75 = arith.constant 0 : index
    %256 = vector.load %arg2[%c96, %c0_75] : memref<392x128xf32, #tpu.memory_space<vmem>>, vector<1x6xf32>
    %c104 = arith.constant 104 : index
    %c0_76 = arith.constant 0 : index
    %257 = vector.load %arg2[%c104, %c0_76] : memref<392x128xf32, #tpu.memory_space<vmem>>, vector<1x6xf32>
    %cst_77 = arith.constant dense<0.000000e+00> : vector<16xf32>
    %258 = vector.multi_reduction <add>, %255, %cst_77 [1] : vector<16x6xf32> to vector<16xf32>
    %259 = vector.shape_cast %258 : vector<16xf32> to vector<16x1xf32>
    %cst_78 = arith.constant 6.000000e+00 : f32
    %260 = vector.broadcast %cst_78 : f32 to vector<16x1xf32>
    %261 = arith.divf %259, %260 : vector<16x1xf32>
    %262 = vector.broadcast %261 : vector<16x1xf32> to vector<16x6xf32>
    %263 = arith.subf %255, %262 : vector<16x6xf32>
    %264 = arith.mulf %263, %263 : vector<16x6xf32>
    %cst_79 = arith.constant dense<0.000000e+00> : vector<16xf32>
    %265 = vector.multi_reduction <add>, %264, %cst_79 [1] : vector<16x6xf32> to vector<16xf32>
    %266 = vector.shape_cast %265 : vector<16xf32> to vector<16x1xf32>
    %cst_80 = arith.constant 6.000000e+00 : f32
    %267 = vector.broadcast %cst_80 : f32 to vector<16x1xf32>
    %268 = arith.divf %266, %267 : vector<16x1xf32>
    %cst_81 = arith.constant 9.99999974E-6 : f32
    %269 = vector.broadcast %cst_81 : f32 to vector<16x1xf32>
    %270 = arith.addf %268, %269 : vector<16x1xf32>
    %271 = math.rsqrt %270 : vector<16x1xf32>
    %272 = vector.broadcast %271 : vector<16x1xf32> to vector<16x6xf32>
    %273 = arith.mulf %263, %272 : vector<16x6xf32>
    %274 = vector.broadcast %256 : vector<1x6xf32> to vector<16x6xf32>
    %275 = arith.mulf %273, %274 : vector<16x6xf32>
    %276 = vector.broadcast %257 : vector<1x6xf32> to vector<16x6xf32>
    %277 = arith.addf %275, %276 : vector<16x6xf32>
    %c208 = arith.constant 208 : index
    %c0_82 = arith.constant 0 : index
    %278 = vector.load %arg1[%c208, %c0_82] : memref<896x128xbf16, #tpu.memory_space<vmem>>, vector<6x128xbf16>
    %c80 = arith.constant 80 : index
    %c0_83 = arith.constant 0 : index
    %279 = vector.load %arg2[%c80, %c0_83] : memref<392x128xf32, #tpu.memory_space<vmem>>, vector<1x128xf32>
    %c224 = arith.constant 224 : index
    %c0_84 = arith.constant 0 : index
    %280 = vector.load %arg1[%c224, %c0_84] : memref<896x128xbf16, #tpu.memory_space<vmem>>, vector<128x6xbf16>
    %c88 = arith.constant 88 : index
    %c0_85 = arith.constant 0 : index
    %281 = vector.load %arg2[%c88, %c0_85] : memref<392x128xf32, #tpu.memory_space<vmem>>, vector<1x6xf32>
    %282 = arith.truncf %277 : vector<16x6xf32> to vector<16x6xbf16>
    %cst_86 = arith.constant dense<0.000000e+00> : vector<16x128xf32>
    %283 = tpu.matmul %282, %278, %cst_86 {dimension_numbers = #tpu.dot_dimension_numbers<[1], [0], [0], [1], [0, 0, 1, 1], [], []>} : vector<16x6xbf16>, vector<6x128xbf16>, vector<16x128xf32> -> vector<16x128xf32>
    %284 = vector.broadcast %279 : vector<1x128xf32> to vector<16x128xf32>
    %285 = arith.addf %283, %284 : vector<16x128xf32>
    %cst_87 = arith.constant 0.000000e+00 : f32
    %286 = vector.broadcast %cst_87 : f32 to vector<16x128xf32>
    %287 = arith.maximumf %285, %286 : vector<16x128xf32>
    %288 = arith.truncf %287 : vector<16x128xf32> to vector<16x128xbf16>
    %cst_88 = arith.constant dense<0.000000e+00> : vector<16x6xf32>
    %289 = tpu.matmul %288, %280, %cst_88 {dimension_numbers = #tpu.dot_dimension_numbers<[1], [0], [0], [1], [0, 0, 1, 1], [], []>} : vector<16x128xbf16>, vector<128x6xbf16>, vector<16x6xf32> -> vector<16x6xf32>
    %290 = vector.broadcast %281 : vector<1x6xf32> to vector<16x6xf32>
    %291 = arith.addf %289, %290 : vector<16x6xf32>
    %292 = arith.addf %277, %291 : vector<16x6xf32>
    %c112 = arith.constant 112 : index
    %c0_89 = arith.constant 0 : index
    %293 = vector.load %arg2[%c112, %c0_89] : memref<392x128xf32, #tpu.memory_space<vmem>>, vector<1x6xf32>
    %c120 = arith.constant 120 : index
    %c0_90 = arith.constant 0 : index
    %294 = vector.load %arg2[%c120, %c0_90] : memref<392x128xf32, #tpu.memory_space<vmem>>, vector<1x6xf32>
    %cst_91 = arith.constant dense<0.000000e+00> : vector<16xf32>
    %295 = vector.multi_reduction <add>, %292, %cst_91 [1] : vector<16x6xf32> to vector<16xf32>
    %296 = vector.shape_cast %295 : vector<16xf32> to vector<16x1xf32>
    %cst_92 = arith.constant 6.000000e+00 : f32
    %297 = vector.broadcast %cst_92 : f32 to vector<16x1xf32>
    %298 = arith.divf %296, %297 : vector<16x1xf32>
    %299 = vector.broadcast %298 : vector<16x1xf32> to vector<16x6xf32>
    %300 = arith.subf %292, %299 : vector<16x6xf32>
    %301 = arith.mulf %300, %300 : vector<16x6xf32>
    %cst_93 = arith.constant dense<0.000000e+00> : vector<16xf32>
    %302 = vector.multi_reduction <add>, %301, %cst_93 [1] : vector<16x6xf32> to vector<16xf32>
    %303 = vector.shape_cast %302 : vector<16xf32> to vector<16x1xf32>
    %cst_94 = arith.constant 6.000000e+00 : f32
    %304 = vector.broadcast %cst_94 : f32 to vector<16x1xf32>
    %305 = arith.divf %303, %304 : vector<16x1xf32>
    %cst_95 = arith.constant 9.99999974E-6 : f32
    %306 = vector.broadcast %cst_95 : f32 to vector<16x1xf32>
    %307 = arith.addf %305, %306 : vector<16x1xf32>
    %308 = math.rsqrt %307 : vector<16x1xf32>
    %309 = vector.broadcast %308 : vector<16x1xf32> to vector<16x6xf32>
    %310 = arith.mulf %300, %309 : vector<16x6xf32>
    %311 = vector.broadcast %293 : vector<1x6xf32> to vector<16x6xf32>
    %312 = arith.mulf %310, %311 : vector<16x6xf32>
    %313 = vector.broadcast %294 : vector<1x6xf32> to vector<16x6xf32>
    %314 = arith.addf %312, %313 : vector<16x6xf32>
    %c384 = arith.constant 384 : index
    %c0_96 = arith.constant 0 : index
    %315 = vector.load %arg2[%c384, %c0_96] : memref<392x128xf32, #tpu.memory_space<vmem>>, vector<1x48xf32>
    %c768 = arith.constant 768 : index
    %c0_97 = arith.constant 0 : index
    %316 = vector.load %arg1[%c768, %c0_97] : memref<896x128xbf16, #tpu.memory_space<vmem>>, vector<6x48xbf16>
    %c784 = arith.constant 784 : index
    %c0_98 = arith.constant 0 : index
    %317 = vector.load %arg1[%c784, %c0_98] : memref<896x128xbf16, #tpu.memory_space<vmem>>, vector<12x48xbf16>
    %c320 = arith.constant 320 : index
    %c0_99 = arith.constant 0 : index
    %318 = vector.load %arg2[%c320, %c0_99] : memref<392x128xf32, #tpu.memory_space<vmem>>, vector<1x48xf32>
    %c0_100 = arith.constant 0 : index
    %c0_101 = arith.constant 0 : index
    %319 = vector.load %arg3[%c0_100, %c0_101] : memref<64x12xf32, #tpu.memory_space<vmem>>, vector<2x12xf32>
    %c8_102 = arith.constant 8 : index
    %c0_103 = arith.constant 0 : index
    %320 = vector.load %arg3[%c8_102, %c0_103] : memref<64x12xf32, #tpu.memory_space<vmem>>, vector<2x12xf32>
    %321 = arith.truncf %314 : vector<16x6xf32> to vector<16x6xbf16>
    %cst_104 = arith.constant dense<0.000000e+00> : vector<16x48xf32>
    %322 = tpu.matmul %321, %316, %cst_104 {dimension_numbers = #tpu.dot_dimension_numbers<[1], [0], [0], [1], [0, 0, 1, 1], [], []>} : vector<16x6xbf16>, vector<6x48xbf16>, vector<16x48xf32> -> vector<16x48xf32>
    %323 = vector.broadcast %318 : vector<1x48xf32> to vector<16x48xf32>
    %324 = arith.addf %322, %323 : vector<16x48xf32>
    %cst_105 = arith.constant 5.000000e-01 : f32
    %325 = vector.broadcast %cst_105 : f32 to vector<1x48xf32>
    %326 = arith.cmpf ogt, %315, %325 : vector<1x48xf32>
    %327 = vector.extract_strided_slice %324 {offsets = [0, 0], sizes = [2, 48], strides = [1, 1]} : vector<16x48xf32> to vector<2x48xf32>
    %328 = vector.extract_strided_slice %324 {offsets = [14, 0], sizes = [2, 48], strides = [1, 1]} : vector<16x48xf32> to vector<2x48xf32>
    %329 = vector.shape_cast %326 : vector<1x48xi1> to vector<1x48xi1>
    %330 = vector.broadcast %329 : vector<1x48xi1> to vector<2x48xi1>
    %331 = arith.select %330, %327, %328 : vector<2x48xi1>, vector<2x48xf32>
    %332 = arith.truncf %319 : vector<2x12xf32> to vector<2x12xbf16>
    %cst_106 = arith.constant dense<0.000000e+00> : vector<2x48xf32>
    %333 = tpu.matmul %332, %317, %cst_106 {dimension_numbers = #tpu.dot_dimension_numbers<[1], [0], [0], [1], [0, 0, 1, 1], [], []>} : vector<2x12xbf16>, vector<12x48xbf16>, vector<2x48xf32> -> vector<2x48xf32>
    %334 = arith.addf %331, %333 : vector<2x48xf32>
    %335 = vector.extract_strided_slice %334 {offsets = [0, 0], sizes = [2, 12], strides = [1, 1]} : vector<2x48xf32> to vector<2x12xf32>
    %336 = arith.negf %335 : vector<2x12xf32>
    %337 = math.exp %336 : vector<2x12xf32>
    %cst_107 = arith.constant 1.000000e+00 : f32
    %338 = vector.broadcast %cst_107 : f32 to vector<2x12xf32>
    %339 = arith.addf %338, %337 : vector<2x12xf32>
    %340 = arith.divf %338, %339 : vector<2x12xf32>
    %341 = vector.extract_strided_slice %334 {offsets = [0, 12], sizes = [2, 12], strides = [1, 1]} : vector<2x48xf32> to vector<2x12xf32>
    %342 = arith.negf %341 : vector<2x12xf32>
    %343 = math.exp %342 : vector<2x12xf32>
    %cst_108 = arith.constant 1.000000e+00 : f32
    %344 = vector.broadcast %cst_108 : f32 to vector<2x12xf32>
    %345 = arith.addf %344, %343 : vector<2x12xf32>
    %346 = arith.divf %344, %345 : vector<2x12xf32>
    %347 = vector.extract_strided_slice %334 {offsets = [0, 24], sizes = [2, 12], strides = [1, 1]} : vector<2x48xf32> to vector<2x12xf32>
    %348 = math.tanh %347 : vector<2x12xf32>
    %349 = vector.extract_strided_slice %334 {offsets = [0, 36], sizes = [2, 12], strides = [1, 1]} : vector<2x48xf32> to vector<2x12xf32>
    %350 = arith.negf %349 : vector<2x12xf32>
    %351 = math.exp %350 : vector<2x12xf32>
    %cst_109 = arith.constant 1.000000e+00 : f32
    %352 = vector.broadcast %cst_109 : f32 to vector<2x12xf32>
    %353 = arith.addf %352, %351 : vector<2x12xf32>
    %354 = arith.divf %352, %353 : vector<2x12xf32>
    %355 = arith.mulf %346, %320 : vector<2x12xf32>
    %356 = arith.mulf %340, %348 : vector<2x12xf32>
    %357 = arith.addf %355, %356 : vector<2x12xf32>
    %358 = math.tanh %357 : vector<2x12xf32>
    %359 = arith.mulf %354, %358 : vector<2x12xf32>
    %360 = vector.extract_strided_slice %359 {offsets = [0, 0], sizes = [2, 6], strides = [1, 1]} : vector<2x12xf32> to vector<2x6xf32>
    %361 = vector.extract_strided_slice %359 {offsets = [0, 6], sizes = [2, 6], strides = [1, 1]} : vector<2x12xf32> to vector<2x6xf32>
    %362 = vector.extract_strided_slice %324 {offsets = [2, 0], sizes = [2, 48], strides = [1, 1]} : vector<16x48xf32> to vector<2x48xf32>
    %363 = vector.extract_strided_slice %324 {offsets = [12, 0], sizes = [2, 48], strides = [1, 1]} : vector<16x48xf32> to vector<2x48xf32>
    %364 = vector.shape_cast %326 : vector<1x48xi1> to vector<1x48xi1>
    %365 = vector.broadcast %364 : vector<1x48xi1> to vector<2x48xi1>
    %366 = arith.select %365, %362, %363 : vector<2x48xi1>, vector<2x48xf32>
    %367 = arith.truncf %359 : vector<2x12xf32> to vector<2x12xbf16>
    %cst_110 = arith.constant dense<0.000000e+00> : vector<2x48xf32>
    %368 = tpu.matmul %367, %317, %cst_110 {dimension_numbers = #tpu.dot_dimension_numbers<[1], [0], [0], [1], [0, 0, 1, 1], [], []>} : vector<2x12xbf16>, vector<12x48xbf16>, vector<2x48xf32> -> vector<2x48xf32>
    %369 = arith.addf %366, %368 : vector<2x48xf32>
    %370 = vector.extract_strided_slice %369 {offsets = [0, 0], sizes = [2, 12], strides = [1, 1]} : vector<2x48xf32> to vector<2x12xf32>
    %371 = arith.negf %370 : vector<2x12xf32>
    %372 = math.exp %371 : vector<2x12xf32>
    %cst_111 = arith.constant 1.000000e+00 : f32
    %373 = vector.broadcast %cst_111 : f32 to vector<2x12xf32>
    %374 = arith.addf %373, %372 : vector<2x12xf32>
    %375 = arith.divf %373, %374 : vector<2x12xf32>
    %376 = vector.extract_strided_slice %369 {offsets = [0, 12], sizes = [2, 12], strides = [1, 1]} : vector<2x48xf32> to vector<2x12xf32>
    %377 = arith.negf %376 : vector<2x12xf32>
    %378 = math.exp %377 : vector<2x12xf32>
    %cst_112 = arith.constant 1.000000e+00 : f32
    %379 = vector.broadcast %cst_112 : f32 to vector<2x12xf32>
    %380 = arith.addf %379, %378 : vector<2x12xf32>
    %381 = arith.divf %379, %380 : vector<2x12xf32>
    %382 = vector.extract_strided_slice %369 {offsets = [0, 24], sizes = [2, 12], strides = [1, 1]} : vector<2x48xf32> to vector<2x12xf32>
    %383 = math.tanh %382 : vector<2x12xf32>
    %384 = vector.extract_strided_slice %369 {offsets = [0, 36], sizes = [2, 12], strides = [1, 1]} : vector<2x48xf32> to vector<2x12xf32>
    %385 = arith.negf %384 : vector<2x12xf32>
    %386 = math.exp %385 : vector<2x12xf32>
    %cst_113 = arith.constant 1.000000e+00 : f32
    %387 = vector.broadcast %cst_113 : f32 to vector<2x12xf32>
    %388 = arith.addf %387, %386 : vector<2x12xf32>
    %389 = arith.divf %387, %388 : vector<2x12xf32>
    %390 = arith.mulf %381, %357 : vector<2x12xf32>
    %391 = arith.mulf %375, %383 : vector<2x12xf32>
    %392 = arith.addf %390, %391 : vector<2x12xf32>
    %393 = math.tanh %392 : vector<2x12xf32>
    %394 = arith.mulf %389, %393 : vector<2x12xf32>
    %395 = vector.extract_strided_slice %394 {offsets = [0, 0], sizes = [2, 6], strides = [1, 1]} : vector<2x12xf32> to vector<2x6xf32>
    %396 = vector.extract_strided_slice %394 {offsets = [0, 6], sizes = [2, 6], strides = [1, 1]} : vector<2x12xf32> to vector<2x6xf32>
    %397 = vector.extract_strided_slice %324 {offsets = [4, 0], sizes = [2, 48], strides = [1, 1]} : vector<16x48xf32> to vector<2x48xf32>
    %398 = vector.extract_strided_slice %324 {offsets = [10, 0], sizes = [2, 48], strides = [1, 1]} : vector<16x48xf32> to vector<2x48xf32>
    %399 = vector.shape_cast %326 : vector<1x48xi1> to vector<1x48xi1>
    %400 = vector.broadcast %399 : vector<1x48xi1> to vector<2x48xi1>
    %401 = arith.select %400, %397, %398 : vector<2x48xi1>, vector<2x48xf32>
    %402 = arith.truncf %394 : vector<2x12xf32> to vector<2x12xbf16>
    %cst_114 = arith.constant dense<0.000000e+00> : vector<2x48xf32>
    %403 = tpu.matmul %402, %317, %cst_114 {dimension_numbers = #tpu.dot_dimension_numbers<[1], [0], [0], [1], [0, 0, 1, 1], [], []>} : vector<2x12xbf16>, vector<12x48xbf16>, vector<2x48xf32> -> vector<2x48xf32>
    %404 = arith.addf %401, %403 : vector<2x48xf32>
    %405 = vector.extract_strided_slice %404 {offsets = [0, 0], sizes = [2, 12], strides = [1, 1]} : vector<2x48xf32> to vector<2x12xf32>
    %406 = arith.negf %405 : vector<2x12xf32>
    %407 = math.exp %406 : vector<2x12xf32>
    %cst_115 = arith.constant 1.000000e+00 : f32
    %408 = vector.broadcast %cst_115 : f32 to vector<2x12xf32>
    %409 = arith.addf %408, %407 : vector<2x12xf32>
    %410 = arith.divf %408, %409 : vector<2x12xf32>
    %411 = vector.extract_strided_slice %404 {offsets = [0, 12], sizes = [2, 12], strides = [1, 1]} : vector<2x48xf32> to vector<2x12xf32>
    %412 = arith.negf %411 : vector<2x12xf32>
    %413 = math.exp %412 : vector<2x12xf32>
    %cst_116 = arith.constant 1.000000e+00 : f32
    %414 = vector.broadcast %cst_116 : f32 to vector<2x12xf32>
    %415 = arith.addf %414, %413 : vector<2x12xf32>
    %416 = arith.divf %414, %415 : vector<2x12xf32>
    %417 = vector.extract_strided_slice %404 {offsets = [0, 24], sizes = [2, 12], strides = [1, 1]} : vector<2x48xf32> to vector<2x12xf32>
    %418 = math.tanh %417 : vector<2x12xf32>
    %419 = vector.extract_strided_slice %404 {offsets = [0, 36], sizes = [2, 12], strides = [1, 1]} : vector<2x48xf32> to vector<2x12xf32>
    %420 = arith.negf %419 : vector<2x12xf32>
    %421 = math.exp %420 : vector<2x12xf32>
    %cst_117 = arith.constant 1.000000e+00 : f32
    %422 = vector.broadcast %cst_117 : f32 to vector<2x12xf32>
    %423 = arith.addf %422, %421 : vector<2x12xf32>
    %424 = arith.divf %422, %423 : vector<2x12xf32>
    %425 = arith.mulf %416, %392 : vector<2x12xf32>
    %426 = arith.mulf %410, %418 : vector<2x12xf32>
    %427 = arith.addf %425, %426 : vector<2x12xf32>
    %428 = math.tanh %427 : vector<2x12xf32>
    %429 = arith.mulf %424, %428 : vector<2x12xf32>
    %430 = vector.extract_strided_slice %429 {offsets = [0, 0], sizes = [2, 6], strides = [1, 1]} : vector<2x12xf32> to vector<2x6xf32>
    %431 = vector.extract_strided_slice %429 {offsets = [0, 6], sizes = [2, 6], strides = [1, 1]} : vector<2x12xf32> to vector<2x6xf32>
    %432 = vector.extract_strided_slice %324 {offsets = [6, 0], sizes = [2, 48], strides = [1, 1]} : vector<16x48xf32> to vector<2x48xf32>
    %433 = vector.extract_strided_slice %324 {offsets = [8, 0], sizes = [2, 48], strides = [1, 1]} : vector<16x48xf32> to vector<2x48xf32>
    %434 = vector.shape_cast %326 : vector<1x48xi1> to vector<1x48xi1>
    %435 = vector.broadcast %434 : vector<1x48xi1> to vector<2x48xi1>
    %436 = arith.select %435, %432, %433 : vector<2x48xi1>, vector<2x48xf32>
    %437 = arith.truncf %429 : vector<2x12xf32> to vector<2x12xbf16>
    %cst_118 = arith.constant dense<0.000000e+00> : vector<2x48xf32>
    %438 = tpu.matmul %437, %317, %cst_118 {dimension_numbers = #tpu.dot_dimension_numbers<[1], [0], [0], [1], [0, 0, 1, 1], [], []>} : vector<2x12xbf16>, vector<12x48xbf16>, vector<2x48xf32> -> vector<2x48xf32>
    %439 = arith.addf %436, %438 : vector<2x48xf32>
    %440 = vector.extract_strided_slice %439 {offsets = [0, 0], sizes = [2, 12], strides = [1, 1]} : vector<2x48xf32> to vector<2x12xf32>
    %441 = arith.negf %440 : vector<2x12xf32>
    %442 = math.exp %441 : vector<2x12xf32>
    %cst_119 = arith.constant 1.000000e+00 : f32
    %443 = vector.broadcast %cst_119 : f32 to vector<2x12xf32>
    %444 = arith.addf %443, %442 : vector<2x12xf32>
    %445 = arith.divf %443, %444 : vector<2x12xf32>
    %446 = vector.extract_strided_slice %439 {offsets = [0, 12], sizes = [2, 12], strides = [1, 1]} : vector<2x48xf32> to vector<2x12xf32>
    %447 = arith.negf %446 : vector<2x12xf32>
    %448 = math.exp %447 : vector<2x12xf32>
    %cst_120 = arith.constant 1.000000e+00 : f32
    %449 = vector.broadcast %cst_120 : f32 to vector<2x12xf32>
    %450 = arith.addf %449, %448 : vector<2x12xf32>
    %451 = arith.divf %449, %450 : vector<2x12xf32>
    %452 = vector.extract_strided_slice %439 {offsets = [0, 24], sizes = [2, 12], strides = [1, 1]} : vector<2x48xf32> to vector<2x12xf32>
    %453 = math.tanh %452 : vector<2x12xf32>
    %454 = vector.extract_strided_slice %439 {offsets = [0, 36], sizes = [2, 12], strides = [1, 1]} : vector<2x48xf32> to vector<2x12xf32>
    %455 = arith.negf %454 : vector<2x12xf32>
    %456 = math.exp %455 : vector<2x12xf32>
    %cst_121 = arith.constant 1.000000e+00 : f32
    %457 = vector.broadcast %cst_121 : f32 to vector<2x12xf32>
    %458 = arith.addf %457, %456 : vector<2x12xf32>
    %459 = arith.divf %457, %458 : vector<2x12xf32>
    %460 = arith.mulf %451, %427 : vector<2x12xf32>
    %461 = arith.mulf %445, %453 : vector<2x12xf32>
    %462 = arith.addf %460, %461 : vector<2x12xf32>
    %463 = math.tanh %462 : vector<2x12xf32>
    %464 = arith.mulf %459, %463 : vector<2x12xf32>
    %465 = vector.extract_strided_slice %464 {offsets = [0, 0], sizes = [2, 6], strides = [1, 1]} : vector<2x12xf32> to vector<2x6xf32>
    %466 = vector.extract_strided_slice %464 {offsets = [0, 6], sizes = [2, 6], strides = [1, 1]} : vector<2x12xf32> to vector<2x6xf32>
    %467 = vector.extract_strided_slice %324 {offsets = [8, 0], sizes = [2, 48], strides = [1, 1]} : vector<16x48xf32> to vector<2x48xf32>
    %468 = vector.extract_strided_slice %324 {offsets = [6, 0], sizes = [2, 48], strides = [1, 1]} : vector<16x48xf32> to vector<2x48xf32>
    %469 = vector.shape_cast %326 : vector<1x48xi1> to vector<1x48xi1>
    %470 = vector.broadcast %469 : vector<1x48xi1> to vector<2x48xi1>
    %471 = arith.select %470, %467, %468 : vector<2x48xi1>, vector<2x48xf32>
    %472 = arith.truncf %464 : vector<2x12xf32> to vector<2x12xbf16>
    %cst_122 = arith.constant dense<0.000000e+00> : vector<2x48xf32>
    %473 = tpu.matmul %472, %317, %cst_122 {dimension_numbers = #tpu.dot_dimension_numbers<[1], [0], [0], [1], [0, 0, 1, 1], [], []>} : vector<2x12xbf16>, vector<12x48xbf16>, vector<2x48xf32> -> vector<2x48xf32>
    %474 = arith.addf %471, %473 : vector<2x48xf32>
    %475 = vector.extract_strided_slice %474 {offsets = [0, 0], sizes = [2, 12], strides = [1, 1]} : vector<2x48xf32> to vector<2x12xf32>
    %476 = arith.negf %475 : vector<2x12xf32>
    %477 = math.exp %476 : vector<2x12xf32>
    %cst_123 = arith.constant 1.000000e+00 : f32
    %478 = vector.broadcast %cst_123 : f32 to vector<2x12xf32>
    %479 = arith.addf %478, %477 : vector<2x12xf32>
    %480 = arith.divf %478, %479 : vector<2x12xf32>
    %481 = vector.extract_strided_slice %474 {offsets = [0, 12], sizes = [2, 12], strides = [1, 1]} : vector<2x48xf32> to vector<2x12xf32>
    %482 = arith.negf %481 : vector<2x12xf32>
    %483 = math.exp %482 : vector<2x12xf32>
    %cst_124 = arith.constant 1.000000e+00 : f32
    %484 = vector.broadcast %cst_124 : f32 to vector<2x12xf32>
    %485 = arith.addf %484, %483 : vector<2x12xf32>
    %486 = arith.divf %484, %485 : vector<2x12xf32>
    %487 = vector.extract_strided_slice %474 {offsets = [0, 24], sizes = [2, 12], strides = [1, 1]} : vector<2x48xf32> to vector<2x12xf32>
    %488 = math.tanh %487 : vector<2x12xf32>
    %489 = vector.extract_strided_slice %474 {offsets = [0, 36], sizes = [2, 12], strides = [1, 1]} : vector<2x48xf32> to vector<2x12xf32>
    %490 = arith.negf %489 : vector<2x12xf32>
    %491 = math.exp %490 : vector<2x12xf32>
    %cst_125 = arith.constant 1.000000e+00 : f32
    %492 = vector.broadcast %cst_125 : f32 to vector<2x12xf32>
    %493 = arith.addf %492, %491 : vector<2x12xf32>
    %494 = arith.divf %492, %493 : vector<2x12xf32>
    %495 = arith.mulf %486, %462 : vector<2x12xf32>
    %496 = arith.mulf %480, %488 : vector<2x12xf32>
    %497 = arith.addf %495, %496 : vector<2x12xf32>
    %498 = math.tanh %497 : vector<2x12xf32>
    %499 = arith.mulf %494, %498 : vector<2x12xf32>
    %500 = vector.extract_strided_slice %499 {offsets = [0, 0], sizes = [2, 6], strides = [1, 1]} : vector<2x12xf32> to vector<2x6xf32>
    %501 = vector.extract_strided_slice %499 {offsets = [0, 6], sizes = [2, 6], strides = [1, 1]} : vector<2x12xf32> to vector<2x6xf32>
    %502 = vector.extract_strided_slice %324 {offsets = [10, 0], sizes = [2, 48], strides = [1, 1]} : vector<16x48xf32> to vector<2x48xf32>
    %503 = vector.extract_strided_slice %324 {offsets = [4, 0], sizes = [2, 48], strides = [1, 1]} : vector<16x48xf32> to vector<2x48xf32>
    %504 = vector.shape_cast %326 : vector<1x48xi1> to vector<1x48xi1>
    %505 = vector.broadcast %504 : vector<1x48xi1> to vector<2x48xi1>
    %506 = arith.select %505, %502, %503 : vector<2x48xi1>, vector<2x48xf32>
    %507 = arith.truncf %499 : vector<2x12xf32> to vector<2x12xbf16>
    %cst_126 = arith.constant dense<0.000000e+00> : vector<2x48xf32>
    %508 = tpu.matmul %507, %317, %cst_126 {dimension_numbers = #tpu.dot_dimension_numbers<[1], [0], [0], [1], [0, 0, 1, 1], [], []>} : vector<2x12xbf16>, vector<12x48xbf16>, vector<2x48xf32> -> vector<2x48xf32>
    %509 = arith.addf %506, %508 : vector<2x48xf32>
    %510 = vector.extract_strided_slice %509 {offsets = [0, 0], sizes = [2, 12], strides = [1, 1]} : vector<2x48xf32> to vector<2x12xf32>
    %511 = arith.negf %510 : vector<2x12xf32>
    %512 = math.exp %511 : vector<2x12xf32>
    %cst_127 = arith.constant 1.000000e+00 : f32
    %513 = vector.broadcast %cst_127 : f32 to vector<2x12xf32>
    %514 = arith.addf %513, %512 : vector<2x12xf32>
    %515 = arith.divf %513, %514 : vector<2x12xf32>
    %516 = vector.extract_strided_slice %509 {offsets = [0, 12], sizes = [2, 12], strides = [1, 1]} : vector<2x48xf32> to vector<2x12xf32>
    %517 = arith.negf %516 : vector<2x12xf32>
    %518 = math.exp %517 : vector<2x12xf32>
    %cst_128 = arith.constant 1.000000e+00 : f32
    %519 = vector.broadcast %cst_128 : f32 to vector<2x12xf32>
    %520 = arith.addf %519, %518 : vector<2x12xf32>
    %521 = arith.divf %519, %520 : vector<2x12xf32>
    %522 = vector.extract_strided_slice %509 {offsets = [0, 24], sizes = [2, 12], strides = [1, 1]} : vector<2x48xf32> to vector<2x12xf32>
    %523 = math.tanh %522 : vector<2x12xf32>
    %524 = vector.extract_strided_slice %509 {offsets = [0, 36], sizes = [2, 12], strides = [1, 1]} : vector<2x48xf32> to vector<2x12xf32>
    %525 = arith.negf %524 : vector<2x12xf32>
    %526 = math.exp %525 : vector<2x12xf32>
    %cst_129 = arith.constant 1.000000e+00 : f32
    %527 = vector.broadcast %cst_129 : f32 to vector<2x12xf32>
    %528 = arith.addf %527, %526 : vector<2x12xf32>
    %529 = arith.divf %527, %528 : vector<2x12xf32>
    %530 = arith.mulf %521, %497 : vector<2x12xf32>
    %531 = arith.mulf %515, %523 : vector<2x12xf32>
    %532 = arith.addf %530, %531 : vector<2x12xf32>
    %533 = math.tanh %532 : vector<2x12xf32>
    %534 = arith.mulf %529, %533 : vector<2x12xf32>
    %535 = vector.extract_strided_slice %534 {offsets = [0, 0], sizes = [2, 6], strides = [1, 1]} : vector<2x12xf32> to vector<2x6xf32>
    %536 = vector.extract_strided_slice %534 {offsets = [0, 6], sizes = [2, 6], strides = [1, 1]} : vector<2x12xf32> to vector<2x6xf32>
    %537 = vector.extract_strided_slice %324 {offsets = [12, 0], sizes = [2, 48], strides = [1, 1]} : vector<16x48xf32> to vector<2x48xf32>
    %538 = vector.extract_strided_slice %324 {offsets = [2, 0], sizes = [2, 48], strides = [1, 1]} : vector<16x48xf32> to vector<2x48xf32>
    %539 = vector.shape_cast %326 : vector<1x48xi1> to vector<1x48xi1>
    %540 = vector.broadcast %539 : vector<1x48xi1> to vector<2x48xi1>
    %541 = arith.select %540, %537, %538 : vector<2x48xi1>, vector<2x48xf32>
    %542 = arith.truncf %534 : vector<2x12xf32> to vector<2x12xbf16>
    %cst_130 = arith.constant dense<0.000000e+00> : vector<2x48xf32>
    %543 = tpu.matmul %542, %317, %cst_130 {dimension_numbers = #tpu.dot_dimension_numbers<[1], [0], [0], [1], [0, 0, 1, 1], [], []>} : vector<2x12xbf16>, vector<12x48xbf16>, vector<2x48xf32> -> vector<2x48xf32>
    %544 = arith.addf %541, %543 : vector<2x48xf32>
    %545 = vector.extract_strided_slice %544 {offsets = [0, 0], sizes = [2, 12], strides = [1, 1]} : vector<2x48xf32> to vector<2x12xf32>
    %546 = arith.negf %545 : vector<2x12xf32>
    %547 = math.exp %546 : vector<2x12xf32>
    %cst_131 = arith.constant 1.000000e+00 : f32
    %548 = vector.broadcast %cst_131 : f32 to vector<2x12xf32>
    %549 = arith.addf %548, %547 : vector<2x12xf32>
    %550 = arith.divf %548, %549 : vector<2x12xf32>
    %551 = vector.extract_strided_slice %544 {offsets = [0, 12], sizes = [2, 12], strides = [1, 1]} : vector<2x48xf32> to vector<2x12xf32>
    %552 = arith.negf %551 : vector<2x12xf32>
    %553 = math.exp %552 : vector<2x12xf32>
    %cst_132 = arith.constant 1.000000e+00 : f32
    %554 = vector.broadcast %cst_132 : f32 to vector<2x12xf32>
    %555 = arith.addf %554, %553 : vector<2x12xf32>
    %556 = arith.divf %554, %555 : vector<2x12xf32>
    %557 = vector.extract_strided_slice %544 {offsets = [0, 24], sizes = [2, 12], strides = [1, 1]} : vector<2x48xf32> to vector<2x12xf32>
    %558 = math.tanh %557 : vector<2x12xf32>
    %559 = vector.extract_strided_slice %544 {offsets = [0, 36], sizes = [2, 12], strides = [1, 1]} : vector<2x48xf32> to vector<2x12xf32>
    %560 = arith.negf %559 : vector<2x12xf32>
    %561 = math.exp %560 : vector<2x12xf32>
    %cst_133 = arith.constant 1.000000e+00 : f32
    %562 = vector.broadcast %cst_133 : f32 to vector<2x12xf32>
    %563 = arith.addf %562, %561 : vector<2x12xf32>
    %564 = arith.divf %562, %563 : vector<2x12xf32>
    %565 = arith.mulf %556, %532 : vector<2x12xf32>
    %566 = arith.mulf %550, %558 : vector<2x12xf32>
    %567 = arith.addf %565, %566 : vector<2x12xf32>
    %568 = math.tanh %567 : vector<2x12xf32>
    %569 = arith.mulf %564, %568 : vector<2x12xf32>
    %570 = vector.extract_strided_slice %569 {offsets = [0, 0], sizes = [2, 6], strides = [1, 1]} : vector<2x12xf32> to vector<2x6xf32>
    %571 = vector.extract_strided_slice %569 {offsets = [0, 6], sizes = [2, 6], strides = [1, 1]} : vector<2x12xf32> to vector<2x6xf32>
    %572 = vector.extract_strided_slice %324 {offsets = [14, 0], sizes = [2, 48], strides = [1, 1]} : vector<16x48xf32> to vector<2x48xf32>
    %573 = vector.extract_strided_slice %324 {offsets = [0, 0], sizes = [2, 48], strides = [1, 1]} : vector<16x48xf32> to vector<2x48xf32>
    %574 = vector.shape_cast %326 : vector<1x48xi1> to vector<1x48xi1>
    %575 = vector.broadcast %574 : vector<1x48xi1> to vector<2x48xi1>
    %576 = arith.select %575, %572, %573 : vector<2x48xi1>, vector<2x48xf32>
    %577 = arith.truncf %569 : vector<2x12xf32> to vector<2x12xbf16>
    %cst_134 = arith.constant dense<0.000000e+00> : vector<2x48xf32>
    %578 = tpu.matmul %577, %317, %cst_134 {dimension_numbers = #tpu.dot_dimension_numbers<[1], [0], [0], [1], [0, 0, 1, 1], [], []>} : vector<2x12xbf16>, vector<12x48xbf16>, vector<2x48xf32> -> vector<2x48xf32>
    %579 = arith.addf %576, %578 : vector<2x48xf32>
    %580 = vector.extract_strided_slice %579 {offsets = [0, 0], sizes = [2, 12], strides = [1, 1]} : vector<2x48xf32> to vector<2x12xf32>
    %581 = arith.negf %580 : vector<2x12xf32>
    %582 = math.exp %581 : vector<2x12xf32>
    %cst_135 = arith.constant 1.000000e+00 : f32
    %583 = vector.broadcast %cst_135 : f32 to vector<2x12xf32>
    %584 = arith.addf %583, %582 : vector<2x12xf32>
    %585 = arith.divf %583, %584 : vector<2x12xf32>
    %586 = vector.extract_strided_slice %579 {offsets = [0, 12], sizes = [2, 12], strides = [1, 1]} : vector<2x48xf32> to vector<2x12xf32>
    %587 = arith.negf %586 : vector<2x12xf32>
    %588 = math.exp %587 : vector<2x12xf32>
    %cst_136 = arith.constant 1.000000e+00 : f32
    %589 = vector.broadcast %cst_136 : f32 to vector<2x12xf32>
    %590 = arith.addf %589, %588 : vector<2x12xf32>
    %591 = arith.divf %589, %590 : vector<2x12xf32>
    %592 = vector.extract_strided_slice %579 {offsets = [0, 24], sizes = [2, 12], strides = [1, 1]} : vector<2x48xf32> to vector<2x12xf32>
    %593 = math.tanh %592 : vector<2x12xf32>
    %594 = vector.extract_strided_slice %579 {offsets = [0, 36], sizes = [2, 12], strides = [1, 1]} : vector<2x48xf32> to vector<2x12xf32>
    %595 = arith.negf %594 : vector<2x12xf32>
    %596 = math.exp %595 : vector<2x12xf32>
    %cst_137 = arith.constant 1.000000e+00 : f32
    %597 = vector.broadcast %cst_137 : f32 to vector<2x12xf32>
    %598 = arith.addf %597, %596 : vector<2x12xf32>
    %599 = arith.divf %597, %598 : vector<2x12xf32>
    %600 = arith.mulf %591, %567 : vector<2x12xf32>
    %601 = arith.mulf %585, %593 : vector<2x12xf32>
    %602 = arith.addf %600, %601 : vector<2x12xf32>
    %603 = math.tanh %602 : vector<2x12xf32>
    %604 = arith.mulf %599, %603 : vector<2x12xf32>
    %605 = vector.extract_strided_slice %604 {offsets = [0, 0], sizes = [2, 6], strides = [1, 1]} : vector<2x12xf32> to vector<2x6xf32>
    %606 = vector.extract_strided_slice %604 {offsets = [0, 6], sizes = [2, 6], strides = [1, 1]} : vector<2x12xf32> to vector<2x6xf32>
    %607 = tpu.concatenate %360, %395, %430, %465, %500, %535, %570, %605 in 0 : vector<2x6xf32>, vector<2x6xf32>, vector<2x6xf32>, vector<2x6xf32>, vector<2x6xf32>, vector<2x6xf32>, vector<2x6xf32>, vector<2x6xf32> -> vector<16x6xf32>
    %608 = tpu.concatenate %606, %571, %536, %501, %466, %431, %396, %361 in 0 : vector<2x6xf32>, vector<2x6xf32>, vector<2x6xf32>, vector<2x6xf32>, vector<2x6xf32>, vector<2x6xf32>, vector<2x6xf32>, vector<2x6xf32> -> vector<16x6xf32>
    %609 = tpu.concatenate %607, %608 in 1 : vector<16x6xf32>, vector<16x6xf32> -> vector<16x12xf32>
    %c800 = arith.constant 800 : index
    %c0_138 = arith.constant 0 : index
    %610 = vector.load %arg1[%c800, %c0_138] : memref<896x128xbf16, #tpu.memory_space<vmem>>, vector<12x48xbf16>
    %c816 = arith.constant 816 : index
    %c0_139 = arith.constant 0 : index
    %611 = vector.load %arg1[%c816, %c0_139] : memref<896x128xbf16, #tpu.memory_space<vmem>>, vector<12x48xbf16>
    %c328 = arith.constant 328 : index
    %c0_140 = arith.constant 0 : index
    %612 = vector.load %arg2[%c328, %c0_140] : memref<392x128xf32, #tpu.memory_space<vmem>>, vector<1x48xf32>
    %c16_141 = arith.constant 16 : index
    %c0_142 = arith.constant 0 : index
    %613 = vector.load %arg3[%c16_141, %c0_142] : memref<64x12xf32, #tpu.memory_space<vmem>>, vector<2x12xf32>
    %c24_143 = arith.constant 24 : index
    %c0_144 = arith.constant 0 : index
    %614 = vector.load %arg3[%c24_143, %c0_144] : memref<64x12xf32, #tpu.memory_space<vmem>>, vector<2x12xf32>
    %615 = arith.truncf %609 : vector<16x12xf32> to vector<16x12xbf16>
    %cst_145 = arith.constant dense<0.000000e+00> : vector<16x48xf32>
    %616 = tpu.matmul %615, %610, %cst_145 {dimension_numbers = #tpu.dot_dimension_numbers<[1], [0], [0], [1], [0, 0, 1, 1], [], []>} : vector<16x12xbf16>, vector<12x48xbf16>, vector<16x48xf32> -> vector<16x48xf32>
    %617 = vector.broadcast %612 : vector<1x48xf32> to vector<16x48xf32>
    %618 = arith.addf %616, %617 : vector<16x48xf32>
    %cst_146 = arith.constant 5.000000e-01 : f32
    %619 = vector.broadcast %cst_146 : f32 to vector<1x48xf32>
    %620 = arith.cmpf ogt, %315, %619 : vector<1x48xf32>
    %621 = vector.extract_strided_slice %618 {offsets = [0, 0], sizes = [2, 48], strides = [1, 1]} : vector<16x48xf32> to vector<2x48xf32>
    %622 = vector.extract_strided_slice %618 {offsets = [14, 0], sizes = [2, 48], strides = [1, 1]} : vector<16x48xf32> to vector<2x48xf32>
    %623 = vector.shape_cast %620 : vector<1x48xi1> to vector<1x48xi1>
    %624 = vector.broadcast %623 : vector<1x48xi1> to vector<2x48xi1>
    %625 = arith.select %624, %621, %622 : vector<2x48xi1>, vector<2x48xf32>
    %626 = arith.truncf %613 : vector<2x12xf32> to vector<2x12xbf16>
    %cst_147 = arith.constant dense<0.000000e+00> : vector<2x48xf32>
    %627 = tpu.matmul %626, %611, %cst_147 {dimension_numbers = #tpu.dot_dimension_numbers<[1], [0], [0], [1], [0, 0, 1, 1], [], []>} : vector<2x12xbf16>, vector<12x48xbf16>, vector<2x48xf32> -> vector<2x48xf32>
    %628 = arith.addf %625, %627 : vector<2x48xf32>
    %629 = vector.extract_strided_slice %628 {offsets = [0, 0], sizes = [2, 12], strides = [1, 1]} : vector<2x48xf32> to vector<2x12xf32>
    %630 = arith.negf %629 : vector<2x12xf32>
    %631 = math.exp %630 : vector<2x12xf32>
    %cst_148 = arith.constant 1.000000e+00 : f32
    %632 = vector.broadcast %cst_148 : f32 to vector<2x12xf32>
    %633 = arith.addf %632, %631 : vector<2x12xf32>
    %634 = arith.divf %632, %633 : vector<2x12xf32>
    %635 = vector.extract_strided_slice %628 {offsets = [0, 12], sizes = [2, 12], strides = [1, 1]} : vector<2x48xf32> to vector<2x12xf32>
    %636 = arith.negf %635 : vector<2x12xf32>
    %637 = math.exp %636 : vector<2x12xf32>
    %cst_149 = arith.constant 1.000000e+00 : f32
    %638 = vector.broadcast %cst_149 : f32 to vector<2x12xf32>
    %639 = arith.addf %638, %637 : vector<2x12xf32>
    %640 = arith.divf %638, %639 : vector<2x12xf32>
    %641 = vector.extract_strided_slice %628 {offsets = [0, 24], sizes = [2, 12], strides = [1, 1]} : vector<2x48xf32> to vector<2x12xf32>
    %642 = math.tanh %641 : vector<2x12xf32>
    %643 = vector.extract_strided_slice %628 {offsets = [0, 36], sizes = [2, 12], strides = [1, 1]} : vector<2x48xf32> to vector<2x12xf32>
    %644 = arith.negf %643 : vector<2x12xf32>
    %645 = math.exp %644 : vector<2x12xf32>
    %cst_150 = arith.constant 1.000000e+00 : f32
    %646 = vector.broadcast %cst_150 : f32 to vector<2x12xf32>
    %647 = arith.addf %646, %645 : vector<2x12xf32>
    %648 = arith.divf %646, %647 : vector<2x12xf32>
    %649 = arith.mulf %640, %614 : vector<2x12xf32>
    %650 = arith.mulf %634, %642 : vector<2x12xf32>
    %651 = arith.addf %649, %650 : vector<2x12xf32>
    %652 = math.tanh %651 : vector<2x12xf32>
    %653 = arith.mulf %648, %652 : vector<2x12xf32>
    %654 = vector.extract_strided_slice %653 {offsets = [0, 0], sizes = [2, 6], strides = [1, 1]} : vector<2x12xf32> to vector<2x6xf32>
    %655 = vector.extract_strided_slice %653 {offsets = [0, 6], sizes = [2, 6], strides = [1, 1]} : vector<2x12xf32> to vector<2x6xf32>
    %656 = vector.extract_strided_slice %618 {offsets = [2, 0], sizes = [2, 48], strides = [1, 1]} : vector<16x48xf32> to vector<2x48xf32>
    %657 = vector.extract_strided_slice %618 {offsets = [12, 0], sizes = [2, 48], strides = [1, 1]} : vector<16x48xf32> to vector<2x48xf32>
    %658 = vector.shape_cast %620 : vector<1x48xi1> to vector<1x48xi1>
    %659 = vector.broadcast %658 : vector<1x48xi1> to vector<2x48xi1>
    %660 = arith.select %659, %656, %657 : vector<2x48xi1>, vector<2x48xf32>
    %661 = arith.truncf %653 : vector<2x12xf32> to vector<2x12xbf16>
    %cst_151 = arith.constant dense<0.000000e+00> : vector<2x48xf32>
    %662 = tpu.matmul %661, %611, %cst_151 {dimension_numbers = #tpu.dot_dimension_numbers<[1], [0], [0], [1], [0, 0, 1, 1], [], []>} : vector<2x12xbf16>, vector<12x48xbf16>, vector<2x48xf32> -> vector<2x48xf32>
    %663 = arith.addf %660, %662 : vector<2x48xf32>
    %664 = vector.extract_strided_slice %663 {offsets = [0, 0], sizes = [2, 12], strides = [1, 1]} : vector<2x48xf32> to vector<2x12xf32>
    %665 = arith.negf %664 : vector<2x12xf32>
    %666 = math.exp %665 : vector<2x12xf32>
    %cst_152 = arith.constant 1.000000e+00 : f32
    %667 = vector.broadcast %cst_152 : f32 to vector<2x12xf32>
    %668 = arith.addf %667, %666 : vector<2x12xf32>
    %669 = arith.divf %667, %668 : vector<2x12xf32>
    %670 = vector.extract_strided_slice %663 {offsets = [0, 12], sizes = [2, 12], strides = [1, 1]} : vector<2x48xf32> to vector<2x12xf32>
    %671 = arith.negf %670 : vector<2x12xf32>
    %672 = math.exp %671 : vector<2x12xf32>
    %cst_153 = arith.constant 1.000000e+00 : f32
    %673 = vector.broadcast %cst_153 : f32 to vector<2x12xf32>
    %674 = arith.addf %673, %672 : vector<2x12xf32>
    %675 = arith.divf %673, %674 : vector<2x12xf32>
    %676 = vector.extract_strided_slice %663 {offsets = [0, 24], sizes = [2, 12], strides = [1, 1]} : vector<2x48xf32> to vector<2x12xf32>
    %677 = math.tanh %676 : vector<2x12xf32>
    %678 = vector.extract_strided_slice %663 {offsets = [0, 36], sizes = [2, 12], strides = [1, 1]} : vector<2x48xf32> to vector<2x12xf32>
    %679 = arith.negf %678 : vector<2x12xf32>
    %680 = math.exp %679 : vector<2x12xf32>
    %cst_154 = arith.constant 1.000000e+00 : f32
    %681 = vector.broadcast %cst_154 : f32 to vector<2x12xf32>
    %682 = arith.addf %681, %680 : vector<2x12xf32>
    %683 = arith.divf %681, %682 : vector<2x12xf32>
    %684 = arith.mulf %675, %651 : vector<2x12xf32>
    %685 = arith.mulf %669, %677 : vector<2x12xf32>
    %686 = arith.addf %684, %685 : vector<2x12xf32>
    %687 = math.tanh %686 : vector<2x12xf32>
    %688 = arith.mulf %683, %687 : vector<2x12xf32>
    %689 = vector.extract_strided_slice %688 {offsets = [0, 0], sizes = [2, 6], strides = [1, 1]} : vector<2x12xf32> to vector<2x6xf32>
    %690 = vector.extract_strided_slice %688 {offsets = [0, 6], sizes = [2, 6], strides = [1, 1]} : vector<2x12xf32> to vector<2x6xf32>
    %691 = vector.extract_strided_slice %618 {offsets = [4, 0], sizes = [2, 48], strides = [1, 1]} : vector<16x48xf32> to vector<2x48xf32>
    %692 = vector.extract_strided_slice %618 {offsets = [10, 0], sizes = [2, 48], strides = [1, 1]} : vector<16x48xf32> to vector<2x48xf32>
    %693 = vector.shape_cast %620 : vector<1x48xi1> to vector<1x48xi1>
    %694 = vector.broadcast %693 : vector<1x48xi1> to vector<2x48xi1>
    %695 = arith.select %694, %691, %692 : vector<2x48xi1>, vector<2x48xf32>
    %696 = arith.truncf %688 : vector<2x12xf32> to vector<2x12xbf16>
    %cst_155 = arith.constant dense<0.000000e+00> : vector<2x48xf32>
    %697 = tpu.matmul %696, %611, %cst_155 {dimension_numbers = #tpu.dot_dimension_numbers<[1], [0], [0], [1], [0, 0, 1, 1], [], []>} : vector<2x12xbf16>, vector<12x48xbf16>, vector<2x48xf32> -> vector<2x48xf32>
    %698 = arith.addf %695, %697 : vector<2x48xf32>
    %699 = vector.extract_strided_slice %698 {offsets = [0, 0], sizes = [2, 12], strides = [1, 1]} : vector<2x48xf32> to vector<2x12xf32>
    %700 = arith.negf %699 : vector<2x12xf32>
    %701 = math.exp %700 : vector<2x12xf32>
    %cst_156 = arith.constant 1.000000e+00 : f32
    %702 = vector.broadcast %cst_156 : f32 to vector<2x12xf32>
    %703 = arith.addf %702, %701 : vector<2x12xf32>
    %704 = arith.divf %702, %703 : vector<2x12xf32>
    %705 = vector.extract_strided_slice %698 {offsets = [0, 12], sizes = [2, 12], strides = [1, 1]} : vector<2x48xf32> to vector<2x12xf32>
    %706 = arith.negf %705 : vector<2x12xf32>
    %707 = math.exp %706 : vector<2x12xf32>
    %cst_157 = arith.constant 1.000000e+00 : f32
    %708 = vector.broadcast %cst_157 : f32 to vector<2x12xf32>
    %709 = arith.addf %708, %707 : vector<2x12xf32>
    %710 = arith.divf %708, %709 : vector<2x12xf32>
    %711 = vector.extract_strided_slice %698 {offsets = [0, 24], sizes = [2, 12], strides = [1, 1]} : vector<2x48xf32> to vector<2x12xf32>
    %712 = math.tanh %711 : vector<2x12xf32>
    %713 = vector.extract_strided_slice %698 {offsets = [0, 36], sizes = [2, 12], strides = [1, 1]} : vector<2x48xf32> to vector<2x12xf32>
    %714 = arith.negf %713 : vector<2x12xf32>
    %715 = math.exp %714 : vector<2x12xf32>
    %cst_158 = arith.constant 1.000000e+00 : f32
    %716 = vector.broadcast %cst_158 : f32 to vector<2x12xf32>
    %717 = arith.addf %716, %715 : vector<2x12xf32>
    %718 = arith.divf %716, %717 : vector<2x12xf32>
    %719 = arith.mulf %710, %686 : vector<2x12xf32>
    %720 = arith.mulf %704, %712 : vector<2x12xf32>
    %721 = arith.addf %719, %720 : vector<2x12xf32>
    %722 = math.tanh %721 : vector<2x12xf32>
    %723 = arith.mulf %718, %722 : vector<2x12xf32>
    %724 = vector.extract_strided_slice %723 {offsets = [0, 0], sizes = [2, 6], strides = [1, 1]} : vector<2x12xf32> to vector<2x6xf32>
    %725 = vector.extract_strided_slice %723 {offsets = [0, 6], sizes = [2, 6], strides = [1, 1]} : vector<2x12xf32> to vector<2x6xf32>
    %726 = vector.extract_strided_slice %618 {offsets = [6, 0], sizes = [2, 48], strides = [1, 1]} : vector<16x48xf32> to vector<2x48xf32>
    %727 = vector.extract_strided_slice %618 {offsets = [8, 0], sizes = [2, 48], strides = [1, 1]} : vector<16x48xf32> to vector<2x48xf32>
    %728 = vector.shape_cast %620 : vector<1x48xi1> to vector<1x48xi1>
    %729 = vector.broadcast %728 : vector<1x48xi1> to vector<2x48xi1>
    %730 = arith.select %729, %726, %727 : vector<2x48xi1>, vector<2x48xf32>
    %731 = arith.truncf %723 : vector<2x12xf32> to vector<2x12xbf16>
    %cst_159 = arith.constant dense<0.000000e+00> : vector<2x48xf32>
    %732 = tpu.matmul %731, %611, %cst_159 {dimension_numbers = #tpu.dot_dimension_numbers<[1], [0], [0], [1], [0, 0, 1, 1], [], []>} : vector<2x12xbf16>, vector<12x48xbf16>, vector<2x48xf32> -> vector<2x48xf32>
    %733 = arith.addf %730, %732 : vector<2x48xf32>
    %734 = vector.extract_strided_slice %733 {offsets = [0, 0], sizes = [2, 12], strides = [1, 1]} : vector<2x48xf32> to vector<2x12xf32>
    %735 = arith.negf %734 : vector<2x12xf32>
    %736 = math.exp %735 : vector<2x12xf32>
    %cst_160 = arith.constant 1.000000e+00 : f32
    %737 = vector.broadcast %cst_160 : f32 to vector<2x12xf32>
    %738 = arith.addf %737, %736 : vector<2x12xf32>
    %739 = arith.divf %737, %738 : vector<2x12xf32>
    %740 = vector.extract_strided_slice %733 {offsets = [0, 12], sizes = [2, 12], strides = [1, 1]} : vector<2x48xf32> to vector<2x12xf32>
    %741 = arith.negf %740 : vector<2x12xf32>
    %742 = math.exp %741 : vector<2x12xf32>
    %cst_161 = arith.constant 1.000000e+00 : f32
    %743 = vector.broadcast %cst_161 : f32 to vector<2x12xf32>
    %744 = arith.addf %743, %742 : vector<2x12xf32>
    %745 = arith.divf %743, %744 : vector<2x12xf32>
    %746 = vector.extract_strided_slice %733 {offsets = [0, 24], sizes = [2, 12], strides = [1, 1]} : vector<2x48xf32> to vector<2x12xf32>
    %747 = math.tanh %746 : vector<2x12xf32>
    %748 = vector.extract_strided_slice %733 {offsets = [0, 36], sizes = [2, 12], strides = [1, 1]} : vector<2x48xf32> to vector<2x12xf32>
    %749 = arith.negf %748 : vector<2x12xf32>
    %750 = math.exp %749 : vector<2x12xf32>
    %cst_162 = arith.constant 1.000000e+00 : f32
    %751 = vector.broadcast %cst_162 : f32 to vector<2x12xf32>
    %752 = arith.addf %751, %750 : vector<2x12xf32>
    %753 = arith.divf %751, %752 : vector<2x12xf32>
    %754 = arith.mulf %745, %721 : vector<2x12xf32>
    %755 = arith.mulf %739, %747 : vector<2x12xf32>
    %756 = arith.addf %754, %755 : vector<2x12xf32>
    %757 = math.tanh %756 : vector<2x12xf32>
    %758 = arith.mulf %753, %757 : vector<2x12xf32>
    %759 = vector.extract_strided_slice %758 {offsets = [0, 0], sizes = [2, 6], strides = [1, 1]} : vector<2x12xf32> to vector<2x6xf32>
    %760 = vector.extract_strided_slice %758 {offsets = [0, 6], sizes = [2, 6], strides = [1, 1]} : vector<2x12xf32> to vector<2x6xf32>
    %761 = vector.extract_strided_slice %618 {offsets = [8, 0], sizes = [2, 48], strides = [1, 1]} : vector<16x48xf32> to vector<2x48xf32>
    %762 = vector.extract_strided_slice %618 {offsets = [6, 0], sizes = [2, 48], strides = [1, 1]} : vector<16x48xf32> to vector<2x48xf32>
    %763 = vector.shape_cast %620 : vector<1x48xi1> to vector<1x48xi1>
    %764 = vector.broadcast %763 : vector<1x48xi1> to vector<2x48xi1>
    %765 = arith.select %764, %761, %762 : vector<2x48xi1>, vector<2x48xf32>
    %766 = arith.truncf %758 : vector<2x12xf32> to vector<2x12xbf16>
    %cst_163 = arith.constant dense<0.000000e+00> : vector<2x48xf32>
    %767 = tpu.matmul %766, %611, %cst_163 {dimension_numbers = #tpu.dot_dimension_numbers<[1], [0], [0], [1], [0, 0, 1, 1], [], []>} : vector<2x12xbf16>, vector<12x48xbf16>, vector<2x48xf32> -> vector<2x48xf32>
    %768 = arith.addf %765, %767 : vector<2x48xf32>
    %769 = vector.extract_strided_slice %768 {offsets = [0, 0], sizes = [2, 12], strides = [1, 1]} : vector<2x48xf32> to vector<2x12xf32>
    %770 = arith.negf %769 : vector<2x12xf32>
    %771 = math.exp %770 : vector<2x12xf32>
    %cst_164 = arith.constant 1.000000e+00 : f32
    %772 = vector.broadcast %cst_164 : f32 to vector<2x12xf32>
    %773 = arith.addf %772, %771 : vector<2x12xf32>
    %774 = arith.divf %772, %773 : vector<2x12xf32>
    %775 = vector.extract_strided_slice %768 {offsets = [0, 12], sizes = [2, 12], strides = [1, 1]} : vector<2x48xf32> to vector<2x12xf32>
    %776 = arith.negf %775 : vector<2x12xf32>
    %777 = math.exp %776 : vector<2x12xf32>
    %cst_165 = arith.constant 1.000000e+00 : f32
    %778 = vector.broadcast %cst_165 : f32 to vector<2x12xf32>
    %779 = arith.addf %778, %777 : vector<2x12xf32>
    %780 = arith.divf %778, %779 : vector<2x12xf32>
    %781 = vector.extract_strided_slice %768 {offsets = [0, 24], sizes = [2, 12], strides = [1, 1]} : vector<2x48xf32> to vector<2x12xf32>
    %782 = math.tanh %781 : vector<2x12xf32>
    %783 = vector.extract_strided_slice %768 {offsets = [0, 36], sizes = [2, 12], strides = [1, 1]} : vector<2x48xf32> to vector<2x12xf32>
    %784 = arith.negf %783 : vector<2x12xf32>
    %785 = math.exp %784 : vector<2x12xf32>
    %cst_166 = arith.constant 1.000000e+00 : f32
    %786 = vector.broadcast %cst_166 : f32 to vector<2x12xf32>
    %787 = arith.addf %786, %785 : vector<2x12xf32>
    %788 = arith.divf %786, %787 : vector<2x12xf32>
    %789 = arith.mulf %780, %756 : vector<2x12xf32>
    %790 = arith.mulf %774, %782 : vector<2x12xf32>
    %791 = arith.addf %789, %790 : vector<2x12xf32>
    %792 = math.tanh %791 : vector<2x12xf32>
    %793 = arith.mulf %788, %792 : vector<2x12xf32>
    %794 = vector.extract_strided_slice %793 {offsets = [0, 0], sizes = [2, 6], strides = [1, 1]} : vector<2x12xf32> to vector<2x6xf32>
    %795 = vector.extract_strided_slice %793 {offsets = [0, 6], sizes = [2, 6], strides = [1, 1]} : vector<2x12xf32> to vector<2x6xf32>
    %796 = vector.extract_strided_slice %618 {offsets = [10, 0], sizes = [2, 48], strides = [1, 1]} : vector<16x48xf32> to vector<2x48xf32>
    %797 = vector.extract_strided_slice %618 {offsets = [4, 0], sizes = [2, 48], strides = [1, 1]} : vector<16x48xf32> to vector<2x48xf32>
    %798 = vector.shape_cast %620 : vector<1x48xi1> to vector<1x48xi1>
    %799 = vector.broadcast %798 : vector<1x48xi1> to vector<2x48xi1>
    %800 = arith.select %799, %796, %797 : vector<2x48xi1>, vector<2x48xf32>
    %801 = arith.truncf %793 : vector<2x12xf32> to vector<2x12xbf16>
    %cst_167 = arith.constant dense<0.000000e+00> : vector<2x48xf32>
    %802 = tpu.matmul %801, %611, %cst_167 {dimension_numbers = #tpu.dot_dimension_numbers<[1], [0], [0], [1], [0, 0, 1, 1], [], []>} : vector<2x12xbf16>, vector<12x48xbf16>, vector<2x48xf32> -> vector<2x48xf32>
    %803 = arith.addf %800, %802 : vector<2x48xf32>
    %804 = vector.extract_strided_slice %803 {offsets = [0, 0], sizes = [2, 12], strides = [1, 1]} : vector<2x48xf32> to vector<2x12xf32>
    %805 = arith.negf %804 : vector<2x12xf32>
    %806 = math.exp %805 : vector<2x12xf32>
    %cst_168 = arith.constant 1.000000e+00 : f32
    %807 = vector.broadcast %cst_168 : f32 to vector<2x12xf32>
    %808 = arith.addf %807, %806 : vector<2x12xf32>
    %809 = arith.divf %807, %808 : vector<2x12xf32>
    %810 = vector.extract_strided_slice %803 {offsets = [0, 12], sizes = [2, 12], strides = [1, 1]} : vector<2x48xf32> to vector<2x12xf32>
    %811 = arith.negf %810 : vector<2x12xf32>
    %812 = math.exp %811 : vector<2x12xf32>
    %cst_169 = arith.constant 1.000000e+00 : f32
    %813 = vector.broadcast %cst_169 : f32 to vector<2x12xf32>
    %814 = arith.addf %813, %812 : vector<2x12xf32>
    %815 = arith.divf %813, %814 : vector<2x12xf32>
    %816 = vector.extract_strided_slice %803 {offsets = [0, 24], sizes = [2, 12], strides = [1, 1]} : vector<2x48xf32> to vector<2x12xf32>
    %817 = math.tanh %816 : vector<2x12xf32>
    %818 = vector.extract_strided_slice %803 {offsets = [0, 36], sizes = [2, 12], strides = [1, 1]} : vector<2x48xf32> to vector<2x12xf32>
    %819 = arith.negf %818 : vector<2x12xf32>
    %820 = math.exp %819 : vector<2x12xf32>
    %cst_170 = arith.constant 1.000000e+00 : f32
    %821 = vector.broadcast %cst_170 : f32 to vector<2x12xf32>
    %822 = arith.addf %821, %820 : vector<2x12xf32>
    %823 = arith.divf %821, %822 : vector<2x12xf32>
    %824 = arith.mulf %815, %791 : vector<2x12xf32>
    %825 = arith.mulf %809, %817 : vector<2x12xf32>
    %826 = arith.addf %824, %825 : vector<2x12xf32>
    %827 = math.tanh %826 : vector<2x12xf32>
    %828 = arith.mulf %823, %827 : vector<2x12xf32>
    %829 = vector.extract_strided_slice %828 {offsets = [0, 0], sizes = [2, 6], strides = [1, 1]} : vector<2x12xf32> to vector<2x6xf32>
    %830 = vector.extract_strided_slice %828 {offsets = [0, 6], sizes = [2, 6], strides = [1, 1]} : vector<2x12xf32> to vector<2x6xf32>
    %831 = vector.extract_strided_slice %618 {offsets = [12, 0], sizes = [2, 48], strides = [1, 1]} : vector<16x48xf32> to vector<2x48xf32>
    %832 = vector.extract_strided_slice %618 {offsets = [2, 0], sizes = [2, 48], strides = [1, 1]} : vector<16x48xf32> to vector<2x48xf32>
    %833 = vector.shape_cast %620 : vector<1x48xi1> to vector<1x48xi1>
    %834 = vector.broadcast %833 : vector<1x48xi1> to vector<2x48xi1>
    %835 = arith.select %834, %831, %832 : vector<2x48xi1>, vector<2x48xf32>
    %836 = arith.truncf %828 : vector<2x12xf32> to vector<2x12xbf16>
    %cst_171 = arith.constant dense<0.000000e+00> : vector<2x48xf32>
    %837 = tpu.matmul %836, %611, %cst_171 {dimension_numbers = #tpu.dot_dimension_numbers<[1], [0], [0], [1], [0, 0, 1, 1], [], []>} : vector<2x12xbf16>, vector<12x48xbf16>, vector<2x48xf32> -> vector<2x48xf32>
    %838 = arith.addf %835, %837 : vector<2x48xf32>
    %839 = vector.extract_strided_slice %838 {offsets = [0, 0], sizes = [2, 12], strides = [1, 1]} : vector<2x48xf32> to vector<2x12xf32>
    %840 = arith.negf %839 : vector<2x12xf32>
    %841 = math.exp %840 : vector<2x12xf32>
    %cst_172 = arith.constant 1.000000e+00 : f32
    %842 = vector.broadcast %cst_172 : f32 to vector<2x12xf32>
    %843 = arith.addf %842, %841 : vector<2x12xf32>
    %844 = arith.divf %842, %843 : vector<2x12xf32>
    %845 = vector.extract_strided_slice %838 {offsets = [0, 12], sizes = [2, 12], strides = [1, 1]} : vector<2x48xf32> to vector<2x12xf32>
    %846 = arith.negf %845 : vector<2x12xf32>
    %847 = math.exp %846 : vector<2x12xf32>
    %cst_173 = arith.constant 1.000000e+00 : f32
    %848 = vector.broadcast %cst_173 : f32 to vector<2x12xf32>
    %849 = arith.addf %848, %847 : vector<2x12xf32>
    %850 = arith.divf %848, %849 : vector<2x12xf32>
    %851 = vector.extract_strided_slice %838 {offsets = [0, 24], sizes = [2, 12], strides = [1, 1]} : vector<2x48xf32> to vector<2x12xf32>
    %852 = math.tanh %851 : vector<2x12xf32>
    %853 = vector.extract_strided_slice %838 {offsets = [0, 36], sizes = [2, 12], strides = [1, 1]} : vector<2x48xf32> to vector<2x12xf32>
    %854 = arith.negf %853 : vector<2x12xf32>
    %855 = math.exp %854 : vector<2x12xf32>
    %cst_174 = arith.constant 1.000000e+00 : f32
    %856 = vector.broadcast %cst_174 : f32 to vector<2x12xf32>
    %857 = arith.addf %856, %855 : vector<2x12xf32>
    %858 = arith.divf %856, %857 : vector<2x12xf32>
    %859 = arith.mulf %850, %826 : vector<2x12xf32>
    %860 = arith.mulf %844, %852 : vector<2x12xf32>
    %861 = arith.addf %859, %860 : vector<2x12xf32>
    %862 = math.tanh %861 : vector<2x12xf32>
    %863 = arith.mulf %858, %862 : vector<2x12xf32>
    %864 = vector.extract_strided_slice %863 {offsets = [0, 0], sizes = [2, 6], strides = [1, 1]} : vector<2x12xf32> to vector<2x6xf32>
    %865 = vector.extract_strided_slice %863 {offsets = [0, 6], sizes = [2, 6], strides = [1, 1]} : vector<2x12xf32> to vector<2x6xf32>
    %866 = vector.extract_strided_slice %618 {offsets = [14, 0], sizes = [2, 48], strides = [1, 1]} : vector<16x48xf32> to vector<2x48xf32>
    %867 = vector.extract_strided_slice %618 {offsets = [0, 0], sizes = [2, 48], strides = [1, 1]} : vector<16x48xf32> to vector<2x48xf32>
    %868 = vector.shape_cast %620 : vector<1x48xi1> to vector<1x48xi1>
    %869 = vector.broadcast %868 : vector<1x48xi1> to vector<2x48xi1>
    %870 = arith.select %869, %866, %867 : vector<2x48xi1>, vector<2x48xf32>
    %871 = arith.truncf %863 : vector<2x12xf32> to vector<2x12xbf16>
    %cst_175 = arith.constant dense<0.000000e+00> : vector<2x48xf32>
    %872 = tpu.matmul %871, %611, %cst_175 {dimension_numbers = #tpu.dot_dimension_numbers<[1], [0], [0], [1], [0, 0, 1, 1], [], []>} : vector<2x12xbf16>, vector<12x48xbf16>, vector<2x48xf32> -> vector<2x48xf32>
    %873 = arith.addf %870, %872 : vector<2x48xf32>
    %874 = vector.extract_strided_slice %873 {offsets = [0, 0], sizes = [2, 12], strides = [1, 1]} : vector<2x48xf32> to vector<2x12xf32>
    %875 = arith.negf %874 : vector<2x12xf32>
    %876 = math.exp %875 : vector<2x12xf32>
    %cst_176 = arith.constant 1.000000e+00 : f32
    %877 = vector.broadcast %cst_176 : f32 to vector<2x12xf32>
    %878 = arith.addf %877, %876 : vector<2x12xf32>
    %879 = arith.divf %877, %878 : vector<2x12xf32>
    %880 = vector.extract_strided_slice %873 {offsets = [0, 12], sizes = [2, 12], strides = [1, 1]} : vector<2x48xf32> to vector<2x12xf32>
    %881 = arith.negf %880 : vector<2x12xf32>
    %882 = math.exp %881 : vector<2x12xf32>
    %cst_177 = arith.constant 1.000000e+00 : f32
    %883 = vector.broadcast %cst_177 : f32 to vector<2x12xf32>
    %884 = arith.addf %883, %882 : vector<2x12xf32>
    %885 = arith.divf %883, %884 : vector<2x12xf32>
    %886 = vector.extract_strided_slice %873 {offsets = [0, 24], sizes = [2, 12], strides = [1, 1]} : vector<2x48xf32> to vector<2x12xf32>
    %887 = math.tanh %886 : vector<2x12xf32>
    %888 = vector.extract_strided_slice %873 {offsets = [0, 36], sizes = [2, 12], strides = [1, 1]} : vector<2x48xf32> to vector<2x12xf32>
    %889 = arith.negf %888 : vector<2x12xf32>
    %890 = math.exp %889 : vector<2x12xf32>
    %cst_178 = arith.constant 1.000000e+00 : f32
    %891 = vector.broadcast %cst_178 : f32 to vector<2x12xf32>
    %892 = arith.addf %891, %890 : vector<2x12xf32>
    %893 = arith.divf %891, %892 : vector<2x12xf32>
    %894 = arith.mulf %885, %861 : vector<2x12xf32>
    %895 = arith.mulf %879, %887 : vector<2x12xf32>
    %896 = arith.addf %894, %895 : vector<2x12xf32>
    %897 = math.tanh %896 : vector<2x12xf32>
    %898 = arith.mulf %893, %897 : vector<2x12xf32>
    %899 = vector.extract_strided_slice %898 {offsets = [0, 0], sizes = [2, 6], strides = [1, 1]} : vector<2x12xf32> to vector<2x6xf32>
    %900 = vector.extract_strided_slice %898 {offsets = [0, 6], sizes = [2, 6], strides = [1, 1]} : vector<2x12xf32> to vector<2x6xf32>
    %901 = tpu.concatenate %654, %689, %724, %759, %794, %829, %864, %899 in 0 : vector<2x6xf32>, vector<2x6xf32>, vector<2x6xf32>, vector<2x6xf32>, vector<2x6xf32>, vector<2x6xf32>, vector<2x6xf32>, vector<2x6xf32> -> vector<16x6xf32>
    %902 = tpu.concatenate %900, %865, %830, %795, %760, %725, %690, %655 in 0 : vector<2x6xf32>, vector<2x6xf32>, vector<2x6xf32>, vector<2x6xf32>, vector<2x6xf32>, vector<2x6xf32>, vector<2x6xf32>, vector<2x6xf32> -> vector<16x6xf32>
    %903 = tpu.concatenate %901, %902 in 1 : vector<16x6xf32>, vector<16x6xf32> -> vector<16x12xf32>
    %c864 = arith.constant 864 : index
    %c0_179 = arith.constant 0 : index
    %904 = vector.load %arg1[%c864, %c0_179] : memref<896x128xbf16, #tpu.memory_space<vmem>>, vector<6x12xbf16>
    %905 = arith.truncf %0 : vector<16x6xf32> to vector<16x6xbf16>
    %cst_180 = arith.constant dense<0.000000e+00> : vector<16x12xf32>
    %906 = tpu.matmul %905, %904, %cst_180 {dimension_numbers = #tpu.dot_dimension_numbers<[1], [0], [0], [1], [0, 0, 1, 1], [], []>} : vector<16x6xbf16>, vector<6x12xbf16>, vector<16x12xf32> -> vector<16x12xf32>
    %c368 = arith.constant 368 : index
    %c0_181 = arith.constant 0 : index
    %907 = vector.load %arg2[%c368, %c0_181] : memref<392x128xf32, #tpu.memory_space<vmem>>, vector<1x12xf32>
    %908 = vector.broadcast %907 : vector<1x12xf32> to vector<16x12xf32>
    %909 = arith.addf %906, %908 : vector<16x12xf32>
    %c352 = arith.constant 352 : index
    %c0_182 = arith.constant 0 : index
    %910 = vector.load %arg1[%c352, %c0_182] : memref<896x128xbf16, #tpu.memory_space<vmem>>, vector<12x36xbf16>
    %c128 = arith.constant 128 : index
    %c0_183 = arith.constant 0 : index
    %911 = vector.load %arg2[%c128, %c0_183] : memref<392x128xf32, #tpu.memory_space<vmem>>, vector<1x36xf32>
    %c368_184 = arith.constant 368 : index
    %c0_185 = arith.constant 0 : index
    %912 = vector.load %arg1[%c368_184, %c0_185] : memref<896x128xbf16, #tpu.memory_space<vmem>>, vector<12x12xbf16>
    %c136 = arith.constant 136 : index
    %c0_186 = arith.constant 0 : index
    %913 = vector.load %arg2[%c136, %c0_186] : memref<392x128xf32, #tpu.memory_space<vmem>>, vector<1x12xf32>
    %914 = arith.truncf %909 : vector<16x12xf32> to vector<16x12xbf16>
    %cst_187 = arith.constant dense<0.000000e+00> : vector<16x36xf32>
    %915 = tpu.matmul %914, %910, %cst_187 {dimension_numbers = #tpu.dot_dimension_numbers<[1], [0], [0], [1], [0, 0, 1, 1], [], []>} : vector<16x12xbf16>, vector<12x36xbf16>, vector<16x36xf32> -> vector<16x36xf32>
    %916 = vector.broadcast %911 : vector<1x36xf32> to vector<16x36xf32>
    %917 = arith.addf %915, %916 : vector<16x36xf32>
    %918 = vector.extract_strided_slice %917 {offsets = [0, 0], sizes = [16, 12], strides = [1, 1]} : vector<16x36xf32> to vector<16x12xf32>
    %cst_188 = arith.constant 5.000000e-01 : f32
    %919 = vector.broadcast %cst_188 : f32 to vector<16x12xf32>
    %920 = arith.mulf %918, %919 : vector<16x12xf32>
    %921 = vector.extract_strided_slice %917 {offsets = [0, 12], sizes = [16, 12], strides = [1, 1]} : vector<16x36xf32> to vector<16x12xf32>
    %922 = vector.extract_strided_slice %917 {offsets = [0, 24], sizes = [16, 12], strides = [1, 1]} : vector<16x36xf32> to vector<16x12xf32>
    %923 = vector.extract_strided_slice %920 {offsets = [0, 0], sizes = [16, 4], strides = [1, 1]} : vector<16x12xf32> to vector<16x4xf32>
    %924 = vector.extract_strided_slice %921 {offsets = [0, 0], sizes = [16, 4], strides = [1, 1]} : vector<16x12xf32> to vector<16x4xf32>
    %925 = arith.truncf %923 : vector<16x4xf32> to vector<16x4xbf16>
    %926 = arith.truncf %924 : vector<16x4xf32> to vector<16x4xbf16>
    %cst_189 = arith.constant dense<0.000000e+00> : vector<16x16xf32>
    %927 = tpu.matmul %925, %926, %cst_189 {dimension_numbers = #tpu.dot_dimension_numbers<[1], [1], [0], [0], [0, 0, 1, 0], [], []>} : vector<16x4xbf16>, vector<16x4xbf16>, vector<16x16xf32> -> vector<16x16xf32>
    %928 = arith.addf %927, %38 : vector<16x16xf32>
    %cst_190 = arith.constant dense<0xFF800000> : vector<16xf32>
    %929 = vector.multi_reduction <maximumf>, %928, %cst_190 [1] : vector<16x16xf32> to vector<16xf32>
    %930 = vector.shape_cast %929 : vector<16xf32> to vector<16x1xf32>
    %931 = vector.broadcast %930 : vector<16x1xf32> to vector<16x16xf32>
    %932 = arith.subf %928, %931 : vector<16x16xf32>
    %933 = math.exp %932 : vector<16x16xf32>
    %cst_191 = arith.constant dense<0.000000e+00> : vector<16xf32>
    %934 = vector.multi_reduction <add>, %933, %cst_191 [1] : vector<16x16xf32> to vector<16xf32>
    %935 = vector.shape_cast %934 : vector<16xf32> to vector<16x1xf32>
    %936 = tpu.reciprocal %935 {approx = true} : vector<16x1xf32> -> vector<16x1xf32>
    %937 = vector.broadcast %936 : vector<16x1xf32> to vector<16x16xf32>
    %938 = arith.mulf %933, %937 : vector<16x16xf32>
    %939 = vector.extract_strided_slice %922 {offsets = [0, 0], sizes = [16, 4], strides = [1, 1]} : vector<16x12xf32> to vector<16x4xf32>
    %940 = arith.truncf %938 : vector<16x16xf32> to vector<16x16xbf16>
    %941 = arith.truncf %939 : vector<16x4xf32> to vector<16x4xbf16>
    %cst_192 = arith.constant dense<0.000000e+00> : vector<16x4xf32>
    %942 = tpu.matmul %940, %941, %cst_192 {dimension_numbers = #tpu.dot_dimension_numbers<[1], [0], [0], [1], [0, 0, 1, 1], [], []>} : vector<16x16xbf16>, vector<16x4xbf16>, vector<16x4xf32> -> vector<16x4xf32>
    %943 = vector.extract_strided_slice %920 {offsets = [0, 4], sizes = [16, 4], strides = [1, 1]} : vector<16x12xf32> to vector<16x4xf32>
    %944 = vector.extract_strided_slice %921 {offsets = [0, 4], sizes = [16, 4], strides = [1, 1]} : vector<16x12xf32> to vector<16x4xf32>
    %945 = arith.truncf %943 : vector<16x4xf32> to vector<16x4xbf16>
    %946 = arith.truncf %944 : vector<16x4xf32> to vector<16x4xbf16>
    %cst_193 = arith.constant dense<0.000000e+00> : vector<16x16xf32>
    %947 = tpu.matmul %945, %946, %cst_193 {dimension_numbers = #tpu.dot_dimension_numbers<[1], [1], [0], [0], [0, 0, 1, 0], [], []>} : vector<16x4xbf16>, vector<16x4xbf16>, vector<16x16xf32> -> vector<16x16xf32>
    %948 = arith.addf %947, %38 : vector<16x16xf32>
    %cst_194 = arith.constant dense<0xFF800000> : vector<16xf32>
    %949 = vector.multi_reduction <maximumf>, %948, %cst_194 [1] : vector<16x16xf32> to vector<16xf32>
    %950 = vector.shape_cast %949 : vector<16xf32> to vector<16x1xf32>
    %951 = vector.broadcast %950 : vector<16x1xf32> to vector<16x16xf32>
    %952 = arith.subf %948, %951 : vector<16x16xf32>
    %953 = math.exp %952 : vector<16x16xf32>
    %cst_195 = arith.constant dense<0.000000e+00> : vector<16xf32>
    %954 = vector.multi_reduction <add>, %953, %cst_195 [1] : vector<16x16xf32> to vector<16xf32>
    %955 = vector.shape_cast %954 : vector<16xf32> to vector<16x1xf32>
    %956 = tpu.reciprocal %955 {approx = true} : vector<16x1xf32> -> vector<16x1xf32>
    %957 = vector.broadcast %956 : vector<16x1xf32> to vector<16x16xf32>
    %958 = arith.mulf %953, %957 : vector<16x16xf32>
    %959 = vector.extract_strided_slice %922 {offsets = [0, 4], sizes = [16, 4], strides = [1, 1]} : vector<16x12xf32> to vector<16x4xf32>
    %960 = arith.truncf %958 : vector<16x16xf32> to vector<16x16xbf16>
    %961 = arith.truncf %959 : vector<16x4xf32> to vector<16x4xbf16>
    %cst_196 = arith.constant dense<0.000000e+00> : vector<16x4xf32>
    %962 = tpu.matmul %960, %961, %cst_196 {dimension_numbers = #tpu.dot_dimension_numbers<[1], [0], [0], [1], [0, 0, 1, 1], [], []>} : vector<16x16xbf16>, vector<16x4xbf16>, vector<16x4xf32> -> vector<16x4xf32>
    %963 = vector.extract_strided_slice %920 {offsets = [0, 8], sizes = [16, 4], strides = [1, 1]} : vector<16x12xf32> to vector<16x4xf32>
    %964 = vector.extract_strided_slice %921 {offsets = [0, 8], sizes = [16, 4], strides = [1, 1]} : vector<16x12xf32> to vector<16x4xf32>
    %965 = arith.truncf %963 : vector<16x4xf32> to vector<16x4xbf16>
    %966 = arith.truncf %964 : vector<16x4xf32> to vector<16x4xbf16>
    %cst_197 = arith.constant dense<0.000000e+00> : vector<16x16xf32>
    %967 = tpu.matmul %965, %966, %cst_197 {dimension_numbers = #tpu.dot_dimension_numbers<[1], [1], [0], [0], [0, 0, 1, 0], [], []>} : vector<16x4xbf16>, vector<16x4xbf16>, vector<16x16xf32> -> vector<16x16xf32>
    %968 = arith.addf %967, %38 : vector<16x16xf32>
    %cst_198 = arith.constant dense<0xFF800000> : vector<16xf32>
    %969 = vector.multi_reduction <maximumf>, %968, %cst_198 [1] : vector<16x16xf32> to vector<16xf32>
    %970 = vector.shape_cast %969 : vector<16xf32> to vector<16x1xf32>
    %971 = vector.broadcast %970 : vector<16x1xf32> to vector<16x16xf32>
    %972 = arith.subf %968, %971 : vector<16x16xf32>
    %973 = math.exp %972 : vector<16x16xf32>
    %cst_199 = arith.constant dense<0.000000e+00> : vector<16xf32>
    %974 = vector.multi_reduction <add>, %973, %cst_199 [1] : vector<16x16xf32> to vector<16xf32>
    %975 = vector.shape_cast %974 : vector<16xf32> to vector<16x1xf32>
    %976 = tpu.reciprocal %975 {approx = true} : vector<16x1xf32> -> vector<16x1xf32>
    %977 = vector.broadcast %976 : vector<16x1xf32> to vector<16x16xf32>
    %978 = arith.mulf %973, %977 : vector<16x16xf32>
    %979 = vector.extract_strided_slice %922 {offsets = [0, 8], sizes = [16, 4], strides = [1, 1]} : vector<16x12xf32> to vector<16x4xf32>
    %980 = arith.truncf %978 : vector<16x16xf32> to vector<16x16xbf16>
    %981 = arith.truncf %979 : vector<16x4xf32> to vector<16x4xbf16>
    %cst_200 = arith.constant dense<0.000000e+00> : vector<16x4xf32>
    %982 = tpu.matmul %980, %981, %cst_200 {dimension_numbers = #tpu.dot_dimension_numbers<[1], [0], [0], [1], [0, 0, 1, 1], [], []>} : vector<16x16xbf16>, vector<16x4xbf16>, vector<16x4xf32> -> vector<16x4xf32>
    %983 = tpu.concatenate %942, %962, %982 in 1 : vector<16x4xf32>, vector<16x4xf32>, vector<16x4xf32> -> vector<16x12xf32>
    %984 = arith.truncf %983 : vector<16x12xf32> to vector<16x12xbf16>
    %cst_201 = arith.constant dense<0.000000e+00> : vector<16x12xf32>
    %985 = tpu.matmul %984, %912, %cst_201 {dimension_numbers = #tpu.dot_dimension_numbers<[1], [0], [0], [1], [0, 0, 1, 1], [], []>} : vector<16x12xbf16>, vector<12x12xbf16>, vector<16x12xf32> -> vector<16x12xf32>
    %986 = vector.broadcast %913 : vector<1x12xf32> to vector<16x12xf32>
    %987 = arith.addf %985, %986 : vector<16x12xf32>
    %988 = arith.addf %909, %987 : vector<16x12xf32>
    %c176_202 = arith.constant 176 : index
    %c0_203 = arith.constant 0 : index
    %989 = vector.load %arg2[%c176_202, %c0_203] : memref<392x128xf32, #tpu.memory_space<vmem>>, vector<1x12xf32>
    %c184 = arith.constant 184 : index
    %c0_204 = arith.constant 0 : index
    %990 = vector.load %arg2[%c184, %c0_204] : memref<392x128xf32, #tpu.memory_space<vmem>>, vector<1x12xf32>
    %cst_205 = arith.constant dense<0.000000e+00> : vector<16xf32>
    %991 = vector.multi_reduction <add>, %988, %cst_205 [1] : vector<16x12xf32> to vector<16xf32>
    %992 = vector.shape_cast %991 : vector<16xf32> to vector<16x1xf32>
    %cst_206 = arith.constant 1.200000e+01 : f32
    %993 = vector.broadcast %cst_206 : f32 to vector<16x1xf32>
    %994 = arith.divf %992, %993 : vector<16x1xf32>
    %995 = vector.broadcast %994 : vector<16x1xf32> to vector<16x12xf32>
    %996 = arith.subf %988, %995 : vector<16x12xf32>
    %997 = arith.mulf %996, %996 : vector<16x12xf32>
    %cst_207 = arith.constant dense<0.000000e+00> : vector<16xf32>
    %998 = vector.multi_reduction <add>, %997, %cst_207 [1] : vector<16x12xf32> to vector<16xf32>
    %999 = vector.shape_cast %998 : vector<16xf32> to vector<16x1xf32>
    %cst_208 = arith.constant 1.200000e+01 : f32
    %1000 = vector.broadcast %cst_208 : f32 to vector<16x1xf32>
    %1001 = arith.divf %999, %1000 : vector<16x1xf32>
    %cst_209 = arith.constant 9.99999974E-6 : f32
    %1002 = vector.broadcast %cst_209 : f32 to vector<16x1xf32>
    %1003 = arith.addf %1001, %1002 : vector<16x1xf32>
    %1004 = math.rsqrt %1003 : vector<16x1xf32>
    %1005 = vector.broadcast %1004 : vector<16x1xf32> to vector<16x12xf32>
    %1006 = arith.mulf %996, %1005 : vector<16x12xf32>
    %1007 = vector.broadcast %989 : vector<1x12xf32> to vector<16x12xf32>
    %1008 = arith.mulf %1006, %1007 : vector<16x12xf32>
    %1009 = vector.broadcast %990 : vector<1x12xf32> to vector<16x12xf32>
    %1010 = arith.addf %1008, %1009 : vector<16x12xf32>
    %c384_210 = arith.constant 384 : index
    %c0_211 = arith.constant 0 : index
    %1011 = vector.load %arg1[%c384_210, %c0_211] : memref<896x128xbf16, #tpu.memory_space<vmem>>, vector<12x36xbf16>
    %c144 = arith.constant 144 : index
    %c0_212 = arith.constant 0 : index
    %1012 = vector.load %arg2[%c144, %c0_212] : memref<392x128xf32, #tpu.memory_space<vmem>>, vector<1x36xf32>
    %c400 = arith.constant 400 : index
    %c0_213 = arith.constant 0 : index
    %1013 = vector.load %arg1[%c400, %c0_213] : memref<896x128xbf16, #tpu.memory_space<vmem>>, vector<12x12xbf16>
    %c152 = arith.constant 152 : index
    %c0_214 = arith.constant 0 : index
    %1014 = vector.load %arg2[%c152, %c0_214] : memref<392x128xf32, #tpu.memory_space<vmem>>, vector<1x12xf32>
    %1015 = tpu.concatenate %1010, %903 in 0 : vector<16x12xf32>, vector<16x12xf32> -> vector<32x12xf32>
    %1016 = arith.truncf %1015 : vector<32x12xf32> to vector<32x12xbf16>
    %cst_215 = arith.constant dense<0.000000e+00> : vector<32x36xf32>
    %1017 = tpu.matmul %1016, %1011, %cst_215 {dimension_numbers = #tpu.dot_dimension_numbers<[1], [0], [0], [1], [0, 0, 1, 1], [], []>} : vector<32x12xbf16>, vector<12x36xbf16>, vector<32x36xf32> -> vector<32x36xf32>
    %1018 = vector.broadcast %1012 : vector<1x36xf32> to vector<32x36xf32>
    %1019 = arith.addf %1017, %1018 : vector<32x36xf32>
    %1020 = vector.extract_strided_slice %1019 {offsets = [0, 0], sizes = [16, 36], strides = [1, 1]} : vector<32x36xf32> to vector<16x36xf32>
    %1021 = vector.extract_strided_slice %1019 {offsets = [16, 0], sizes = [16, 36], strides = [1, 1]} : vector<32x36xf32> to vector<16x36xf32>
    %1022 = vector.extract_strided_slice %1020 {offsets = [0, 0], sizes = [16, 12], strides = [1, 1]} : vector<16x36xf32> to vector<16x12xf32>
    %cst_216 = arith.constant 5.000000e-01 : f32
    %1023 = vector.broadcast %cst_216 : f32 to vector<16x12xf32>
    %1024 = arith.mulf %1022, %1023 : vector<16x12xf32>
    %1025 = vector.extract_strided_slice %1021 {offsets = [0, 12], sizes = [16, 12], strides = [1, 1]} : vector<16x36xf32> to vector<16x12xf32>
    %1026 = vector.extract_strided_slice %1021 {offsets = [0, 24], sizes = [16, 12], strides = [1, 1]} : vector<16x36xf32> to vector<16x12xf32>
    %1027 = vector.extract_strided_slice %1024 {offsets = [0, 0], sizes = [16, 4], strides = [1, 1]} : vector<16x12xf32> to vector<16x4xf32>
    %1028 = vector.extract_strided_slice %1025 {offsets = [0, 0], sizes = [16, 4], strides = [1, 1]} : vector<16x12xf32> to vector<16x4xf32>
    %1029 = arith.truncf %1027 : vector<16x4xf32> to vector<16x4xbf16>
    %1030 = arith.truncf %1028 : vector<16x4xf32> to vector<16x4xbf16>
    %cst_217 = arith.constant dense<0.000000e+00> : vector<16x16xf32>
    %1031 = tpu.matmul %1029, %1030, %cst_217 {dimension_numbers = #tpu.dot_dimension_numbers<[1], [1], [0], [0], [0, 0, 1, 0], [], []>} : vector<16x4xbf16>, vector<16x4xbf16>, vector<16x16xf32> -> vector<16x16xf32>
    %1032 = arith.addf %1031, %38 : vector<16x16xf32>
    %cst_218 = arith.constant dense<0xFF800000> : vector<16xf32>
    %1033 = vector.multi_reduction <maximumf>, %1032, %cst_218 [1] : vector<16x16xf32> to vector<16xf32>
    %1034 = vector.shape_cast %1033 : vector<16xf32> to vector<16x1xf32>
    %1035 = vector.broadcast %1034 : vector<16x1xf32> to vector<16x16xf32>
    %1036 = arith.subf %1032, %1035 : vector<16x16xf32>
    %1037 = math.exp %1036 : vector<16x16xf32>
    %cst_219 = arith.constant dense<0.000000e+00> : vector<16xf32>
    %1038 = vector.multi_reduction <add>, %1037, %cst_219 [1] : vector<16x16xf32> to vector<16xf32>
    %1039 = vector.shape_cast %1038 : vector<16xf32> to vector<16x1xf32>
    %1040 = tpu.reciprocal %1039 {approx = true} : vector<16x1xf32> -> vector<16x1xf32>
    %1041 = vector.broadcast %1040 : vector<16x1xf32> to vector<16x16xf32>
    %1042 = arith.mulf %1037, %1041 : vector<16x16xf32>
    %1043 = vector.extract_strided_slice %1026 {offsets = [0, 0], sizes = [16, 4], strides = [1, 1]} : vector<16x12xf32> to vector<16x4xf32>
    %1044 = arith.truncf %1042 : vector<16x16xf32> to vector<16x16xbf16>
    %1045 = arith.truncf %1043 : vector<16x4xf32> to vector<16x4xbf16>
    %cst_220 = arith.constant dense<0.000000e+00> : vector<16x4xf32>
    %1046 = tpu.matmul %1044, %1045, %cst_220 {dimension_numbers = #tpu.dot_dimension_numbers<[1], [0], [0], [1], [0, 0, 1, 1], [], []>} : vector<16x16xbf16>, vector<16x4xbf16>, vector<16x4xf32> -> vector<16x4xf32>
    %1047 = vector.extract_strided_slice %1024 {offsets = [0, 4], sizes = [16, 4], strides = [1, 1]} : vector<16x12xf32> to vector<16x4xf32>
    %1048 = vector.extract_strided_slice %1025 {offsets = [0, 4], sizes = [16, 4], strides = [1, 1]} : vector<16x12xf32> to vector<16x4xf32>
    %1049 = arith.truncf %1047 : vector<16x4xf32> to vector<16x4xbf16>
    %1050 = arith.truncf %1048 : vector<16x4xf32> to vector<16x4xbf16>
    %cst_221 = arith.constant dense<0.000000e+00> : vector<16x16xf32>
    %1051 = tpu.matmul %1049, %1050, %cst_221 {dimension_numbers = #tpu.dot_dimension_numbers<[1], [1], [0], [0], [0, 0, 1, 0], [], []>} : vector<16x4xbf16>, vector<16x4xbf16>, vector<16x16xf32> -> vector<16x16xf32>
    %1052 = arith.addf %1051, %38 : vector<16x16xf32>
    %cst_222 = arith.constant dense<0xFF800000> : vector<16xf32>
    %1053 = vector.multi_reduction <maximumf>, %1052, %cst_222 [1] : vector<16x16xf32> to vector<16xf32>
    %1054 = vector.shape_cast %1053 : vector<16xf32> to vector<16x1xf32>
    %1055 = vector.broadcast %1054 : vector<16x1xf32> to vector<16x16xf32>
    %1056 = arith.subf %1052, %1055 : vector<16x16xf32>
    %1057 = math.exp %1056 : vector<16x16xf32>
    %cst_223 = arith.constant dense<0.000000e+00> : vector<16xf32>
    %1058 = vector.multi_reduction <add>, %1057, %cst_223 [1] : vector<16x16xf32> to vector<16xf32>
    %1059 = vector.shape_cast %1058 : vector<16xf32> to vector<16x1xf32>
    %1060 = tpu.reciprocal %1059 {approx = true} : vector<16x1xf32> -> vector<16x1xf32>
    %1061 = vector.broadcast %1060 : vector<16x1xf32> to vector<16x16xf32>
    %1062 = arith.mulf %1057, %1061 : vector<16x16xf32>
    %1063 = vector.extract_strided_slice %1026 {offsets = [0, 4], sizes = [16, 4], strides = [1, 1]} : vector<16x12xf32> to vector<16x4xf32>
    %1064 = arith.truncf %1062 : vector<16x16xf32> to vector<16x16xbf16>
    %1065 = arith.truncf %1063 : vector<16x4xf32> to vector<16x4xbf16>
    %cst_224 = arith.constant dense<0.000000e+00> : vector<16x4xf32>
    %1066 = tpu.matmul %1064, %1065, %cst_224 {dimension_numbers = #tpu.dot_dimension_numbers<[1], [0], [0], [1], [0, 0, 1, 1], [], []>} : vector<16x16xbf16>, vector<16x4xbf16>, vector<16x4xf32> -> vector<16x4xf32>
    %1067 = vector.extract_strided_slice %1024 {offsets = [0, 8], sizes = [16, 4], strides = [1, 1]} : vector<16x12xf32> to vector<16x4xf32>
    %1068 = vector.extract_strided_slice %1025 {offsets = [0, 8], sizes = [16, 4], strides = [1, 1]} : vector<16x12xf32> to vector<16x4xf32>
    %1069 = arith.truncf %1067 : vector<16x4xf32> to vector<16x4xbf16>
    %1070 = arith.truncf %1068 : vector<16x4xf32> to vector<16x4xbf16>
    %cst_225 = arith.constant dense<0.000000e+00> : vector<16x16xf32>
    %1071 = tpu.matmul %1069, %1070, %cst_225 {dimension_numbers = #tpu.dot_dimension_numbers<[1], [1], [0], [0], [0, 0, 1, 0], [], []>} : vector<16x4xbf16>, vector<16x4xbf16>, vector<16x16xf32> -> vector<16x16xf32>
    %1072 = arith.addf %1071, %38 : vector<16x16xf32>
    %cst_226 = arith.constant dense<0xFF800000> : vector<16xf32>
    %1073 = vector.multi_reduction <maximumf>, %1072, %cst_226 [1] : vector<16x16xf32> to vector<16xf32>
    %1074 = vector.shape_cast %1073 : vector<16xf32> to vector<16x1xf32>
    %1075 = vector.broadcast %1074 : vector<16x1xf32> to vector<16x16xf32>
    %1076 = arith.subf %1072, %1075 : vector<16x16xf32>
    %1077 = math.exp %1076 : vector<16x16xf32>
    %cst_227 = arith.constant dense<0.000000e+00> : vector<16xf32>
    %1078 = vector.multi_reduction <add>, %1077, %cst_227 [1] : vector<16x16xf32> to vector<16xf32>
    %1079 = vector.shape_cast %1078 : vector<16xf32> to vector<16x1xf32>
    %1080 = tpu.reciprocal %1079 {approx = true} : vector<16x1xf32> -> vector<16x1xf32>
    %1081 = vector.broadcast %1080 : vector<16x1xf32> to vector<16x16xf32>
    %1082 = arith.mulf %1077, %1081 : vector<16x16xf32>
    %1083 = vector.extract_strided_slice %1026 {offsets = [0, 8], sizes = [16, 4], strides = [1, 1]} : vector<16x12xf32> to vector<16x4xf32>
    %1084 = arith.truncf %1082 : vector<16x16xf32> to vector<16x16xbf16>
    %1085 = arith.truncf %1083 : vector<16x4xf32> to vector<16x4xbf16>
    %cst_228 = arith.constant dense<0.000000e+00> : vector<16x4xf32>
    %1086 = tpu.matmul %1084, %1085, %cst_228 {dimension_numbers = #tpu.dot_dimension_numbers<[1], [0], [0], [1], [0, 0, 1, 1], [], []>} : vector<16x16xbf16>, vector<16x4xbf16>, vector<16x4xf32> -> vector<16x4xf32>
    %1087 = tpu.concatenate %1046, %1066, %1086 in 1 : vector<16x4xf32>, vector<16x4xf32>, vector<16x4xf32> -> vector<16x12xf32>
    %1088 = arith.truncf %1087 : vector<16x12xf32> to vector<16x12xbf16>
    %cst_229 = arith.constant dense<0.000000e+00> : vector<16x12xf32>
    %1089 = tpu.matmul %1088, %1013, %cst_229 {dimension_numbers = #tpu.dot_dimension_numbers<[1], [0], [0], [1], [0, 0, 1, 1], [], []>} : vector<16x12xbf16>, vector<12x12xbf16>, vector<16x12xf32> -> vector<16x12xf32>
    %1090 = vector.broadcast %1014 : vector<1x12xf32> to vector<16x12xf32>
    %1091 = arith.addf %1089, %1090 : vector<16x12xf32>
    %1092 = arith.addf %1010, %1091 : vector<16x12xf32>
    %c192_230 = arith.constant 192 : index
    %c0_231 = arith.constant 0 : index
    %1093 = vector.load %arg2[%c192_230, %c0_231] : memref<392x128xf32, #tpu.memory_space<vmem>>, vector<1x12xf32>
    %c200 = arith.constant 200 : index
    %c0_232 = arith.constant 0 : index
    %1094 = vector.load %arg2[%c200, %c0_232] : memref<392x128xf32, #tpu.memory_space<vmem>>, vector<1x12xf32>
    %cst_233 = arith.constant dense<0.000000e+00> : vector<16xf32>
    %1095 = vector.multi_reduction <add>, %1092, %cst_233 [1] : vector<16x12xf32> to vector<16xf32>
    %1096 = vector.shape_cast %1095 : vector<16xf32> to vector<16x1xf32>
    %cst_234 = arith.constant 1.200000e+01 : f32
    %1097 = vector.broadcast %cst_234 : f32 to vector<16x1xf32>
    %1098 = arith.divf %1096, %1097 : vector<16x1xf32>
    %1099 = vector.broadcast %1098 : vector<16x1xf32> to vector<16x12xf32>
    %1100 = arith.subf %1092, %1099 : vector<16x12xf32>
    %1101 = arith.mulf %1100, %1100 : vector<16x12xf32>
    %cst_235 = arith.constant dense<0.000000e+00> : vector<16xf32>
    %1102 = vector.multi_reduction <add>, %1101, %cst_235 [1] : vector<16x12xf32> to vector<16xf32>
    %1103 = vector.shape_cast %1102 : vector<16xf32> to vector<16x1xf32>
    %cst_236 = arith.constant 1.200000e+01 : f32
    %1104 = vector.broadcast %cst_236 : f32 to vector<16x1xf32>
    %1105 = arith.divf %1103, %1104 : vector<16x1xf32>
    %cst_237 = arith.constant 9.99999974E-6 : f32
    %1106 = vector.broadcast %cst_237 : f32 to vector<16x1xf32>
    %1107 = arith.addf %1105, %1106 : vector<16x1xf32>
    %1108 = math.rsqrt %1107 : vector<16x1xf32>
    %1109 = vector.broadcast %1108 : vector<16x1xf32> to vector<16x12xf32>
    %1110 = arith.mulf %1100, %1109 : vector<16x12xf32>
    %1111 = vector.broadcast %1093 : vector<1x12xf32> to vector<16x12xf32>
    %1112 = arith.mulf %1110, %1111 : vector<16x12xf32>
    %1113 = vector.broadcast %1094 : vector<1x12xf32> to vector<16x12xf32>
    %1114 = arith.addf %1112, %1113 : vector<16x12xf32>
    %c416 = arith.constant 416 : index
    %c0_238 = arith.constant 0 : index
    %1115 = vector.load %arg1[%c416, %c0_238] : memref<896x128xbf16, #tpu.memory_space<vmem>>, vector<12x128xbf16>
    %c160 = arith.constant 160 : index
    %c0_239 = arith.constant 0 : index
    %1116 = vector.load %arg2[%c160, %c0_239] : memref<392x128xf32, #tpu.memory_space<vmem>>, vector<1x128xf32>
    %c432 = arith.constant 432 : index
    %c0_240 = arith.constant 0 : index
    %1117 = vector.load %arg1[%c432, %c0_240] : memref<896x128xbf16, #tpu.memory_space<vmem>>, vector<128x12xbf16>
    %c168 = arith.constant 168 : index
    %c0_241 = arith.constant 0 : index
    %1118 = vector.load %arg2[%c168, %c0_241] : memref<392x128xf32, #tpu.memory_space<vmem>>, vector<1x12xf32>
    %1119 = arith.truncf %1114 : vector<16x12xf32> to vector<16x12xbf16>
    %cst_242 = arith.constant dense<0.000000e+00> : vector<16x128xf32>
    %1120 = tpu.matmul %1119, %1115, %cst_242 {dimension_numbers = #tpu.dot_dimension_numbers<[1], [0], [0], [1], [0, 0, 1, 1], [], []>} : vector<16x12xbf16>, vector<12x128xbf16>, vector<16x128xf32> -> vector<16x128xf32>
    %1121 = vector.broadcast %1116 : vector<1x128xf32> to vector<16x128xf32>
    %1122 = arith.addf %1120, %1121 : vector<16x128xf32>
    %cst_243 = arith.constant 0.000000e+00 : f32
    %1123 = vector.broadcast %cst_243 : f32 to vector<16x128xf32>
    %1124 = arith.maximumf %1122, %1123 : vector<16x128xf32>
    %1125 = arith.truncf %1124 : vector<16x128xf32> to vector<16x128xbf16>
    %cst_244 = arith.constant dense<0.000000e+00> : vector<16x12xf32>
    %1126 = tpu.matmul %1125, %1117, %cst_244 {dimension_numbers = #tpu.dot_dimension_numbers<[1], [0], [0], [1], [0, 0, 1, 1], [], []>} : vector<16x128xbf16>, vector<128x12xbf16>, vector<16x12xf32> -> vector<16x12xf32>
    %1127 = vector.broadcast %1118 : vector<1x12xf32> to vector<16x12xf32>
    %1128 = arith.addf %1126, %1127 : vector<16x12xf32>
    %1129 = arith.addf %1114, %1128 : vector<16x12xf32>
    %c208_245 = arith.constant 208 : index
    %c0_246 = arith.constant 0 : index
    %1130 = vector.load %arg2[%c208_245, %c0_246] : memref<392x128xf32, #tpu.memory_space<vmem>>, vector<1x12xf32>
    %c216 = arith.constant 216 : index
    %c0_247 = arith.constant 0 : index
    %1131 = vector.load %arg2[%c216, %c0_247] : memref<392x128xf32, #tpu.memory_space<vmem>>, vector<1x12xf32>
    %cst_248 = arith.constant dense<0.000000e+00> : vector<16xf32>
    %1132 = vector.multi_reduction <add>, %1129, %cst_248 [1] : vector<16x12xf32> to vector<16xf32>
    %1133 = vector.shape_cast %1132 : vector<16xf32> to vector<16x1xf32>
    %cst_249 = arith.constant 1.200000e+01 : f32
    %1134 = vector.broadcast %cst_249 : f32 to vector<16x1xf32>
    %1135 = arith.divf %1133, %1134 : vector<16x1xf32>
    %1136 = vector.broadcast %1135 : vector<16x1xf32> to vector<16x12xf32>
    %1137 = arith.subf %1129, %1136 : vector<16x12xf32>
    %1138 = arith.mulf %1137, %1137 : vector<16x12xf32>
    %cst_250 = arith.constant dense<0.000000e+00> : vector<16xf32>
    %1139 = vector.multi_reduction <add>, %1138, %cst_250 [1] : vector<16x12xf32> to vector<16xf32>
    %1140 = vector.shape_cast %1139 : vector<16xf32> to vector<16x1xf32>
    %cst_251 = arith.constant 1.200000e+01 : f32
    %1141 = vector.broadcast %cst_251 : f32 to vector<16x1xf32>
    %1142 = arith.divf %1140, %1141 : vector<16x1xf32>
    %cst_252 = arith.constant 9.99999974E-6 : f32
    %1143 = vector.broadcast %cst_252 : f32 to vector<16x1xf32>
    %1144 = arith.addf %1142, %1143 : vector<16x1xf32>
    %1145 = math.rsqrt %1144 : vector<16x1xf32>
    %1146 = vector.broadcast %1145 : vector<16x1xf32> to vector<16x12xf32>
    %1147 = arith.mulf %1137, %1146 : vector<16x12xf32>
    %1148 = vector.broadcast %1130 : vector<1x12xf32> to vector<16x12xf32>
    %1149 = arith.mulf %1147, %1148 : vector<16x12xf32>
    %1150 = vector.broadcast %1131 : vector<1x12xf32> to vector<16x12xf32>
    %1151 = arith.addf %1149, %1150 : vector<16x12xf32>
    %c560 = arith.constant 560 : index
    %c0_253 = arith.constant 0 : index
    %1152 = vector.load %arg1[%c560, %c0_253] : memref<896x128xbf16, #tpu.memory_space<vmem>>, vector<12x36xbf16>
    %c224_254 = arith.constant 224 : index
    %c0_255 = arith.constant 0 : index
    %1153 = vector.load %arg2[%c224_254, %c0_255] : memref<392x128xf32, #tpu.memory_space<vmem>>, vector<1x36xf32>
    %c576 = arith.constant 576 : index
    %c0_256 = arith.constant 0 : index
    %1154 = vector.load %arg1[%c576, %c0_256] : memref<896x128xbf16, #tpu.memory_space<vmem>>, vector<12x12xbf16>
    %c232 = arith.constant 232 : index
    %c0_257 = arith.constant 0 : index
    %1155 = vector.load %arg2[%c232, %c0_257] : memref<392x128xf32, #tpu.memory_space<vmem>>, vector<1x12xf32>
    %1156 = arith.truncf %1151 : vector<16x12xf32> to vector<16x12xbf16>
    %cst_258 = arith.constant dense<0.000000e+00> : vector<16x36xf32>
    %1157 = tpu.matmul %1156, %1152, %cst_258 {dimension_numbers = #tpu.dot_dimension_numbers<[1], [0], [0], [1], [0, 0, 1, 1], [], []>} : vector<16x12xbf16>, vector<12x36xbf16>, vector<16x36xf32> -> vector<16x36xf32>
    %1158 = vector.broadcast %1153 : vector<1x36xf32> to vector<16x36xf32>
    %1159 = arith.addf %1157, %1158 : vector<16x36xf32>
    %1160 = vector.extract_strided_slice %1159 {offsets = [0, 0], sizes = [16, 12], strides = [1, 1]} : vector<16x36xf32> to vector<16x12xf32>
    %cst_259 = arith.constant 5.000000e-01 : f32
    %1161 = vector.broadcast %cst_259 : f32 to vector<16x12xf32>
    %1162 = arith.mulf %1160, %1161 : vector<16x12xf32>
    %1163 = vector.extract_strided_slice %1159 {offsets = [0, 12], sizes = [16, 12], strides = [1, 1]} : vector<16x36xf32> to vector<16x12xf32>
    %1164 = vector.extract_strided_slice %1159 {offsets = [0, 24], sizes = [16, 12], strides = [1, 1]} : vector<16x36xf32> to vector<16x12xf32>
    %1165 = vector.extract_strided_slice %1162 {offsets = [0, 0], sizes = [16, 4], strides = [1, 1]} : vector<16x12xf32> to vector<16x4xf32>
    %1166 = vector.extract_strided_slice %1163 {offsets = [0, 0], sizes = [16, 4], strides = [1, 1]} : vector<16x12xf32> to vector<16x4xf32>
    %1167 = arith.truncf %1165 : vector<16x4xf32> to vector<16x4xbf16>
    %1168 = arith.truncf %1166 : vector<16x4xf32> to vector<16x4xbf16>
    %cst_260 = arith.constant dense<0.000000e+00> : vector<16x16xf32>
    %1169 = tpu.matmul %1167, %1168, %cst_260 {dimension_numbers = #tpu.dot_dimension_numbers<[1], [1], [0], [0], [0, 0, 1, 0], [], []>} : vector<16x4xbf16>, vector<16x4xbf16>, vector<16x16xf32> -> vector<16x16xf32>
    %1170 = arith.addf %1169, %38 : vector<16x16xf32>
    %cst_261 = arith.constant dense<0xFF800000> : vector<16xf32>
    %1171 = vector.multi_reduction <maximumf>, %1170, %cst_261 [1] : vector<16x16xf32> to vector<16xf32>
    %1172 = vector.shape_cast %1171 : vector<16xf32> to vector<16x1xf32>
    %1173 = vector.broadcast %1172 : vector<16x1xf32> to vector<16x16xf32>
    %1174 = arith.subf %1170, %1173 : vector<16x16xf32>
    %1175 = math.exp %1174 : vector<16x16xf32>
    %cst_262 = arith.constant dense<0.000000e+00> : vector<16xf32>
    %1176 = vector.multi_reduction <add>, %1175, %cst_262 [1] : vector<16x16xf32> to vector<16xf32>
    %1177 = vector.shape_cast %1176 : vector<16xf32> to vector<16x1xf32>
    %1178 = tpu.reciprocal %1177 {approx = true} : vector<16x1xf32> -> vector<16x1xf32>
    %1179 = vector.broadcast %1178 : vector<16x1xf32> to vector<16x16xf32>
    %1180 = arith.mulf %1175, %1179 : vector<16x16xf32>
    %1181 = vector.extract_strided_slice %1164 {offsets = [0, 0], sizes = [16, 4], strides = [1, 1]} : vector<16x12xf32> to vector<16x4xf32>
    %1182 = arith.truncf %1180 : vector<16x16xf32> to vector<16x16xbf16>
    %1183 = arith.truncf %1181 : vector<16x4xf32> to vector<16x4xbf16>
    %cst_263 = arith.constant dense<0.000000e+00> : vector<16x4xf32>
    %1184 = tpu.matmul %1182, %1183, %cst_263 {dimension_numbers = #tpu.dot_dimension_numbers<[1], [0], [0], [1], [0, 0, 1, 1], [], []>} : vector<16x16xbf16>, vector<16x4xbf16>, vector<16x4xf32> -> vector<16x4xf32>
    %1185 = vector.extract_strided_slice %1162 {offsets = [0, 4], sizes = [16, 4], strides = [1, 1]} : vector<16x12xf32> to vector<16x4xf32>
    %1186 = vector.extract_strided_slice %1163 {offsets = [0, 4], sizes = [16, 4], strides = [1, 1]} : vector<16x12xf32> to vector<16x4xf32>
    %1187 = arith.truncf %1185 : vector<16x4xf32> to vector<16x4xbf16>
    %1188 = arith.truncf %1186 : vector<16x4xf32> to vector<16x4xbf16>
    %cst_264 = arith.constant dense<0.000000e+00> : vector<16x16xf32>
    %1189 = tpu.matmul %1187, %1188, %cst_264 {dimension_numbers = #tpu.dot_dimension_numbers<[1], [1], [0], [0], [0, 0, 1, 0], [], []>} : vector<16x4xbf16>, vector<16x4xbf16>, vector<16x16xf32> -> vector<16x16xf32>
    %1190 = arith.addf %1189, %38 : vector<16x16xf32>
    %cst_265 = arith.constant dense<0xFF800000> : vector<16xf32>
    %1191 = vector.multi_reduction <maximumf>, %1190, %cst_265 [1] : vector<16x16xf32> to vector<16xf32>
    %1192 = vector.shape_cast %1191 : vector<16xf32> to vector<16x1xf32>
    %1193 = vector.broadcast %1192 : vector<16x1xf32> to vector<16x16xf32>
    %1194 = arith.subf %1190, %1193 : vector<16x16xf32>
    %1195 = math.exp %1194 : vector<16x16xf32>
    %cst_266 = arith.constant dense<0.000000e+00> : vector<16xf32>
    %1196 = vector.multi_reduction <add>, %1195, %cst_266 [1] : vector<16x16xf32> to vector<16xf32>
    %1197 = vector.shape_cast %1196 : vector<16xf32> to vector<16x1xf32>
    %1198 = tpu.reciprocal %1197 {approx = true} : vector<16x1xf32> -> vector<16x1xf32>
    %1199 = vector.broadcast %1198 : vector<16x1xf32> to vector<16x16xf32>
    %1200 = arith.mulf %1195, %1199 : vector<16x16xf32>
    %1201 = vector.extract_strided_slice %1164 {offsets = [0, 4], sizes = [16, 4], strides = [1, 1]} : vector<16x12xf32> to vector<16x4xf32>
    %1202 = arith.truncf %1200 : vector<16x16xf32> to vector<16x16xbf16>
    %1203 = arith.truncf %1201 : vector<16x4xf32> to vector<16x4xbf16>
    %cst_267 = arith.constant dense<0.000000e+00> : vector<16x4xf32>
    %1204 = tpu.matmul %1202, %1203, %cst_267 {dimension_numbers = #tpu.dot_dimension_numbers<[1], [0], [0], [1], [0, 0, 1, 1], [], []>} : vector<16x16xbf16>, vector<16x4xbf16>, vector<16x4xf32> -> vector<16x4xf32>
    %1205 = vector.extract_strided_slice %1162 {offsets = [0, 8], sizes = [16, 4], strides = [1, 1]} : vector<16x12xf32> to vector<16x4xf32>
    %1206 = vector.extract_strided_slice %1163 {offsets = [0, 8], sizes = [16, 4], strides = [1, 1]} : vector<16x12xf32> to vector<16x4xf32>
    %1207 = arith.truncf %1205 : vector<16x4xf32> to vector<16x4xbf16>
    %1208 = arith.truncf %1206 : vector<16x4xf32> to vector<16x4xbf16>
    %cst_268 = arith.constant dense<0.000000e+00> : vector<16x16xf32>
    %1209 = tpu.matmul %1207, %1208, %cst_268 {dimension_numbers = #tpu.dot_dimension_numbers<[1], [1], [0], [0], [0, 0, 1, 0], [], []>} : vector<16x4xbf16>, vector<16x4xbf16>, vector<16x16xf32> -> vector<16x16xf32>
    %1210 = arith.addf %1209, %38 : vector<16x16xf32>
    %cst_269 = arith.constant dense<0xFF800000> : vector<16xf32>
    %1211 = vector.multi_reduction <maximumf>, %1210, %cst_269 [1] : vector<16x16xf32> to vector<16xf32>
    %1212 = vector.shape_cast %1211 : vector<16xf32> to vector<16x1xf32>
    %1213 = vector.broadcast %1212 : vector<16x1xf32> to vector<16x16xf32>
    %1214 = arith.subf %1210, %1213 : vector<16x16xf32>
    %1215 = math.exp %1214 : vector<16x16xf32>
    %cst_270 = arith.constant dense<0.000000e+00> : vector<16xf32>
    %1216 = vector.multi_reduction <add>, %1215, %cst_270 [1] : vector<16x16xf32> to vector<16xf32>
    %1217 = vector.shape_cast %1216 : vector<16xf32> to vector<16x1xf32>
    %1218 = tpu.reciprocal %1217 {approx = true} : vector<16x1xf32> -> vector<16x1xf32>
    %1219 = vector.broadcast %1218 : vector<16x1xf32> to vector<16x16xf32>
    %1220 = arith.mulf %1215, %1219 : vector<16x16xf32>
    %1221 = vector.extract_strided_slice %1164 {offsets = [0, 8], sizes = [16, 4], strides = [1, 1]} : vector<16x12xf32> to vector<16x4xf32>
    %1222 = arith.truncf %1220 : vector<16x16xf32> to vector<16x16xbf16>
    %1223 = arith.truncf %1221 : vector<16x4xf32> to vector<16x4xbf16>
    %cst_271 = arith.constant dense<0.000000e+00> : vector<16x4xf32>
    %1224 = tpu.matmul %1222, %1223, %cst_271 {dimension_numbers = #tpu.dot_dimension_numbers<[1], [0], [0], [1], [0, 0, 1, 1], [], []>} : vector<16x16xbf16>, vector<16x4xbf16>, vector<16x4xf32> -> vector<16x4xf32>
    %1225 = tpu.concatenate %1184, %1204, %1224 in 1 : vector<16x4xf32>, vector<16x4xf32>, vector<16x4xf32> -> vector<16x12xf32>
    %1226 = arith.truncf %1225 : vector<16x12xf32> to vector<16x12xbf16>
    %cst_272 = arith.constant dense<0.000000e+00> : vector<16x12xf32>
    %1227 = tpu.matmul %1226, %1154, %cst_272 {dimension_numbers = #tpu.dot_dimension_numbers<[1], [0], [0], [1], [0, 0, 1, 1], [], []>} : vector<16x12xbf16>, vector<12x12xbf16>, vector<16x12xf32> -> vector<16x12xf32>
    %1228 = vector.broadcast %1155 : vector<1x12xf32> to vector<16x12xf32>
    %1229 = arith.addf %1227, %1228 : vector<16x12xf32>
    %1230 = arith.addf %1151, %1229 : vector<16x12xf32>
    %c272 = arith.constant 272 : index
    %c0_273 = arith.constant 0 : index
    %1231 = vector.load %arg2[%c272, %c0_273] : memref<392x128xf32, #tpu.memory_space<vmem>>, vector<1x12xf32>
    %c280 = arith.constant 280 : index
    %c0_274 = arith.constant 0 : index
    %1232 = vector.load %arg2[%c280, %c0_274] : memref<392x128xf32, #tpu.memory_space<vmem>>, vector<1x12xf32>
    %cst_275 = arith.constant dense<0.000000e+00> : vector<16xf32>
    %1233 = vector.multi_reduction <add>, %1230, %cst_275 [1] : vector<16x12xf32> to vector<16xf32>
    %1234 = vector.shape_cast %1233 : vector<16xf32> to vector<16x1xf32>
    %cst_276 = arith.constant 1.200000e+01 : f32
    %1235 = vector.broadcast %cst_276 : f32 to vector<16x1xf32>
    %1236 = arith.divf %1234, %1235 : vector<16x1xf32>
    %1237 = vector.broadcast %1236 : vector<16x1xf32> to vector<16x12xf32>
    %1238 = arith.subf %1230, %1237 : vector<16x12xf32>
    %1239 = arith.mulf %1238, %1238 : vector<16x12xf32>
    %cst_277 = arith.constant dense<0.000000e+00> : vector<16xf32>
    %1240 = vector.multi_reduction <add>, %1239, %cst_277 [1] : vector<16x12xf32> to vector<16xf32>
    %1241 = vector.shape_cast %1240 : vector<16xf32> to vector<16x1xf32>
    %cst_278 = arith.constant 1.200000e+01 : f32
    %1242 = vector.broadcast %cst_278 : f32 to vector<16x1xf32>
    %1243 = arith.divf %1241, %1242 : vector<16x1xf32>
    %cst_279 = arith.constant 9.99999974E-6 : f32
    %1244 = vector.broadcast %cst_279 : f32 to vector<16x1xf32>
    %1245 = arith.addf %1243, %1244 : vector<16x1xf32>
    %1246 = math.rsqrt %1245 : vector<16x1xf32>
    %1247 = vector.broadcast %1246 : vector<16x1xf32> to vector<16x12xf32>
    %1248 = arith.mulf %1238, %1247 : vector<16x12xf32>
    %1249 = vector.broadcast %1231 : vector<1x12xf32> to vector<16x12xf32>
    %1250 = arith.mulf %1248, %1249 : vector<16x12xf32>
    %1251 = vector.broadcast %1232 : vector<1x12xf32> to vector<16x12xf32>
    %1252 = arith.addf %1250, %1251 : vector<16x12xf32>
    %c592 = arith.constant 592 : index
    %c0_280 = arith.constant 0 : index
    %1253 = vector.load %arg1[%c592, %c0_280] : memref<896x128xbf16, #tpu.memory_space<vmem>>, vector<12x36xbf16>
    %c240 = arith.constant 240 : index
    %c0_281 = arith.constant 0 : index
    %1254 = vector.load %arg2[%c240, %c0_281] : memref<392x128xf32, #tpu.memory_space<vmem>>, vector<1x36xf32>
    %c608 = arith.constant 608 : index
    %c0_282 = arith.constant 0 : index
    %1255 = vector.load %arg1[%c608, %c0_282] : memref<896x128xbf16, #tpu.memory_space<vmem>>, vector<12x12xbf16>
    %c248 = arith.constant 248 : index
    %c0_283 = arith.constant 0 : index
    %1256 = vector.load %arg2[%c248, %c0_283] : memref<392x128xf32, #tpu.memory_space<vmem>>, vector<1x12xf32>
    %1257 = tpu.concatenate %1252, %903 in 0 : vector<16x12xf32>, vector<16x12xf32> -> vector<32x12xf32>
    %1258 = arith.truncf %1257 : vector<32x12xf32> to vector<32x12xbf16>
    %cst_284 = arith.constant dense<0.000000e+00> : vector<32x36xf32>
    %1259 = tpu.matmul %1258, %1253, %cst_284 {dimension_numbers = #tpu.dot_dimension_numbers<[1], [0], [0], [1], [0, 0, 1, 1], [], []>} : vector<32x12xbf16>, vector<12x36xbf16>, vector<32x36xf32> -> vector<32x36xf32>
    %1260 = vector.broadcast %1254 : vector<1x36xf32> to vector<32x36xf32>
    %1261 = arith.addf %1259, %1260 : vector<32x36xf32>
    %1262 = vector.extract_strided_slice %1261 {offsets = [0, 0], sizes = [16, 36], strides = [1, 1]} : vector<32x36xf32> to vector<16x36xf32>
    %1263 = vector.extract_strided_slice %1261 {offsets = [16, 0], sizes = [16, 36], strides = [1, 1]} : vector<32x36xf32> to vector<16x36xf32>
    %1264 = vector.extract_strided_slice %1262 {offsets = [0, 0], sizes = [16, 12], strides = [1, 1]} : vector<16x36xf32> to vector<16x12xf32>
    %cst_285 = arith.constant 5.000000e-01 : f32
    %1265 = vector.broadcast %cst_285 : f32 to vector<16x12xf32>
    %1266 = arith.mulf %1264, %1265 : vector<16x12xf32>
    %1267 = vector.extract_strided_slice %1263 {offsets = [0, 12], sizes = [16, 12], strides = [1, 1]} : vector<16x36xf32> to vector<16x12xf32>
    %1268 = vector.extract_strided_slice %1263 {offsets = [0, 24], sizes = [16, 12], strides = [1, 1]} : vector<16x36xf32> to vector<16x12xf32>
    %1269 = vector.extract_strided_slice %1266 {offsets = [0, 0], sizes = [16, 4], strides = [1, 1]} : vector<16x12xf32> to vector<16x4xf32>
    %1270 = vector.extract_strided_slice %1267 {offsets = [0, 0], sizes = [16, 4], strides = [1, 1]} : vector<16x12xf32> to vector<16x4xf32>
    %1271 = arith.truncf %1269 : vector<16x4xf32> to vector<16x4xbf16>
    %1272 = arith.truncf %1270 : vector<16x4xf32> to vector<16x4xbf16>
    %cst_286 = arith.constant dense<0.000000e+00> : vector<16x16xf32>
    %1273 = tpu.matmul %1271, %1272, %cst_286 {dimension_numbers = #tpu.dot_dimension_numbers<[1], [1], [0], [0], [0, 0, 1, 0], [], []>} : vector<16x4xbf16>, vector<16x4xbf16>, vector<16x16xf32> -> vector<16x16xf32>
    %1274 = arith.addf %1273, %38 : vector<16x16xf32>
    %cst_287 = arith.constant dense<0xFF800000> : vector<16xf32>
    %1275 = vector.multi_reduction <maximumf>, %1274, %cst_287 [1] : vector<16x16xf32> to vector<16xf32>
    %1276 = vector.shape_cast %1275 : vector<16xf32> to vector<16x1xf32>
    %1277 = vector.broadcast %1276 : vector<16x1xf32> to vector<16x16xf32>
    %1278 = arith.subf %1274, %1277 : vector<16x16xf32>
    %1279 = math.exp %1278 : vector<16x16xf32>
    %cst_288 = arith.constant dense<0.000000e+00> : vector<16xf32>
    %1280 = vector.multi_reduction <add>, %1279, %cst_288 [1] : vector<16x16xf32> to vector<16xf32>
    %1281 = vector.shape_cast %1280 : vector<16xf32> to vector<16x1xf32>
    %1282 = tpu.reciprocal %1281 {approx = true} : vector<16x1xf32> -> vector<16x1xf32>
    %1283 = vector.broadcast %1282 : vector<16x1xf32> to vector<16x16xf32>
    %1284 = arith.mulf %1279, %1283 : vector<16x16xf32>
    %1285 = vector.extract_strided_slice %1268 {offsets = [0, 0], sizes = [16, 4], strides = [1, 1]} : vector<16x12xf32> to vector<16x4xf32>
    %1286 = arith.truncf %1284 : vector<16x16xf32> to vector<16x16xbf16>
    %1287 = arith.truncf %1285 : vector<16x4xf32> to vector<16x4xbf16>
    %cst_289 = arith.constant dense<0.000000e+00> : vector<16x4xf32>
    %1288 = tpu.matmul %1286, %1287, %cst_289 {dimension_numbers = #tpu.dot_dimension_numbers<[1], [0], [0], [1], [0, 0, 1, 1], [], []>} : vector<16x16xbf16>, vector<16x4xbf16>, vector<16x4xf32> -> vector<16x4xf32>
    %1289 = vector.extract_strided_slice %1266 {offsets = [0, 4], sizes = [16, 4], strides = [1, 1]} : vector<16x12xf32> to vector<16x4xf32>
    %1290 = vector.extract_strided_slice %1267 {offsets = [0, 4], sizes = [16, 4], strides = [1, 1]} : vector<16x12xf32> to vector<16x4xf32>
    %1291 = arith.truncf %1289 : vector<16x4xf32> to vector<16x4xbf16>
    %1292 = arith.truncf %1290 : vector<16x4xf32> to vector<16x4xbf16>
    %cst_290 = arith.constant dense<0.000000e+00> : vector<16x16xf32>
    %1293 = tpu.matmul %1291, %1292, %cst_290 {dimension_numbers = #tpu.dot_dimension_numbers<[1], [1], [0], [0], [0, 0, 1, 0], [], []>} : vector<16x4xbf16>, vector<16x4xbf16>, vector<16x16xf32> -> vector<16x16xf32>
    %1294 = arith.addf %1293, %38 : vector<16x16xf32>
    %cst_291 = arith.constant dense<0xFF800000> : vector<16xf32>
    %1295 = vector.multi_reduction <maximumf>, %1294, %cst_291 [1] : vector<16x16xf32> to vector<16xf32>
    %1296 = vector.shape_cast %1295 : vector<16xf32> to vector<16x1xf32>
    %1297 = vector.broadcast %1296 : vector<16x1xf32> to vector<16x16xf32>
    %1298 = arith.subf %1294, %1297 : vector<16x16xf32>
    %1299 = math.exp %1298 : vector<16x16xf32>
    %cst_292 = arith.constant dense<0.000000e+00> : vector<16xf32>
    %1300 = vector.multi_reduction <add>, %1299, %cst_292 [1] : vector<16x16xf32> to vector<16xf32>
    %1301 = vector.shape_cast %1300 : vector<16xf32> to vector<16x1xf32>
    %1302 = tpu.reciprocal %1301 {approx = true} : vector<16x1xf32> -> vector<16x1xf32>
    %1303 = vector.broadcast %1302 : vector<16x1xf32> to vector<16x16xf32>
    %1304 = arith.mulf %1299, %1303 : vector<16x16xf32>
    %1305 = vector.extract_strided_slice %1268 {offsets = [0, 4], sizes = [16, 4], strides = [1, 1]} : vector<16x12xf32> to vector<16x4xf32>
    %1306 = arith.truncf %1304 : vector<16x16xf32> to vector<16x16xbf16>
    %1307 = arith.truncf %1305 : vector<16x4xf32> to vector<16x4xbf16>
    %cst_293 = arith.constant dense<0.000000e+00> : vector<16x4xf32>
    %1308 = tpu.matmul %1306, %1307, %cst_293 {dimension_numbers = #tpu.dot_dimension_numbers<[1], [0], [0], [1], [0, 0, 1, 1], [], []>} : vector<16x16xbf16>, vector<16x4xbf16>, vector<16x4xf32> -> vector<16x4xf32>
    %1309 = vector.extract_strided_slice %1266 {offsets = [0, 8], sizes = [16, 4], strides = [1, 1]} : vector<16x12xf32> to vector<16x4xf32>
    %1310 = vector.extract_strided_slice %1267 {offsets = [0, 8], sizes = [16, 4], strides = [1, 1]} : vector<16x12xf32> to vector<16x4xf32>
    %1311 = arith.truncf %1309 : vector<16x4xf32> to vector<16x4xbf16>
    %1312 = arith.truncf %1310 : vector<16x4xf32> to vector<16x4xbf16>
    %cst_294 = arith.constant dense<0.000000e+00> : vector<16x16xf32>
    %1313 = tpu.matmul %1311, %1312, %cst_294 {dimension_numbers = #tpu.dot_dimension_numbers<[1], [1], [0], [0], [0, 0, 1, 0], [], []>} : vector<16x4xbf16>, vector<16x4xbf16>, vector<16x16xf32> -> vector<16x16xf32>
    %1314 = arith.addf %1313, %38 : vector<16x16xf32>
    %cst_295 = arith.constant dense<0xFF800000> : vector<16xf32>
    %1315 = vector.multi_reduction <maximumf>, %1314, %cst_295 [1] : vector<16x16xf32> to vector<16xf32>
    %1316 = vector.shape_cast %1315 : vector<16xf32> to vector<16x1xf32>
    %1317 = vector.broadcast %1316 : vector<16x1xf32> to vector<16x16xf32>
    %1318 = arith.subf %1314, %1317 : vector<16x16xf32>
    %1319 = math.exp %1318 : vector<16x16xf32>
    %cst_296 = arith.constant dense<0.000000e+00> : vector<16xf32>
    %1320 = vector.multi_reduction <add>, %1319, %cst_296 [1] : vector<16x16xf32> to vector<16xf32>
    %1321 = vector.shape_cast %1320 : vector<16xf32> to vector<16x1xf32>
    %1322 = tpu.reciprocal %1321 {approx = true} : vector<16x1xf32> -> vector<16x1xf32>
    %1323 = vector.broadcast %1322 : vector<16x1xf32> to vector<16x16xf32>
    %1324 = arith.mulf %1319, %1323 : vector<16x16xf32>
    %1325 = vector.extract_strided_slice %1268 {offsets = [0, 8], sizes = [16, 4], strides = [1, 1]} : vector<16x12xf32> to vector<16x4xf32>
    %1326 = arith.truncf %1324 : vector<16x16xf32> to vector<16x16xbf16>
    %1327 = arith.truncf %1325 : vector<16x4xf32> to vector<16x4xbf16>
    %cst_297 = arith.constant dense<0.000000e+00> : vector<16x4xf32>
    %1328 = tpu.matmul %1326, %1327, %cst_297 {dimension_numbers = #tpu.dot_dimension_numbers<[1], [0], [0], [1], [0, 0, 1, 1], [], []>} : vector<16x16xbf16>, vector<16x4xbf16>, vector<16x4xf32> -> vector<16x4xf32>
    %1329 = tpu.concatenate %1288, %1308, %1328 in 1 : vector<16x4xf32>, vector<16x4xf32>, vector<16x4xf32> -> vector<16x12xf32>
    %1330 = arith.truncf %1329 : vector<16x12xf32> to vector<16x12xbf16>
    %cst_298 = arith.constant dense<0.000000e+00> : vector<16x12xf32>
    %1331 = tpu.matmul %1330, %1255, %cst_298 {dimension_numbers = #tpu.dot_dimension_numbers<[1], [0], [0], [1], [0, 0, 1, 1], [], []>} : vector<16x12xbf16>, vector<12x12xbf16>, vector<16x12xf32> -> vector<16x12xf32>
    %1332 = vector.broadcast %1256 : vector<1x12xf32> to vector<16x12xf32>
    %1333 = arith.addf %1331, %1332 : vector<16x12xf32>
    %1334 = arith.addf %1252, %1333 : vector<16x12xf32>
    %c288 = arith.constant 288 : index
    %c0_299 = arith.constant 0 : index
    %1335 = vector.load %arg2[%c288, %c0_299] : memref<392x128xf32, #tpu.memory_space<vmem>>, vector<1x12xf32>
    %c296 = arith.constant 296 : index
    %c0_300 = arith.constant 0 : index
    %1336 = vector.load %arg2[%c296, %c0_300] : memref<392x128xf32, #tpu.memory_space<vmem>>, vector<1x12xf32>
    %cst_301 = arith.constant dense<0.000000e+00> : vector<16xf32>
    %1337 = vector.multi_reduction <add>, %1334, %cst_301 [1] : vector<16x12xf32> to vector<16xf32>
    %1338 = vector.shape_cast %1337 : vector<16xf32> to vector<16x1xf32>
    %cst_302 = arith.constant 1.200000e+01 : f32
    %1339 = vector.broadcast %cst_302 : f32 to vector<16x1xf32>
    %1340 = arith.divf %1338, %1339 : vector<16x1xf32>
    %1341 = vector.broadcast %1340 : vector<16x1xf32> to vector<16x12xf32>
    %1342 = arith.subf %1334, %1341 : vector<16x12xf32>
    %1343 = arith.mulf %1342, %1342 : vector<16x12xf32>
    %cst_303 = arith.constant dense<0.000000e+00> : vector<16xf32>
    %1344 = vector.multi_reduction <add>, %1343, %cst_303 [1] : vector<16x12xf32> to vector<16xf32>
    %1345 = vector.shape_cast %1344 : vector<16xf32> to vector<16x1xf32>
    %cst_304 = arith.constant 1.200000e+01 : f32
    %1346 = vector.broadcast %cst_304 : f32 to vector<16x1xf32>
    %1347 = arith.divf %1345, %1346 : vector<16x1xf32>
    %cst_305 = arith.constant 9.99999974E-6 : f32
    %1348 = vector.broadcast %cst_305 : f32 to vector<16x1xf32>
    %1349 = arith.addf %1347, %1348 : vector<16x1xf32>
    %1350 = math.rsqrt %1349 : vector<16x1xf32>
    %1351 = vector.broadcast %1350 : vector<16x1xf32> to vector<16x12xf32>
    %1352 = arith.mulf %1342, %1351 : vector<16x12xf32>
    %1353 = vector.broadcast %1335 : vector<1x12xf32> to vector<16x12xf32>
    %1354 = arith.mulf %1352, %1353 : vector<16x12xf32>
    %1355 = vector.broadcast %1336 : vector<1x12xf32> to vector<16x12xf32>
    %1356 = arith.addf %1354, %1355 : vector<16x12xf32>
    %c624 = arith.constant 624 : index
    %c0_306 = arith.constant 0 : index
    %1357 = vector.load %arg1[%c624, %c0_306] : memref<896x128xbf16, #tpu.memory_space<vmem>>, vector<12x128xbf16>
    %c256 = arith.constant 256 : index
    %c0_307 = arith.constant 0 : index
    %1358 = vector.load %arg2[%c256, %c0_307] : memref<392x128xf32, #tpu.memory_space<vmem>>, vector<1x128xf32>
    %c640 = arith.constant 640 : index
    %c0_308 = arith.constant 0 : index
    %1359 = vector.load %arg1[%c640, %c0_308] : memref<896x128xbf16, #tpu.memory_space<vmem>>, vector<128x12xbf16>
    %c264 = arith.constant 264 : index
    %c0_309 = arith.constant 0 : index
    %1360 = vector.load %arg2[%c264, %c0_309] : memref<392x128xf32, #tpu.memory_space<vmem>>, vector<1x12xf32>
    %1361 = arith.truncf %1356 : vector<16x12xf32> to vector<16x12xbf16>
    %cst_310 = arith.constant dense<0.000000e+00> : vector<16x128xf32>
    %1362 = tpu.matmul %1361, %1357, %cst_310 {dimension_numbers = #tpu.dot_dimension_numbers<[1], [0], [0], [1], [0, 0, 1, 1], [], []>} : vector<16x12xbf16>, vector<12x128xbf16>, vector<16x128xf32> -> vector<16x128xf32>
    %1363 = vector.broadcast %1358 : vector<1x128xf32> to vector<16x128xf32>
    %1364 = arith.addf %1362, %1363 : vector<16x128xf32>
    %cst_311 = arith.constant 0.000000e+00 : f32
    %1365 = vector.broadcast %cst_311 : f32 to vector<16x128xf32>
    %1366 = arith.maximumf %1364, %1365 : vector<16x128xf32>
    %1367 = arith.truncf %1366 : vector<16x128xf32> to vector<16x128xbf16>
    %cst_312 = arith.constant dense<0.000000e+00> : vector<16x12xf32>
    %1368 = tpu.matmul %1367, %1359, %cst_312 {dimension_numbers = #tpu.dot_dimension_numbers<[1], [0], [0], [1], [0, 0, 1, 1], [], []>} : vector<16x128xbf16>, vector<128x12xbf16>, vector<16x12xf32> -> vector<16x12xf32>
    %1369 = vector.broadcast %1360 : vector<1x12xf32> to vector<16x12xf32>
    %1370 = arith.addf %1368, %1369 : vector<16x12xf32>
    %1371 = arith.addf %1356, %1370 : vector<16x12xf32>
    %c304 = arith.constant 304 : index
    %c0_313 = arith.constant 0 : index
    %1372 = vector.load %arg2[%c304, %c0_313] : memref<392x128xf32, #tpu.memory_space<vmem>>, vector<1x12xf32>
    %c312 = arith.constant 312 : index
    %c0_314 = arith.constant 0 : index
    %1373 = vector.load %arg2[%c312, %c0_314] : memref<392x128xf32, #tpu.memory_space<vmem>>, vector<1x12xf32>
    %cst_315 = arith.constant dense<0.000000e+00> : vector<16xf32>
    %1374 = vector.multi_reduction <add>, %1371, %cst_315 [1] : vector<16x12xf32> to vector<16xf32>
    %1375 = vector.shape_cast %1374 : vector<16xf32> to vector<16x1xf32>
    %cst_316 = arith.constant 1.200000e+01 : f32
    %1376 = vector.broadcast %cst_316 : f32 to vector<16x1xf32>
    %1377 = arith.divf %1375, %1376 : vector<16x1xf32>
    %1378 = vector.broadcast %1377 : vector<16x1xf32> to vector<16x12xf32>
    %1379 = arith.subf %1371, %1378 : vector<16x12xf32>
    %1380 = arith.mulf %1379, %1379 : vector<16x12xf32>
    %cst_317 = arith.constant dense<0.000000e+00> : vector<16xf32>
    %1381 = vector.multi_reduction <add>, %1380, %cst_317 [1] : vector<16x12xf32> to vector<16xf32>
    %1382 = vector.shape_cast %1381 : vector<16xf32> to vector<16x1xf32>
    %cst_318 = arith.constant 1.200000e+01 : f32
    %1383 = vector.broadcast %cst_318 : f32 to vector<16x1xf32>
    %1384 = arith.divf %1382, %1383 : vector<16x1xf32>
    %cst_319 = arith.constant 9.99999974E-6 : f32
    %1385 = vector.broadcast %cst_319 : f32 to vector<16x1xf32>
    %1386 = arith.addf %1384, %1385 : vector<16x1xf32>
    %1387 = math.rsqrt %1386 : vector<16x1xf32>
    %1388 = vector.broadcast %1387 : vector<16x1xf32> to vector<16x12xf32>
    %1389 = arith.mulf %1379, %1388 : vector<16x12xf32>
    %1390 = vector.broadcast %1372 : vector<1x12xf32> to vector<16x12xf32>
    %1391 = arith.mulf %1389, %1390 : vector<16x12xf32>
    %1392 = vector.broadcast %1373 : vector<1x12xf32> to vector<16x12xf32>
    %1393 = arith.addf %1391, %1392 : vector<16x12xf32>
    %c832 = arith.constant 832 : index
    %c0_320 = arith.constant 0 : index
    %1394 = vector.load %arg1[%c832, %c0_320] : memref<896x128xbf16, #tpu.memory_space<vmem>>, vector<12x24xbf16>
    %c336 = arith.constant 336 : index
    %c0_321 = arith.constant 0 : index
    %1395 = vector.load %arg2[%c336, %c0_321] : memref<392x128xf32, #tpu.memory_space<vmem>>, vector<6x24xf32>
    %c344 = arith.constant 344 : index
    %c0_322 = arith.constant 0 : index
    %1396 = vector.load %arg2[%c344, %c0_322] : memref<392x128xf32, #tpu.memory_space<vmem>>, vector<1x24xf32>
    %c32_323 = arith.constant 32 : index
    %c0_324 = arith.constant 0 : index
    %1397 = vector.load %arg3[%c32_323, %c0_324] : memref<64x12xf32, #tpu.memory_space<vmem>>, vector<2x6xf32>
    %c40_325 = arith.constant 40 : index
    %c0_326 = arith.constant 0 : index
    %1398 = vector.load %arg3[%c40_325, %c0_326] : memref<64x12xf32, #tpu.memory_space<vmem>>, vector<2x6xf32>
    %1399 = arith.truncf %1393 : vector<16x12xf32> to vector<16x12xbf16>
    %cst_327 = arith.constant dense<0.000000e+00> : vector<16x24xf32>
    %1400 = tpu.matmul %1399, %1394, %cst_327 {dimension_numbers = #tpu.dot_dimension_numbers<[1], [0], [0], [1], [0, 0, 1, 1], [], []>} : vector<16x12xbf16>, vector<12x24xbf16>, vector<16x24xf32> -> vector<16x24xf32>
    %1401 = vector.broadcast %1396 : vector<1x24xf32> to vector<16x24xf32>
    %1402 = arith.addf %1400, %1401 : vector<16x24xf32>
    %1403 = vector.extract_strided_slice %1395 {offsets = [0, 0], sizes = [1, 24], strides = [1, 1]} : vector<6x24xf32> to vector<1x24xf32>
    %1404 = vector.extract_strided_slice %1395 {offsets = [1, 0], sizes = [1, 24], strides = [1, 1]} : vector<6x24xf32> to vector<1x24xf32>
    %1405 = vector.extract_strided_slice %1395 {offsets = [2, 0], sizes = [1, 24], strides = [1, 1]} : vector<6x24xf32> to vector<1x24xf32>
    %1406 = vector.extract_strided_slice %1395 {offsets = [3, 0], sizes = [1, 24], strides = [1, 1]} : vector<6x24xf32> to vector<1x24xf32>
    %1407 = vector.extract_strided_slice %1395 {offsets = [4, 0], sizes = [1, 24], strides = [1, 1]} : vector<6x24xf32> to vector<1x24xf32>
    %1408 = vector.extract_strided_slice %1395 {offsets = [5, 0], sizes = [1, 24], strides = [1, 1]} : vector<6x24xf32> to vector<1x24xf32>
    %1409 = vector.extract_strided_slice %1397 {offsets = [0, 0], sizes = [2, 1], strides = [1, 1]} : vector<2x6xf32> to vector<2x1xf32>
    %1410 = vector.broadcast %1409 : vector<2x1xf32> to vector<2x24xf32>
    %1411 = vector.broadcast %1403 : vector<1x24xf32> to vector<2x24xf32>
    %1412 = arith.mulf %1410, %1411 : vector<2x24xf32>
    %1413 = vector.extract_strided_slice %1397 {offsets = [0, 1], sizes = [2, 1], strides = [1, 1]} : vector<2x6xf32> to vector<2x1xf32>
    %1414 = vector.broadcast %1413 : vector<2x1xf32> to vector<2x24xf32>
    %1415 = vector.broadcast %1404 : vector<1x24xf32> to vector<2x24xf32>
    %1416 = arith.mulf %1414, %1415 : vector<2x24xf32>
    %1417 = arith.addf %1412, %1416 : vector<2x24xf32>
    %1418 = vector.extract_strided_slice %1397 {offsets = [0, 2], sizes = [2, 1], strides = [1, 1]} : vector<2x6xf32> to vector<2x1xf32>
    %1419 = vector.broadcast %1418 : vector<2x1xf32> to vector<2x24xf32>
    %1420 = vector.broadcast %1405 : vector<1x24xf32> to vector<2x24xf32>
    %1421 = arith.mulf %1419, %1420 : vector<2x24xf32>
    %1422 = arith.addf %1417, %1421 : vector<2x24xf32>
    %1423 = vector.extract_strided_slice %1397 {offsets = [0, 3], sizes = [2, 1], strides = [1, 1]} : vector<2x6xf32> to vector<2x1xf32>
    %1424 = vector.broadcast %1423 : vector<2x1xf32> to vector<2x24xf32>
    %1425 = vector.broadcast %1406 : vector<1x24xf32> to vector<2x24xf32>
    %1426 = arith.mulf %1424, %1425 : vector<2x24xf32>
    %1427 = arith.addf %1422, %1426 : vector<2x24xf32>
    %1428 = vector.extract_strided_slice %1397 {offsets = [0, 4], sizes = [2, 1], strides = [1, 1]} : vector<2x6xf32> to vector<2x1xf32>
    %1429 = vector.broadcast %1428 : vector<2x1xf32> to vector<2x24xf32>
    %1430 = vector.broadcast %1407 : vector<1x24xf32> to vector<2x24xf32>
    %1431 = arith.mulf %1429, %1430 : vector<2x24xf32>
    %1432 = arith.addf %1427, %1431 : vector<2x24xf32>
    %1433 = vector.extract_strided_slice %1397 {offsets = [0, 5], sizes = [2, 1], strides = [1, 1]} : vector<2x6xf32> to vector<2x1xf32>
    %1434 = vector.broadcast %1433 : vector<2x1xf32> to vector<2x24xf32>
    %1435 = vector.broadcast %1408 : vector<1x24xf32> to vector<2x24xf32>
    %1436 = arith.mulf %1434, %1435 : vector<2x24xf32>
    %1437 = arith.addf %1432, %1436 : vector<2x24xf32>
    %1438 = vector.extract_strided_slice %1402 {offsets = [0, 0], sizes = [2, 24], strides = [1, 1]} : vector<16x24xf32> to vector<2x24xf32>
    %1439 = arith.addf %1438, %1437 : vector<2x24xf32>
    %1440 = vector.extract_strided_slice %1439 {offsets = [0, 0], sizes = [2, 6], strides = [1, 1]} : vector<2x24xf32> to vector<2x6xf32>
    %1441 = arith.negf %1440 : vector<2x6xf32>
    %1442 = math.exp %1441 : vector<2x6xf32>
    %cst_328 = arith.constant 1.000000e+00 : f32
    %1443 = vector.broadcast %cst_328 : f32 to vector<2x6xf32>
    %1444 = arith.addf %1443, %1442 : vector<2x6xf32>
    %1445 = arith.divf %1443, %1444 : vector<2x6xf32>
    %1446 = vector.extract_strided_slice %1439 {offsets = [0, 6], sizes = [2, 6], strides = [1, 1]} : vector<2x24xf32> to vector<2x6xf32>
    %1447 = arith.negf %1446 : vector<2x6xf32>
    %1448 = math.exp %1447 : vector<2x6xf32>
    %cst_329 = arith.constant 1.000000e+00 : f32
    %1449 = vector.broadcast %cst_329 : f32 to vector<2x6xf32>
    %1450 = arith.addf %1449, %1448 : vector<2x6xf32>
    %1451 = arith.divf %1449, %1450 : vector<2x6xf32>
    %1452 = vector.extract_strided_slice %1439 {offsets = [0, 12], sizes = [2, 6], strides = [1, 1]} : vector<2x24xf32> to vector<2x6xf32>
    %1453 = math.tanh %1452 : vector<2x6xf32>
    %1454 = vector.extract_strided_slice %1439 {offsets = [0, 18], sizes = [2, 6], strides = [1, 1]} : vector<2x24xf32> to vector<2x6xf32>
    %1455 = arith.negf %1454 : vector<2x6xf32>
    %1456 = math.exp %1455 : vector<2x6xf32>
    %cst_330 = arith.constant 1.000000e+00 : f32
    %1457 = vector.broadcast %cst_330 : f32 to vector<2x6xf32>
    %1458 = arith.addf %1457, %1456 : vector<2x6xf32>
    %1459 = arith.divf %1457, %1458 : vector<2x6xf32>
    %1460 = arith.mulf %1451, %1398 : vector<2x6xf32>
    %1461 = arith.mulf %1445, %1453 : vector<2x6xf32>
    %1462 = arith.addf %1460, %1461 : vector<2x6xf32>
    %1463 = math.tanh %1462 : vector<2x6xf32>
    %1464 = arith.mulf %1459, %1463 : vector<2x6xf32>
    %1465 = vector.extract_strided_slice %1464 {offsets = [0, 0], sizes = [2, 1], strides = [1, 1]} : vector<2x6xf32> to vector<2x1xf32>
    %1466 = vector.broadcast %1465 : vector<2x1xf32> to vector<2x24xf32>
    %1467 = vector.broadcast %1403 : vector<1x24xf32> to vector<2x24xf32>
    %1468 = arith.mulf %1466, %1467 : vector<2x24xf32>
    %1469 = vector.extract_strided_slice %1464 {offsets = [0, 1], sizes = [2, 1], strides = [1, 1]} : vector<2x6xf32> to vector<2x1xf32>
    %1470 = vector.broadcast %1469 : vector<2x1xf32> to vector<2x24xf32>
    %1471 = vector.broadcast %1404 : vector<1x24xf32> to vector<2x24xf32>
    %1472 = arith.mulf %1470, %1471 : vector<2x24xf32>
    %1473 = arith.addf %1468, %1472 : vector<2x24xf32>
    %1474 = vector.extract_strided_slice %1464 {offsets = [0, 2], sizes = [2, 1], strides = [1, 1]} : vector<2x6xf32> to vector<2x1xf32>
    %1475 = vector.broadcast %1474 : vector<2x1xf32> to vector<2x24xf32>
    %1476 = vector.broadcast %1405 : vector<1x24xf32> to vector<2x24xf32>
    %1477 = arith.mulf %1475, %1476 : vector<2x24xf32>
    %1478 = arith.addf %1473, %1477 : vector<2x24xf32>
    %1479 = vector.extract_strided_slice %1464 {offsets = [0, 3], sizes = [2, 1], strides = [1, 1]} : vector<2x6xf32> to vector<2x1xf32>
    %1480 = vector.broadcast %1479 : vector<2x1xf32> to vector<2x24xf32>
    %1481 = vector.broadcast %1406 : vector<1x24xf32> to vector<2x24xf32>
    %1482 = arith.mulf %1480, %1481 : vector<2x24xf32>
    %1483 = arith.addf %1478, %1482 : vector<2x24xf32>
    %1484 = vector.extract_strided_slice %1464 {offsets = [0, 4], sizes = [2, 1], strides = [1, 1]} : vector<2x6xf32> to vector<2x1xf32>
    %1485 = vector.broadcast %1484 : vector<2x1xf32> to vector<2x24xf32>
    %1486 = vector.broadcast %1407 : vector<1x24xf32> to vector<2x24xf32>
    %1487 = arith.mulf %1485, %1486 : vector<2x24xf32>
    %1488 = arith.addf %1483, %1487 : vector<2x24xf32>
    %1489 = vector.extract_strided_slice %1464 {offsets = [0, 5], sizes = [2, 1], strides = [1, 1]} : vector<2x6xf32> to vector<2x1xf32>
    %1490 = vector.broadcast %1489 : vector<2x1xf32> to vector<2x24xf32>
    %1491 = vector.broadcast %1408 : vector<1x24xf32> to vector<2x24xf32>
    %1492 = arith.mulf %1490, %1491 : vector<2x24xf32>
    %1493 = arith.addf %1488, %1492 : vector<2x24xf32>
    %1494 = vector.extract_strided_slice %1402 {offsets = [2, 0], sizes = [2, 24], strides = [1, 1]} : vector<16x24xf32> to vector<2x24xf32>
    %1495 = arith.addf %1494, %1493 : vector<2x24xf32>
    %1496 = vector.extract_strided_slice %1495 {offsets = [0, 0], sizes = [2, 6], strides = [1, 1]} : vector<2x24xf32> to vector<2x6xf32>
    %1497 = arith.negf %1496 : vector<2x6xf32>
    %1498 = math.exp %1497 : vector<2x6xf32>
    %cst_331 = arith.constant 1.000000e+00 : f32
    %1499 = vector.broadcast %cst_331 : f32 to vector<2x6xf32>
    %1500 = arith.addf %1499, %1498 : vector<2x6xf32>
    %1501 = arith.divf %1499, %1500 : vector<2x6xf32>
    %1502 = vector.extract_strided_slice %1495 {offsets = [0, 6], sizes = [2, 6], strides = [1, 1]} : vector<2x24xf32> to vector<2x6xf32>
    %1503 = arith.negf %1502 : vector<2x6xf32>
    %1504 = math.exp %1503 : vector<2x6xf32>
    %cst_332 = arith.constant 1.000000e+00 : f32
    %1505 = vector.broadcast %cst_332 : f32 to vector<2x6xf32>
    %1506 = arith.addf %1505, %1504 : vector<2x6xf32>
    %1507 = arith.divf %1505, %1506 : vector<2x6xf32>
    %1508 = vector.extract_strided_slice %1495 {offsets = [0, 12], sizes = [2, 6], strides = [1, 1]} : vector<2x24xf32> to vector<2x6xf32>
    %1509 = math.tanh %1508 : vector<2x6xf32>
    %1510 = vector.extract_strided_slice %1495 {offsets = [0, 18], sizes = [2, 6], strides = [1, 1]} : vector<2x24xf32> to vector<2x6xf32>
    %1511 = arith.negf %1510 : vector<2x6xf32>
    %1512 = math.exp %1511 : vector<2x6xf32>
    %cst_333 = arith.constant 1.000000e+00 : f32
    %1513 = vector.broadcast %cst_333 : f32 to vector<2x6xf32>
    %1514 = arith.addf %1513, %1512 : vector<2x6xf32>
    %1515 = arith.divf %1513, %1514 : vector<2x6xf32>
    %1516 = arith.mulf %1507, %1462 : vector<2x6xf32>
    %1517 = arith.mulf %1501, %1509 : vector<2x6xf32>
    %1518 = arith.addf %1516, %1517 : vector<2x6xf32>
    %1519 = math.tanh %1518 : vector<2x6xf32>
    %1520 = arith.mulf %1515, %1519 : vector<2x6xf32>
    %1521 = vector.extract_strided_slice %1520 {offsets = [0, 0], sizes = [2, 1], strides = [1, 1]} : vector<2x6xf32> to vector<2x1xf32>
    %1522 = vector.broadcast %1521 : vector<2x1xf32> to vector<2x24xf32>
    %1523 = vector.broadcast %1403 : vector<1x24xf32> to vector<2x24xf32>
    %1524 = arith.mulf %1522, %1523 : vector<2x24xf32>
    %1525 = vector.extract_strided_slice %1520 {offsets = [0, 1], sizes = [2, 1], strides = [1, 1]} : vector<2x6xf32> to vector<2x1xf32>
    %1526 = vector.broadcast %1525 : vector<2x1xf32> to vector<2x24xf32>
    %1527 = vector.broadcast %1404 : vector<1x24xf32> to vector<2x24xf32>
    %1528 = arith.mulf %1526, %1527 : vector<2x24xf32>
    %1529 = arith.addf %1524, %1528 : vector<2x24xf32>
    %1530 = vector.extract_strided_slice %1520 {offsets = [0, 2], sizes = [2, 1], strides = [1, 1]} : vector<2x6xf32> to vector<2x1xf32>
    %1531 = vector.broadcast %1530 : vector<2x1xf32> to vector<2x24xf32>
    %1532 = vector.broadcast %1405 : vector<1x24xf32> to vector<2x24xf32>
    %1533 = arith.mulf %1531, %1532 : vector<2x24xf32>
    %1534 = arith.addf %1529, %1533 : vector<2x24xf32>
    %1535 = vector.extract_strided_slice %1520 {offsets = [0, 3], sizes = [2, 1], strides = [1, 1]} : vector<2x6xf32> to vector<2x1xf32>
    %1536 = vector.broadcast %1535 : vector<2x1xf32> to vector<2x24xf32>
    %1537 = vector.broadcast %1406 : vector<1x24xf32> to vector<2x24xf32>
    %1538 = arith.mulf %1536, %1537 : vector<2x24xf32>
    %1539 = arith.addf %1534, %1538 : vector<2x24xf32>
    %1540 = vector.extract_strided_slice %1520 {offsets = [0, 4], sizes = [2, 1], strides = [1, 1]} : vector<2x6xf32> to vector<2x1xf32>
    %1541 = vector.broadcast %1540 : vector<2x1xf32> to vector<2x24xf32>
    %1542 = vector.broadcast %1407 : vector<1x24xf32> to vector<2x24xf32>
    %1543 = arith.mulf %1541, %1542 : vector<2x24xf32>
    %1544 = arith.addf %1539, %1543 : vector<2x24xf32>
    %1545 = vector.extract_strided_slice %1520 {offsets = [0, 5], sizes = [2, 1], strides = [1, 1]} : vector<2x6xf32> to vector<2x1xf32>
    %1546 = vector.broadcast %1545 : vector<2x1xf32> to vector<2x24xf32>
    %1547 = vector.broadcast %1408 : vector<1x24xf32> to vector<2x24xf32>
    %1548 = arith.mulf %1546, %1547 : vector<2x24xf32>
    %1549 = arith.addf %1544, %1548 : vector<2x24xf32>
    %1550 = vector.extract_strided_slice %1402 {offsets = [4, 0], sizes = [2, 24], strides = [1, 1]} : vector<16x24xf32> to vector<2x24xf32>
    %1551 = arith.addf %1550, %1549 : vector<2x24xf32>
    %1552 = vector.extract_strided_slice %1551 {offsets = [0, 0], sizes = [2, 6], strides = [1, 1]} : vector<2x24xf32> to vector<2x6xf32>
    %1553 = arith.negf %1552 : vector<2x6xf32>
    %1554 = math.exp %1553 : vector<2x6xf32>
    %cst_334 = arith.constant 1.000000e+00 : f32
    %1555 = vector.broadcast %cst_334 : f32 to vector<2x6xf32>
    %1556 = arith.addf %1555, %1554 : vector<2x6xf32>
    %1557 = arith.divf %1555, %1556 : vector<2x6xf32>
    %1558 = vector.extract_strided_slice %1551 {offsets = [0, 6], sizes = [2, 6], strides = [1, 1]} : vector<2x24xf32> to vector<2x6xf32>
    %1559 = arith.negf %1558 : vector<2x6xf32>
    %1560 = math.exp %1559 : vector<2x6xf32>
    %cst_335 = arith.constant 1.000000e+00 : f32
    %1561 = vector.broadcast %cst_335 : f32 to vector<2x6xf32>
    %1562 = arith.addf %1561, %1560 : vector<2x6xf32>
    %1563 = arith.divf %1561, %1562 : vector<2x6xf32>
    %1564 = vector.extract_strided_slice %1551 {offsets = [0, 12], sizes = [2, 6], strides = [1, 1]} : vector<2x24xf32> to vector<2x6xf32>
    %1565 = math.tanh %1564 : vector<2x6xf32>
    %1566 = vector.extract_strided_slice %1551 {offsets = [0, 18], sizes = [2, 6], strides = [1, 1]} : vector<2x24xf32> to vector<2x6xf32>
    %1567 = arith.negf %1566 : vector<2x6xf32>
    %1568 = math.exp %1567 : vector<2x6xf32>
    %cst_336 = arith.constant 1.000000e+00 : f32
    %1569 = vector.broadcast %cst_336 : f32 to vector<2x6xf32>
    %1570 = arith.addf %1569, %1568 : vector<2x6xf32>
    %1571 = arith.divf %1569, %1570 : vector<2x6xf32>
    %1572 = arith.mulf %1563, %1518 : vector<2x6xf32>
    %1573 = arith.mulf %1557, %1565 : vector<2x6xf32>
    %1574 = arith.addf %1572, %1573 : vector<2x6xf32>
    %1575 = math.tanh %1574 : vector<2x6xf32>
    %1576 = arith.mulf %1571, %1575 : vector<2x6xf32>
    %1577 = vector.extract_strided_slice %1576 {offsets = [0, 0], sizes = [2, 1], strides = [1, 1]} : vector<2x6xf32> to vector<2x1xf32>
    %1578 = vector.broadcast %1577 : vector<2x1xf32> to vector<2x24xf32>
    %1579 = vector.broadcast %1403 : vector<1x24xf32> to vector<2x24xf32>
    %1580 = arith.mulf %1578, %1579 : vector<2x24xf32>
    %1581 = vector.extract_strided_slice %1576 {offsets = [0, 1], sizes = [2, 1], strides = [1, 1]} : vector<2x6xf32> to vector<2x1xf32>
    %1582 = vector.broadcast %1581 : vector<2x1xf32> to vector<2x24xf32>
    %1583 = vector.broadcast %1404 : vector<1x24xf32> to vector<2x24xf32>
    %1584 = arith.mulf %1582, %1583 : vector<2x24xf32>
    %1585 = arith.addf %1580, %1584 : vector<2x24xf32>
    %1586 = vector.extract_strided_slice %1576 {offsets = [0, 2], sizes = [2, 1], strides = [1, 1]} : vector<2x6xf32> to vector<2x1xf32>
    %1587 = vector.broadcast %1586 : vector<2x1xf32> to vector<2x24xf32>
    %1588 = vector.broadcast %1405 : vector<1x24xf32> to vector<2x24xf32>
    %1589 = arith.mulf %1587, %1588 : vector<2x24xf32>
    %1590 = arith.addf %1585, %1589 : vector<2x24xf32>
    %1591 = vector.extract_strided_slice %1576 {offsets = [0, 3], sizes = [2, 1], strides = [1, 1]} : vector<2x6xf32> to vector<2x1xf32>
    %1592 = vector.broadcast %1591 : vector<2x1xf32> to vector<2x24xf32>
    %1593 = vector.broadcast %1406 : vector<1x24xf32> to vector<2x24xf32>
    %1594 = arith.mulf %1592, %1593 : vector<2x24xf32>
    %1595 = arith.addf %1590, %1594 : vector<2x24xf32>
    %1596 = vector.extract_strided_slice %1576 {offsets = [0, 4], sizes = [2, 1], strides = [1, 1]} : vector<2x6xf32> to vector<2x1xf32>
    %1597 = vector.broadcast %1596 : vector<2x1xf32> to vector<2x24xf32>
    %1598 = vector.broadcast %1407 : vector<1x24xf32> to vector<2x24xf32>
    %1599 = arith.mulf %1597, %1598 : vector<2x24xf32>
    %1600 = arith.addf %1595, %1599 : vector<2x24xf32>
    %1601 = vector.extract_strided_slice %1576 {offsets = [0, 5], sizes = [2, 1], strides = [1, 1]} : vector<2x6xf32> to vector<2x1xf32>
    %1602 = vector.broadcast %1601 : vector<2x1xf32> to vector<2x24xf32>
    %1603 = vector.broadcast %1408 : vector<1x24xf32> to vector<2x24xf32>
    %1604 = arith.mulf %1602, %1603 : vector<2x24xf32>
    %1605 = arith.addf %1600, %1604 : vector<2x24xf32>
    %1606 = vector.extract_strided_slice %1402 {offsets = [6, 0], sizes = [2, 24], strides = [1, 1]} : vector<16x24xf32> to vector<2x24xf32>
    %1607 = arith.addf %1606, %1605 : vector<2x24xf32>
    %1608 = vector.extract_strided_slice %1607 {offsets = [0, 0], sizes = [2, 6], strides = [1, 1]} : vector<2x24xf32> to vector<2x6xf32>
    %1609 = arith.negf %1608 : vector<2x6xf32>
    %1610 = math.exp %1609 : vector<2x6xf32>
    %cst_337 = arith.constant 1.000000e+00 : f32
    %1611 = vector.broadcast %cst_337 : f32 to vector<2x6xf32>
    %1612 = arith.addf %1611, %1610 : vector<2x6xf32>
    %1613 = arith.divf %1611, %1612 : vector<2x6xf32>
    %1614 = vector.extract_strided_slice %1607 {offsets = [0, 6], sizes = [2, 6], strides = [1, 1]} : vector<2x24xf32> to vector<2x6xf32>
    %1615 = arith.negf %1614 : vector<2x6xf32>
    %1616 = math.exp %1615 : vector<2x6xf32>
    %cst_338 = arith.constant 1.000000e+00 : f32
    %1617 = vector.broadcast %cst_338 : f32 to vector<2x6xf32>
    %1618 = arith.addf %1617, %1616 : vector<2x6xf32>
    %1619 = arith.divf %1617, %1618 : vector<2x6xf32>
    %1620 = vector.extract_strided_slice %1607 {offsets = [0, 12], sizes = [2, 6], strides = [1, 1]} : vector<2x24xf32> to vector<2x6xf32>
    %1621 = math.tanh %1620 : vector<2x6xf32>
    %1622 = vector.extract_strided_slice %1607 {offsets = [0, 18], sizes = [2, 6], strides = [1, 1]} : vector<2x24xf32> to vector<2x6xf32>
    %1623 = arith.negf %1622 : vector<2x6xf32>
    %1624 = math.exp %1623 : vector<2x6xf32>
    %cst_339 = arith.constant 1.000000e+00 : f32
    %1625 = vector.broadcast %cst_339 : f32 to vector<2x6xf32>
    %1626 = arith.addf %1625, %1624 : vector<2x6xf32>
    %1627 = arith.divf %1625, %1626 : vector<2x6xf32>
    %1628 = arith.mulf %1619, %1574 : vector<2x6xf32>
    %1629 = arith.mulf %1613, %1621 : vector<2x6xf32>
    %1630 = arith.addf %1628, %1629 : vector<2x6xf32>
    %1631 = math.tanh %1630 : vector<2x6xf32>
    %1632 = arith.mulf %1627, %1631 : vector<2x6xf32>
    %1633 = vector.extract_strided_slice %1632 {offsets = [0, 0], sizes = [2, 1], strides = [1, 1]} : vector<2x6xf32> to vector<2x1xf32>
    %1634 = vector.broadcast %1633 : vector<2x1xf32> to vector<2x24xf32>
    %1635 = vector.broadcast %1403 : vector<1x24xf32> to vector<2x24xf32>
    %1636 = arith.mulf %1634, %1635 : vector<2x24xf32>
    %1637 = vector.extract_strided_slice %1632 {offsets = [0, 1], sizes = [2, 1], strides = [1, 1]} : vector<2x6xf32> to vector<2x1xf32>
    %1638 = vector.broadcast %1637 : vector<2x1xf32> to vector<2x24xf32>
    %1639 = vector.broadcast %1404 : vector<1x24xf32> to vector<2x24xf32>
    %1640 = arith.mulf %1638, %1639 : vector<2x24xf32>
    %1641 = arith.addf %1636, %1640 : vector<2x24xf32>
    %1642 = vector.extract_strided_slice %1632 {offsets = [0, 2], sizes = [2, 1], strides = [1, 1]} : vector<2x6xf32> to vector<2x1xf32>
    %1643 = vector.broadcast %1642 : vector<2x1xf32> to vector<2x24xf32>
    %1644 = vector.broadcast %1405 : vector<1x24xf32> to vector<2x24xf32>
    %1645 = arith.mulf %1643, %1644 : vector<2x24xf32>
    %1646 = arith.addf %1641, %1645 : vector<2x24xf32>
    %1647 = vector.extract_strided_slice %1632 {offsets = [0, 3], sizes = [2, 1], strides = [1, 1]} : vector<2x6xf32> to vector<2x1xf32>
    %1648 = vector.broadcast %1647 : vector<2x1xf32> to vector<2x24xf32>
    %1649 = vector.broadcast %1406 : vector<1x24xf32> to vector<2x24xf32>
    %1650 = arith.mulf %1648, %1649 : vector<2x24xf32>
    %1651 = arith.addf %1646, %1650 : vector<2x24xf32>
    %1652 = vector.extract_strided_slice %1632 {offsets = [0, 4], sizes = [2, 1], strides = [1, 1]} : vector<2x6xf32> to vector<2x1xf32>
    %1653 = vector.broadcast %1652 : vector<2x1xf32> to vector<2x24xf32>
    %1654 = vector.broadcast %1407 : vector<1x24xf32> to vector<2x24xf32>
    %1655 = arith.mulf %1653, %1654 : vector<2x24xf32>
    %1656 = arith.addf %1651, %1655 : vector<2x24xf32>
    %1657 = vector.extract_strided_slice %1632 {offsets = [0, 5], sizes = [2, 1], strides = [1, 1]} : vector<2x6xf32> to vector<2x1xf32>
    %1658 = vector.broadcast %1657 : vector<2x1xf32> to vector<2x24xf32>
    %1659 = vector.broadcast %1408 : vector<1x24xf32> to vector<2x24xf32>
    %1660 = arith.mulf %1658, %1659 : vector<2x24xf32>
    %1661 = arith.addf %1656, %1660 : vector<2x24xf32>
    %1662 = vector.extract_strided_slice %1402 {offsets = [8, 0], sizes = [2, 24], strides = [1, 1]} : vector<16x24xf32> to vector<2x24xf32>
    %1663 = arith.addf %1662, %1661 : vector<2x24xf32>
    %1664 = vector.extract_strided_slice %1663 {offsets = [0, 0], sizes = [2, 6], strides = [1, 1]} : vector<2x24xf32> to vector<2x6xf32>
    %1665 = arith.negf %1664 : vector<2x6xf32>
    %1666 = math.exp %1665 : vector<2x6xf32>
    %cst_340 = arith.constant 1.000000e+00 : f32
    %1667 = vector.broadcast %cst_340 : f32 to vector<2x6xf32>
    %1668 = arith.addf %1667, %1666 : vector<2x6xf32>
    %1669 = arith.divf %1667, %1668 : vector<2x6xf32>
    %1670 = vector.extract_strided_slice %1663 {offsets = [0, 6], sizes = [2, 6], strides = [1, 1]} : vector<2x24xf32> to vector<2x6xf32>
    %1671 = arith.negf %1670 : vector<2x6xf32>
    %1672 = math.exp %1671 : vector<2x6xf32>
    %cst_341 = arith.constant 1.000000e+00 : f32
    %1673 = vector.broadcast %cst_341 : f32 to vector<2x6xf32>
    %1674 = arith.addf %1673, %1672 : vector<2x6xf32>
    %1675 = arith.divf %1673, %1674 : vector<2x6xf32>
    %1676 = vector.extract_strided_slice %1663 {offsets = [0, 12], sizes = [2, 6], strides = [1, 1]} : vector<2x24xf32> to vector<2x6xf32>
    %1677 = math.tanh %1676 : vector<2x6xf32>
    %1678 = vector.extract_strided_slice %1663 {offsets = [0, 18], sizes = [2, 6], strides = [1, 1]} : vector<2x24xf32> to vector<2x6xf32>
    %1679 = arith.negf %1678 : vector<2x6xf32>
    %1680 = math.exp %1679 : vector<2x6xf32>
    %cst_342 = arith.constant 1.000000e+00 : f32
    %1681 = vector.broadcast %cst_342 : f32 to vector<2x6xf32>
    %1682 = arith.addf %1681, %1680 : vector<2x6xf32>
    %1683 = arith.divf %1681, %1682 : vector<2x6xf32>
    %1684 = arith.mulf %1675, %1630 : vector<2x6xf32>
    %1685 = arith.mulf %1669, %1677 : vector<2x6xf32>
    %1686 = arith.addf %1684, %1685 : vector<2x6xf32>
    %1687 = math.tanh %1686 : vector<2x6xf32>
    %1688 = arith.mulf %1683, %1687 : vector<2x6xf32>
    %1689 = vector.extract_strided_slice %1688 {offsets = [0, 0], sizes = [2, 1], strides = [1, 1]} : vector<2x6xf32> to vector<2x1xf32>
    %1690 = vector.broadcast %1689 : vector<2x1xf32> to vector<2x24xf32>
    %1691 = vector.broadcast %1403 : vector<1x24xf32> to vector<2x24xf32>
    %1692 = arith.mulf %1690, %1691 : vector<2x24xf32>
    %1693 = vector.extract_strided_slice %1688 {offsets = [0, 1], sizes = [2, 1], strides = [1, 1]} : vector<2x6xf32> to vector<2x1xf32>
    %1694 = vector.broadcast %1693 : vector<2x1xf32> to vector<2x24xf32>
    %1695 = vector.broadcast %1404 : vector<1x24xf32> to vector<2x24xf32>
    %1696 = arith.mulf %1694, %1695 : vector<2x24xf32>
    %1697 = arith.addf %1692, %1696 : vector<2x24xf32>
    %1698 = vector.extract_strided_slice %1688 {offsets = [0, 2], sizes = [2, 1], strides = [1, 1]} : vector<2x6xf32> to vector<2x1xf32>
    %1699 = vector.broadcast %1698 : vector<2x1xf32> to vector<2x24xf32>
    %1700 = vector.broadcast %1405 : vector<1x24xf32> to vector<2x24xf32>
    %1701 = arith.mulf %1699, %1700 : vector<2x24xf32>
    %1702 = arith.addf %1697, %1701 : vector<2x24xf32>
    %1703 = vector.extract_strided_slice %1688 {offsets = [0, 3], sizes = [2, 1], strides = [1, 1]} : vector<2x6xf32> to vector<2x1xf32>
    %1704 = vector.broadcast %1703 : vector<2x1xf32> to vector<2x24xf32>
    %1705 = vector.broadcast %1406 : vector<1x24xf32> to vector<2x24xf32>
    %1706 = arith.mulf %1704, %1705 : vector<2x24xf32>
    %1707 = arith.addf %1702, %1706 : vector<2x24xf32>
    %1708 = vector.extract_strided_slice %1688 {offsets = [0, 4], sizes = [2, 1], strides = [1, 1]} : vector<2x6xf32> to vector<2x1xf32>
    %1709 = vector.broadcast %1708 : vector<2x1xf32> to vector<2x24xf32>
    %1710 = vector.broadcast %1407 : vector<1x24xf32> to vector<2x24xf32>
    %1711 = arith.mulf %1709, %1710 : vector<2x24xf32>
    %1712 = arith.addf %1707, %1711 : vector<2x24xf32>
    %1713 = vector.extract_strided_slice %1688 {offsets = [0, 5], sizes = [2, 1], strides = [1, 1]} : vector<2x6xf32> to vector<2x1xf32>
    %1714 = vector.broadcast %1713 : vector<2x1xf32> to vector<2x24xf32>
    %1715 = vector.broadcast %1408 : vector<1x24xf32> to vector<2x24xf32>
    %1716 = arith.mulf %1714, %1715 : vector<2x24xf32>
    %1717 = arith.addf %1712, %1716 : vector<2x24xf32>
    %1718 = vector.extract_strided_slice %1402 {offsets = [10, 0], sizes = [2, 24], strides = [1, 1]} : vector<16x24xf32> to vector<2x24xf32>
    %1719 = arith.addf %1718, %1717 : vector<2x24xf32>
    %1720 = vector.extract_strided_slice %1719 {offsets = [0, 0], sizes = [2, 6], strides = [1, 1]} : vector<2x24xf32> to vector<2x6xf32>
    %1721 = arith.negf %1720 : vector<2x6xf32>
    %1722 = math.exp %1721 : vector<2x6xf32>
    %cst_343 = arith.constant 1.000000e+00 : f32
    %1723 = vector.broadcast %cst_343 : f32 to vector<2x6xf32>
    %1724 = arith.addf %1723, %1722 : vector<2x6xf32>
    %1725 = arith.divf %1723, %1724 : vector<2x6xf32>
    %1726 = vector.extract_strided_slice %1719 {offsets = [0, 6], sizes = [2, 6], strides = [1, 1]} : vector<2x24xf32> to vector<2x6xf32>
    %1727 = arith.negf %1726 : vector<2x6xf32>
    %1728 = math.exp %1727 : vector<2x6xf32>
    %cst_344 = arith.constant 1.000000e+00 : f32
    %1729 = vector.broadcast %cst_344 : f32 to vector<2x6xf32>
    %1730 = arith.addf %1729, %1728 : vector<2x6xf32>
    %1731 = arith.divf %1729, %1730 : vector<2x6xf32>
    %1732 = vector.extract_strided_slice %1719 {offsets = [0, 12], sizes = [2, 6], strides = [1, 1]} : vector<2x24xf32> to vector<2x6xf32>
    %1733 = math.tanh %1732 : vector<2x6xf32>
    %1734 = vector.extract_strided_slice %1719 {offsets = [0, 18], sizes = [2, 6], strides = [1, 1]} : vector<2x24xf32> to vector<2x6xf32>
    %1735 = arith.negf %1734 : vector<2x6xf32>
    %1736 = math.exp %1735 : vector<2x6xf32>
    %cst_345 = arith.constant 1.000000e+00 : f32
    %1737 = vector.broadcast %cst_345 : f32 to vector<2x6xf32>
    %1738 = arith.addf %1737, %1736 : vector<2x6xf32>
    %1739 = arith.divf %1737, %1738 : vector<2x6xf32>
    %1740 = arith.mulf %1731, %1686 : vector<2x6xf32>
    %1741 = arith.mulf %1725, %1733 : vector<2x6xf32>
    %1742 = arith.addf %1740, %1741 : vector<2x6xf32>
    %1743 = math.tanh %1742 : vector<2x6xf32>
    %1744 = arith.mulf %1739, %1743 : vector<2x6xf32>
    %1745 = vector.extract_strided_slice %1744 {offsets = [0, 0], sizes = [2, 1], strides = [1, 1]} : vector<2x6xf32> to vector<2x1xf32>
    %1746 = vector.broadcast %1745 : vector<2x1xf32> to vector<2x24xf32>
    %1747 = vector.broadcast %1403 : vector<1x24xf32> to vector<2x24xf32>
    %1748 = arith.mulf %1746, %1747 : vector<2x24xf32>
    %1749 = vector.extract_strided_slice %1744 {offsets = [0, 1], sizes = [2, 1], strides = [1, 1]} : vector<2x6xf32> to vector<2x1xf32>
    %1750 = vector.broadcast %1749 : vector<2x1xf32> to vector<2x24xf32>
    %1751 = vector.broadcast %1404 : vector<1x24xf32> to vector<2x24xf32>
    %1752 = arith.mulf %1750, %1751 : vector<2x24xf32>
    %1753 = arith.addf %1748, %1752 : vector<2x24xf32>
    %1754 = vector.extract_strided_slice %1744 {offsets = [0, 2], sizes = [2, 1], strides = [1, 1]} : vector<2x6xf32> to vector<2x1xf32>
    %1755 = vector.broadcast %1754 : vector<2x1xf32> to vector<2x24xf32>
    %1756 = vector.broadcast %1405 : vector<1x24xf32> to vector<2x24xf32>
    %1757 = arith.mulf %1755, %1756 : vector<2x24xf32>
    %1758 = arith.addf %1753, %1757 : vector<2x24xf32>
    %1759 = vector.extract_strided_slice %1744 {offsets = [0, 3], sizes = [2, 1], strides = [1, 1]} : vector<2x6xf32> to vector<2x1xf32>
    %1760 = vector.broadcast %1759 : vector<2x1xf32> to vector<2x24xf32>
    %1761 = vector.broadcast %1406 : vector<1x24xf32> to vector<2x24xf32>
    %1762 = arith.mulf %1760, %1761 : vector<2x24xf32>
    %1763 = arith.addf %1758, %1762 : vector<2x24xf32>
    %1764 = vector.extract_strided_slice %1744 {offsets = [0, 4], sizes = [2, 1], strides = [1, 1]} : vector<2x6xf32> to vector<2x1xf32>
    %1765 = vector.broadcast %1764 : vector<2x1xf32> to vector<2x24xf32>
    %1766 = vector.broadcast %1407 : vector<1x24xf32> to vector<2x24xf32>
    %1767 = arith.mulf %1765, %1766 : vector<2x24xf32>
    %1768 = arith.addf %1763, %1767 : vector<2x24xf32>
    %1769 = vector.extract_strided_slice %1744 {offsets = [0, 5], sizes = [2, 1], strides = [1, 1]} : vector<2x6xf32> to vector<2x1xf32>
    %1770 = vector.broadcast %1769 : vector<2x1xf32> to vector<2x24xf32>
    %1771 = vector.broadcast %1408 : vector<1x24xf32> to vector<2x24xf32>
    %1772 = arith.mulf %1770, %1771 : vector<2x24xf32>
    %1773 = arith.addf %1768, %1772 : vector<2x24xf32>
    %1774 = vector.extract_strided_slice %1402 {offsets = [12, 0], sizes = [2, 24], strides = [1, 1]} : vector<16x24xf32> to vector<2x24xf32>
    %1775 = arith.addf %1774, %1773 : vector<2x24xf32>
    %1776 = vector.extract_strided_slice %1775 {offsets = [0, 0], sizes = [2, 6], strides = [1, 1]} : vector<2x24xf32> to vector<2x6xf32>
    %1777 = arith.negf %1776 : vector<2x6xf32>
    %1778 = math.exp %1777 : vector<2x6xf32>
    %cst_346 = arith.constant 1.000000e+00 : f32
    %1779 = vector.broadcast %cst_346 : f32 to vector<2x6xf32>
    %1780 = arith.addf %1779, %1778 : vector<2x6xf32>
    %1781 = arith.divf %1779, %1780 : vector<2x6xf32>
    %1782 = vector.extract_strided_slice %1775 {offsets = [0, 6], sizes = [2, 6], strides = [1, 1]} : vector<2x24xf32> to vector<2x6xf32>
    %1783 = arith.negf %1782 : vector<2x6xf32>
    %1784 = math.exp %1783 : vector<2x6xf32>
    %cst_347 = arith.constant 1.000000e+00 : f32
    %1785 = vector.broadcast %cst_347 : f32 to vector<2x6xf32>
    %1786 = arith.addf %1785, %1784 : vector<2x6xf32>
    %1787 = arith.divf %1785, %1786 : vector<2x6xf32>
    %1788 = vector.extract_strided_slice %1775 {offsets = [0, 12], sizes = [2, 6], strides = [1, 1]} : vector<2x24xf32> to vector<2x6xf32>
    %1789 = math.tanh %1788 : vector<2x6xf32>
    %1790 = vector.extract_strided_slice %1775 {offsets = [0, 18], sizes = [2, 6], strides = [1, 1]} : vector<2x24xf32> to vector<2x6xf32>
    %1791 = arith.negf %1790 : vector<2x6xf32>
    %1792 = math.exp %1791 : vector<2x6xf32>
    %cst_348 = arith.constant 1.000000e+00 : f32
    %1793 = vector.broadcast %cst_348 : f32 to vector<2x6xf32>
    %1794 = arith.addf %1793, %1792 : vector<2x6xf32>
    %1795 = arith.divf %1793, %1794 : vector<2x6xf32>
    %1796 = arith.mulf %1787, %1742 : vector<2x6xf32>
    %1797 = arith.mulf %1781, %1789 : vector<2x6xf32>
    %1798 = arith.addf %1796, %1797 : vector<2x6xf32>
    %1799 = math.tanh %1798 : vector<2x6xf32>
    %1800 = arith.mulf %1795, %1799 : vector<2x6xf32>
    %1801 = vector.extract_strided_slice %1800 {offsets = [0, 0], sizes = [2, 1], strides = [1, 1]} : vector<2x6xf32> to vector<2x1xf32>
    %1802 = vector.broadcast %1801 : vector<2x1xf32> to vector<2x24xf32>
    %1803 = vector.broadcast %1403 : vector<1x24xf32> to vector<2x24xf32>
    %1804 = arith.mulf %1802, %1803 : vector<2x24xf32>
    %1805 = vector.extract_strided_slice %1800 {offsets = [0, 1], sizes = [2, 1], strides = [1, 1]} : vector<2x6xf32> to vector<2x1xf32>
    %1806 = vector.broadcast %1805 : vector<2x1xf32> to vector<2x24xf32>
    %1807 = vector.broadcast %1404 : vector<1x24xf32> to vector<2x24xf32>
    %1808 = arith.mulf %1806, %1807 : vector<2x24xf32>
    %1809 = arith.addf %1804, %1808 : vector<2x24xf32>
    %1810 = vector.extract_strided_slice %1800 {offsets = [0, 2], sizes = [2, 1], strides = [1, 1]} : vector<2x6xf32> to vector<2x1xf32>
    %1811 = vector.broadcast %1810 : vector<2x1xf32> to vector<2x24xf32>
    %1812 = vector.broadcast %1405 : vector<1x24xf32> to vector<2x24xf32>
    %1813 = arith.mulf %1811, %1812 : vector<2x24xf32>
    %1814 = arith.addf %1809, %1813 : vector<2x24xf32>
    %1815 = vector.extract_strided_slice %1800 {offsets = [0, 3], sizes = [2, 1], strides = [1, 1]} : vector<2x6xf32> to vector<2x1xf32>
    %1816 = vector.broadcast %1815 : vector<2x1xf32> to vector<2x24xf32>
    %1817 = vector.broadcast %1406 : vector<1x24xf32> to vector<2x24xf32>
    %1818 = arith.mulf %1816, %1817 : vector<2x24xf32>
    %1819 = arith.addf %1814, %1818 : vector<2x24xf32>
    %1820 = vector.extract_strided_slice %1800 {offsets = [0, 4], sizes = [2, 1], strides = [1, 1]} : vector<2x6xf32> to vector<2x1xf32>
    %1821 = vector.broadcast %1820 : vector<2x1xf32> to vector<2x24xf32>
    %1822 = vector.broadcast %1407 : vector<1x24xf32> to vector<2x24xf32>
    %1823 = arith.mulf %1821, %1822 : vector<2x24xf32>
    %1824 = arith.addf %1819, %1823 : vector<2x24xf32>
    %1825 = vector.extract_strided_slice %1800 {offsets = [0, 5], sizes = [2, 1], strides = [1, 1]} : vector<2x6xf32> to vector<2x1xf32>
    %1826 = vector.broadcast %1825 : vector<2x1xf32> to vector<2x24xf32>
    %1827 = vector.broadcast %1408 : vector<1x24xf32> to vector<2x24xf32>
    %1828 = arith.mulf %1826, %1827 : vector<2x24xf32>
    %1829 = arith.addf %1824, %1828 : vector<2x24xf32>
    %1830 = vector.extract_strided_slice %1402 {offsets = [14, 0], sizes = [2, 24], strides = [1, 1]} : vector<16x24xf32> to vector<2x24xf32>
    %1831 = arith.addf %1830, %1829 : vector<2x24xf32>
    %1832 = vector.extract_strided_slice %1831 {offsets = [0, 0], sizes = [2, 6], strides = [1, 1]} : vector<2x24xf32> to vector<2x6xf32>
    %1833 = arith.negf %1832 : vector<2x6xf32>
    %1834 = math.exp %1833 : vector<2x6xf32>
    %cst_349 = arith.constant 1.000000e+00 : f32
    %1835 = vector.broadcast %cst_349 : f32 to vector<2x6xf32>
    %1836 = arith.addf %1835, %1834 : vector<2x6xf32>
    %1837 = arith.divf %1835, %1836 : vector<2x6xf32>
    %1838 = vector.extract_strided_slice %1831 {offsets = [0, 6], sizes = [2, 6], strides = [1, 1]} : vector<2x24xf32> to vector<2x6xf32>
    %1839 = arith.negf %1838 : vector<2x6xf32>
    %1840 = math.exp %1839 : vector<2x6xf32>
    %cst_350 = arith.constant 1.000000e+00 : f32
    %1841 = vector.broadcast %cst_350 : f32 to vector<2x6xf32>
    %1842 = arith.addf %1841, %1840 : vector<2x6xf32>
    %1843 = arith.divf %1841, %1842 : vector<2x6xf32>
    %1844 = vector.extract_strided_slice %1831 {offsets = [0, 12], sizes = [2, 6], strides = [1, 1]} : vector<2x24xf32> to vector<2x6xf32>
    %1845 = math.tanh %1844 : vector<2x6xf32>
    %1846 = vector.extract_strided_slice %1831 {offsets = [0, 18], sizes = [2, 6], strides = [1, 1]} : vector<2x24xf32> to vector<2x6xf32>
    %1847 = arith.negf %1846 : vector<2x6xf32>
    %1848 = math.exp %1847 : vector<2x6xf32>
    %cst_351 = arith.constant 1.000000e+00 : f32
    %1849 = vector.broadcast %cst_351 : f32 to vector<2x6xf32>
    %1850 = arith.addf %1849, %1848 : vector<2x6xf32>
    %1851 = arith.divf %1849, %1850 : vector<2x6xf32>
    %1852 = arith.mulf %1843, %1798 : vector<2x6xf32>
    %1853 = arith.mulf %1837, %1845 : vector<2x6xf32>
    %1854 = arith.addf %1852, %1853 : vector<2x6xf32>
    %1855 = math.tanh %1854 : vector<2x6xf32>
    %1856 = arith.mulf %1851, %1855 : vector<2x6xf32>
    %1857 = tpu.concatenate %1464, %1520, %1576, %1632, %1688, %1744, %1800, %1856 in 0 : vector<2x6xf32>, vector<2x6xf32>, vector<2x6xf32>, vector<2x6xf32>, vector<2x6xf32>, vector<2x6xf32>, vector<2x6xf32>, vector<2x6xf32> -> vector<16x6xf32>
    %c848 = arith.constant 848 : index
    %c0_352 = arith.constant 0 : index
    %1858 = vector.load %arg1[%c848, %c0_352] : memref<896x128xbf16, #tpu.memory_space<vmem>>, vector<6x24xbf16>
    %c352_353 = arith.constant 352 : index
    %c0_354 = arith.constant 0 : index
    %1859 = vector.load %arg2[%c352_353, %c0_354] : memref<392x128xf32, #tpu.memory_space<vmem>>, vector<6x24xf32>
    %c360 = arith.constant 360 : index
    %c0_355 = arith.constant 0 : index
    %1860 = vector.load %arg2[%c360, %c0_355] : memref<392x128xf32, #tpu.memory_space<vmem>>, vector<1x24xf32>
    %c48_356 = arith.constant 48 : index
    %c0_357 = arith.constant 0 : index
    %1861 = vector.load %arg3[%c48_356, %c0_357] : memref<64x12xf32, #tpu.memory_space<vmem>>, vector<2x6xf32>
    %c56_358 = arith.constant 56 : index
    %c0_359 = arith.constant 0 : index
    %1862 = vector.load %arg3[%c56_358, %c0_359] : memref<64x12xf32, #tpu.memory_space<vmem>>, vector<2x6xf32>
    %1863 = arith.truncf %1857 : vector<16x6xf32> to vector<16x6xbf16>
    %cst_360 = arith.constant dense<0.000000e+00> : vector<16x24xf32>
    %1864 = tpu.matmul %1863, %1858, %cst_360 {dimension_numbers = #tpu.dot_dimension_numbers<[1], [0], [0], [1], [0, 0, 1, 1], [], []>} : vector<16x6xbf16>, vector<6x24xbf16>, vector<16x24xf32> -> vector<16x24xf32>
    %1865 = vector.broadcast %1860 : vector<1x24xf32> to vector<16x24xf32>
    %1866 = arith.addf %1864, %1865 : vector<16x24xf32>
    %1867 = vector.extract_strided_slice %1859 {offsets = [0, 0], sizes = [1, 24], strides = [1, 1]} : vector<6x24xf32> to vector<1x24xf32>
    %1868 = vector.extract_strided_slice %1859 {offsets = [1, 0], sizes = [1, 24], strides = [1, 1]} : vector<6x24xf32> to vector<1x24xf32>
    %1869 = vector.extract_strided_slice %1859 {offsets = [2, 0], sizes = [1, 24], strides = [1, 1]} : vector<6x24xf32> to vector<1x24xf32>
    %1870 = vector.extract_strided_slice %1859 {offsets = [3, 0], sizes = [1, 24], strides = [1, 1]} : vector<6x24xf32> to vector<1x24xf32>
    %1871 = vector.extract_strided_slice %1859 {offsets = [4, 0], sizes = [1, 24], strides = [1, 1]} : vector<6x24xf32> to vector<1x24xf32>
    %1872 = vector.extract_strided_slice %1859 {offsets = [5, 0], sizes = [1, 24], strides = [1, 1]} : vector<6x24xf32> to vector<1x24xf32>
    %1873 = vector.extract_strided_slice %1861 {offsets = [0, 0], sizes = [2, 1], strides = [1, 1]} : vector<2x6xf32> to vector<2x1xf32>
    %1874 = vector.broadcast %1873 : vector<2x1xf32> to vector<2x24xf32>
    %1875 = vector.broadcast %1867 : vector<1x24xf32> to vector<2x24xf32>
    %1876 = arith.mulf %1874, %1875 : vector<2x24xf32>
    %1877 = vector.extract_strided_slice %1861 {offsets = [0, 1], sizes = [2, 1], strides = [1, 1]} : vector<2x6xf32> to vector<2x1xf32>
    %1878 = vector.broadcast %1877 : vector<2x1xf32> to vector<2x24xf32>
    %1879 = vector.broadcast %1868 : vector<1x24xf32> to vector<2x24xf32>
    %1880 = arith.mulf %1878, %1879 : vector<2x24xf32>
    %1881 = arith.addf %1876, %1880 : vector<2x24xf32>
    %1882 = vector.extract_strided_slice %1861 {offsets = [0, 2], sizes = [2, 1], strides = [1, 1]} : vector<2x6xf32> to vector<2x1xf32>
    %1883 = vector.broadcast %1882 : vector<2x1xf32> to vector<2x24xf32>
    %1884 = vector.broadcast %1869 : vector<1x24xf32> to vector<2x24xf32>
    %1885 = arith.mulf %1883, %1884 : vector<2x24xf32>
    %1886 = arith.addf %1881, %1885 : vector<2x24xf32>
    %1887 = vector.extract_strided_slice %1861 {offsets = [0, 3], sizes = [2, 1], strides = [1, 1]} : vector<2x6xf32> to vector<2x1xf32>
    %1888 = vector.broadcast %1887 : vector<2x1xf32> to vector<2x24xf32>
    %1889 = vector.broadcast %1870 : vector<1x24xf32> to vector<2x24xf32>
    %1890 = arith.mulf %1888, %1889 : vector<2x24xf32>
    %1891 = arith.addf %1886, %1890 : vector<2x24xf32>
    %1892 = vector.extract_strided_slice %1861 {offsets = [0, 4], sizes = [2, 1], strides = [1, 1]} : vector<2x6xf32> to vector<2x1xf32>
    %1893 = vector.broadcast %1892 : vector<2x1xf32> to vector<2x24xf32>
    %1894 = vector.broadcast %1871 : vector<1x24xf32> to vector<2x24xf32>
    %1895 = arith.mulf %1893, %1894 : vector<2x24xf32>
    %1896 = arith.addf %1891, %1895 : vector<2x24xf32>
    %1897 = vector.extract_strided_slice %1861 {offsets = [0, 5], sizes = [2, 1], strides = [1, 1]} : vector<2x6xf32> to vector<2x1xf32>
    %1898 = vector.broadcast %1897 : vector<2x1xf32> to vector<2x24xf32>
    %1899 = vector.broadcast %1872 : vector<1x24xf32> to vector<2x24xf32>
    %1900 = arith.mulf %1898, %1899 : vector<2x24xf32>
    %1901 = arith.addf %1896, %1900 : vector<2x24xf32>
    %1902 = vector.extract_strided_slice %1866 {offsets = [0, 0], sizes = [2, 24], strides = [1, 1]} : vector<16x24xf32> to vector<2x24xf32>
    %1903 = arith.addf %1902, %1901 : vector<2x24xf32>
    %1904 = vector.extract_strided_slice %1903 {offsets = [0, 0], sizes = [2, 6], strides = [1, 1]} : vector<2x24xf32> to vector<2x6xf32>
    %1905 = arith.negf %1904 : vector<2x6xf32>
    %1906 = math.exp %1905 : vector<2x6xf32>
    %cst_361 = arith.constant 1.000000e+00 : f32
    %1907 = vector.broadcast %cst_361 : f32 to vector<2x6xf32>
    %1908 = arith.addf %1907, %1906 : vector<2x6xf32>
    %1909 = arith.divf %1907, %1908 : vector<2x6xf32>
    %1910 = vector.extract_strided_slice %1903 {offsets = [0, 6], sizes = [2, 6], strides = [1, 1]} : vector<2x24xf32> to vector<2x6xf32>
    %1911 = arith.negf %1910 : vector<2x6xf32>
    %1912 = math.exp %1911 : vector<2x6xf32>
    %cst_362 = arith.constant 1.000000e+00 : f32
    %1913 = vector.broadcast %cst_362 : f32 to vector<2x6xf32>
    %1914 = arith.addf %1913, %1912 : vector<2x6xf32>
    %1915 = arith.divf %1913, %1914 : vector<2x6xf32>
    %1916 = vector.extract_strided_slice %1903 {offsets = [0, 12], sizes = [2, 6], strides = [1, 1]} : vector<2x24xf32> to vector<2x6xf32>
    %1917 = math.tanh %1916 : vector<2x6xf32>
    %1918 = vector.extract_strided_slice %1903 {offsets = [0, 18], sizes = [2, 6], strides = [1, 1]} : vector<2x24xf32> to vector<2x6xf32>
    %1919 = arith.negf %1918 : vector<2x6xf32>
    %1920 = math.exp %1919 : vector<2x6xf32>
    %cst_363 = arith.constant 1.000000e+00 : f32
    %1921 = vector.broadcast %cst_363 : f32 to vector<2x6xf32>
    %1922 = arith.addf %1921, %1920 : vector<2x6xf32>
    %1923 = arith.divf %1921, %1922 : vector<2x6xf32>
    %1924 = arith.mulf %1915, %1862 : vector<2x6xf32>
    %1925 = arith.mulf %1909, %1917 : vector<2x6xf32>
    %1926 = arith.addf %1924, %1925 : vector<2x6xf32>
    %1927 = math.tanh %1926 : vector<2x6xf32>
    %1928 = arith.mulf %1923, %1927 : vector<2x6xf32>
    %1929 = vector.extract_strided_slice %1928 {offsets = [0, 0], sizes = [2, 1], strides = [1, 1]} : vector<2x6xf32> to vector<2x1xf32>
    %1930 = vector.broadcast %1929 : vector<2x1xf32> to vector<2x24xf32>
    %1931 = vector.broadcast %1867 : vector<1x24xf32> to vector<2x24xf32>
    %1932 = arith.mulf %1930, %1931 : vector<2x24xf32>
    %1933 = vector.extract_strided_slice %1928 {offsets = [0, 1], sizes = [2, 1], strides = [1, 1]} : vector<2x6xf32> to vector<2x1xf32>
    %1934 = vector.broadcast %1933 : vector<2x1xf32> to vector<2x24xf32>
    %1935 = vector.broadcast %1868 : vector<1x24xf32> to vector<2x24xf32>
    %1936 = arith.mulf %1934, %1935 : vector<2x24xf32>
    %1937 = arith.addf %1932, %1936 : vector<2x24xf32>
    %1938 = vector.extract_strided_slice %1928 {offsets = [0, 2], sizes = [2, 1], strides = [1, 1]} : vector<2x6xf32> to vector<2x1xf32>
    %1939 = vector.broadcast %1938 : vector<2x1xf32> to vector<2x24xf32>
    %1940 = vector.broadcast %1869 : vector<1x24xf32> to vector<2x24xf32>
    %1941 = arith.mulf %1939, %1940 : vector<2x24xf32>
    %1942 = arith.addf %1937, %1941 : vector<2x24xf32>
    %1943 = vector.extract_strided_slice %1928 {offsets = [0, 3], sizes = [2, 1], strides = [1, 1]} : vector<2x6xf32> to vector<2x1xf32>
    %1944 = vector.broadcast %1943 : vector<2x1xf32> to vector<2x24xf32>
    %1945 = vector.broadcast %1870 : vector<1x24xf32> to vector<2x24xf32>
    %1946 = arith.mulf %1944, %1945 : vector<2x24xf32>
    %1947 = arith.addf %1942, %1946 : vector<2x24xf32>
    %1948 = vector.extract_strided_slice %1928 {offsets = [0, 4], sizes = [2, 1], strides = [1, 1]} : vector<2x6xf32> to vector<2x1xf32>
    %1949 = vector.broadcast %1948 : vector<2x1xf32> to vector<2x24xf32>
    %1950 = vector.broadcast %1871 : vector<1x24xf32> to vector<2x24xf32>
    %1951 = arith.mulf %1949, %1950 : vector<2x24xf32>
    %1952 = arith.addf %1947, %1951 : vector<2x24xf32>
    %1953 = vector.extract_strided_slice %1928 {offsets = [0, 5], sizes = [2, 1], strides = [1, 1]} : vector<2x6xf32> to vector<2x1xf32>
    %1954 = vector.broadcast %1953 : vector<2x1xf32> to vector<2x24xf32>
    %1955 = vector.broadcast %1872 : vector<1x24xf32> to vector<2x24xf32>
    %1956 = arith.mulf %1954, %1955 : vector<2x24xf32>
    %1957 = arith.addf %1952, %1956 : vector<2x24xf32>
    %1958 = vector.extract_strided_slice %1866 {offsets = [2, 0], sizes = [2, 24], strides = [1, 1]} : vector<16x24xf32> to vector<2x24xf32>
    %1959 = arith.addf %1958, %1957 : vector<2x24xf32>
    %1960 = vector.extract_strided_slice %1959 {offsets = [0, 0], sizes = [2, 6], strides = [1, 1]} : vector<2x24xf32> to vector<2x6xf32>
    %1961 = arith.negf %1960 : vector<2x6xf32>
    %1962 = math.exp %1961 : vector<2x6xf32>
    %cst_364 = arith.constant 1.000000e+00 : f32
    %1963 = vector.broadcast %cst_364 : f32 to vector<2x6xf32>
    %1964 = arith.addf %1963, %1962 : vector<2x6xf32>
    %1965 = arith.divf %1963, %1964 : vector<2x6xf32>
    %1966 = vector.extract_strided_slice %1959 {offsets = [0, 6], sizes = [2, 6], strides = [1, 1]} : vector<2x24xf32> to vector<2x6xf32>
    %1967 = arith.negf %1966 : vector<2x6xf32>
    %1968 = math.exp %1967 : vector<2x6xf32>
    %cst_365 = arith.constant 1.000000e+00 : f32
    %1969 = vector.broadcast %cst_365 : f32 to vector<2x6xf32>
    %1970 = arith.addf %1969, %1968 : vector<2x6xf32>
    %1971 = arith.divf %1969, %1970 : vector<2x6xf32>
    %1972 = vector.extract_strided_slice %1959 {offsets = [0, 12], sizes = [2, 6], strides = [1, 1]} : vector<2x24xf32> to vector<2x6xf32>
    %1973 = math.tanh %1972 : vector<2x6xf32>
    %1974 = vector.extract_strided_slice %1959 {offsets = [0, 18], sizes = [2, 6], strides = [1, 1]} : vector<2x24xf32> to vector<2x6xf32>
    %1975 = arith.negf %1974 : vector<2x6xf32>
    %1976 = math.exp %1975 : vector<2x6xf32>
    %cst_366 = arith.constant 1.000000e+00 : f32
    %1977 = vector.broadcast %cst_366 : f32 to vector<2x6xf32>
    %1978 = arith.addf %1977, %1976 : vector<2x6xf32>
    %1979 = arith.divf %1977, %1978 : vector<2x6xf32>
    %1980 = arith.mulf %1971, %1926 : vector<2x6xf32>
    %1981 = arith.mulf %1965, %1973 : vector<2x6xf32>
    %1982 = arith.addf %1980, %1981 : vector<2x6xf32>
    %1983 = math.tanh %1982 : vector<2x6xf32>
    %1984 = arith.mulf %1979, %1983 : vector<2x6xf32>
    %1985 = vector.extract_strided_slice %1984 {offsets = [0, 0], sizes = [2, 1], strides = [1, 1]} : vector<2x6xf32> to vector<2x1xf32>
    %1986 = vector.broadcast %1985 : vector<2x1xf32> to vector<2x24xf32>
    %1987 = vector.broadcast %1867 : vector<1x24xf32> to vector<2x24xf32>
    %1988 = arith.mulf %1986, %1987 : vector<2x24xf32>
    %1989 = vector.extract_strided_slice %1984 {offsets = [0, 1], sizes = [2, 1], strides = [1, 1]} : vector<2x6xf32> to vector<2x1xf32>
    %1990 = vector.broadcast %1989 : vector<2x1xf32> to vector<2x24xf32>
    %1991 = vector.broadcast %1868 : vector<1x24xf32> to vector<2x24xf32>
    %1992 = arith.mulf %1990, %1991 : vector<2x24xf32>
    %1993 = arith.addf %1988, %1992 : vector<2x24xf32>
    %1994 = vector.extract_strided_slice %1984 {offsets = [0, 2], sizes = [2, 1], strides = [1, 1]} : vector<2x6xf32> to vector<2x1xf32>
    %1995 = vector.broadcast %1994 : vector<2x1xf32> to vector<2x24xf32>
    %1996 = vector.broadcast %1869 : vector<1x24xf32> to vector<2x24xf32>
    %1997 = arith.mulf %1995, %1996 : vector<2x24xf32>
    %1998 = arith.addf %1993, %1997 : vector<2x24xf32>
    %1999 = vector.extract_strided_slice %1984 {offsets = [0, 3], sizes = [2, 1], strides = [1, 1]} : vector<2x6xf32> to vector<2x1xf32>
    %2000 = vector.broadcast %1999 : vector<2x1xf32> to vector<2x24xf32>
    %2001 = vector.broadcast %1870 : vector<1x24xf32> to vector<2x24xf32>
    %2002 = arith.mulf %2000, %2001 : vector<2x24xf32>
    %2003 = arith.addf %1998, %2002 : vector<2x24xf32>
    %2004 = vector.extract_strided_slice %1984 {offsets = [0, 4], sizes = [2, 1], strides = [1, 1]} : vector<2x6xf32> to vector<2x1xf32>
    %2005 = vector.broadcast %2004 : vector<2x1xf32> to vector<2x24xf32>
    %2006 = vector.broadcast %1871 : vector<1x24xf32> to vector<2x24xf32>
    %2007 = arith.mulf %2005, %2006 : vector<2x24xf32>
    %2008 = arith.addf %2003, %2007 : vector<2x24xf32>
    %2009 = vector.extract_strided_slice %1984 {offsets = [0, 5], sizes = [2, 1], strides = [1, 1]} : vector<2x6xf32> to vector<2x1xf32>
    %2010 = vector.broadcast %2009 : vector<2x1xf32> to vector<2x24xf32>
    %2011 = vector.broadcast %1872 : vector<1x24xf32> to vector<2x24xf32>
    %2012 = arith.mulf %2010, %2011 : vector<2x24xf32>
    %2013 = arith.addf %2008, %2012 : vector<2x24xf32>
    %2014 = vector.extract_strided_slice %1866 {offsets = [4, 0], sizes = [2, 24], strides = [1, 1]} : vector<16x24xf32> to vector<2x24xf32>
    %2015 = arith.addf %2014, %2013 : vector<2x24xf32>
    %2016 = vector.extract_strided_slice %2015 {offsets = [0, 0], sizes = [2, 6], strides = [1, 1]} : vector<2x24xf32> to vector<2x6xf32>
    %2017 = arith.negf %2016 : vector<2x6xf32>
    %2018 = math.exp %2017 : vector<2x6xf32>
    %cst_367 = arith.constant 1.000000e+00 : f32
    %2019 = vector.broadcast %cst_367 : f32 to vector<2x6xf32>
    %2020 = arith.addf %2019, %2018 : vector<2x6xf32>
    %2021 = arith.divf %2019, %2020 : vector<2x6xf32>
    %2022 = vector.extract_strided_slice %2015 {offsets = [0, 6], sizes = [2, 6], strides = [1, 1]} : vector<2x24xf32> to vector<2x6xf32>
    %2023 = arith.negf %2022 : vector<2x6xf32>
    %2024 = math.exp %2023 : vector<2x6xf32>
    %cst_368 = arith.constant 1.000000e+00 : f32
    %2025 = vector.broadcast %cst_368 : f32 to vector<2x6xf32>
    %2026 = arith.addf %2025, %2024 : vector<2x6xf32>
    %2027 = arith.divf %2025, %2026 : vector<2x6xf32>
    %2028 = vector.extract_strided_slice %2015 {offsets = [0, 12], sizes = [2, 6], strides = [1, 1]} : vector<2x24xf32> to vector<2x6xf32>
    %2029 = math.tanh %2028 : vector<2x6xf32>
    %2030 = vector.extract_strided_slice %2015 {offsets = [0, 18], sizes = [2, 6], strides = [1, 1]} : vector<2x24xf32> to vector<2x6xf32>
    %2031 = arith.negf %2030 : vector<2x6xf32>
    %2032 = math.exp %2031 : vector<2x6xf32>
    %cst_369 = arith.constant 1.000000e+00 : f32
    %2033 = vector.broadcast %cst_369 : f32 to vector<2x6xf32>
    %2034 = arith.addf %2033, %2032 : vector<2x6xf32>
    %2035 = arith.divf %2033, %2034 : vector<2x6xf32>
    %2036 = arith.mulf %2027, %1982 : vector<2x6xf32>
    %2037 = arith.mulf %2021, %2029 : vector<2x6xf32>
    %2038 = arith.addf %2036, %2037 : vector<2x6xf32>
    %2039 = math.tanh %2038 : vector<2x6xf32>
    %2040 = arith.mulf %2035, %2039 : vector<2x6xf32>
    %2041 = vector.extract_strided_slice %2040 {offsets = [0, 0], sizes = [2, 1], strides = [1, 1]} : vector<2x6xf32> to vector<2x1xf32>
    %2042 = vector.broadcast %2041 : vector<2x1xf32> to vector<2x24xf32>
    %2043 = vector.broadcast %1867 : vector<1x24xf32> to vector<2x24xf32>
    %2044 = arith.mulf %2042, %2043 : vector<2x24xf32>
    %2045 = vector.extract_strided_slice %2040 {offsets = [0, 1], sizes = [2, 1], strides = [1, 1]} : vector<2x6xf32> to vector<2x1xf32>
    %2046 = vector.broadcast %2045 : vector<2x1xf32> to vector<2x24xf32>
    %2047 = vector.broadcast %1868 : vector<1x24xf32> to vector<2x24xf32>
    %2048 = arith.mulf %2046, %2047 : vector<2x24xf32>
    %2049 = arith.addf %2044, %2048 : vector<2x24xf32>
    %2050 = vector.extract_strided_slice %2040 {offsets = [0, 2], sizes = [2, 1], strides = [1, 1]} : vector<2x6xf32> to vector<2x1xf32>
    %2051 = vector.broadcast %2050 : vector<2x1xf32> to vector<2x24xf32>
    %2052 = vector.broadcast %1869 : vector<1x24xf32> to vector<2x24xf32>
    %2053 = arith.mulf %2051, %2052 : vector<2x24xf32>
    %2054 = arith.addf %2049, %2053 : vector<2x24xf32>
    %2055 = vector.extract_strided_slice %2040 {offsets = [0, 3], sizes = [2, 1], strides = [1, 1]} : vector<2x6xf32> to vector<2x1xf32>
    %2056 = vector.broadcast %2055 : vector<2x1xf32> to vector<2x24xf32>
    %2057 = vector.broadcast %1870 : vector<1x24xf32> to vector<2x24xf32>
    %2058 = arith.mulf %2056, %2057 : vector<2x24xf32>
    %2059 = arith.addf %2054, %2058 : vector<2x24xf32>
    %2060 = vector.extract_strided_slice %2040 {offsets = [0, 4], sizes = [2, 1], strides = [1, 1]} : vector<2x6xf32> to vector<2x1xf32>
    %2061 = vector.broadcast %2060 : vector<2x1xf32> to vector<2x24xf32>
    %2062 = vector.broadcast %1871 : vector<1x24xf32> to vector<2x24xf32>
    %2063 = arith.mulf %2061, %2062 : vector<2x24xf32>
    %2064 = arith.addf %2059, %2063 : vector<2x24xf32>
    %2065 = vector.extract_strided_slice %2040 {offsets = [0, 5], sizes = [2, 1], strides = [1, 1]} : vector<2x6xf32> to vector<2x1xf32>
    %2066 = vector.broadcast %2065 : vector<2x1xf32> to vector<2x24xf32>
    %2067 = vector.broadcast %1872 : vector<1x24xf32> to vector<2x24xf32>
    %2068 = arith.mulf %2066, %2067 : vector<2x24xf32>
    %2069 = arith.addf %2064, %2068 : vector<2x24xf32>
    %2070 = vector.extract_strided_slice %1866 {offsets = [6, 0], sizes = [2, 24], strides = [1, 1]} : vector<16x24xf32> to vector<2x24xf32>
    %2071 = arith.addf %2070, %2069 : vector<2x24xf32>
    %2072 = vector.extract_strided_slice %2071 {offsets = [0, 0], sizes = [2, 6], strides = [1, 1]} : vector<2x24xf32> to vector<2x6xf32>
    %2073 = arith.negf %2072 : vector<2x6xf32>
    %2074 = math.exp %2073 : vector<2x6xf32>
    %cst_370 = arith.constant 1.000000e+00 : f32
    %2075 = vector.broadcast %cst_370 : f32 to vector<2x6xf32>
    %2076 = arith.addf %2075, %2074 : vector<2x6xf32>
    %2077 = arith.divf %2075, %2076 : vector<2x6xf32>
    %2078 = vector.extract_strided_slice %2071 {offsets = [0, 6], sizes = [2, 6], strides = [1, 1]} : vector<2x24xf32> to vector<2x6xf32>
    %2079 = arith.negf %2078 : vector<2x6xf32>
    %2080 = math.exp %2079 : vector<2x6xf32>
    %cst_371 = arith.constant 1.000000e+00 : f32
    %2081 = vector.broadcast %cst_371 : f32 to vector<2x6xf32>
    %2082 = arith.addf %2081, %2080 : vector<2x6xf32>
    %2083 = arith.divf %2081, %2082 : vector<2x6xf32>
    %2084 = vector.extract_strided_slice %2071 {offsets = [0, 12], sizes = [2, 6], strides = [1, 1]} : vector<2x24xf32> to vector<2x6xf32>
    %2085 = math.tanh %2084 : vector<2x6xf32>
    %2086 = vector.extract_strided_slice %2071 {offsets = [0, 18], sizes = [2, 6], strides = [1, 1]} : vector<2x24xf32> to vector<2x6xf32>
    %2087 = arith.negf %2086 : vector<2x6xf32>
    %2088 = math.exp %2087 : vector<2x6xf32>
    %cst_372 = arith.constant 1.000000e+00 : f32
    %2089 = vector.broadcast %cst_372 : f32 to vector<2x6xf32>
    %2090 = arith.addf %2089, %2088 : vector<2x6xf32>
    %2091 = arith.divf %2089, %2090 : vector<2x6xf32>
    %2092 = arith.mulf %2083, %2038 : vector<2x6xf32>
    %2093 = arith.mulf %2077, %2085 : vector<2x6xf32>
    %2094 = arith.addf %2092, %2093 : vector<2x6xf32>
    %2095 = math.tanh %2094 : vector<2x6xf32>
    %2096 = arith.mulf %2091, %2095 : vector<2x6xf32>
    %2097 = vector.extract_strided_slice %2096 {offsets = [0, 0], sizes = [2, 1], strides = [1, 1]} : vector<2x6xf32> to vector<2x1xf32>
    %2098 = vector.broadcast %2097 : vector<2x1xf32> to vector<2x24xf32>
    %2099 = vector.broadcast %1867 : vector<1x24xf32> to vector<2x24xf32>
    %2100 = arith.mulf %2098, %2099 : vector<2x24xf32>
    %2101 = vector.extract_strided_slice %2096 {offsets = [0, 1], sizes = [2, 1], strides = [1, 1]} : vector<2x6xf32> to vector<2x1xf32>
    %2102 = vector.broadcast %2101 : vector<2x1xf32> to vector<2x24xf32>
    %2103 = vector.broadcast %1868 : vector<1x24xf32> to vector<2x24xf32>
    %2104 = arith.mulf %2102, %2103 : vector<2x24xf32>
    %2105 = arith.addf %2100, %2104 : vector<2x24xf32>
    %2106 = vector.extract_strided_slice %2096 {offsets = [0, 2], sizes = [2, 1], strides = [1, 1]} : vector<2x6xf32> to vector<2x1xf32>
    %2107 = vector.broadcast %2106 : vector<2x1xf32> to vector<2x24xf32>
    %2108 = vector.broadcast %1869 : vector<1x24xf32> to vector<2x24xf32>
    %2109 = arith.mulf %2107, %2108 : vector<2x24xf32>
    %2110 = arith.addf %2105, %2109 : vector<2x24xf32>
    %2111 = vector.extract_strided_slice %2096 {offsets = [0, 3], sizes = [2, 1], strides = [1, 1]} : vector<2x6xf32> to vector<2x1xf32>
    %2112 = vector.broadcast %2111 : vector<2x1xf32> to vector<2x24xf32>
    %2113 = vector.broadcast %1870 : vector<1x24xf32> to vector<2x24xf32>
    %2114 = arith.mulf %2112, %2113 : vector<2x24xf32>
    %2115 = arith.addf %2110, %2114 : vector<2x24xf32>
    %2116 = vector.extract_strided_slice %2096 {offsets = [0, 4], sizes = [2, 1], strides = [1, 1]} : vector<2x6xf32> to vector<2x1xf32>
    %2117 = vector.broadcast %2116 : vector<2x1xf32> to vector<2x24xf32>
    %2118 = vector.broadcast %1871 : vector<1x24xf32> to vector<2x24xf32>
    %2119 = arith.mulf %2117, %2118 : vector<2x24xf32>
    %2120 = arith.addf %2115, %2119 : vector<2x24xf32>
    %2121 = vector.extract_strided_slice %2096 {offsets = [0, 5], sizes = [2, 1], strides = [1, 1]} : vector<2x6xf32> to vector<2x1xf32>
    %2122 = vector.broadcast %2121 : vector<2x1xf32> to vector<2x24xf32>
    %2123 = vector.broadcast %1872 : vector<1x24xf32> to vector<2x24xf32>
    %2124 = arith.mulf %2122, %2123 : vector<2x24xf32>
    %2125 = arith.addf %2120, %2124 : vector<2x24xf32>
    %2126 = vector.extract_strided_slice %1866 {offsets = [8, 0], sizes = [2, 24], strides = [1, 1]} : vector<16x24xf32> to vector<2x24xf32>
    %2127 = arith.addf %2126, %2125 : vector<2x24xf32>
    %2128 = vector.extract_strided_slice %2127 {offsets = [0, 0], sizes = [2, 6], strides = [1, 1]} : vector<2x24xf32> to vector<2x6xf32>
    %2129 = arith.negf %2128 : vector<2x6xf32>
    %2130 = math.exp %2129 : vector<2x6xf32>
    %cst_373 = arith.constant 1.000000e+00 : f32
    %2131 = vector.broadcast %cst_373 : f32 to vector<2x6xf32>
    %2132 = arith.addf %2131, %2130 : vector<2x6xf32>
    %2133 = arith.divf %2131, %2132 : vector<2x6xf32>
    %2134 = vector.extract_strided_slice %2127 {offsets = [0, 6], sizes = [2, 6], strides = [1, 1]} : vector<2x24xf32> to vector<2x6xf32>
    %2135 = arith.negf %2134 : vector<2x6xf32>
    %2136 = math.exp %2135 : vector<2x6xf32>
    %cst_374 = arith.constant 1.000000e+00 : f32
    %2137 = vector.broadcast %cst_374 : f32 to vector<2x6xf32>
    %2138 = arith.addf %2137, %2136 : vector<2x6xf32>
    %2139 = arith.divf %2137, %2138 : vector<2x6xf32>
    %2140 = vector.extract_strided_slice %2127 {offsets = [0, 12], sizes = [2, 6], strides = [1, 1]} : vector<2x24xf32> to vector<2x6xf32>
    %2141 = math.tanh %2140 : vector<2x6xf32>
    %2142 = vector.extract_strided_slice %2127 {offsets = [0, 18], sizes = [2, 6], strides = [1, 1]} : vector<2x24xf32> to vector<2x6xf32>
    %2143 = arith.negf %2142 : vector<2x6xf32>
    %2144 = math.exp %2143 : vector<2x6xf32>
    %cst_375 = arith.constant 1.000000e+00 : f32
    %2145 = vector.broadcast %cst_375 : f32 to vector<2x6xf32>
    %2146 = arith.addf %2145, %2144 : vector<2x6xf32>
    %2147 = arith.divf %2145, %2146 : vector<2x6xf32>
    %2148 = arith.mulf %2139, %2094 : vector<2x6xf32>
    %2149 = arith.mulf %2133, %2141 : vector<2x6xf32>
    %2150 = arith.addf %2148, %2149 : vector<2x6xf32>
    %2151 = math.tanh %2150 : vector<2x6xf32>
    %2152 = arith.mulf %2147, %2151 : vector<2x6xf32>
    %2153 = vector.extract_strided_slice %2152 {offsets = [0, 0], sizes = [2, 1], strides = [1, 1]} : vector<2x6xf32> to vector<2x1xf32>
    %2154 = vector.broadcast %2153 : vector<2x1xf32> to vector<2x24xf32>
    %2155 = vector.broadcast %1867 : vector<1x24xf32> to vector<2x24xf32>
    %2156 = arith.mulf %2154, %2155 : vector<2x24xf32>
    %2157 = vector.extract_strided_slice %2152 {offsets = [0, 1], sizes = [2, 1], strides = [1, 1]} : vector<2x6xf32> to vector<2x1xf32>
    %2158 = vector.broadcast %2157 : vector<2x1xf32> to vector<2x24xf32>
    %2159 = vector.broadcast %1868 : vector<1x24xf32> to vector<2x24xf32>
    %2160 = arith.mulf %2158, %2159 : vector<2x24xf32>
    %2161 = arith.addf %2156, %2160 : vector<2x24xf32>
    %2162 = vector.extract_strided_slice %2152 {offsets = [0, 2], sizes = [2, 1], strides = [1, 1]} : vector<2x6xf32> to vector<2x1xf32>
    %2163 = vector.broadcast %2162 : vector<2x1xf32> to vector<2x24xf32>
    %2164 = vector.broadcast %1869 : vector<1x24xf32> to vector<2x24xf32>
    %2165 = arith.mulf %2163, %2164 : vector<2x24xf32>
    %2166 = arith.addf %2161, %2165 : vector<2x24xf32>
    %2167 = vector.extract_strided_slice %2152 {offsets = [0, 3], sizes = [2, 1], strides = [1, 1]} : vector<2x6xf32> to vector<2x1xf32>
    %2168 = vector.broadcast %2167 : vector<2x1xf32> to vector<2x24xf32>
    %2169 = vector.broadcast %1870 : vector<1x24xf32> to vector<2x24xf32>
    %2170 = arith.mulf %2168, %2169 : vector<2x24xf32>
    %2171 = arith.addf %2166, %2170 : vector<2x24xf32>
    %2172 = vector.extract_strided_slice %2152 {offsets = [0, 4], sizes = [2, 1], strides = [1, 1]} : vector<2x6xf32> to vector<2x1xf32>
    %2173 = vector.broadcast %2172 : vector<2x1xf32> to vector<2x24xf32>
    %2174 = vector.broadcast %1871 : vector<1x24xf32> to vector<2x24xf32>
    %2175 = arith.mulf %2173, %2174 : vector<2x24xf32>
    %2176 = arith.addf %2171, %2175 : vector<2x24xf32>
    %2177 = vector.extract_strided_slice %2152 {offsets = [0, 5], sizes = [2, 1], strides = [1, 1]} : vector<2x6xf32> to vector<2x1xf32>
    %2178 = vector.broadcast %2177 : vector<2x1xf32> to vector<2x24xf32>
    %2179 = vector.broadcast %1872 : vector<1x24xf32> to vector<2x24xf32>
    %2180 = arith.mulf %2178, %2179 : vector<2x24xf32>
    %2181 = arith.addf %2176, %2180 : vector<2x24xf32>
    %2182 = vector.extract_strided_slice %1866 {offsets = [10, 0], sizes = [2, 24], strides = [1, 1]} : vector<16x24xf32> to vector<2x24xf32>
    %2183 = arith.addf %2182, %2181 : vector<2x24xf32>
    %2184 = vector.extract_strided_slice %2183 {offsets = [0, 0], sizes = [2, 6], strides = [1, 1]} : vector<2x24xf32> to vector<2x6xf32>
    %2185 = arith.negf %2184 : vector<2x6xf32>
    %2186 = math.exp %2185 : vector<2x6xf32>
    %cst_376 = arith.constant 1.000000e+00 : f32
    %2187 = vector.broadcast %cst_376 : f32 to vector<2x6xf32>
    %2188 = arith.addf %2187, %2186 : vector<2x6xf32>
    %2189 = arith.divf %2187, %2188 : vector<2x6xf32>
    %2190 = vector.extract_strided_slice %2183 {offsets = [0, 6], sizes = [2, 6], strides = [1, 1]} : vector<2x24xf32> to vector<2x6xf32>
    %2191 = arith.negf %2190 : vector<2x6xf32>
    %2192 = math.exp %2191 : vector<2x6xf32>
    %cst_377 = arith.constant 1.000000e+00 : f32
    %2193 = vector.broadcast %cst_377 : f32 to vector<2x6xf32>
    %2194 = arith.addf %2193, %2192 : vector<2x6xf32>
    %2195 = arith.divf %2193, %2194 : vector<2x6xf32>
    %2196 = vector.extract_strided_slice %2183 {offsets = [0, 12], sizes = [2, 6], strides = [1, 1]} : vector<2x24xf32> to vector<2x6xf32>
    %2197 = math.tanh %2196 : vector<2x6xf32>
    %2198 = vector.extract_strided_slice %2183 {offsets = [0, 18], sizes = [2, 6], strides = [1, 1]} : vector<2x24xf32> to vector<2x6xf32>
    %2199 = arith.negf %2198 : vector<2x6xf32>
    %2200 = math.exp %2199 : vector<2x6xf32>
    %cst_378 = arith.constant 1.000000e+00 : f32
    %2201 = vector.broadcast %cst_378 : f32 to vector<2x6xf32>
    %2202 = arith.addf %2201, %2200 : vector<2x6xf32>
    %2203 = arith.divf %2201, %2202 : vector<2x6xf32>
    %2204 = arith.mulf %2195, %2150 : vector<2x6xf32>
    %2205 = arith.mulf %2189, %2197 : vector<2x6xf32>
    %2206 = arith.addf %2204, %2205 : vector<2x6xf32>
    %2207 = math.tanh %2206 : vector<2x6xf32>
    %2208 = arith.mulf %2203, %2207 : vector<2x6xf32>
    %2209 = vector.extract_strided_slice %2208 {offsets = [0, 0], sizes = [2, 1], strides = [1, 1]} : vector<2x6xf32> to vector<2x1xf32>
    %2210 = vector.broadcast %2209 : vector<2x1xf32> to vector<2x24xf32>
    %2211 = vector.broadcast %1867 : vector<1x24xf32> to vector<2x24xf32>
    %2212 = arith.mulf %2210, %2211 : vector<2x24xf32>
    %2213 = vector.extract_strided_slice %2208 {offsets = [0, 1], sizes = [2, 1], strides = [1, 1]} : vector<2x6xf32> to vector<2x1xf32>
    %2214 = vector.broadcast %2213 : vector<2x1xf32> to vector<2x24xf32>
    %2215 = vector.broadcast %1868 : vector<1x24xf32> to vector<2x24xf32>
    %2216 = arith.mulf %2214, %2215 : vector<2x24xf32>
    %2217 = arith.addf %2212, %2216 : vector<2x24xf32>
    %2218 = vector.extract_strided_slice %2208 {offsets = [0, 2], sizes = [2, 1], strides = [1, 1]} : vector<2x6xf32> to vector<2x1xf32>
    %2219 = vector.broadcast %2218 : vector<2x1xf32> to vector<2x24xf32>
    %2220 = vector.broadcast %1869 : vector<1x24xf32> to vector<2x24xf32>
    %2221 = arith.mulf %2219, %2220 : vector<2x24xf32>
    %2222 = arith.addf %2217, %2221 : vector<2x24xf32>
    %2223 = vector.extract_strided_slice %2208 {offsets = [0, 3], sizes = [2, 1], strides = [1, 1]} : vector<2x6xf32> to vector<2x1xf32>
    %2224 = vector.broadcast %2223 : vector<2x1xf32> to vector<2x24xf32>
    %2225 = vector.broadcast %1870 : vector<1x24xf32> to vector<2x24xf32>
    %2226 = arith.mulf %2224, %2225 : vector<2x24xf32>
    %2227 = arith.addf %2222, %2226 : vector<2x24xf32>
    %2228 = vector.extract_strided_slice %2208 {offsets = [0, 4], sizes = [2, 1], strides = [1, 1]} : vector<2x6xf32> to vector<2x1xf32>
    %2229 = vector.broadcast %2228 : vector<2x1xf32> to vector<2x24xf32>
    %2230 = vector.broadcast %1871 : vector<1x24xf32> to vector<2x24xf32>
    %2231 = arith.mulf %2229, %2230 : vector<2x24xf32>
    %2232 = arith.addf %2227, %2231 : vector<2x24xf32>
    %2233 = vector.extract_strided_slice %2208 {offsets = [0, 5], sizes = [2, 1], strides = [1, 1]} : vector<2x6xf32> to vector<2x1xf32>
    %2234 = vector.broadcast %2233 : vector<2x1xf32> to vector<2x24xf32>
    %2235 = vector.broadcast %1872 : vector<1x24xf32> to vector<2x24xf32>
    %2236 = arith.mulf %2234, %2235 : vector<2x24xf32>
    %2237 = arith.addf %2232, %2236 : vector<2x24xf32>
    %2238 = vector.extract_strided_slice %1866 {offsets = [12, 0], sizes = [2, 24], strides = [1, 1]} : vector<16x24xf32> to vector<2x24xf32>
    %2239 = arith.addf %2238, %2237 : vector<2x24xf32>
    %2240 = vector.extract_strided_slice %2239 {offsets = [0, 0], sizes = [2, 6], strides = [1, 1]} : vector<2x24xf32> to vector<2x6xf32>
    %2241 = arith.negf %2240 : vector<2x6xf32>
    %2242 = math.exp %2241 : vector<2x6xf32>
    %cst_379 = arith.constant 1.000000e+00 : f32
    %2243 = vector.broadcast %cst_379 : f32 to vector<2x6xf32>
    %2244 = arith.addf %2243, %2242 : vector<2x6xf32>
    %2245 = arith.divf %2243, %2244 : vector<2x6xf32>
    %2246 = vector.extract_strided_slice %2239 {offsets = [0, 6], sizes = [2, 6], strides = [1, 1]} : vector<2x24xf32> to vector<2x6xf32>
    %2247 = arith.negf %2246 : vector<2x6xf32>
    %2248 = math.exp %2247 : vector<2x6xf32>
    %cst_380 = arith.constant 1.000000e+00 : f32
    %2249 = vector.broadcast %cst_380 : f32 to vector<2x6xf32>
    %2250 = arith.addf %2249, %2248 : vector<2x6xf32>
    %2251 = arith.divf %2249, %2250 : vector<2x6xf32>
    %2252 = vector.extract_strided_slice %2239 {offsets = [0, 12], sizes = [2, 6], strides = [1, 1]} : vector<2x24xf32> to vector<2x6xf32>
    %2253 = math.tanh %2252 : vector<2x6xf32>
    %2254 = vector.extract_strided_slice %2239 {offsets = [0, 18], sizes = [2, 6], strides = [1, 1]} : vector<2x24xf32> to vector<2x6xf32>
    %2255 = arith.negf %2254 : vector<2x6xf32>
    %2256 = math.exp %2255 : vector<2x6xf32>
    %cst_381 = arith.constant 1.000000e+00 : f32
    %2257 = vector.broadcast %cst_381 : f32 to vector<2x6xf32>
    %2258 = arith.addf %2257, %2256 : vector<2x6xf32>
    %2259 = arith.divf %2257, %2258 : vector<2x6xf32>
    %2260 = arith.mulf %2251, %2206 : vector<2x6xf32>
    %2261 = arith.mulf %2245, %2253 : vector<2x6xf32>
    %2262 = arith.addf %2260, %2261 : vector<2x6xf32>
    %2263 = math.tanh %2262 : vector<2x6xf32>
    %2264 = arith.mulf %2259, %2263 : vector<2x6xf32>
    %2265 = vector.extract_strided_slice %2264 {offsets = [0, 0], sizes = [2, 1], strides = [1, 1]} : vector<2x6xf32> to vector<2x1xf32>
    %2266 = vector.broadcast %2265 : vector<2x1xf32> to vector<2x24xf32>
    %2267 = vector.broadcast %1867 : vector<1x24xf32> to vector<2x24xf32>
    %2268 = arith.mulf %2266, %2267 : vector<2x24xf32>
    %2269 = vector.extract_strided_slice %2264 {offsets = [0, 1], sizes = [2, 1], strides = [1, 1]} : vector<2x6xf32> to vector<2x1xf32>
    %2270 = vector.broadcast %2269 : vector<2x1xf32> to vector<2x24xf32>
    %2271 = vector.broadcast %1868 : vector<1x24xf32> to vector<2x24xf32>
    %2272 = arith.mulf %2270, %2271 : vector<2x24xf32>
    %2273 = arith.addf %2268, %2272 : vector<2x24xf32>
    %2274 = vector.extract_strided_slice %2264 {offsets = [0, 2], sizes = [2, 1], strides = [1, 1]} : vector<2x6xf32> to vector<2x1xf32>
    %2275 = vector.broadcast %2274 : vector<2x1xf32> to vector<2x24xf32>
    %2276 = vector.broadcast %1869 : vector<1x24xf32> to vector<2x24xf32>
    %2277 = arith.mulf %2275, %2276 : vector<2x24xf32>
    %2278 = arith.addf %2273, %2277 : vector<2x24xf32>
    %2279 = vector.extract_strided_slice %2264 {offsets = [0, 3], sizes = [2, 1], strides = [1, 1]} : vector<2x6xf32> to vector<2x1xf32>
    %2280 = vector.broadcast %2279 : vector<2x1xf32> to vector<2x24xf32>
    %2281 = vector.broadcast %1870 : vector<1x24xf32> to vector<2x24xf32>
    %2282 = arith.mulf %2280, %2281 : vector<2x24xf32>
    %2283 = arith.addf %2278, %2282 : vector<2x24xf32>
    %2284 = vector.extract_strided_slice %2264 {offsets = [0, 4], sizes = [2, 1], strides = [1, 1]} : vector<2x6xf32> to vector<2x1xf32>
    %2285 = vector.broadcast %2284 : vector<2x1xf32> to vector<2x24xf32>
    %2286 = vector.broadcast %1871 : vector<1x24xf32> to vector<2x24xf32>
    %2287 = arith.mulf %2285, %2286 : vector<2x24xf32>
    %2288 = arith.addf %2283, %2287 : vector<2x24xf32>
    %2289 = vector.extract_strided_slice %2264 {offsets = [0, 5], sizes = [2, 1], strides = [1, 1]} : vector<2x6xf32> to vector<2x1xf32>
    %2290 = vector.broadcast %2289 : vector<2x1xf32> to vector<2x24xf32>
    %2291 = vector.broadcast %1872 : vector<1x24xf32> to vector<2x24xf32>
    %2292 = arith.mulf %2290, %2291 : vector<2x24xf32>
    %2293 = arith.addf %2288, %2292 : vector<2x24xf32>
    %2294 = vector.extract_strided_slice %1866 {offsets = [14, 0], sizes = [2, 24], strides = [1, 1]} : vector<16x24xf32> to vector<2x24xf32>
    %2295 = arith.addf %2294, %2293 : vector<2x24xf32>
    %2296 = vector.extract_strided_slice %2295 {offsets = [0, 0], sizes = [2, 6], strides = [1, 1]} : vector<2x24xf32> to vector<2x6xf32>
    %2297 = arith.negf %2296 : vector<2x6xf32>
    %2298 = math.exp %2297 : vector<2x6xf32>
    %cst_382 = arith.constant 1.000000e+00 : f32
    %2299 = vector.broadcast %cst_382 : f32 to vector<2x6xf32>
    %2300 = arith.addf %2299, %2298 : vector<2x6xf32>
    %2301 = arith.divf %2299, %2300 : vector<2x6xf32>
    %2302 = vector.extract_strided_slice %2295 {offsets = [0, 6], sizes = [2, 6], strides = [1, 1]} : vector<2x24xf32> to vector<2x6xf32>
    %2303 = arith.negf %2302 : vector<2x6xf32>
    %2304 = math.exp %2303 : vector<2x6xf32>
    %cst_383 = arith.constant 1.000000e+00 : f32
    %2305 = vector.broadcast %cst_383 : f32 to vector<2x6xf32>
    %2306 = arith.addf %2305, %2304 : vector<2x6xf32>
    %2307 = arith.divf %2305, %2306 : vector<2x6xf32>
    %2308 = vector.extract_strided_slice %2295 {offsets = [0, 12], sizes = [2, 6], strides = [1, 1]} : vector<2x24xf32> to vector<2x6xf32>
    %2309 = math.tanh %2308 : vector<2x6xf32>
    %2310 = vector.extract_strided_slice %2295 {offsets = [0, 18], sizes = [2, 6], strides = [1, 1]} : vector<2x24xf32> to vector<2x6xf32>
    %2311 = arith.negf %2310 : vector<2x6xf32>
    %2312 = math.exp %2311 : vector<2x6xf32>
    %cst_384 = arith.constant 1.000000e+00 : f32
    %2313 = vector.broadcast %cst_384 : f32 to vector<2x6xf32>
    %2314 = arith.addf %2313, %2312 : vector<2x6xf32>
    %2315 = arith.divf %2313, %2314 : vector<2x6xf32>
    %2316 = arith.mulf %2307, %2262 : vector<2x6xf32>
    %2317 = arith.mulf %2301, %2309 : vector<2x6xf32>
    %2318 = arith.addf %2316, %2317 : vector<2x6xf32>
    %2319 = math.tanh %2318 : vector<2x6xf32>
    %2320 = arith.mulf %2315, %2319 : vector<2x6xf32>
    %2321 = tpu.concatenate %1928, %1984, %2040, %2096, %2152, %2208, %2264, %2320 in 0 : vector<2x6xf32>, vector<2x6xf32>, vector<2x6xf32>, vector<2x6xf32>, vector<2x6xf32>, vector<2x6xf32>, vector<2x6xf32>, vector<2x6xf32> -> vector<16x6xf32>
    %2322 = arith.addf %2321, %0 : vector<16x6xf32>
    %c880 = arith.constant 880 : index
    %c0_385 = arith.constant 0 : index
    %2323 = vector.load %arg1[%c880, %c0_385] : memref<896x128xbf16, #tpu.memory_space<vmem>>, vector<6x6xbf16>
    %2324 = arith.truncf %2322 : vector<16x6xf32> to vector<16x6xbf16>
    %cst_386 = arith.constant dense<0.000000e+00> : vector<16x6xf32>
    %2325 = tpu.matmul %2324, %2323, %cst_386 {dimension_numbers = #tpu.dot_dimension_numbers<[1], [0], [0], [1], [0, 0, 1, 1], [], []>} : vector<16x6xbf16>, vector<6x6xbf16>, vector<16x6xf32> -> vector<16x6xf32>
    %c376 = arith.constant 376 : index
    %c0_387 = arith.constant 0 : index
    %2326 = vector.load %arg2[%c376, %c0_387] : memref<392x128xf32, #tpu.memory_space<vmem>>, vector<1x6xf32>
    %2327 = vector.broadcast %2326 : vector<1x6xf32> to vector<16x6xf32>
    %2328 = arith.addf %2325, %2327 : vector<16x6xf32>
    %c0_388 = arith.constant 0 : index
    %c0_389 = arith.constant 0 : index
    %2329 = vector.load %arg4[%c0_388, %c0_389] : memref<16x6xf32, #tpu.memory_space<vmem>>, vector<16x6xf32>
    tpu.vector_store %arg4[%c0_388, %c0_389], %2328 {strides = array<i32>} : memref<16x6xf32, #tpu.memory_space<vmem>>, vector<16x6xf32>,
    return
  }
}

</mosaic_0001>

<llo_original>
// kernel: forward.1
$region0: #{forward.1}
  #allocation0 [shape = 'u32[]', space=smem, size = 0x4, offset = 0x4, fixed_abs, tag = 'smem constant byte address 0x4 - core index']
  #allocation1 [shape = 'u32[144,128]{1,0:T(1,128)}', space=vmem, size = 0x12000, scoped, tag = 'internal scratch']
  %s0 = inlined_call_operand.vmem [shape: f32[16,6], index: 0, kind: input, shape index: {}]
  %s1 = inlined_call_operand.hbm [shape: bf16[896,128], index: 1, kind: input, shape index: {}]
  %s2 = inlined_call_operand.hbm [shape: f32[392,128], index: 2, kind: input, shape index: {}]
  %s3 = inlined_call_operand.vmem [shape: f32[64,12], index: 3, kind: input, shape index: {}]
  %s4 = inlined_call_operand.vmem [shape: f32[16,6], index: 4, kind: output, shape index: {}]
  %s5 = sld [smem:[#allocation0]]
  $region34: #{forward.1} parent=0
    _
  %s7 = ssub.s32 1, %s5
  %s8 = scalar_select 0, %s7, %s5
  $region1: #{forward.1} parent=0
    #allocation2 [shape = 'u8[229376]{0}', space=vmem, size = 0x38000, scoped, tag = 'input window, operand 1, single buffered']
    #allocation3 [shape = 's32[1]{0}', space=sflag, size = 0x4, scoped, tag = 'scoped memory for forward.1']
    #allocation4 [shape = 'u8[200704]{0}', space=vmem, size = 0x31000, scoped, tag = 'input window, operand 2, single buffered']
    #allocation5 [shape = 's32[1]{0}', space=sflag, size = 0x4, scoped, tag = 'scoped memory for forward.1']
    %9 = vsyncpa [#allocation3], 0
    %10 = vsyncpa [#allocation5], 0
    // Predicated region
    $region2: #{forward.1} parent=1 // pred_check
      _
    $region3: #{forward.1} parent=1 // pred_check_branch
      %12 = sbr.rel (0) target = $region5
    $region4: #{forward.1} parent=1 // pred_region
      _
    $region5: #{forward.1} parent=1 // pred_fallthru
      _
    // Predicated region
    $region6: #{forward.1} parent=1 // pred_check
      _
    $region7: #{forward.1} parent=1 // pred_check_branch
      %14 = sbr.rel (0) target = $region9
    $region8: #{forward.1} parent=1 // pred_region
      %s16 = ssub.s32 7168, 7168
      %17 = vsyncadd [#allocation3], %s16
      %s18 = sshll.u32 [#allocation2], 4
      %s19 = int_to_ptr.vmem [resolvable:$true] %s18
      %24 = dma.hbm_to_vmem [thread:$0]  %s1, 7168, %s19, [#allocation3], 64, 64, 4
    $region9: #{forward.1} parent=1 // pred_fallthru
      _
    // Predicated region
    $region10: #{forward.1} parent=1 // pred_check
      _
    $region11: #{forward.1} parent=1 // pred_check_branch
      %26 = sbr.rel (0) target = $region13
    $region12: #{forward.1} parent=1 // pred_region
      %s28 = ssub.s32 6272, 6272
      %29 = vsyncadd [#allocation5], %s28
      %s30 = sshll.u32 [#allocation4], 4
      %s31 = int_to_ptr.vmem [resolvable:$true] %s30
      %36 = dma.hbm_to_vmem [thread:$0]  %s2, 6272, %s31, [#allocation5], 128, 128, 8
    $region13: #{forward.1} parent=1 // pred_fallthru
      _
    // Predicated region
    $region14: #{forward.1} parent=1 // pred_check
      _
    $region15: #{forward.1} parent=1 // pred_check_branch
      %38 = sbr.rel (0) target = $region17
    $region16: #{forward.1} parent=1 // pred_region
      _
    $region17: #{forward.1} parent=1 // pred_fallthru
      _
    // Predicated region
    $region18: #{forward.1} parent=1 // pred_check
      _
    $region19: #{forward.1} parent=1 // pred_check_branch
      %40 = sbr.rel (0) target = $region21
    $region20: #{forward.1} parent=1 // pred_region
      %41 = dma.done [#allocation3], 7168
    $region21: #{forward.1} parent=1 // pred_fallthru
      _
    // Predicated region
    $region22: #{forward.1} parent=1 // pred_check
      _
    $region23: #{forward.1} parent=1 // pred_check_branch
      %43 = sbr.rel (0) target = $region25
    $region24: #{forward.1} parent=1 // pred_region
      %44 = dma.done [#allocation5], 6272
    $region25: #{forward.1} parent=1 // pred_fallthru
      _
    %v46 = vld [vmem:[%s0] sm:$0xff]
    %v47 = vld [vmem:[%s0 + $0x8] sm:$0xff]
    %v48 = vlaneseq
    %v49 = vshrl.u32 %v48, 7
    %v50 = vadd.s32 %v49, 8
    %v51 = vlaneseq
    %v52 = vand.u32 %v51, 127
    %vm53 = vcmp.lt.s32.totalorder %v49, 0
    %v54 = vsub.s32 0, %v49
    %v55 = vsel %vm53, %v54, %v49
    %v56 = vshrl.u32 %v55, 1
    %v57 = vand.u32 %v55, 1
    %v58 = vsub.s32 0, %v57
    %v59 = vsel %vm53, %v58, %v57
    %vm60 = vcmp.lt.s32.totalorder %v50, 0
    %v61 = vsub.s32 0, %v50
    %v62 = vsel %vm60, %v61, %v50
    %v63 = vshrl.u32 %v62, 1
    %v64 = vand.u32 %v62, 1
    %v65 = vsub.s32 0, %v64
    %v66 = vsel %vm60, %v65, %v64
    %vm67 = vcmp.ne.s32.totalorder %v59, 0
    %vm68 = vcmp.ne.s32.totalorder %v66, 0
    %vm69 = vcmp.lt.s32.totalorder %v59, 0
    %vm70 = vcmp.lt.s32.totalorder %v66, 0
    %vm71 = vmand %vm69, %vm67
    %vm72 = vmand %vm70, %vm68
    %v73 = vadd.s32 %v59, 2
    %v74 = vadd.s32 %v66, 2
    %v75 = vsel %vm71, %v73, %v59
    %v76 = vsel %vm72, %v74, %v66
    %vm77 = vcmp.lt.s32.totalorder %v52, 0
    %v78 = vsub.s32 0, %v52
    %v79 = vsel %vm77, %v78, %v52
    %v80 = vshrl.u32 %v79, 1
    %v81 = vand.u32 %v79, 1
    %v82 = vsub.s32 0, %v81
    %v83 = vsel %vm77, %v82, %v81
    %vm84 = vcmp.ne.s32.totalorder %v83, 0
    %vm85 = vcmp.lt.s32.totalorder %v83, 0
    %vm86 = vmand %vm85, %vm84
    %v87 = vadd.s32 %v83, 2
    %v88 = vsel %vm86, %v87, %v83
    %vm89 = vcmp.eq.s32.totalorder %v75, %v88
    %vm90 = vcmp.eq.s32.totalorder %v76, %v88
    %v91 = vsel %vm89, 0.0, -1e+30
    %v92 = vsel %vm90, 0.0, -1e+30
    %v93 = vld [vmem:[#allocation2] sm:$0x7]
    %v94 = vld [vmem:[#allocation4] sm:$0x1]
    %v95 = vld [vmem:[#allocation2 + $0x8] sm:$0x7]
    %v96 = vld [vmem:[#allocation4 + $0x8] sm:$0x1]
    %v97 = vpack.c.bf16 %v47, %v46
    %v98 = vlaneseq
    %v99 = vshrl.u32 %v98, 7
    %v100 = vsub.s32 0, %v99
    %v101 = vrot.slane %v94, %v100
    %vm102 = vcmask 48128
    %v104 = vsel %vm102, %v97, 0
    %vm106 = vcmask 1042432
    %v108 = vsel %vm106, %v93, 0
    %110 = vmatprep.subr.bf16.mxu0 0
    %111 = vmatpush1.bf16.msra.mxu0 %v108
    %112 = vmatprep.subr.bf16.mxu0 0
    %113 = vmatpush1.bf16.msra.mxu0 0
    %114 = vmatprep.subr.bf16.mxu0 0
    %115 = vmatpush1.bf16.msra.mxu0 0
    %116 = vmatprep.subr.bf16.mxu0 0
    %117 = vmatpush1.bf16.msra.mxu0 0
    %118 = vmatprep.subr.bf16.mxu0 0
    %119 = vmatpush1.bf16.msra.mxu0 0
    %120 = vmatprep.subr.bf16.mxu0 0
    %121 = vmatpush1.bf16.msra.mxu0 0
    %122 = vmatprep.subr.bf16.mxu0 0
    %123 = vmatpush1.bf16.msra.mxu0 0
    %124 = vmatprep.subr.bf16.mxu0 0
    %125 = vmatpush1.bf16.msra.mxu0 0
    %126 = vmatprep.subr.bf16.mxu0 0
    %127 = vmatpush1.bf16.msra.mxu0 0
    %128 = vmatprep.subr.bf16.mxu0 0
    %129 = vmatpush1.bf16.msra.mxu0 0
    %130 = vmatprep.subr.bf16.mxu0 0
    %131 = vmatpush1.bf16.msra.mxu0 0
    %132 = vmatprep.subr.bf16.mxu0 0
    %133 = vmatpush1.bf16.msra.mxu0 0
    %134 = vmatprep.subr.bf16.mxu0 0
    %135 = vmatpush1.bf16.msra.mxu0 0
    %136 = vmatprep.subr.bf16.mxu0 0
    %137 = vmatpush1.bf16.msra.mxu0 0
    %138 = vmatprep.subr.bf16.mxu0 0
    %139 = vmatpush1.bf16.msra.mxu0 0
    %140 = vmatprep.subr.bf16.mxu0 0
    %141 = vmatpush1.bf16.msra.mxu0 0
    %142 = vmatprep.mubr.bf16.mxu0 0
    %143 = vmatmul.mubr.bf16.gmra.mrb[0].mxu0 %v104
    %v144 = vpop.f32.mrb[0].mxu0
    %v145 = vadd.f32 %v101, %v144
    %v146 = vpop.f32.mrb[0].mxu0
    %v147 = vpop.f32.mrb[0].mxu0
    %v148 = vadd.f32 %v101, %v147
    %v149 = vpop.f32.mrb[0].mxu0
    %150 = vdwg.mxu0
    %v151 = vmul.f32 %v145, 0.70710677
    %v152 = vmul.f32 %v148, 0.70710677
    %v153 = vpack.c.bf16 %v152, %v151
    %v154 = vpack.c.bf16 %v148, %v145
    %156 = vrot.lane.b32.xlu0 %v154, 122
    %v157 = vpop.permute.xlu0 %156
    %vm158 = vcmask 15360
    %v160 = vsel %vm158, %v153, 0
    %v163 = vsel %vm158, %v157, 0
    %165 = vmatprep.subr.bf16.mxu0 0
    %166 = vmatpush1.bf16.xpose.msra.mxu0 %v163
    %167 = vmatprep.subr.bf16.mxu0 0
    %168 = vmatpush1.bf16.xpose.msra.mxu0 0
    %169 = vmatprep.subr.bf16.mxu0 0
    %170 = vmatpush1.bf16.xpose.msra.mxu0 0
    %171 = vmatprep.subr.bf16.mxu0 0
    %172 = vmatpush1.bf16.xpose.msra.mxu0 0
    %173 = vmatprep.subr.bf16.mxu0 0
    %174 = vmatpush1.bf16.xpose.msra.mxu0 0
    %175 = vmatprep.subr.bf16.mxu0 0
    %176 = vmatpush1.bf16.xpose.msra.mxu0 0
    %177 = vmatprep.subr.bf16.mxu0 0
    %178 = vmatpush1.bf16.xpose.msra.mxu0 0
    %179 = vmatprep.subr.bf16.mxu0 0
    %180 = vmatpush1.bf16.xpose.msra.mxu0 0
    %181 = vmatprep.subr.bf16.mxu0 0
    %182 = vmatpush1.bf16.xpose.msra.mxu0 0
    %183 = vmatprep.subr.bf16.mxu0 0
    %184 = vmatpush1.bf16.xpose.msra.mxu0 0
    %185 = vmatprep.subr.bf16.mxu0 0
    %186 = vmatpush1.bf16.xpose.msra.mxu0 0
    %187 = vmatprep.subr.bf16.mxu0 0
    %188 = vmatpush1.bf16.xpose.msra.mxu0 0
    %189 = vmatprep.subr.bf16.mxu0 0
    %190 = vmatpush1.bf16.xpose.msra.mxu0 0
    %191 = vmatprep.subr.bf16.mxu0 0
    %192 = vmatpush1.bf16.xpose.msra.mxu0 0
    %193 = vmatprep.subr.bf16.mxu0 0
    %194 = vmatpush1.bf16.xpose.msra.mxu0 0
    %195 = vmatprep.subr.bf16.mxu0 0
    %196 = vmatpush1.bf16.xpose.msra.mxu0 0
    %197 = vmatprep.mubr.bf16.mxu0 0
    %198 = vmatmul.mubr.bf16.gmra.mrb[0].mxu0 %v160
    %v199 = vpop.f32.mrb[0].mxu0
    %v200 = vadd.f32 %v91, %v199
    %v201 = vpop.f32.mrb[0].mxu0
    %v202 = vpop.f32.mrb[0].mxu0
    %v203 = vadd.f32 %v92, %v202
    %v204 = vpop.f32.mrb[0].mxu0
    %205 = vdwg.mxu0
    %vm206 = vcmask 130048
    %v207 = vsel %vm206, %v200, -inf
    %208 = vmax.xlane.f32.xlu0 %v207
    %v209 = vpop.xlane.xlu0 %208
    %v210 = vsel %vm206, %v203, -inf
    %211 = vmax.xlane.f32.xlu0 %v210
    %v212 = vpop.xlane.xlu0 %211
    %v213 = vsub.f32 %v200, %v209
    %v214 = vsub.f32 %v203, %v212
    %v215 = vmul.f32 %v213, 1.442695
    %v216 = vpow.pop %v215
    %v217 = vmul.f32 %v214, 1.442695
    %v218 = vpow.pop %v217
    %v219 = vsel %vm206, %v216, 0.0
    %220 = vadd.xlane.f32.xlu0 %v219
    %v221 = vpop.xlane.xlu0 %220
    %v222 = vsel %vm206, %v218, 0.0
    %223 = vadd.xlane.f32.xlu0 %v222
    %v224 = vpop.xlane.xlu0 %223
    %v225 = vrcp.pop %v221
    %v226 = vrcp.pop %v224
    %v227 = vmul.f32 %v216, %v225
    %v228 = vmul.f32 %v218, %v226
    %v229 = vpack.c.bf16 %v228, %v227
    %230 = vrot.lane.b32.xlu0 %v154, 116
    %v231 = vpop.permute.xlu0 %230
    %v234 = vsel %vm206, %v229, 0
    %236 = vmatprep.subr.bf16.mxu0 0
    %237 = vmatpush1.bf16.msra.mxu0 %v231
    %238 = vmatprep.subr.bf16.mxu0 0
    %239 = vmatpush1.bf16.msra.mxu0 0
    %240 = vmatprep.subr.bf16.mxu0 0
    %241 = vmatpush1.bf16.msra.mxu0 0
    %242 = vmatprep.subr.bf16.mxu0 0
    %243 = vmatpush1.bf16.msra.mxu0 0
    %244 = vmatprep.subr.bf16.mxu0 0
    %245 = vmatpush1.bf16.msra.mxu0 0
    %246 = vmatprep.subr.bf16.mxu0 0
    %247 = vmatpush1.bf16.msra.mxu0 0
    %248 = vmatprep.subr.bf16.mxu0 0
    %249 = vmatpush1.bf16.msra.mxu0 0
    %250 = vmatprep.subr.bf16.mxu0 0
    %251 = vmatpush1.bf16.msra.mxu0 0
    %252 = vmatprep.subr.bf16.mxu0 0
    %253 = vmatpush1.bf16.msra.mxu0 0
    %254 = vmatprep.subr.bf16.mxu0 0
    %255 = vmatpush1.bf16.msra.mxu0 0
    %256 = vmatprep.subr.bf16.mxu0 0
    %257 = vmatpush1.bf16.msra.mxu0 0
    %258 = vmatprep.subr.bf16.mxu0 0
    %259 = vmatpush1.bf16.msra.mxu0 0
    %260 = vmatprep.subr.bf16.mxu0 0
    %261 = vmatpush1.bf16.msra.mxu0 0
    %262 = vmatprep.subr.bf16.mxu0 0
    %263 = vmatpush1.bf16.msra.mxu0 0
    %264 = vmatprep.subr.bf16.mxu0 0
    %265 = vmatpush1.bf16.msra.mxu0 0
    %266 = vmatprep.subr.bf16.mxu0 0
    %267 = vmatpush1.bf16.msra.mxu0 0
    %268 = vmatprep.mubr.bf16.mxu0 0
    %269 = vmatmul.mubr.bf16.gmra.mrb[0].mxu0 %v234
    %v270 = vpop.f32.mrb[0].mxu0
    %v271 = vadd.f32 0.0, %v270
    %v272 = vpop.f32.mrb[0].mxu0
    %v273 = vpop.f32.mrb[0].mxu0
    %v274 = vadd.f32 0.0, %v273
    %v275 = vpop.f32.mrb[0].mxu0
    %276 = vdwg.mxu0
    %278 = vrot.lane.b32.xlu0 %v153, 126
    %v279 = vpop.permute.xlu0 %278
    %280 = vrot.lane.b32.xlu0 %v154, 120
    %v281 = vpop.permute.xlu0 %280
    %v283 = vsel %vm158, %v279, 0
    %v286 = vsel %vm158, %v281, 0
    %288 = vmatprep.subr.bf16.mxu0 0
    %289 = vmatpush1.bf16.xpose.msra.mxu0 %v286
    %290 = vmatprep.subr.bf16.mxu0 0
    %291 = vmatpush1.bf16.xpose.msra.mxu0 0
    %292 = vmatprep.subr.bf16.mxu0 0
    %293 = vmatpush1.bf16.xpose.msra.mxu0 0
    %294 = vmatprep.subr.bf16.mxu0 0
    %295 = vmatpush1.bf16.xpose.msra.mxu0 0
    %296 = vmatprep.subr.bf16.mxu0 0
    %297 = vmatpush1.bf16.xpose.msra.mxu0 0
    %298 = vmatprep.subr.bf16.mxu0 0
    %299 = vmatpush1.bf16.xpose.msra.mxu0 0
    %300 = vmatprep.subr.bf16.mxu0 0
    %301 = vmatpush1.bf16.xpose.msra.mxu0 0
    %302 = vmatprep.subr.bf16.mxu0 0
    %303 = vmatpush1.bf16.xpose.msra.mxu0 0
    %304 = vmatprep.subr.bf16.mxu0 0
    %305 = vmatpush1.bf16.xpose.msra.mxu0 0
    %306 = vmatprep.subr.bf16.mxu0 0
    %307 = vmatpush1.bf16.xpose.msra.mxu0 0
    %308 = vmatprep.subr.bf16.mxu0 0
    %309 = vmatpush1.bf16.xpose.msra.mxu0 0
    %310 = vmatprep.subr.bf16.mxu0 0
    %311 = vmatpush1.bf16.xpose.msra.mxu0 0
    %312 = vmatprep.subr.bf16.mxu0 0
    %313 = vmatpush1.bf16.xpose.msra.mxu0 0
    %314 = vmatprep.subr.bf16.mxu0 0
    %315 = vmatpush1.bf16.xpose.msra.mxu0 0
    %316 = vmatprep.subr.bf16.mxu0 0
    %317 = vmatpush1.bf16.xpose.msra.mxu0 0
    %318 = vmatprep.subr.bf16.mxu0 0
    %319 = vmatpush1.bf16.xpose.msra.mxu0 0
    %320 = vmatprep.mubr.bf16.mxu0 0
    %321 = vmatmul.mubr.bf16.gmra.mrb[0].mxu0 %v283
    %v322 = vpop.f32.mrb[0].mxu0
    %v323 = vadd.f32 %v91, %v322
    %v324 = vpop.f32.mrb[0].mxu0
    %v325 = vpop.f32.mrb[0].mxu0
    %v326 = vadd.f32 %v92, %v325
    %v327 = vpop.f32.mrb[0].mxu0
    %328 = vdwg.mxu0
    %v329 = vsel %vm206, %v323, -inf
    %330 = vmax.xlane.f32.xlu0 %v329
    %v331 = vpop.xlane.xlu0 %330
    %v332 = vsel %vm206, %v326, -inf
    %333 = vmax.xlane.f32.xlu0 %v332
    %v334 = vpop.xlane.xlu0 %333
    %v335 = vsub.f32 %v323, %v331
    %v336 = vsub.f32 %v326, %v334
    %v337 = vmul.f32 %v335, 1.442695
    %v338 = vpow.pop %v337
    %v339 = vmul.f32 %v336, 1.442695
    %v340 = vpow.pop %v339
    %v341 = vsel %vm206, %v338, 0.0
    %342 = vadd.xlane.f32.xlu0 %v341
    %v343 = vpop.xlane.xlu0 %342
    %v344 = vsel %vm206, %v340, 0.0
    %345 = vadd.xlane.f32.xlu0 %v344
    %v346 = vpop.xlane.xlu0 %345
    %v347 = vrcp.pop %v343
    %v348 = vrcp.pop %v346
    %v349 = vmul.f32 %v338, %v347
    %v350 = vmul.f32 %v340, %v348
    %v351 = vpack.c.bf16 %v350, %v349
    %352 = vrot.lane.b32.xlu0 %v154, 114
    %v353 = vpop.permute.xlu0 %352
    %v356 = vsel %vm206, %v351, 0
    %358 = vmatprep.subr.bf16.mxu0 0
    %359 = vmatpush1.bf16.msra.mxu0 %v353
    %360 = vmatprep.subr.bf16.mxu0 0
    %361 = vmatpush1.bf16.msra.mxu0 0
    %362 = vmatprep.subr.bf16.mxu0 0
    %363 = vmatpush1.bf16.msra.mxu0 0
    %364 = vmatprep.subr.bf16.mxu0 0
    %365 = vmatpush1.bf16.msra.mxu0 0
    %366 = vmatprep.subr.bf16.mxu0 0
    %367 = vmatpush1.bf16.msra.mxu0 0
    %368 = vmatprep.subr.bf16.mxu0 0
    %369 = vmatpush1.bf16.msra.mxu0 0
    %370 = vmatprep.subr.bf16.mxu0 0
    %371 = vmatpush1.bf16.msra.mxu0 0
    %372 = vmatprep.subr.bf16.mxu0 0
    %373 = vmatpush1.bf16.msra.mxu0 0
    %374 = vmatprep.subr.bf16.mxu0 0
    %375 = vmatpush1.bf16.msra.mxu0 0
    %376 = vmatprep.subr.bf16.mxu0 0
    %377 = vmatpush1.bf16.msra.mxu0 0
    %378 = vmatprep.subr.bf16.mxu0 0
    %379 = vmatpush1.bf16.msra.mxu0 0
    %380 = vmatprep.subr.bf16.mxu0 0
    %381 = vmatpush1.bf16.msra.mxu0 0
    %382 = vmatprep.subr.bf16.mxu0 0
    %383 = vmatpush1.bf16.msra.mxu0 0
    %384 = vmatprep.subr.bf16.mxu0 0
    %385 = vmatpush1.bf16.msra.mxu0 0
    %386 = vmatprep.subr.bf16.mxu0 0
    %387 = vmatpush1.bf16.msra.mxu0 0
    %388 = vmatprep.subr.bf16.mxu0 0
    %389 = vmatpush1.bf16.msra.mxu0 0
    %390 = vmatprep.mubr.bf16.mxu0 0
    %391 = vmatmul.mubr.bf16.gmra.mrb[0].mxu0 %v356
    %v392 = vpop.f32.mrb[0].mxu0
    %v393 = vadd.f32 0.0, %v392
    %v394 = vpop.f32.mrb[0].mxu0
    %v395 = vpop.f32.mrb[0].mxu0
    %v396 = vadd.f32 0.0, %v395
    %v397 = vpop.f32.mrb[0].mxu0
    %398 = vdwg.mxu0
    %399 = vrot.lane.b32.xlu0 %v153, 124
    %v400 = vpop.permute.xlu0 %399
    %401 = vrot.lane.b32.xlu0 %v154, 118
    %v402 = vpop.permute.xlu0 %401
    %v404 = vsel %vm158, %v400, 0
    %v407 = vsel %vm158, %v402, 0
    %409 = vmatprep.subr.bf16.mxu0 0
    %410 = vmatpush1.bf16.xpose.msra.mxu0 %v407
    %411 = vmatprep.subr.bf16.mxu0 0
    %412 = vmatpush1.bf16.xpose.msra.mxu0 0
    %413 = vmatprep.subr.bf16.mxu0 0
    %414 = vmatpush1.bf16.xpose.msra.mxu0 0
    %415 = vmatprep.subr.bf16.mxu0 0
    %416 = vmatpush1.bf16.xpose.msra.mxu0 0
    %417 = vmatprep.subr.bf16.mxu0 0
    %418 = vmatpush1.bf16.xpose.msra.mxu0 0
    %419 = vmatprep.subr.bf16.mxu0 0
    %420 = vmatpush1.bf16.xpose.msra.mxu0 0
    %421 = vmatprep.subr.bf16.mxu0 0
    %422 = vmatpush1.bf16.xpose.msra.mxu0 0
    %423 = vmatprep.subr.bf16.mxu0 0
    %424 = vmatpush1.bf16.xpose.msra.mxu0 0
    %425 = vmatprep.subr.bf16.mxu0 0
    %426 = vmatpush1.bf16.xpose.msra.mxu0 0
    %427 = vmatprep.subr.bf16.mxu0 0
    %428 = vmatpush1.bf16.xpose.msra.mxu0 0
    %429 = vmatprep.subr.bf16.mxu0 0
    %430 = vmatpush1.bf16.xpose.msra.mxu0 0
    %431 = vmatprep.subr.bf16.mxu0 0
    %432 = vmatpush1.bf16.xpose.msra.mxu0 0
    %433 = vmatprep.subr.bf16.mxu0 0
    %434 = vmatpush1.bf16.xpose.msra.mxu0 0
    %435 = vmatprep.subr.bf16.mxu0 0
    %436 = vmatpush1.bf16.xpose.msra.mxu0 0
    %437 = vmatprep.subr.bf16.mxu0 0
    %438 = vmatpush1.bf16.xpose.msra.mxu0 0
    %439 = vmatprep.subr.bf16.mxu0 0
    %440 = vmatpush1.bf16.xpose.msra.mxu0 0
    %441 = vmatprep.mubr.bf16.mxu0 0
    %442 = vmatmul.mubr.bf16.gmra.mrb[0].mxu0 %v404
    %v443 = vpop.f32.mrb[0].mxu0
    %v444 = vadd.f32 %v91, %v443
    %v445 = vpop.f32.mrb[0].mxu0
    %v446 = vpop.f32.mrb[0].mxu0
    %v447 = vadd.f32 %v92, %v446
    %v448 = vpop.f32.mrb[0].mxu0
    %449 = vdwg.mxu0
    %v450 = vsel %vm206, %v444, -inf
    %451 = vmax.xlane.f32.xlu0 %v450
    %v452 = vpop.xlane.xlu0 %451
    %v453 = vsel %vm206, %v447, -inf
    %454 = vmax.xlane.f32.xlu0 %v453
    %v455 = vpop.xlane.xlu0 %454
    %v456 = vsub.f32 %v444, %v452
    %v457 = vsub.f32 %v447, %v455
    %v458 = vmul.f32 %v456, 1.442695
    %v459 = vpow.pop %v458
    %v460 = vmul.f32 %v457, 1.442695
    %v461 = vpow.pop %v460
    %v462 = vsel %vm206, %v459, 0.0
    %463 = vadd.xlane.f32.xlu0 %v462
    %v464 = vpop.xlane.xlu0 %463
    %v465 = vsel %vm206, %v461, 0.0
    %466 = vadd.xlane.f32.xlu0 %v465
    %v467 = vpop.xlane.xlu0 %466
    %v468 = vrcp.pop %v464
    %v469 = vrcp.pop %v467
    %v470 = vmul.f32 %v459, %v468
    %v471 = vmul.f32 %v461, %v469
    %v472 = vpack.c.bf16 %v471, %v470
    %473 = vrot.lane.b32.xlu0 %v154, 112
    %v474 = vpop.permute.xlu0 %473
    %v477 = vsel %vm206, %v472, 0
    %479 = vmatprep.subr.bf16.mxu0 0
    %480 = vmatpush1.bf16.msra.mxu0 %v474
    %481 = vmatprep.subr.bf16.mxu0 0
    %482 = vmatpush1.bf16.msra.mxu0 0
    %483 = vmatprep.subr.bf16.mxu0 0
    %484 = vmatpush1.bf16.msra.mxu0 0
    %485 = vmatprep.subr.bf16.mxu0 0
    %486 = vmatpush1.bf16.msra.mxu0 0
    %487 = vmatprep.subr.bf16.mxu0 0
    %488 = vmatpush1.bf16.msra.mxu0 0
    %489 = vmatprep.subr.bf16.mxu0 0
    %490 = vmatpush1.bf16.msra.mxu0 0
    %491 = vmatprep.subr.bf16.mxu0 0
    %492 = vmatpush1.bf16.msra.mxu0 0
    %493 = vmatprep.subr.bf16.mxu0 0
    %494 = vmatpush1.bf16.msra.mxu0 0
    %495 = vmatprep.subr.bf16.mxu0 0
    %496 = vmatpush1.bf16.msra.mxu0 0
    %497 = vmatprep.subr.bf16.mxu0 0
    %498 = vmatpush1.bf16.msra.mxu0 0
    %499 = vmatprep.subr.bf16.mxu0 0
    %500 = vmatpush1.bf16.msra.mxu0 0
    %501 = vmatprep.subr.bf16.mxu0 0
    %502 = vmatpush1.bf16.msra.mxu0 0
    %503 = vmatprep.subr.bf16.mxu0 0
    %504 = vmatpush1.bf16.msra.mxu0 0
    %505 = vmatprep.subr.bf16.mxu0 0
    %506 = vmatpush1.bf16.msra.mxu0 0
    %507 = vmatprep.subr.bf16.mxu0 0
    %508 = vmatpush1.bf16.msra.mxu0 0
    %509 = vmatprep.subr.bf16.mxu0 0
    %510 = vmatpush1.bf16.msra.mxu0 0
    %511 = vmatprep.mubr.bf16.mxu0 0
    %512 = vmatmul.mubr.bf16.gmra.mrb[0].mxu0 %v477
    %v513 = vpop.f32.mrb[0].mxu0
    %v514 = vadd.f32 0.0, %v513
    %v515 = vpop.f32.mrb[0].mxu0
    %v516 = vpop.f32.mrb[0].mxu0
    %v517 = vadd.f32 0.0, %v516
    %v518 = vpop.f32.mrb[0].mxu0
    %519 = vdwg.mxu0
    %522 = vrot.lane.b32.xlu0 %v393, 2
    %v523 = vpop.permute.xlu0 %522
    %524 = vrot.lane.b32.xlu0 %v396, 2
    %v525 = vpop.permute.xlu0 %524
    %530 = vrot.lane.b32.xlu0 %v514, 4
    %v531 = vpop.permute.xlu0 %530
    %532 = vrot.lane.b32.xlu0 %v517, 4
    %v533 = vpop.permute.xlu0 %532
    %v536 = vsel %vm158, %v271, %v523
    %v537 = vsel %vm158, %v274, %v525
    %vm538 = vcmask 31744
    %v539 = vsel %vm538, %v536, %v531
    %v540 = vsel %vm538, %v537, %v533
    %v541 = vpack.c.bf16 %v540, %v539
    %v542 = vlaneseq
    %v543 = vshrl.u32 %v542, 7
    %v544 = vsub.s32 0, %v543
    %v545 = vrot.slane %v96, %v544
    %v547 = vsel %vm102, %v541, 0
    %v550 = vsel %vm106, %v95, 0
    %552 = vmatprep.subr.bf16.mxu0 0
    %553 = vmatpush1.bf16.msra.mxu0 %v550
    %554 = vmatprep.subr.bf16.mxu0 0
    %555 = vmatpush1.bf16.msra.mxu0 0
    %556 = vmatprep.subr.bf16.mxu0 0
    %557 = vmatpush1.bf16.msra.mxu0 0
    %558 = vmatprep.subr.bf16.mxu0 0
    %559 = vmatpush1.bf16.msra.mxu0 0
    %560 = vmatprep.subr.bf16.mxu0 0
    %561 = vmatpush1.bf16.msra.mxu0 0
    %562 = vmatprep.subr.bf16.mxu0 0
    %563 = vmatpush1.bf16.msra.mxu0 0
    %564 = vmatprep.subr.bf16.mxu0 0
    %565 = vmatpush1.bf16.msra.mxu0 0
    %566 = vmatprep.subr.bf16.mxu0 0
    %567 = vmatpush1.bf16.msra.mxu0 0
    %568 = vmatprep.subr.bf16.mxu0 0
    %569 = vmatpush1.bf16.msra.mxu0 0
    %570 = vmatprep.subr.bf16.mxu0 0
    %571 = vmatpush1.bf16.msra.mxu0 0
    %572 = vmatprep.subr.bf16.mxu0 0
    %573 = vmatpush1.bf16.msra.mxu0 0
    %574 = vmatprep.subr.bf16.mxu0 0
    %575 = vmatpush1.bf16.msra.mxu0 0
    %576 = vmatprep.subr.bf16.mxu0 0
    %577 = vmatpush1.bf16.msra.mxu0 0
    %578 = vmatprep.subr.bf16.mxu0 0
    %579 = vmatpush1.bf16.msra.mxu0 0
    %580 = vmatprep.subr.bf16.mxu0 0
    %581 = vmatpush1.bf16.msra.mxu0 0
    %582 = vmatprep.subr.bf16.mxu0 0
    %583 = vmatpush1.bf16.msra.mxu0 0
    %584 = vmatprep.mubr.bf16.mxu0 0
    %585 = vmatmul.mubr.bf16.gmra.mrb[0].mxu0 %v547
    %v586 = vpop.f32.mrb[0].mxu0
    %v587 = vadd.f32 %v545, %v586
    %v588 = vpop.f32.mrb[0].mxu0
    %v589 = vpop.f32.mrb[0].mxu0
    %v590 = vadd.f32 %v545, %v589
    %v591 = vpop.f32.mrb[0].mxu0
    %592 = vdwg.mxu0
    %v593 = vadd.f32 %v46, %v587
    %v594 = vadd.f32 %v47, %v590
    %v595 = vld [vmem:[#allocation4 + $0x20] sm:$0x1]
    %v596 = vld [vmem:[#allocation4 + $0x28] sm:$0x1]
    %v597 = vsel %vm102, %v593, 0.0
    %598 = vadd.xlane.f32.xlu0 %v597
    %v599 = vpop.xlane.xlu0 %598
    %v600 = vsel %vm102, %v594, 0.0
    %601 = vadd.xlane.f32.xlu0 %v600
    %v602 = vpop.xlane.xlu0 %601
    %v603 = vrcp.pop 6.0
    %v604 = vmul.f32 %v599, %v603
    %v605 = vmul.f32 %v602, %v603
    %v606 = vsub.f32 %v593, %v604
    %v607 = vsub.f32 %v594, %v605
    %v608 = vmul.f32 %v606, %v606
    %v609 = vmul.f32 %v607, %v607
    %v610 = vsel %vm102, %v608, 0.0
    %611 = vadd.xlane.f32.xlu0 %v610
    %v612 = vpop.xlane.xlu0 %611
    %v613 = vsel %vm102, %v609, 0.0
    %614 = vadd.xlane.f32.xlu0 %v613
    %v615 = vpop.xlane.xlu0 %614
    %v616 = vmul.f32 %v612, %v603
    %v617 = vmul.f32 %v615, %v603
    %v618 = vadd.f32 %v616, 1e-05
    %v619 = vadd.f32 %v617, 1e-05
    %v620 = vrsqrt.pop %v618
    %v621 = vrsqrt.pop %v619
    %v622 = vmul.f32 %v606, %v620
    %v623 = vmul.f32 %v607, %v621
    %v624 = vlaneseq
    %v625 = vshrl.u32 %v624, 7
    %v626 = vsub.s32 0, %v625
    %v627 = vrot.slane %v595, %v626
    %v628 = vmul.f32 %v622, %v627
    %v629 = vmul.f32 %v623, %v627
    %v630 = vlaneseq
    %v631 = vshrl.u32 %v630, 7
    %v632 = vsub.s32 0, %v631
    %v633 = vrot.slane %v596, %v632
    %v634 = vadd.f32 %v628, %v633
    %v635 = vadd.f32 %v629, %v633
    %v636 = vld [vmem:[#allocation2 + $0x10] sm:$0x7]
    %v637 = vld [vmem:[#allocation4 + $0x10] sm:$0x1]
    %v638 = vld [vmem:[#allocation2 + $0x18] sm:$0xf]
    %v639 = vld [vmem:[#allocation2 + $0x1c] sm:$0xf]
    %v640 = vld [vmem:[#allocation2 + $0x20] sm:$0xf]
    %v641 = vld [vmem:[#allocation2 + $0x24] sm:$0xf]
    %v642 = vld [vmem:[#allocation2 + $0x28] sm:$0xf]
    %v643 = vld [vmem:[#allocation2 + $0x2c] sm:$0xf]
    %v644 = vld [vmem:[#allocation2 + $0x30] sm:$0xf]
    %v645 = vld [vmem:[#allocation2 + $0x34] sm:$0xf]
    %v646 = vld [vmem:[#allocation2 + $0x38] sm:$0xf]
    %v647 = vld [vmem:[#allocation2 + $0x3c] sm:$0xf]
    %v648 = vld [vmem:[#allocation2 + $0x40] sm:$0xf]
    %v649 = vld [vmem:[#allocation2 + $0x44] sm:$0xf]
    %v650 = vld [vmem:[#allocation2 + $0x48] sm:$0xf]
    %v651 = vld [vmem:[#allocation2 + $0x4c] sm:$0xf]
    %v652 = vld [vmem:[#allocation2 + $0x50] sm:$0xf]
    %v653 = vld [vmem:[#allocation2 + $0x54] sm:$0xf]
    %v654 = vld [vmem:[#allocation4 + $0x18] sm:$0x1]
    %v655 = vpack.c.bf16 %v635, %v634
    %v656 = vlaneseq
    %v657 = vshrl.u32 %v656, 7
    %v658 = vsub.s32 0, %v657
    %v659 = vrot.slane %v637, %v658
    %v661 = vsel %vm102, %v655, 0
    %v664 = vsel %vm106, %v636, 0
    %666 = vmatprep.subr.bf16.mxu0 0
    %667 = vmatpush1.bf16.msra.mxu0 %v664
    %668 = vmatprep.subr.bf16.mxu0 0
    %669 = vmatpush1.bf16.msra.mxu0 0
    %670 = vmatprep.subr.bf16.mxu0 0
    %671 = vmatpush1.bf16.msra.mxu0 0
    %672 = vmatprep.subr.bf16.mxu0 0
    %673 = vmatpush1.bf16.msra.mxu0 0
    %674 = vmatprep.subr.bf16.mxu0 0
    %675 = vmatpush1.bf16.msra.mxu0 0
    %676 = vmatprep.subr.bf16.mxu0 0
    %677 = vmatpush1.bf16.msra.mxu0 0
    %678 = vmatprep.subr.bf16.mxu0 0
    %679 = vmatpush1.bf16.msra.mxu0 0
    %680 = vmatprep.subr.bf16.mxu0 0
    %681 = vmatpush1.bf16.msra.mxu0 0
    %682 = vmatprep.subr.bf16.mxu0 0
    %683 = vmatpush1.bf16.msra.mxu0 0
    %684 = vmatprep.subr.bf16.mxu0 0
    %685 = vmatpush1.bf16.msra.mxu0 0
    %686 = vmatprep.subr.bf16.mxu0 0
    %687 = vmatpush1.bf16.msra.mxu0 0
    %688 = vmatprep.subr.bf16.mxu0 0
    %689 = vmatpush1.bf16.msra.mxu0 0
    %690 = vmatprep.subr.bf16.mxu0 0
    %691 = vmatpush1.bf16.msra.mxu0 0
    %692 = vmatprep.subr.bf16.mxu0 0
    %693 = vmatpush1.bf16.msra.mxu0 0
    %694 = vmatprep.subr.bf16.mxu0 0
    %695 = vmatpush1.bf16.msra.mxu0 0
    %696 = vmatprep.subr.bf16.mxu0 0
    %697 = vmatpush1.bf16.msra.mxu0 0
    %698 = vmatprep.mubr.bf16.mxu0 0
    %699 = vmatmul.mubr.bf16.gmra.mrb[0].mxu0 %v661
    %v700 = vpop.f32.mrb[0].mxu0
    %v701 = vadd.f32 %v659, %v700
    %v702 = vpop.f32.mrb[0].mxu0
    %v703 = vpop.f32.mrb[0].mxu0
    %v704 = vadd.f32 %v659, %v703
    %v705 = vpop.f32.mrb[0].mxu0
    %706 = vdwg.mxu0
    %v707 = vmax.f32 %v701, 0.0
    %v708 = vmax.f32 %v704, 0.0
    %v709 = vpack.c.bf16 %v708, %v707
    %v710 = vlaneseq
    %v711 = vshrl.u32 %v710, 7
    %v712 = vsub.s32 0, %v711
    %v713 = vrot.slane %v654, %v712
    %v730 = vunpack.c.l.b16 %v638
    %v731 = vunpack.c.l.b16 %v639
    %v732 = vunpack.c.l.b16 %v640
    %v733 = vunpack.c.l.b16 %v641
    %v734 = vunpack.c.l.b16 %v642
    %v735 = vunpack.c.l.b16 %v643
    %v736 = vunpack.c.l.b16 %v644
    %v737 = vunpack.c.l.b16 %v645
    %v738 = vunpack.c.l.b16 %v646
    %v739 = vunpack.c.l.b16 %v647
    %v740 = vunpack.c.l.b16 %v648
    %v741 = vunpack.c.l.b16 %v649
    %v742 = vunpack.c.l.b16 %v650
    %v743 = vunpack.c.l.b16 %v651
    %v744 = vunpack.c.l.b16 %v652
    %v745 = vunpack.c.l.b16 %v653
    %v746 = vpack.c.b16 %v731, %v730
    %v747 = vpack.c.b16 %v733, %v732
    %v748 = vpack.c.b16 %v735, %v734
    %v749 = vpack.c.b16 %v737, %v736
    %v750 = vpack.c.b16 %v739, %v738
    %v751 = vpack.c.b16 %v741, %v740
    %v752 = vpack.c.b16 %v743, %v742
    %v753 = vpack.c.b16 %v745, %v744
    %762 = vmatprep.subr.bf16.mxu0 0
    %763 = vmatpush1.bf16.msra.mxu0 %v746
    %764 = vmatprep.subr.bf16.mxu0 0
    %765 = vmatpush1.bf16.msra.mxu0 %v747
    %766 = vmatprep.subr.bf16.mxu0 0
    %767 = vmatpush1.bf16.msra.mxu0 %v748
    %768 = vmatprep.subr.bf16.mxu0 0
    %769 = vmatpush1.bf16.msra.mxu0 %v749
    %770 = vmatprep.subr.bf16.mxu0 0
    %771 = vmatpush1.bf16.msra.mxu0 %v750
    %772 = vmatprep.subr.bf16.mxu0 0
    %773 = vmatpush1.bf16.msra.mxu0 %v751
    %774 = vmatprep.subr.bf16.mxu0 0
    %775 = vmatpush1.bf16.msra.mxu0 %v752
    %776 = vmatprep.subr.bf16.mxu0 0
    %777 = vmatpush1.bf16.msra.mxu0 %v753
    %778 = vmatprep.subr.bf16.mxu0 0
    %779 = vmatpush1.bf16.msra.mxu0 0
    %780 = vmatprep.subr.bf16.mxu0 0
    %781 = vmatpush1.bf16.msra.mxu0 0
    %782 = vmatprep.subr.bf16.mxu0 0
    %783 = vmatpush1.bf16.msra.mxu0 0
    %784 = vmatprep.subr.bf16.mxu0 0
    %785 = vmatpush1.bf16.msra.mxu0 0
    %786 = vmatprep.subr.bf16.mxu0 0
    %787 = vmatpush1.bf16.msra.mxu0 0
    %788 = vmatprep.subr.bf16.mxu0 0
    %789 = vmatpush1.bf16.msra.mxu0 0
    %790 = vmatprep.subr.bf16.mxu0 0
    %791 = vmatpush1.bf16.msra.mxu0 0
    %792 = vmatprep.subr.bf16.mxu0 0
    %793 = vmatpush1.bf16.msra.mxu0 0
    %794 = vmatprep.mubr.bf16.mxu0 0
    %795 = vmatmul.mubr.bf16.gmra.mrb[0].mxu0 %v709
    %v796 = vpop.f32.mrb[0].mxu0
    %v797 = vadd.f32 %v713, %v796
    %v798 = vpop.f32.mrb[0].mxu0
    %v799 = vpop.f32.mrb[0].mxu0
    %v800 = vadd.f32 %v713, %v799
    %v801 = vpop.f32.mrb[0].mxu0
    %802 = vdwg.mxu0
    %v803 = vadd.f32 %v634, %v797
    %v804 = vadd.f32 %v635, %v800
    %v805 = vld [vmem:[#allocation4 + $0x30] sm:$0x1]
    %v806 = vld [vmem:[#allocation4 + $0x38] sm:$0x1]
    %v807 = vsel %vm102, %v803, 0.0
    %808 = vadd.xlane.f32.xlu0 %v807
    %v809 = vpop.xlane.xlu0 %808
    %v810 = vsel %vm102, %v804, 0.0
    %811 = vadd.xlane.f32.xlu0 %v810
    %v812 = vpop.xlane.xlu0 %811
    %v813 = vmul.f32 %v809, %v603
    %v814 = vmul.f32 %v812, %v603
    %v815 = vsub.f32 %v803, %v813
    %v816 = vsub.f32 %v804, %v814
    %v817 = vmul.f32 %v815, %v815
    %v818 = vmul.f32 %v816, %v816
    %v819 = vsel %vm102, %v817, 0.0
    %820 = vadd.xlane.f32.xlu0 %v819
    %v821 = vpop.xlane.xlu0 %820
    %v822 = vsel %vm102, %v818, 0.0
    %823 = vadd.xlane.f32.xlu0 %v822
    %v824 = vpop.xlane.xlu0 %823
    %v825 = vmul.f32 %v821, %v603
    %v826 = vmul.f32 %v824, %v603
    %v827 = vadd.f32 %v825, 1e-05
    %v828 = vadd.f32 %v826, 1e-05
    %v829 = vrsqrt.pop %v827
    %v830 = vrsqrt.pop %v828
    %v831 = vmul.f32 %v815, %v829
    %v832 = vmul.f32 %v816, %v830
    %v833 = vlaneseq
    %v834 = vshrl.u32 %v833, 7
    %v835 = vsub.s32 0, %v834
    %v836 = vrot.slane %v805, %v835
    %v837 = vmul.f32 %v831, %v836
    %v838 = vmul.f32 %v832, %v836
    %v839 = vlaneseq
    %v840 = vshrl.u32 %v839, 7
    %v841 = vsub.s32 0, %v840
    %v842 = vrot.slane %v806, %v841
    %v843 = vadd.f32 %v837, %v842
    %v844 = vadd.f32 %v838, %v842
    %v845 = vld [vmem:[#allocation2 + $0x58] sm:$0x7]
    %v846 = vld [vmem:[#allocation4 + $0x40] sm:$0x1]
    %v847 = vld [vmem:[#allocation2 + $0x60] sm:$0x7]
    %v848 = vld [vmem:[#allocation4 + $0x48] sm:$0x1]
    %v849 = vpack.c.bf16 %v844, %v843
    %v850 = vlaneseq
    %v851 = vshrl.u32 %v850, 7
    %v852 = vsub.s32 0, %v851
    %v853 = vrot.slane %v846, %v852
    %v855 = vsel %vm102, %v849, 0
    %v858 = vsel %vm106, %v845, 0
    %860 = vmatprep.subr.bf16.mxu0 0
    %861 = vmatpush1.bf16.msra.mxu0 %v858
    %862 = vmatprep.subr.bf16.mxu0 0
    %863 = vmatpush1.bf16.msra.mxu0 0
    %864 = vmatprep.subr.bf16.mxu0 0
    %865 = vmatpush1.bf16.msra.mxu0 0
    %866 = vmatprep.subr.bf16.mxu0 0
    %867 = vmatpush1.bf16.msra.mxu0 0
    %868 = vmatprep.subr.bf16.mxu0 0
    %869 = vmatpush1.bf16.msra.mxu0 0
    %870 = vmatprep.subr.bf16.mxu0 0
    %871 = vmatpush1.bf16.msra.mxu0 0
    %872 = vmatprep.subr.bf16.mxu0 0
    %873 = vmatpush1.bf16.msra.mxu0 0
    %874 = vmatprep.subr.bf16.mxu0 0
    %875 = vmatpush1.bf16.msra.mxu0 0
    %876 = vmatprep.subr.bf16.mxu0 0
    %877 = vmatpush1.bf16.msra.mxu0 0
    %878 = vmatprep.subr.bf16.mxu0 0
    %879 = vmatpush1.bf16.msra.mxu0 0
    %880 = vmatprep.subr.bf16.mxu0 0
    %881 = vmatpush1.bf16.msra.mxu0 0
    %882 = vmatprep.subr.bf16.mxu0 0
    %883 = vmatpush1.bf16.msra.mxu0 0
    %884 = vmatprep.subr.bf16.mxu0 0
    %885 = vmatpush1.bf16.msra.mxu0 0
    %886 = vmatprep.subr.bf16.mxu0 0
    %887 = vmatpush1.bf16.msra.mxu0 0
    %888 = vmatprep.subr.bf16.mxu0 0
    %889 = vmatpush1.bf16.msra.mxu0 0
    %890 = vmatprep.subr.bf16.mxu0 0
    %891 = vmatpush1.bf16.msra.mxu0 0
    %892 = vmatprep.mubr.bf16.mxu0 0
    %893 = vmatmul.mubr.bf16.gmra.mrb[0].mxu0 %v855
    %v894 = vpop.f32.mrb[0].mxu0
    %v895 = vadd.f32 %v853, %v894
    %v896 = vpop.f32.mrb[0].mxu0
    %v897 = vpop.f32.mrb[0].mxu0
    %v898 = vadd.f32 %v853, %v897
    %v899 = vpop.f32.mrb[0].mxu0
    %900 = vdwg.mxu0
    %v901 = vmul.f32 %v895, 0.70710677
    %v902 = vmul.f32 %v898, 0.70710677
    %v903 = vpack.c.bf16 %v902, %v901
    %v904 = vpack.c.bf16 %v898, %v895
    %906 = vrot.lane.b32.xlu0 %v904, 122
    %v907 = vpop.permute.xlu0 %906
    %v909 = vsel %vm158, %v903, 0
    %v912 = vsel %vm158, %v907, 0
    %914 = vmatprep.subr.bf16.mxu0 0
    %915 = vmatpush1.bf16.xpose.msra.mxu0 %v912
    %916 = vmatprep.subr.bf16.mxu0 0
    %917 = vmatpush1.bf16.xpose.msra.mxu0 0
    %918 = vmatprep.subr.bf16.mxu0 0
    %919 = vmatpush1.bf16.xpose.msra.mxu0 0
    %920 = vmatprep.subr.bf16.mxu0 0
    %921 = vmatpush1.bf16.xpose.msra.mxu0 0
    %922 = vmatprep.subr.bf16.mxu0 0
    %923 = vmatpush1.bf16.xpose.msra.mxu0 0
    %924 = vmatprep.subr.bf16.mxu0 0
    %925 = vmatpush1.bf16.xpose.msra.mxu0 0
    %926 = vmatprep.subr.bf16.mxu0 0
    %927 = vmatpush1.bf16.xpose.msra.mxu0 0
    %928 = vmatprep.subr.bf16.mxu0 0
    %929 = vmatpush1.bf16.xpose.msra.mxu0 0
    %930 = vmatprep.subr.bf16.mxu0 0
    %931 = vmatpush1.bf16.xpose.msra.mxu0 0
    %932 = vmatprep.subr.bf16.mxu0 0
    %933 = vmatpush1.bf16.xpose.msra.mxu0 0
    %934 = vmatprep.subr.bf16.mxu0 0
    %935 = vmatpush1.bf16.xpose.msra.mxu0 0
    %936 = vmatprep.subr.bf16.mxu0 0
    %937 = vmatpush1.bf16.xpose.msra.mxu0 0
    %938 = vmatprep.subr.bf16.mxu0 0
    %939 = vmatpush1.bf16.xpose.msra.mxu0 0
    %940 = vmatprep.subr.bf16.mxu0 0
    %941 = vmatpush1.bf16.xpose.msra.mxu0 0
    %942 = vmatprep.subr.bf16.mxu0 0
    %943 = vmatpush1.bf16.xpose.msra.mxu0 0
    %944 = vmatprep.subr.bf16.mxu0 0
    %945 = vmatpush1.bf16.xpose.msra.mxu0 0
    %946 = vmatprep.mubr.bf16.mxu0 0
    %947 = vmatmul.mubr.bf16.gmra.mrb[0].mxu0 %v909
    %v948 = vpop.f32.mrb[0].mxu0
    %v949 = vadd.f32 %v91, %v948
    %v950 = vpop.f32.mrb[0].mxu0
    %v951 = vpop.f32.mrb[0].mxu0
    %v952 = vadd.f32 %v92, %v951
    %v953 = vpop.f32.mrb[0].mxu0
    %954 = vdwg.mxu0
    %v955 = vsel %vm206, %v949, -inf
    %956 = vmax.xlane.f32.xlu0 %v955
    %v957 = vpop.xlane.xlu0 %956
    %v958 = vsel %vm206, %v952, -inf
    %959 = vmax.xlane.f32.xlu0 %v958
    %v960 = vpop.xlane.xlu0 %959
    %v961 = vsub.f32 %v949, %v957
    %v962 = vsub.f32 %v952, %v960
    %v963 = vmul.f32 %v961, 1.442695
    %v964 = vpow.pop %v963
    %v965 = vmul.f32 %v962, 1.442695
    %v966 = vpow.pop %v965
    %v967 = vsel %vm206, %v964, 0.0
    %968 = vadd.xlane.f32.xlu0 %v967
    %v969 = vpop.xlane.xlu0 %968
    %v970 = vsel %vm206, %v966, 0.0
    %971 = vadd.xlane.f32.xlu0 %v970
    %v972 = vpop.xlane.xlu0 %971
    %v973 = vrcp.pop %v969
    %v974 = vrcp.pop %v972
    %v975 = vmul.f32 %v964, %v973
    %v976 = vmul.f32 %v966, %v974
    %v977 = vpack.c.bf16 %v976, %v975
    %978 = vrot.lane.b32.xlu0 %v904, 116
    %v979 = vpop.permute.xlu0 %978
    %v982 = vsel %vm206, %v977, 0
    %984 = vmatprep.subr.bf16.mxu0 0
    %985 = vmatpush1.bf16.msra.mxu0 %v979
    %986 = vmatprep.subr.bf16.mxu0 0
    %987 = vmatpush1.bf16.msra.mxu0 0
    %988 = vmatprep.subr.bf16.mxu0 0
    %989 = vmatpush1.bf16.msra.mxu0 0
    %990 = vmatprep.subr.bf16.mxu0 0
    %991 = vmatpush1.bf16.msra.mxu0 0
    %992 = vmatprep.subr.bf16.mxu0 0
    %993 = vmatpush1.bf16.msra.mxu0 0
    %994 = vmatprep.subr.bf16.mxu0 0
    %995 = vmatpush1.bf16.msra.mxu0 0
    %996 = vmatprep.subr.bf16.mxu0 0
    %997 = vmatpush1.bf16.msra.mxu0 0
    %998 = vmatprep.subr.bf16.mxu0 0
    %999 = vmatpush1.bf16.msra.mxu0 0
    %1000 = vmatprep.subr.bf16.mxu0 0
    %1001 = vmatpush1.bf16.msra.mxu0 0
    %1002 = vmatprep.subr.bf16.mxu0 0
    %1003 = vmatpush1.bf16.msra.mxu0 0
    %1004 = vmatprep.subr.bf16.mxu0 0
    %1005 = vmatpush1.bf16.msra.mxu0 0
    %1006 = vmatprep.subr.bf16.mxu0 0
    %1007 = vmatpush1.bf16.msra.mxu0 0
    %1008 = vmatprep.subr.bf16.mxu0 0
    %1009 = vmatpush1.bf16.msra.mxu0 0
    %1010 = vmatprep.subr.bf16.mxu0 0
    %1011 = vmatpush1.bf16.msra.mxu0 0
    %1012 = vmatprep.subr.bf16.mxu0 0
    %1013 = vmatpush1.bf16.msra.mxu0 0
    %1014 = vmatprep.subr.bf16.mxu0 0
    %1015 = vmatpush1.bf16.msra.mxu0 0
    %1016 = vmatprep.mubr.bf16.mxu0 0
    %1017 = vmatmul.mubr.bf16.gmra.mrb[0].mxu0 %v982
    %v1018 = vpop.f32.mrb[0].mxu0
    %v1019 = vadd.f32 0.0, %v1018
    %v1020 = vpop.f32.mrb[0].mxu0
    %v1021 = vpop.f32.mrb[0].mxu0
    %v1022 = vadd.f32 0.0, %v1021
    %v1023 = vpop.f32.mrb[0].mxu0
    %1024 = vdwg.mxu0
    %1026 = vrot.lane.b32.xlu0 %v903, 126
    %v1027 = vpop.permute.xlu0 %1026
    %1028 = vrot.lane.b32.xlu0 %v904, 120
    %v1029 = vpop.permute.xlu0 %1028
    %v1031 = vsel %vm158, %v1027, 0
    %v1034 = vsel %vm158, %v1029, 0
    %1036 = vmatprep.subr.bf16.mxu0 0
    %1037 = vmatpush1.bf16.xpose.msra.mxu0 %v1034
    %1038 = vmatprep.subr.bf16.mxu0 0
    %1039 = vmatpush1.bf16.xpose.msra.mxu0 0
    %1040 = vmatprep.subr.bf16.mxu0 0
    %1041 = vmatpush1.bf16.xpose.msra.mxu0 0
    %1042 = vmatprep.subr.bf16.mxu0 0
    %1043 = vmatpush1.bf16.xpose.msra.mxu0 0
    %1044 = vmatprep.subr.bf16.mxu0 0
    %1045 = vmatpush1.bf16.xpose.msra.mxu0 0
    %1046 = vmatprep.subr.bf16.mxu0 0
    %1047 = vmatpush1.bf16.xpose.msra.mxu0 0
    %1048 = vmatprep.subr.bf16.mxu0 0
    %1049 = vmatpush1.bf16.xpose.msra.mxu0 0
    %1050 = vmatprep.subr.bf16.mxu0 0
    %1051 = vmatpush1.bf16.xpose.msra.mxu0 0
    %1052 = vmatprep.subr.bf16.mxu0 0
    %1053 = vmatpush1.bf16.xpose.msra.mxu0 0
    %1054 = vmatprep.subr.bf16.mxu0 0
    %1055 = vmatpush1.bf16.xpose.msra.mxu0 0
    %1056 = vmatprep.subr.bf16.mxu0 0
    %1057 = vmatpush1.bf16.xpose.msra.mxu0 0
    %1058 = vmatprep.subr.bf16.mxu0 0
    %1059 = vmatpush1.bf16.xpose.msra.mxu0 0
    %1060 = vmatprep.subr.bf16.mxu0 0
    %1061 = vmatpush1.bf16.xpose.msra.mxu0 0
    %1062 = vmatprep.subr.bf16.mxu0 0
    %1063 = vmatpush1.bf16.xpose.msra.mxu0 0
    %1064 = vmatprep.subr.bf16.mxu0 0
    %1065 = vmatpush1.bf16.xpose.msra.mxu0 0
    %1066 = vmatprep.subr.bf16.mxu0 0
    %1067 = vmatpush1.bf16.xpose.msra.mxu0 0
    %1068 = vmatprep.mubr.bf16.mxu0 0
    %1069 = vmatmul.mubr.bf16.gmra.mrb[0].mxu0 %v1031
    %v1070 = vpop.f32.mrb[0].mxu0
    %v1071 = vadd.f32 %v91, %v1070
    %v1072 = vpop.f32.mrb[0].mxu0
    %v1073 = vpop.f32.mrb[0].mxu0
    %v1074 = vadd.f32 %v92, %v1073
    %v1075 = vpop.f32.mrb[0].mxu0
    %1076 = vdwg.mxu0
    %v1077 = vsel %vm206, %v1071, -inf
    %1078 = vmax.xlane.f32.xlu0 %v1077
    %v1079 = vpop.xlane.xlu0 %1078
    %v1080 = vsel %vm206, %v1074, -inf
    %1081 = vmax.xlane.f32.xlu0 %v1080
    %v1082 = vpop.xlane.xlu0 %1081
    %v1083 = vsub.f32 %v1071, %v1079
    %v1084 = vsub.f32 %v1074, %v1082
    %v1085 = vmul.f32 %v1083, 1.442695
    %v1086 = vpow.pop %v1085
    %v1087 = vmul.f32 %v1084, 1.442695
    %v1088 = vpow.pop %v1087
    %v1089 = vsel %vm206, %v1086, 0.0
    %1090 = vadd.xlane.f32.xlu0 %v1089
    %v1091 = vpop.xlane.xlu0 %1090
    %v1092 = vsel %vm206, %v1088, 0.0
    %1093 = vadd.xlane.f32.xlu0 %v1092
    %v1094 = vpop.xlane.xlu0 %1093
    %v1095 = vrcp.pop %v1091
    %v1096 = vrcp.pop %v1094
    %v1097 = vmul.f32 %v1086, %v1095
    %v1098 = vmul.f32 %v1088, %v1096
    %v1099 = vpack.c.bf16 %v1098, %v1097
    %1100 = vrot.lane.b32.xlu0 %v904, 114
    %v1101 = vpop.permute.xlu0 %1100
    %v1104 = vsel %vm206, %v1099, 0
    %1106 = vmatprep.subr.bf16.mxu0 0
    %1107 = vmatpush1.bf16.msra.mxu0 %v1101
    %1108 = vmatprep.subr.bf16.mxu0 0
    %1109 = vmatpush1.bf16.msra.mxu0 0
    %1110 = vmatprep.subr.bf16.mxu0 0
    %1111 = vmatpush1.bf16.msra.mxu0 0
    %1112 = vmatprep.subr.bf16.mxu0 0
    %1113 = vmatpush1.bf16.msra.mxu0 0
    %1114 = vmatprep.subr.bf16.mxu0 0
    %1115 = vmatpush1.bf16.msra.mxu0 0
    %1116 = vmatprep.subr.bf16.mxu0 0
    %1117 = vmatpush1.bf16.msra.mxu0 0
    %1118 = vmatprep.subr.bf16.mxu0 0
    %1119 = vmatpush1.bf16.msra.mxu0 0
    %1120 = vmatprep.subr.bf16.mxu0 0
    %1121 = vmatpush1.bf16.msra.mxu0 0
    %1122 = vmatprep.subr.bf16.mxu0 0
    %1123 = vmatpush1.bf16.msra.mxu0 0
    %1124 = vmatprep.subr.bf16.mxu0 0
    %1125 = vmatpush1.bf16.msra.mxu0 0
    %1126 = vmatprep.subr.bf16.mxu0 0
    %1127 = vmatpush1.bf16.msra.mxu0 0
    %1128 = vmatprep.subr.bf16.mxu0 0
    %1129 = vmatpush1.bf16.msra.mxu0 0
    %1130 = vmatprep.subr.bf16.mxu0 0
    %1131 = vmatpush1.bf16.msra.mxu0 0
    %1132 = vmatprep.subr.bf16.mxu0 0
    %1133 = vmatpush1.bf16.msra.mxu0 0
    %1134 = vmatprep.subr.bf16.mxu0 0
    %1135 = vmatpush1.bf16.msra.mxu0 0
    %1136 = vmatprep.subr.bf16.mxu0 0
    %1137 = vmatpush1.bf16.msra.mxu0 0
    %1138 = vmatprep.mubr.bf16.mxu0 0
    %1139 = vmatmul.mubr.bf16.gmra.mrb[0].mxu0 %v1104
    %v1140 = vpop.f32.mrb[0].mxu0
    %v1141 = vadd.f32 0.0, %v1140
    %v1142 = vpop.f32.mrb[0].mxu0
    %v1143 = vpop.f32.mrb[0].mxu0
    %v1144 = vadd.f32 0.0, %v1143
    %v1145 = vpop.f32.mrb[0].mxu0
    %1146 = vdwg.mxu0
    %1147 = vrot.lane.b32.xlu0 %v903, 124
    %v1148 = vpop.permute.xlu0 %1147
    %1149 = vrot.lane.b32.xlu0 %v904, 118
    %v1150 = vpop.permute.xlu0 %1149
    %v1152 = vsel %vm158, %v1148, 0
    %v1155 = vsel %vm158, %v1150, 0
    %1157 = vmatprep.subr.bf16.mxu0 0
    %1158 = vmatpush1.bf16.xpose.msra.mxu0 %v1155
    %1159 = vmatprep.subr.bf16.mxu0 0
    %1160 = vmatpush1.bf16.xpose.msra.mxu0 0
    %1161 = vmatprep.subr.bf16.mxu0 0
    %1162 = vmatpush1.bf16.xpose.msra.mxu0 0
    %1163 = vmatprep.subr.bf16.mxu0 0
    %1164 = vmatpush1.bf16.xpose.msra.mxu0 0
    %1165 = vmatprep.subr.bf16.mxu0 0
    %1166 = vmatpush1.bf16.xpose.msra.mxu0 0
    %1167 = vmatprep.subr.bf16.mxu0 0
    %1168 = vmatpush1.bf16.xpose.msra.mxu0 0
    %1169 = vmatprep.subr.bf16.mxu0 0
    %1170 = vmatpush1.bf16.xpose.msra.mxu0 0
    %1171 = vmatprep.subr.bf16.mxu0 0
    %1172 = vmatpush1.bf16.xpose.msra.mxu0 0
    %1173 = vmatprep.subr.bf16.mxu0 0
    %1174 = vmatpush1.bf16.xpose.msra.mxu0 0
    %1175 = vmatprep.subr.bf16.mxu0 0
    %1176 = vmatpush1.bf16.xpose.msra.mxu0 0
    %1177 = vmatprep.subr.bf16.mxu0 0
    %1178 = vmatpush1.bf16.xpose.msra.mxu0 0
    %1179 = vmatprep.subr.bf16.mxu0 0
    %1180 = vmatpush1.bf16.xpose.msra.mxu0 0
    %1181 = vmatprep.subr.bf16.mxu0 0
    %1182 = vmatpush1.bf16.xpose.msra.mxu0 0
    %1183 = vmatprep.subr.bf16.mxu0 0
    %1184 = vmatpush1.bf16.xpose.msra.mxu0 0
    %1185 = vmatprep.subr.bf16.mxu0 0
    %1186 = vmatpush1.bf16.xpose.msra.mxu0 0
    %1187 = vmatprep.subr.bf16.mxu0 0
    %1188 = vmatpush1.bf16.xpose.msra.mxu0 0
    %1189 = vmatprep.mubr.bf16.mxu0 0
    %1190 = vmatmul.mubr.bf16.gmra.mrb[0].mxu0 %v1152
    %v1191 = vpop.f32.mrb[0].mxu0
    %v1192 = vadd.f32 %v91, %v1191
    %v1193 = vpop.f32.mrb[0].mxu0
    %v1194 = vpop.f32.mrb[0].mxu0
    %v1195 = vadd.f32 %v92, %v1194
    %v1196 = vpop.f32.mrb[0].mxu0
    %1197 = vdwg.mxu0
    %v1198 = vsel %vm206, %v1192, -inf
    %1199 = vmax.xlane.f32.xlu0 %v1198
    %v1200 = vpop.xlane.xlu0 %1199
    %v1201 = vsel %vm206, %v1195, -inf
    %1202 = vmax.xlane.f32.xlu0 %v1201
    %v1203 = vpop.xlane.xlu0 %1202
    %v1204 = vsub.f32 %v1192, %v1200
    %v1205 = vsub.f32 %v1195, %v1203
    %v1206 = vmul.f32 %v1204, 1.442695
    %v1207 = vpow.pop %v1206
    %v1208 = vmul.f32 %v1205, 1.442695
    %v1209 = vpow.pop %v1208
    %v1210 = vsel %vm206, %v1207, 0.0
    %1211 = vadd.xlane.f32.xlu0 %v1210
    %v1212 = vpop.xlane.xlu0 %1211
    %v1213 = vsel %vm206, %v1209, 0.0
    %1214 = vadd.xlane.f32.xlu0 %v1213
    %v1215 = vpop.xlane.xlu0 %1214
    %v1216 = vrcp.pop %v1212
    %v1217 = vrcp.pop %v1215
    %v1218 = vmul.f32 %v1207, %v1216
    %v1219 = vmul.f32 %v1209, %v1217
    %v1220 = vpack.c.bf16 %v1219, %v1218
    %1221 = vrot.lane.b32.xlu0 %v904, 112
    %v1222 = vpop.permute.xlu0 %1221
    %v1225 = vsel %vm206, %v1220, 0
    %1227 = vmatprep.subr.bf16.mxu0 0
    %1228 = vmatpush1.bf16.msra.mxu0 %v1222
    %1229 = vmatprep.subr.bf16.mxu0 0
    %1230 = vmatpush1.bf16.msra.mxu0 0
    %1231 = vmatprep.subr.bf16.mxu0 0
    %1232 = vmatpush1.bf16.msra.mxu0 0
    %1233 = vmatprep.subr.bf16.mxu0 0
    %1234 = vmatpush1.bf16.msra.mxu0 0
    %1235 = vmatprep.subr.bf16.mxu0 0
    %1236 = vmatpush1.bf16.msra.mxu0 0
    %1237 = vmatprep.subr.bf16.mxu0 0
    %1238 = vmatpush1.bf16.msra.mxu0 0
    %1239 = vmatprep.subr.bf16.mxu0 0
    %1240 = vmatpush1.bf16.msra.mxu0 0
    %1241 = vmatprep.subr.bf16.mxu0 0
    %1242 = vmatpush1.bf16.msra.mxu0 0
    %1243 = vmatprep.subr.bf16.mxu0 0
    %1244 = vmatpush1.bf16.msra.mxu0 0
    %1245 = vmatprep.subr.bf16.mxu0 0
    %1246 = vmatpush1.bf16.msra.mxu0 0
    %1247 = vmatprep.subr.bf16.mxu0 0
    %1248 = vmatpush1.bf16.msra.mxu0 0
    %1249 = vmatprep.subr.bf16.mxu0 0
    %1250 = vmatpush1.bf16.msra.mxu0 0
    %1251 = vmatprep.subr.bf16.mxu0 0
    %1252 = vmatpush1.bf16.msra.mxu0 0
    %1253 = vmatprep.subr.bf16.mxu0 0
    %1254 = vmatpush1.bf16.msra.mxu0 0
    %1255 = vmatprep.subr.bf16.mxu0 0
    %1256 = vmatpush1.bf16.msra.mxu0 0
    %1257 = vmatprep.subr.bf16.mxu0 0
    %1258 = vmatpush1.bf16.msra.mxu0 0
    %1259 = vmatprep.mubr.bf16.mxu0 0
    %1260 = vmatmul.mubr.bf16.gmra.mrb[0].mxu0 %v1225
    %v1261 = vpop.f32.mrb[0].mxu0
    %v1262 = vadd.f32 0.0, %v1261
    %v1263 = vpop.f32.mrb[0].mxu0
    %v1264 = vpop.f32.mrb[0].mxu0
    %v1265 = vadd.f32 0.0, %v1264
    %v1266 = vpop.f32.mrb[0].mxu0
    %1267 = vdwg.mxu0
    %1270 = vrot.lane.b32.xlu0 %v1141, 2
    %v1271 = vpop.permute.xlu0 %1270
    %1272 = vrot.lane.b32.xlu0 %v1144, 2
    %v1273 = vpop.permute.xlu0 %1272
    %1278 = vrot.lane.b32.xlu0 %v1262, 4
    %v1279 = vpop.permute.xlu0 %1278
    %1280 = vrot.lane.b32.xlu0 %v1265, 4
    %v1281 = vpop.permute.xlu0 %1280
    %v1284 = vsel %vm158, %v1019, %v1271
    %v1285 = vsel %vm158, %v1022, %v1273
    %v1286 = vsel %vm538, %v1284, %v1279
    %v1287 = vsel %vm538, %v1285, %v1281
    %v1288 = vpack.c.bf16 %v1287, %v1286
    %v1289 = vlaneseq
    %v1290 = vshrl.u32 %v1289, 7
    %v1291 = vsub.s32 0, %v1290
    %v1292 = vrot.slane %v848, %v1291
    %v1294 = vsel %vm102, %v1288, 0
    %v1297 = vsel %vm106, %v847, 0
    %1299 = vmatprep.subr.bf16.mxu0 0
    %1300 = vmatpush1.bf16.msra.mxu0 %v1297
    %1301 = vmatprep.subr.bf16.mxu0 0
    %1302 = vmatpush1.bf16.msra.mxu0 0
    %1303 = vmatprep.subr.bf16.mxu0 0
    %1304 = vmatpush1.bf16.msra.mxu0 0
    %1305 = vmatprep.subr.bf16.mxu0 0
    %1306 = vmatpush1.bf16.msra.mxu0 0
    %1307 = vmatprep.subr.bf16.mxu0 0
    %1308 = vmatpush1.bf16.msra.mxu0 0
    %1309 = vmatprep.subr.bf16.mxu0 0
    %1310 = vmatpush1.bf16.msra.mxu0 0
    %1311 = vmatprep.subr.bf16.mxu0 0
    %1312 = vmatpush1.bf16.msra.mxu0 0
    %1313 = vmatprep.subr.bf16.mxu0 0
    %1314 = vmatpush1.bf16.msra.mxu0 0
    %1315 = vmatprep.subr.bf16.mxu0 0
    %1316 = vmatpush1.bf16.msra.mxu0 0
    %1317 = vmatprep.subr.bf16.mxu0 0
    %1318 = vmatpush1.bf16.msra.mxu0 0
    %1319 = vmatprep.subr.bf16.mxu0 0
    %1320 = vmatpush1.bf16.msra.mxu0 0
    %1321 = vmatprep.subr.bf16.mxu0 0
    %1322 = vmatpush1.bf16.msra.mxu0 0
    %1323 = vmatprep.subr.bf16.mxu0 0
    %1324 = vmatpush1.bf16.msra.mxu0 0
    %1325 = vmatprep.subr.bf16.mxu0 0
    %1326 = vmatpush1.bf16.msra.mxu0 0
    %1327 = vmatprep.subr.bf16.mxu0 0
    %1328 = vmatpush1.bf16.msra.mxu0 0
    %1329 = vmatprep.subr.bf16.mxu0 0
    %1330 = vmatpush1.bf16.msra.mxu0 0
    %1331 = vmatprep.mubr.bf16.mxu0 0
    %1332 = vmatmul.mubr.bf16.gmra.mrb[0].mxu0 %v1294
    %v1333 = vpop.f32.mrb[0].mxu0
    %v1334 = vadd.f32 %v1292, %v1333
    %v1335 = vpop.f32.mrb[0].mxu0
    %v1336 = vpop.f32.mrb[0].mxu0
    %v1337 = vadd.f32 %v1292, %v1336
    %v1338 = vpop.f32.mrb[0].mxu0
    %1339 = vdwg.mxu0
    %v1340 = vadd.f32 %v843, %v1334
    %v1341 = vadd.f32 %v844, %v1337
    %v1342 = vld [vmem:[#allocation4 + $0x60] sm:$0x1]
    %v1343 = vld [vmem:[#allocation4 + $0x68] sm:$0x1]
    %v1344 = vsel %vm102, %v1340, 0.0
    %1345 = vadd.xlane.f32.xlu0 %v1344
    %v1346 = vpop.xlane.xlu0 %1345
    %v1347 = vsel %vm102, %v1341, 0.0
    %1348 = vadd.xlane.f32.xlu0 %v1347
    %v1349 = vpop.xlane.xlu0 %1348
    %v1350 = vmul.f32 %v1346, %v603
    %v1351 = vmul.f32 %v1349, %v603
    %v1352 = vsub.f32 %v1340, %v1350
    %v1353 = vsub.f32 %v1341, %v1351
    %v1354 = vmul.f32 %v1352, %v1352
    %v1355 = vmul.f32 %v1353, %v1353
    %v1356 = vsel %vm102, %v1354, 0.0
    %1357 = vadd.xlane.f32.xlu0 %v1356
    %v1358 = vpop.xlane.xlu0 %1357
    %v1359 = vsel %vm102, %v1355, 0.0
    %1360 = vadd.xlane.f32.xlu0 %v1359
    %v1361 = vpop.xlane.xlu0 %1360
    %v1362 = vmul.f32 %v1358, %v603
    %v1363 = vmul.f32 %v1361, %v603
    %v1364 = vadd.f32 %v1362, 1e-05
    %v1365 = vadd.f32 %v1363, 1e-05
    %v1366 = vrsqrt.pop %v1364
    %v1367 = vrsqrt.pop %v1365
    %v1368 = vmul.f32 %v1352, %v1366
    %v1369 = vmul.f32 %v1353, %v1367
    %v1370 = vlaneseq
    %v1371 = vshrl.u32 %v1370, 7
    %v1372 = vsub.s32 0, %v1371
    %v1373 = vrot.slane %v1342, %v1372
    %v1374 = vmul.f32 %v1368, %v1373
    %v1375 = vmul.f32 %v1369, %v1373
    %v1376 = vlaneseq
    %v1377 = vshrl.u32 %v1376, 7
    %v1378 = vsub.s32 0, %v1377
    %v1379 = vrot.slane %v1343, %v1378
    %v1380 = vadd.f32 %v1374, %v1379
    %v1381 = vadd.f32 %v1375, %v1379
    %v1382 = vld [vmem:[#allocation2 + $0x68] sm:$0x7]
    %v1383 = vld [vmem:[#allocation4 + $0x50] sm:$0x1]
    %v1384 = vld [vmem:[#allocation2 + $0x70] sm:$0xf]
    %v1385 = vld [vmem:[#allocation2 + $0x74] sm:$0xf]
    %v1386 = vld [vmem:[#allocation2 + $0x78] sm:$0xf]
    %v1387 = vld [vmem:[#allocation2 + $0x7c] sm:$0xf]
    %v1388 = vld [vmem:[#allocation2 + $0x80] sm:$0xf]
    %v1389 = vld [vmem:[#allocation2 + $0x84] sm:$0xf]
    %v1390 = vld [vmem:[#allocation2 + $0x88] sm:$0xf]
    %v1391 = vld [vmem:[#allocation2 + $0x8c] sm:$0xf]
    %v1392 = vld [vmem:[#allocation2 + $0x90] sm:$0xf]
    %v1393 = vld [vmem:[#allocation2 + $0x94] sm:$0xf]
    %v1394 = vld [vmem:[#allocation2 + $0x98] sm:$0xf]
    %v1395 = vld [vmem:[#allocation2 + $0x9c] sm:$0xf]
    %v1396 = vld [vmem:[#allocation2 + $0xa0] sm:$0xf]
    %v1397 = vld [vmem:[#allocation2 + $0xa4] sm:$0xf]
    %v1398 = vld [vmem:[#allocation2 + $0xa8] sm:$0xf]
    %v1399 = vld [vmem:[#allocation2 + $0xac] sm:$0xf]
    %v1400 = vld [vmem:[#allocation4 + $0x58] sm:$0x1]
    %v1401 = vpack.c.bf16 %v1381, %v1380
    %v1402 = vlaneseq
    %v1403 = vshrl.u32 %v1402, 7
    %v1404 = vsub.s32 0, %v1403
    %v1405 = vrot.slane %v1383, %v1404
    %v1407 = vsel %vm102, %v1401, 0
    %v1410 = vsel %vm106, %v1382, 0
    %1412 = vmatprep.subr.bf16.mxu0 0
    %1413 = vmatpush1.bf16.msra.mxu0 %v1410
    %1414 = vmatprep.subr.bf16.mxu0 0
    %1415 = vmatpush1.bf16.msra.mxu0 0
    %1416 = vmatprep.subr.bf16.mxu0 0
    %1417 = vmatpush1.bf16.msra.mxu0 0
    %1418 = vmatprep.subr.bf16.mxu0 0
    %1419 = vmatpush1.bf16.msra.mxu0 0
    %1420 = vmatprep.subr.bf16.mxu0 0
    %1421 = vmatpush1.bf16.msra.mxu0 0
    %1422 = vmatprep.subr.bf16.mxu0 0
    %1423 = vmatpush1.bf16.msra.mxu0 0
    %1424 = vmatprep.subr.bf16.mxu0 0
    %1425 = vmatpush1.bf16.msra.mxu0 0
    %1426 = vmatprep.subr.bf16.mxu0 0
    %1427 = vmatpush1.bf16.msra.mxu0 0
    %1428 = vmatprep.subr.bf16.mxu0 0
    %1429 = vmatpush1.bf16.msra.mxu0 0
    %1430 = vmatprep.subr.bf16.mxu0 0
    %1431 = vmatpush1.bf16.msra.mxu0 0
    %1432 = vmatprep.subr.bf16.mxu0 0
    %1433 = vmatpush1.bf16.msra.mxu0 0
    %1434 = vmatprep.subr.bf16.mxu0 0
    %1435 = vmatpush1.bf16.msra.mxu0 0
    %1436 = vmatprep.subr.bf16.mxu0 0
    %1437 = vmatpush1.bf16.msra.mxu0 0
    %1438 = vmatprep.subr.bf16.mxu0 0
    %1439 = vmatpush1.bf16.msra.mxu0 0
    %1440 = vmatprep.subr.bf16.mxu0 0
    %1441 = vmatpush1.bf16.msra.mxu0 0
    %1442 = vmatprep.subr.bf16.mxu0 0
    %1443 = vmatpush1.bf16.msra.mxu0 0
    %1444 = vmatprep.mubr.bf16.mxu0 0
    %1445 = vmatmul.mubr.bf16.gmra.mrb[0].mxu0 %v1407
    %v1446 = vpop.f32.mrb[0].mxu0
    %v1447 = vadd.f32 %v1405, %v1446
    %v1448 = vpop.f32.mrb[0].mxu0
    %v1449 = vpop.f32.mrb[0].mxu0
    %v1450 = vadd.f32 %v1405, %v1449
    %v1451 = vpop.f32.mrb[0].mxu0
    %1452 = vdwg.mxu0
    %v1453 = vmax.f32 %v1447, 0.0
    %v1454 = vmax.f32 %v1450, 0.0
    %v1455 = vpack.c.bf16 %v1454, %v1453
    %v1456 = vlaneseq
    %v1457 = vshrl.u32 %v1456, 7
    %v1458 = vsub.s32 0, %v1457
    %v1459 = vrot.slane %v1400, %v1458
    %v1476 = vunpack.c.l.b16 %v1384
    %v1477 = vunpack.c.l.b16 %v1385
    %v1478 = vunpack.c.l.b16 %v1386
    %v1479 = vunpack.c.l.b16 %v1387
    %v1480 = vunpack.c.l.b16 %v1388
    %v1481 = vunpack.c.l.b16 %v1389
    %v1482 = vunpack.c.l.b16 %v1390
    %v1483 = vunpack.c.l.b16 %v1391
    %v1484 = vunpack.c.l.b16 %v1392
    %v1485 = vunpack.c.l.b16 %v1393
    %v1486 = vunpack.c.l.b16 %v1394
    %v1487 = vunpack.c.l.b16 %v1395
    %v1488 = vunpack.c.l.b16 %v1396
    %v1489 = vunpack.c.l.b16 %v1397
    %v1490 = vunpack.c.l.b16 %v1398
    %v1491 = vunpack.c.l.b16 %v1399
    %v1492 = vpack.c.b16 %v1477, %v1476
    %v1493 = vpack.c.b16 %v1479, %v1478
    %v1494 = vpack.c.b16 %v1481, %v1480
    %v1495 = vpack.c.b16 %v1483, %v1482
    %v1496 = vpack.c.b16 %v1485, %v1484
    %v1497 = vpack.c.b16 %v1487, %v1486
    %v1498 = vpack.c.b16 %v1489, %v1488
    %v1499 = vpack.c.b16 %v1491, %v1490
    %1508 = vmatprep.subr.bf16.mxu0 0
    %1509 = vmatpush1.bf16.msra.mxu0 %v1492
    %1510 = vmatprep.subr.bf16.mxu0 0
    %1511 = vmatpush1.bf16.msra.mxu0 %v1493
    %1512 = vmatprep.subr.bf16.mxu0 0
    %1513 = vmatpush1.bf16.msra.mxu0 %v1494
    %1514 = vmatprep.subr.bf16.mxu0 0
    %1515 = vmatpush1.bf16.msra.mxu0 %v1495
    %1516 = vmatprep.subr.bf16.mxu0 0
    %1517 = vmatpush1.bf16.msra.mxu0 %v1496
    %1518 = vmatprep.subr.bf16.mxu0 0
    %1519 = vmatpush1.bf16.msra.mxu0 %v1497
    %1520 = vmatprep.subr.bf16.mxu0 0
    %1521 = vmatpush1.bf16.msra.mxu0 %v1498
    %1522 = vmatprep.subr.bf16.mxu0 0
    %1523 = vmatpush1.bf16.msra.mxu0 %v1499
    %1524 = vmatprep.subr.bf16.mxu0 0
    %1525 = vmatpush1.bf16.msra.mxu0 0
    %1526 = vmatprep.subr.bf16.mxu0 0
    %1527 = vmatpush1.bf16.msra.mxu0 0
    %1528 = vmatprep.subr.bf16.mxu0 0
    %1529 = vmatpush1.bf16.msra.mxu0 0
    %1530 = vmatprep.subr.bf16.mxu0 0
    %1531 = vmatpush1.bf16.msra.mxu0 0
    %1532 = vmatprep.subr.bf16.mxu0 0
    %1533 = vmatpush1.bf16.msra.mxu0 0
    %1534 = vmatprep.subr.bf16.mxu0 0
    %1535 = vmatpush1.bf16.msra.mxu0 0
    %1536 = vmatprep.subr.bf16.mxu0 0
    %1537 = vmatpush1.bf16.msra.mxu0 0
    %1538 = vmatprep.subr.bf16.mxu0 0
    %1539 = vmatpush1.bf16.msra.mxu0 0
    %1540 = vmatprep.mubr.bf16.mxu0 0
    %1541 = vmatmul.mubr.bf16.gmra.mrb[0].mxu0 %v1455
    %v1542 = vpop.f32.mrb[0].mxu0
    %v1543 = vadd.f32 %v1459, %v1542
    %v1544 = vpop.f32.mrb[0].mxu0
    %v1545 = vpop.f32.mrb[0].mxu0
    %v1546 = vadd.f32 %v1459, %v1545
    %v1547 = vpop.f32.mrb[0].mxu0
    %1548 = vdwg.mxu0
    %v1549 = vadd.f32 %v1380, %v1543
    %v1550 = vadd.f32 %v1381, %v1546
    %v1551 = vld [vmem:[#allocation4 + $0x70] sm:$0x1]
    %v1552 = vld [vmem:[#allocation4 + $0x78] sm:$0x1]
    %v1553 = vsel %vm102, %v1549, 0.0
    %1554 = vadd.xlane.f32.xlu0 %v1553
    %v1555 = vpop.xlane.xlu0 %1554
    %v1556 = vsel %vm102, %v1550, 0.0
    %1557 = vadd.xlane.f32.xlu0 %v1556
    %v1558 = vpop.xlane.xlu0 %1557
    %v1559 = vmul.f32 %v1555, %v603
    %v1560 = vmul.f32 %v1558, %v603
    %v1561 = vsub.f32 %v1549, %v1559
    %v1562 = vsub.f32 %v1550, %v1560
    %v1563 = vmul.f32 %v1561, %v1561
    %v1564 = vmul.f32 %v1562, %v1562
    %v1565 = vsel %vm102, %v1563, 0.0
    %1566 = vadd.xlane.f32.xlu0 %v1565
    %v1567 = vpop.xlane.xlu0 %1566
    %v1568 = vsel %vm102, %v1564, 0.0
    %1569 = vadd.xlane.f32.xlu0 %v1568
    %v1570 = vpop.xlane.xlu0 %1569
    %v1571 = vmul.f32 %v1567, %v603
    %v1572 = vmul.f32 %v1570, %v603
    %v1573 = vadd.f32 %v1571, 1e-05
    %v1574 = vadd.f32 %v1572, 1e-05
    %v1575 = vrsqrt.pop %v1573
    %v1576 = vrsqrt.pop %v1574
    %v1577 = vmul.f32 %v1561, %v1575
    %v1578 = vmul.f32 %v1562, %v1576
    %v1579 = vlaneseq
    %v1580 = vshrl.u32 %v1579, 7
    %v1581 = vsub.s32 0, %v1580
    %v1582 = vrot.slane %v1551, %v1581
    %v1583 = vmul.f32 %v1577, %v1582
    %v1584 = vmul.f32 %v1578, %v1582
    %v1585 = vlaneseq
    %v1586 = vshrl.u32 %v1585, 7
    %v1587 = vsub.s32 0, %v1586
    %v1588 = vrot.slane %v1552, %v1587
    %v1589 = vadd.f32 %v1583, %v1588
    %v1590 = vadd.f32 %v1584, %v1588
    %v1591 = vld [vmem:[#allocation4 + $0x180] sm:$0x1]
    %v1592 = vld [vmem:[#allocation2 + $0x180] sm:$0x7]
    %v1593 = vld [vmem:[#allocation2 + $0x188] sm:$0xf]
    %v1594 = vld [vmem:[#allocation2 + $0x18c] sm:$0x3]
    %v1595 = vld [vmem:[#allocation4 + $0x140] sm:$0x1]
    %v1596 = vld [vmem:[%s3] sm:$0x3]
    %v1597 = vld [vmem:[%s3 + $0x8] sm:$0x3]
    %v1598 = vpack.c.bf16 %v1590, %v1589
    %v1599 = vlaneseq
    %v1600 = vshrl.u32 %v1599, 7
    %v1601 = vsub.s32 0, %v1600
    %v1602 = vrot.slane %v1595, %v1601
    %v1604 = vsel %vm102, %v1598, 0
    %v1607 = vsel %vm106, %v1592, 0
    %1609 = vmatprep.subr.bf16.mxu0 0
    %1610 = vmatpush1.bf16.msra.mxu0 %v1607
    %1611 = vmatprep.subr.bf16.mxu0 0
    %1612 = vmatpush1.bf16.msra.mxu0 0
    %1613 = vmatprep.subr.bf16.mxu0 0
    %1614 = vmatpush1.bf16.msra.mxu0 0
    %1615 = vmatprep.subr.bf16.mxu0 0
    %1616 = vmatpush1.bf16.msra.mxu0 0
    %1617 = vmatprep.subr.bf16.mxu0 0
    %1618 = vmatpush1.bf16.msra.mxu0 0
    %1619 = vmatprep.subr.bf16.mxu0 0
    %1620 = vmatpush1.bf16.msra.mxu0 0
    %1621 = vmatprep.subr.bf16.mxu0 0
    %1622 = vmatpush1.bf16.msra.mxu0 0
    %1623 = vmatprep.subr.bf16.mxu0 0
    %1624 = vmatpush1.bf16.msra.mxu0 0
    %1625 = vmatprep.subr.bf16.mxu0 0
    %1626 = vmatpush1.bf16.msra.mxu0 0
    %1627 = vmatprep.subr.bf16.mxu0 0
    %1628 = vmatpush1.bf16.msra.mxu0 0
    %1629 = vmatprep.subr.bf16.mxu0 0
    %1630 = vmatpush1.bf16.msra.mxu0 0
    %1631 = vmatprep.subr.bf16.mxu0 0
    %1632 = vmatpush1.bf16.msra.mxu0 0
    %1633 = vmatprep.subr.bf16.mxu0 0
    %1634 = vmatpush1.bf16.msra.mxu0 0
    %1635 = vmatprep.subr.bf16.mxu0 0
    %1636 = vmatpush1.bf16.msra.mxu0 0
    %1637 = vmatprep.subr.bf16.mxu0 0
    %1638 = vmatpush1.bf16.msra.mxu0 0
    %1639 = vmatprep.subr.bf16.mxu0 0
    %1640 = vmatpush1.bf16.msra.mxu0 0
    %1641 = vmatprep.mubr.bf16.mxu0 0
    %1642 = vmatmul.mubr.bf16.gmra.mrb[0].mxu0 %v1604
    %v1643 = vpop.f32.mrb[0].mxu0
    %v1644 = vadd.f32 %v1602, %v1643
    %v1645 = vpop.f32.mrb[0].mxu0
    %v1646 = vpop.f32.mrb[0].mxu0
    %v1647 = vadd.f32 %v1602, %v1646
    %v1648 = vpop.f32.mrb[0].mxu0
    %1649 = vdwg.mxu0
    %vm1650 = vcmp.gt.f32.partialorder %v1591, 0.5
    %v1651 = vsel %vm1650, 1, 0
    %v1652 = vlaneseq
    %v1653 = vshrl.u32 %v1652, 7
    %v1654 = vsub.s32 0, %v1653
    %v1655 = vrot.slane %v1651, %v1654
    %vm1656 = vcmp.eq.s32.totalorder %v1655, 1
    %v1658 = vrot.slane %v1647, 6
    %v1660 = vsel %vm1656, %v1644, %v1658
    %v1661 = vpack.c.bf16 %v1596, %v1596
    %v1664 = vunpack.c.l.b16 %v1593
    %v1665 = vunpack.c.l.b16 %v1594
    %v1666 = vpack.c.b16 %v1665, %v1664
    %vm1667 = vcmask 97280
    %v1669 = vsel %vm1667, %v1661, 0
    %vm1671 = vcmask 1045504
    %v1673 = vsel %vm1671, %v1666, 0
    %1675 = vmatprep.subr.bf16.mxu0 0
    %1676 = vmatpush1.bf16.msra.mxu0 %v1673
    %1677 = vmatprep.subr.bf16.mxu0 0
    %1678 = vmatpush1.bf16.msra.mxu0 0
    %1679 = vmatprep.subr.bf16.mxu0 0
    %1680 = vmatpush1.bf16.msra.mxu0 0
    %1681 = vmatprep.subr.bf16.mxu0 0
    %1682 = vmatpush1.bf16.msra.mxu0 0
    %1683 = vmatprep.subr.bf16.mxu0 0
    %1684 = vmatpush1.bf16.msra.mxu0 0
    %1685 = vmatprep.subr.bf16.mxu0 0
    %1686 = vmatpush1.bf16.msra.mxu0 0
    %1687 = vmatprep.subr.bf16.mxu0 0
    %1688 = vmatpush1.bf16.msra.mxu0 0
    %1689 = vmatprep.subr.bf16.mxu0 0
    %1690 = vmatpush1.bf16.msra.mxu0 0
    %1691 = vmatprep.subr.bf16.mxu0 0
    %1692 = vmatpush1.bf16.msra.mxu0 0
    %1693 = vmatprep.subr.bf16.mxu0 0
    %1694 = vmatpush1.bf16.msra.mxu0 0
    %1695 = vmatprep.subr.bf16.mxu0 0
    %1696 = vmatpush1.bf16.msra.mxu0 0
    %1697 = vmatprep.subr.bf16.mxu0 0
    %1698 = vmatpush1.bf16.msra.mxu0 0
    %1699 = vmatprep.subr.bf16.mxu0 0
    %1700 = vmatpush1.bf16.msra.mxu0 0
    %1701 = vmatprep.subr.bf16.mxu0 0
    %1702 = vmatpush1.bf16.msra.mxu0 0
    %1703 = vmatprep.subr.bf16.mxu0 0
    %1704 = vmatpush1.bf16.msra.mxu0 0
    %1705 = vmatprep.subr.bf16.mxu0 0
    %1706 = vmatpush1.bf16.msra.mxu0 0
    %1707 = vmatprep.mubr.bf16.mxu0 0
    %1708 = vmatmul.mubr.bf16.gmra.mrb[0].mxu0 %v1669
    %v1709 = vpop.f32.mrb[0].mxu0
    %v1710 = vadd.f32 0.0, %v1709
    %v1711 = vpop.f32.mrb[0].mxu0
    %v1712 = vpop.f32.mrb[0].mxu0
    %v1713 = vpop.f32.mrb[0].mxu0
    %1714 = vdwg.mxu0
    %v1715 = vadd.f32 %v1660, %v1710
    %v1716 = vxor.u32 %v1715, 2147483648
    %v1717 = vmul.f32 %v1716, 1.442695
    %v1718 = vpow.pop %v1717
    %v1719 = vadd.f32 %v1718, 1.0
    %v1720 = vrcp.pop %v1719
    %v1721 = vmul.f32 1.0, %v1720
    %v1722 = vtanh.pop %v1715
    %1724 = vrot.lane.b32.xlu0 %v1597, 12
    %v1725 = vpop.permute.xlu0 %1724
    %v1727 = vmul.f32 %v1721, %v1725
    %1729 = vrot.lane.b32.xlu0 %v1722, 104
    %v1730 = vpop.permute.xlu0 %1729
    %v1732 = vmul.f32 %v1721, %v1730
    %1734 = vrot.lane.b32.xlu0 %v1732, 12
    %v1735 = vpop.permute.xlu0 %1734
    %v1737 = vadd.f32 %v1727, %v1735
    %v1738 = vtanh.pop %v1737
    %1740 = vrot.lane.b32.xlu0 %v1738, 24
    %v1741 = vpop.permute.xlu0 %1740
    %v1743 = vmul.f32 %v1721, %v1741
    %v1744 = vrot.slane %v1647, 2
    %v1746 = vsel %vm1656, %v1644, %v1744
    %v1747 = vpack.c.bf16 %v1743, %v1743
    %1749 = vrot.lane.b32.xlu0 %v1747, 92
    %v1750 = vpop.permute.xlu0 %1749
    %v1752 = vsel %vm1667, %v1750, 0
    %1754 = vmatprep.subr.bf16.mxu0 0
    %1755 = vmatpush1.bf16.msra.mxu0 %v1673
    %1756 = vmatprep.subr.bf16.mxu0 0
    %1757 = vmatpush1.bf16.msra.mxu0 0
    %1758 = vmatprep.subr.bf16.mxu0 0
    %1759 = vmatpush1.bf16.msra.mxu0 0
    %1760 = vmatprep.subr.bf16.mxu0 0
    %1761 = vmatpush1.bf16.msra.mxu0 0
    %1762 = vmatprep.subr.bf16.mxu0 0
    %1763 = vmatpush1.bf16.msra.mxu0 0
    %1764 = vmatprep.subr.bf16.mxu0 0
    %1765 = vmatpush1.bf16.msra.mxu0 0
    %1766 = vmatprep.subr.bf16.mxu0 0
    %1767 = vmatpush1.bf16.msra.mxu0 0
    %1768 = vmatprep.subr.bf16.mxu0 0
    %1769 = vmatpush1.bf16.msra.mxu0 0
    %1770 = vmatprep.subr.bf16.mxu0 0
    %1771 = vmatpush1.bf16.msra.mxu0 0
    %1772 = vmatprep.subr.bf16.mxu0 0
    %1773 = vmatpush1.bf16.msra.mxu0 0
    %1774 = vmatprep.subr.bf16.mxu0 0
    %1775 = vmatpush1.bf16.msra.mxu0 0
    %1776 = vmatprep.subr.bf16.mxu0 0
    %1777 = vmatpush1.bf16.msra.mxu0 0
    %1778 = vmatprep.subr.bf16.mxu0 0
    %1779 = vmatpush1.bf16.msra.mxu0 0
    %1780 = vmatprep.subr.bf16.mxu0 0
    %1781 = vmatpush1.bf16.msra.mxu0 0
    %1782 = vmatprep.subr.bf16.mxu0 0
    %1783 = vmatpush1.bf16.msra.mxu0 0
    %1784 = vmatprep.subr.bf16.mxu0 0
    %1785 = vmatpush1.bf16.msra.mxu0 0
    %1786 = vmatprep.mubr.bf16.mxu0 0
    %1787 = vmatmul.mubr.bf16.gmra.mrb[0].mxu0 %v1752
    %v1788 = vpop.f32.mrb[0].mxu0
    %v1789 = vadd.f32 0.0, %v1788
    %v1790 = vpop.f32.mrb[0].mxu0
    %v1791 = vpop.f32.mrb[0].mxu0
    %v1792 = vpop.f32.mrb[0].mxu0
    %1793 = vdwg.mxu0
    %v1795 = vrot.slane %v1789, 6
    %v1797 = vadd.f32 %v1746, %v1795
    %v1798 = vxor.u32 %v1797, 2147483648
    %v1799 = vmul.f32 %v1798, 1.442695
    %v1800 = vpow.pop %v1799
    %v1801 = vadd.f32 %v1800, 1.0
    %v1802 = vrcp.pop %v1801
    %v1803 = vmul.f32 1.0, %v1802
    %v1804 = vtanh.pop %v1797
    %v1806 = vrot.slane %v1737, 6
    %v1808 = vmul.f32 %v1803, %v1806
    %1810 = vrot.lane.b32.xlu0 %v1804, 104
    %v1811 = vpop.permute.xlu0 %1810
    %v1813 = vmul.f32 %v1803, %v1811
    %1815 = vrot.lane.b32.xlu0 %v1813, 12
    %v1816 = vpop.permute.xlu0 %1815
    %v1818 = vadd.f32 %v1808, %v1816
    %v1819 = vtanh.pop %v1818
    %1821 = vrot.lane.b32.xlu0 %v1819, 24
    %v1822 = vpop.permute.xlu0 %1821
    %v1824 = vmul.f32 %v1803, %v1822
    %v1825 = vpack.c.bf16 %v1824, %v1824
    %v1827 = vrot.slane %v1825, 1
    %1828 = vrot.lane.b32.xlu0 %v1827, 92
    %v1829 = vpop.permute.xlu0 %1828
    %v1831 = vsel %vm1667, %v1829, 0
    %1833 = vmatprep.subr.bf16.mxu0 0
    %1834 = vmatpush1.bf16.msra.mxu0 %v1673
    %1835 = vmatprep.subr.bf16.mxu0 0
    %1836 = vmatpush1.bf16.msra.mxu0 0
    %1837 = vmatprep.subr.bf16.mxu0 0
    %1838 = vmatpush1.bf16.msra.mxu0 0
    %1839 = vmatprep.subr.bf16.mxu0 0
    %1840 = vmatpush1.bf16.msra.mxu0 0
    %1841 = vmatprep.subr.bf16.mxu0 0
    %1842 = vmatpush1.bf16.msra.mxu0 0
    %1843 = vmatprep.subr.bf16.mxu0 0
    %1844 = vmatpush1.bf16.msra.mxu0 0
    %1845 = vmatprep.subr.bf16.mxu0 0
    %1846 = vmatpush1.bf16.msra.mxu0 0
    %1847 = vmatprep.subr.bf16.mxu0 0
    %1848 = vmatpush1.bf16.msra.mxu0 0
    %1849 = vmatprep.subr.bf16.mxu0 0
    %1850 = vmatpush1.bf16.msra.mxu0 0
    %1851 = vmatprep.subr.bf16.mxu0 0
    %1852 = vmatpush1.bf16.msra.mxu0 0
    %1853 = vmatprep.subr.bf16.mxu0 0
    %1854 = vmatpush1.bf16.msra.mxu0 0
    %1855 = vmatprep.subr.bf16.mxu0 0
    %1856 = vmatpush1.bf16.msra.mxu0 0
    %1857 = vmatprep.subr.bf16.mxu0 0
    %1858 = vmatpush1.bf16.msra.mxu0 0
    %1859 = vmatprep.subr.bf16.mxu0 0
    %1860 = vmatpush1.bf16.msra.mxu0 0
    %1861 = vmatprep.subr.bf16.mxu0 0
    %1862 = vmatpush1.bf16.msra.mxu0 0
    %1863 = vmatprep.subr.bf16.mxu0 0
    %1864 = vmatpush1.bf16.msra.mxu0 0
    %1865 = vmatprep.mubr.bf16.mxu0 0
    %1866 = vmatmul.mubr.bf16.gmra.mrb[0].mxu0 %v1831
    %v1867 = vpop.f32.mrb[0].mxu0
    %v1868 = vadd.f32 0.0, %v1867
    %v1869 = vpop.f32.mrb[0].mxu0
    %v1870 = vpop.f32.mrb[0].mxu0
    %v1871 = vpop.f32.mrb[0].mxu0
    %1872 = vdwg.mxu0
    %v1874 = vrot.slane %v1868, 4
    %v1876 = vadd.f32 %v1660, %v1874
    %v1877 = vxor.u32 %v1876, 2147483648
    %v1878 = vmul.f32 %v1877, 1.442695
    %v1879 = vpow.pop %v1878
    %v1880 = vadd.f32 %v1879, 1.0
    %v1881 = vrcp.pop %v1880
    %v1882 = vmul.f32 1.0, %v1881
    %v1883 = vtanh.pop %v1876
    %v1885 = vrot.slane %v1818, 6
    %v1887 = vmul.f32 %v1882, %v1885
    %1889 = vrot.lane.b32.xlu0 %v1883, 104
    %v1890 = vpop.permute.xlu0 %1889
    %v1892 = vmul.f32 %v1882, %v1890
    %1894 = vrot.lane.b32.xlu0 %v1892, 12
    %v1895 = vpop.permute.xlu0 %1894
    %v1897 = vadd.f32 %v1887, %v1895
    %v1898 = vtanh.pop %v1897
    %1900 = vrot.lane.b32.xlu0 %v1898, 24
    %v1901 = vpop.permute.xlu0 %1900
    %v1903 = vmul.f32 %v1882, %v1901
    %v1904 = vpack.c.bf16 %v1903, %v1903
    %v1906 = vrot.slane %v1904, 2
    %1907 = vrot.lane.b32.xlu0 %v1906, 92
    %v1908 = vpop.permute.xlu0 %1907
    %v1910 = vsel %vm1667, %v1908, 0
    %1912 = vmatprep.subr.bf16.mxu0 0
    %1913 = vmatpush1.bf16.msra.mxu0 %v1673
    %1914 = vmatprep.subr.bf16.mxu0 0
    %1915 = vmatpush1.bf16.msra.mxu0 0
    %1916 = vmatprep.subr.bf16.mxu0 0
    %1917 = vmatpush1.bf16.msra.mxu0 0
    %1918 = vmatprep.subr.bf16.mxu0 0
    %1919 = vmatpush1.bf16.msra.mxu0 0
    %1920 = vmatprep.subr.bf16.mxu0 0
    %1921 = vmatpush1.bf16.msra.mxu0 0
    %1922 = vmatprep.subr.bf16.mxu0 0
    %1923 = vmatpush1.bf16.msra.mxu0 0
    %1924 = vmatprep.subr.bf16.mxu0 0
    %1925 = vmatpush1.bf16.msra.mxu0 0
    %1926 = vmatprep.subr.bf16.mxu0 0
    %1927 = vmatpush1.bf16.msra.mxu0 0
    %1928 = vmatprep.subr.bf16.mxu0 0
    %1929 = vmatpush1.bf16.msra.mxu0 0
    %1930 = vmatprep.subr.bf16.mxu0 0
    %1931 = vmatpush1.bf16.msra.mxu0 0
    %1932 = vmatprep.subr.bf16.mxu0 0
    %1933 = vmatpush1.bf16.msra.mxu0 0
    %1934 = vmatprep.subr.bf16.mxu0 0
    %1935 = vmatpush1.bf16.msra.mxu0 0
    %1936 = vmatprep.subr.bf16.mxu0 0
    %1937 = vmatpush1.bf16.msra.mxu0 0
    %1938 = vmatprep.subr.bf16.mxu0 0
    %1939 = vmatpush1.bf16.msra.mxu0 0
    %1940 = vmatprep.subr.bf16.mxu0 0
    %1941 = vmatpush1.bf16.msra.mxu0 0
    %1942 = vmatprep.subr.bf16.mxu0 0
    %1943 = vmatpush1.bf16.msra.mxu0 0
    %1944 = vmatprep.mubr.bf16.mxu0 0
    %1945 = vmatmul.mubr.bf16.gmra.mrb[0].mxu0 %v1910
    %v1946 = vpop.f32.mrb[0].mxu0
    %v1947 = vadd.f32 0.0, %v1946
    %v1948 = vpop.f32.mrb[0].mxu0
    %v1949 = vpop.f32.mrb[0].mxu0
    %v1950 = vpop.f32.mrb[0].mxu0
    %1951 = vdwg.mxu0
    %v1953 = vrot.slane %v1947, 2
    %v1955 = vadd.f32 %v1746, %v1953
    %v1956 = vxor.u32 %v1955, 2147483648
    %v1957 = vmul.f32 %v1956, 1.442695
    %v1958 = vpow.pop %v1957
    %v1959 = vadd.f32 %v1958, 1.0
    %v1960 = vrcp.pop %v1959
    %v1961 = vmul.f32 1.0, %v1960
    %v1962 = vtanh.pop %v1955
    %v1964 = vrot.slane %v1897, 6
    %v1966 = vmul.f32 %v1961, %v1964
    %1968 = vrot.lane.b32.xlu0 %v1962, 104
    %v1969 = vpop.permute.xlu0 %1968
    %v1971 = vmul.f32 %v1961, %v1969
    %1973 = vrot.lane.b32.xlu0 %v1971, 12
    %v1974 = vpop.permute.xlu0 %1973
    %v1976 = vadd.f32 %v1966, %v1974
    %v1977 = vtanh.pop %v1976
    %1979 = vrot.lane.b32.xlu0 %v1977, 24
    %v1980 = vpop.permute.xlu0 %1979
    %v1982 = vmul.f32 %v1961, %v1980
    %v1984 = vrot.slane %v1644, 6
    %v1986 = vsel %vm1656, %v1647, %v1984
    %v1987 = vpack.c.bf16 %v1982, %v1982
    %v1989 = vrot.slane %v1987, 3
    %1990 = vrot.lane.b32.xlu0 %v1989, 92
    %v1991 = vpop.permute.xlu0 %1990
    %v1993 = vsel %vm1667, %v1991, 0
    %1995 = vmatprep.subr.bf16.mxu0 0
    %1996 = vmatpush1.bf16.msra.mxu0 %v1673
    %1997 = vmatprep.subr.bf16.mxu0 0
    %1998 = vmatpush1.bf16.msra.mxu0 0
    %1999 = vmatprep.subr.bf16.mxu0 0
    %2000 = vmatpush1.bf16.msra.mxu0 0
    %2001 = vmatprep.subr.bf16.mxu0 0
    %2002 = vmatpush1.bf16.msra.mxu0 0
    %2003 = vmatprep.subr.bf16.mxu0 0
    %2004 = vmatpush1.bf16.msra.mxu0 0
    %2005 = vmatprep.subr.bf16.mxu0 0
    %2006 = vmatpush1.bf16.msra.mxu0 0
    %2007 = vmatprep.subr.bf16.mxu0 0
    %2008 = vmatpush1.bf16.msra.mxu0 0
    %2009 = vmatprep.subr.bf16.mxu0 0
    %2010 = vmatpush1.bf16.msra.mxu0 0
    %2011 = vmatprep.subr.bf16.mxu0 0
    %2012 = vmatpush1.bf16.msra.mxu0 0
    %2013 = vmatprep.subr.bf16.mxu0 0
    %2014 = vmatpush1.bf16.msra.mxu0 0
    %2015 = vmatprep.subr.bf16.mxu0 0
    %2016 = vmatpush1.bf16.msra.mxu0 0
    %2017 = vmatprep.subr.bf16.mxu0 0
    %2018 = vmatpush1.bf16.msra.mxu0 0
    %2019 = vmatprep.subr.bf16.mxu0 0
    %2020 = vmatpush1.bf16.msra.mxu0 0
    %2021 = vmatprep.subr.bf16.mxu0 0
    %2022 = vmatpush1.bf16.msra.mxu0 0
    %2023 = vmatprep.subr.bf16.mxu0 0
    %2024 = vmatpush1.bf16.msra.mxu0 0
    %2025 = vmatprep.subr.bf16.mxu0 0
    %2026 = vmatpush1.bf16.msra.mxu0 0
    %2027 = vmatprep.mubr.bf16.mxu0 0
    %2028 = vmatmul.mubr.bf16.gmra.mrb[0].mxu0 %v1993
    %v2029 = vpop.f32.mrb[0].mxu0
    %v2030 = vadd.f32 0.0, %v2029
    %v2031 = vpop.f32.mrb[0].mxu0
    %v2032 = vpop.f32.mrb[0].mxu0
    %v2033 = vpop.f32.mrb[0].mxu0
    %2034 = vdwg.mxu0
    %v2035 = vadd.f32 %v1986, %v2030
    %v2036 = vxor.u32 %v2035, 2147483648
    %v2037 = vmul.f32 %v2036, 1.442695
    %v2038 = vpow.pop %v2037
    %v2039 = vadd.f32 %v2038, 1.0
    %v2040 = vrcp.pop %v2039
    %v2041 = vmul.f32 1.0, %v2040
    %v2042 = vtanh.pop %v2035
    %v2044 = vrot.slane %v1976, 6
    %v2046 = vmul.f32 %v2041, %v2044
    %2048 = vrot.lane.b32.xlu0 %v2042, 104
    %v2049 = vpop.permute.xlu0 %2048
    %v2051 = vmul.f32 %v2041, %v2049
    %2053 = vrot.lane.b32.xlu0 %v2051, 12
    %v2054 = vpop.permute.xlu0 %2053
    %v2056 = vadd.f32 %v2046, %v2054
    %v2057 = vtanh.pop %v2056
    %2059 = vrot.lane.b32.xlu0 %v2057, 24
    %v2060 = vpop.permute.xlu0 %2059
    %v2062 = vmul.f32 %v2041, %v2060
    %v2063 = vrot.slane %v1644, 2
    %v2065 = vsel %vm1656, %v1647, %v2063
    %v2066 = vpack.c.bf16 %v2062, %v2062
    %2068 = vrot.lane.b32.xlu0 %v2066, 92
    %v2069 = vpop.permute.xlu0 %2068
    %v2071 = vsel %vm1667, %v2069, 0
    %2073 = vmatprep.subr.bf16.mxu0 0
    %2074 = vmatpush1.bf16.msra.mxu0 %v1673
    %2075 = vmatprep.subr.bf16.mxu0 0
    %2076 = vmatpush1.bf16.msra.mxu0 0
    %2077 = vmatprep.subr.bf16.mxu0 0
    %2078 = vmatpush1.bf16.msra.mxu0 0
    %2079 = vmatprep.subr.bf16.mxu0 0
    %2080 = vmatpush1.bf16.msra.mxu0 0
    %2081 = vmatprep.subr.bf16.mxu0 0
    %2082 = vmatpush1.bf16.msra.mxu0 0
    %2083 = vmatprep.subr.bf16.mxu0 0
    %2084 = vmatpush1.bf16.msra.mxu0 0
    %2085 = vmatprep.subr.bf16.mxu0 0
    %2086 = vmatpush1.bf16.msra.mxu0 0
    %2087 = vmatprep.subr.bf16.mxu0 0
    %2088 = vmatpush1.bf16.msra.mxu0 0
    %2089 = vmatprep.subr.bf16.mxu0 0
    %2090 = vmatpush1.bf16.msra.mxu0 0
    %2091 = vmatprep.subr.bf16.mxu0 0
    %2092 = vmatpush1.bf16.msra.mxu0 0
    %2093 = vmatprep.subr.bf16.mxu0 0
    %2094 = vmatpush1.bf16.msra.mxu0 0
    %2095 = vmatprep.subr.bf16.mxu0 0
    %2096 = vmatpush1.bf16.msra.mxu0 0
    %2097 = vmatprep.subr.bf16.mxu0 0
    %2098 = vmatpush1.bf16.msra.mxu0 0
    %2099 = vmatprep.subr.bf16.mxu0 0
    %2100 = vmatpush1.bf16.msra.mxu0 0
    %2101 = vmatprep.subr.bf16.mxu0 0
    %2102 = vmatpush1.bf16.msra.mxu0 0
    %2103 = vmatprep.subr.bf16.mxu0 0
    %2104 = vmatpush1.bf16.msra.mxu0 0
    %2105 = vmatprep.mubr.bf16.mxu0 0
    %2106 = vmatmul.mubr.bf16.gmra.mrb[0].mxu0 %v2071
    %v2107 = vpop.f32.mrb[0].mxu0
    %v2108 = vadd.f32 0.0, %v2107
    %v2109 = vpop.f32.mrb[0].mxu0
    %v2110 = vpop.f32.mrb[0].mxu0
    %v2111 = vpop.f32.mrb[0].mxu0
    %2112 = vdwg.mxu0
    %v2114 = vrot.slane %v2108, 6
    %v2116 = vadd.f32 %v2065, %v2114
    %v2117 = vxor.u32 %v2116, 2147483648
    %v2118 = vmul.f32 %v2117, 1.442695
    %v2119 = vpow.pop %v2118
    %v2120 = vadd.f32 %v2119, 1.0
    %v2121 = vrcp.pop %v2120
    %v2122 = vmul.f32 1.0, %v2121
    %v2123 = vtanh.pop %v2116
    %v2125 = vrot.slane %v2056, 6
    %v2127 = vmul.f32 %v2122, %v2125
    %2129 = vrot.lane.b32.xlu0 %v2123, 104
    %v2130 = vpop.permute.xlu0 %2129
    %v2132 = vmul.f32 %v2122, %v2130
    %2134 = vrot.lane.b32.xlu0 %v2132, 12
    %v2135 = vpop.permute.xlu0 %2134
    %v2137 = vadd.f32 %v2127, %v2135
    %v2138 = vtanh.pop %v2137
    %2140 = vrot.lane.b32.xlu0 %v2138, 24
    %v2141 = vpop.permute.xlu0 %2140
    %v2143 = vmul.f32 %v2122, %v2141
    %v2144 = vpack.c.bf16 %v2143, %v2143
    %v2146 = vrot.slane %v2144, 1
    %2147 = vrot.lane.b32.xlu0 %v2146, 92
    %v2148 = vpop.permute.xlu0 %2147
    %v2150 = vsel %vm1667, %v2148, 0
    %2152 = vmatprep.subr.bf16.mxu0 0
    %2153 = vmatpush1.bf16.msra.mxu0 %v1673
    %2154 = vmatprep.subr.bf16.mxu0 0
    %2155 = vmatpush1.bf16.msra.mxu0 0
    %2156 = vmatprep.subr.bf16.mxu0 0
    %2157 = vmatpush1.bf16.msra.mxu0 0
    %2158 = vmatprep.subr.bf16.mxu0 0
    %2159 = vmatpush1.bf16.msra.mxu0 0
    %2160 = vmatprep.subr.bf16.mxu0 0
    %2161 = vmatpush1.bf16.msra.mxu0 0
    %2162 = vmatprep.subr.bf16.mxu0 0
    %2163 = vmatpush1.bf16.msra.mxu0 0
    %2164 = vmatprep.subr.bf16.mxu0 0
    %2165 = vmatpush1.bf16.msra.mxu0 0
    %2166 = vmatprep.subr.bf16.mxu0 0
    %2167 = vmatpush1.bf16.msra.mxu0 0
    %2168 = vmatprep.subr.bf16.mxu0 0
    %2169 = vmatpush1.bf16.msra.mxu0 0
    %2170 = vmatprep.subr.bf16.mxu0 0
    %2171 = vmatpush1.bf16.msra.mxu0 0
    %2172 = vmatprep.subr.bf16.mxu0 0
    %2173 = vmatpush1.bf16.msra.mxu0 0
    %2174 = vmatprep.subr.bf16.mxu0 0
    %2175 = vmatpush1.bf16.msra.mxu0 0
    %2176 = vmatprep.subr.bf16.mxu0 0
    %2177 = vmatpush1.bf16.msra.mxu0 0
    %2178 = vmatprep.subr.bf16.mxu0 0
    %2179 = vmatpush1.bf16.msra.mxu0 0
    %2180 = vmatprep.subr.bf16.mxu0 0
    %2181 = vmatpush1.bf16.msra.mxu0 0
    %2182 = vmatprep.subr.bf16.mxu0 0
    %2183 = vmatpush1.bf16.msra.mxu0 0
    %2184 = vmatprep.mubr.bf16.mxu0 0
    %2185 = vmatmul.mubr.bf16.gmra.mrb[0].mxu0 %v2150
    %v2186 = vpop.f32.mrb[0].mxu0
    %v2187 = vadd.f32 0.0, %v2186
    %v2188 = vpop.f32.mrb[0].mxu0
    %v2189 = vpop.f32.mrb[0].mxu0
    %v2190 = vpop.f32.mrb[0].mxu0
    %2191 = vdwg.mxu0
    %v2193 = vrot.slane %v2187, 4
    %v2195 = vadd.f32 %v1986, %v2193
    %v2196 = vxor.u32 %v2195, 2147483648
    %v2197 = vmul.f32 %v2196, 1.442695
    %v2198 = vpow.pop %v2197
    %v2199 = vadd.f32 %v2198, 1.0
    %v2200 = vrcp.pop %v2199
    %v2201 = vmul.f32 1.0, %v2200
    %v2202 = vtanh.pop %v2195
    %v2204 = vrot.slane %v2137, 6
    %v2206 = vmul.f32 %v2201, %v2204
    %2208 = vrot.lane.b32.xlu0 %v2202, 104
    %v2209 = vpop.permute.xlu0 %2208
    %v2211 = vmul.f32 %v2201, %v2209
    %2213 = vrot.lane.b32.xlu0 %v2211, 12
    %v2214 = vpop.permute.xlu0 %2213
    %v2216 = vadd.f32 %v2206, %v2214
    %v2217 = vtanh.pop %v2216
    %2219 = vrot.lane.b32.xlu0 %v2217, 24
    %v2220 = vpop.permute.xlu0 %2219
    %v2222 = vmul.f32 %v2201, %v2220
    %v2223 = vpack.c.bf16 %v2222, %v2222
    %v2225 = vrot.slane %v2223, 2
    %2226 = vrot.lane.b32.xlu0 %v2225, 92
    %v2227 = vpop.permute.xlu0 %2226
    %v2229 = vsel %vm1667, %v2227, 0
    %2231 = vmatprep.subr.bf16.mxu0 0
    %2232 = vmatpush1.bf16.msra.mxu0 %v1673
    %2233 = vmatprep.subr.bf16.mxu0 0
    %2234 = vmatpush1.bf16.msra.mxu0 0
    %2235 = vmatprep.subr.bf16.mxu0 0
    %2236 = vmatpush1.bf16.msra.mxu0 0
    %2237 = vmatprep.subr.bf16.mxu0 0
    %2238 = vmatpush1.bf16.msra.mxu0 0
    %2239 = vmatprep.subr.bf16.mxu0 0
    %2240 = vmatpush1.bf16.msra.mxu0 0
    %2241 = vmatprep.subr.bf16.mxu0 0
    %2242 = vmatpush1.bf16.msra.mxu0 0
    %2243 = vmatprep.subr.bf16.mxu0 0
    %2244 = vmatpush1.bf16.msra.mxu0 0
    %2245 = vmatprep.subr.bf16.mxu0 0
    %2246 = vmatpush1.bf16.msra.mxu0 0
    %2247 = vmatprep.subr.bf16.mxu0 0
    %2248 = vmatpush1.bf16.msra.mxu0 0
    %2249 = vmatprep.subr.bf16.mxu0 0
    %2250 = vmatpush1.bf16.msra.mxu0 0
    %2251 = vmatprep.subr.bf16.mxu0 0
    %2252 = vmatpush1.bf16.msra.mxu0 0
    %2253 = vmatprep.subr.bf16.mxu0 0
    %2254 = vmatpush1.bf16.msra.mxu0 0
    %2255 = vmatprep.subr.bf16.mxu0 0
    %2256 = vmatpush1.bf16.msra.mxu0 0
    %2257 = vmatprep.subr.bf16.mxu0 0
    %2258 = vmatpush1.bf16.msra.mxu0 0
    %2259 = vmatprep.subr.bf16.mxu0 0
    %2260 = vmatpush1.bf16.msra.mxu0 0
    %2261 = vmatprep.subr.bf16.mxu0 0
    %2262 = vmatpush1.bf16.msra.mxu0 0
    %2263 = vmatprep.mubr.bf16.mxu0 0
    %2264 = vmatmul.mubr.bf16.gmra.mrb[0].mxu0 %v2229
    %v2265 = vpop.f32.mrb[0].mxu0
    %v2266 = vadd.f32 0.0, %v2265
    %v2267 = vpop.f32.mrb[0].mxu0
    %v2268 = vpop.f32.mrb[0].mxu0
    %v2269 = vpop.f32.mrb[0].mxu0
    %2270 = vdwg.mxu0
    %v2272 = vrot.slane %v2266, 2
    %v2274 = vadd.f32 %v2065, %v2272
    %v2275 = vxor.u32 %v2274, 2147483648
    %v2276 = vmul.f32 %v2275, 1.442695
    %v2277 = vpow.pop %v2276
    %v2278 = vadd.f32 %v2277, 1.0
    %v2279 = vrcp.pop %v2278
    %v2280 = vmul.f32 1.0, %v2279
    %v2281 = vtanh.pop %v2274
    %v2283 = vrot.slane %v2216, 6
    %v2285 = vmul.f32 %v2280, %v2283
    %2287 = vrot.lane.b32.xlu0 %v2281, 104
    %v2288 = vpop.permute.xlu0 %2287
    %v2290 = vmul.f32 %v2280, %v2288
    %2292 = vrot.lane.b32.xlu0 %v2290, 12
    %v2293 = vpop.permute.xlu0 %2292
    %v2295 = vadd.f32 %v2285, %v2293
    %v2296 = vtanh.pop %v2295
    %2298 = vrot.lane.b32.xlu0 %v2296, 24
    %v2299 = vpop.permute.xlu0 %2298
    %v2301 = vmul.f32 %v2280, %v2299
    %vm2302 = vcmask 1041408
    %v2303 = vsel %vm2302, %v1743, %v1824
    %vm2304 = vcmask 1043456
    %v2305 = vsel %vm2304, %v2303, %v1903
    %v2306 = vsel %vm1671, %v2305, %v1982
    %v2307 = vsel %vm2302, %v2062, %v2143
    %v2308 = vsel %vm2304, %v2307, %v2222
    %v2309 = vsel %vm1671, %v2308, %v2301
    %v2311 = vrot.slane %v2301, 6
    %v2314 = vrot.slane %v2222, 2
    %v2317 = vrot.slane %v2143, 6
    %v2320 = vrot.slane %v2062, 2
    %v2323 = vrot.slane %v1982, 6
    %v2326 = vrot.slane %v1903, 2
    %v2329 = vrot.slane %v1824, 6
    %v2332 = vrot.slane %v1743, 2
    %v2334 = vsel %vm2302, %v2311, %v2314
    %v2335 = vsel %vm2304, %v2334, %v2317
    %v2336 = vsel %vm1671, %v2335, %v2320
    %v2337 = vsel %vm2302, %v2323, %v2326
    %v2338 = vsel %vm2304, %v2337, %v2329
    %v2339 = vsel %vm1671, %v2338, %v2332
    %2342 = vrot.lane.b32.xlu0 %v2306, 92
    %v2343 = vpop.permute.xlu0 %2342
    %2344 = vrot.lane.b32.xlu0 %v2309, 92
    %v2345 = vpop.permute.xlu0 %2344
    %2350 = vrot.lane.b32.xlu0 %v2336, 92
    %v2351 = vpop.permute.xlu0 %2350
    %2352 = vrot.lane.b32.xlu0 %v2339, 92
    %v2353 = vpop.permute.xlu0 %2352
    %v2356 = vsel %vm102, %v2343, %v2351
    %v2357 = vsel %vm102, %v2345, %v2353
    %v2358 = vld [vmem:[#allocation2 + $0x190] sm:$0xf]
    %v2359 = vld [vmem:[#allocation2 + $0x194] sm:$0x3]
    %v2360 = vld [vmem:[#allocation2 + $0x198] sm:$0xf]
    %v2361 = vld [vmem:[#allocation2 + $0x19c] sm:$0x3]
    %v2362 = vld [vmem:[#allocation4 + $0x148] sm:$0x1]
    %v2363 = vld [vmem:[%s3 + $0x10] sm:$0x3]
    %v2364 = vld [vmem:[%s3 + $0x18] sm:$0x3]
    %v2365 = vpack.c.bf16 %v2357, %v2356
    %v2366 = vlaneseq
    %v2367 = vshrl.u32 %v2366, 7
    %v2368 = vsub.s32 0, %v2367
    %v2369 = vrot.slane %v2362, %v2368
    %v2372 = vunpack.c.l.b16 %v2358
    %v2373 = vunpack.c.l.b16 %v2359
    %v2374 = vpack.c.b16 %v2373, %v2372
    %v2376 = vsel %vm1667, %v2365, 0
    %v2379 = vsel %vm1671, %v2374, 0
    %2381 = vmatprep.subr.bf16.mxu0 0
    %2382 = vmatpush1.bf16.msra.mxu0 %v2379
    %2383 = vmatprep.subr.bf16.mxu0 0
    %2384 = vmatpush1.bf16.msra.mxu0 0
    %2385 = vmatprep.subr.bf16.mxu0 0
    %2386 = vmatpush1.bf16.msra.mxu0 0
    %2387 = vmatprep.subr.bf16.mxu0 0
    %2388 = vmatpush1.bf16.msra.mxu0 0
    %2389 = vmatprep.subr.bf16.mxu0 0
    %2390 = vmatpush1.bf16.msra.mxu0 0
    %2391 = vmatprep.subr.bf16.mxu0 0
    %2392 = vmatpush1.bf16.msra.mxu0 0
    %2393 = vmatprep.subr.bf16.mxu0 0
    %2394 = vmatpush1.bf16.msra.mxu0 0
    %2395 = vmatprep.subr.bf16.mxu0 0
    %2396 = vmatpush1.bf16.msra.mxu0 0
    %2397 = vmatprep.subr.bf16.mxu0 0
    %2398 = vmatpush1.bf16.msra.mxu0 0
    %2399 = vmatprep.subr.bf16.mxu0 0
    %2400 = vmatpush1.bf16.msra.mxu0 0
    %2401 = vmatprep.subr.bf16.mxu0 0
    %2402 = vmatpush1.bf16.msra.mxu0 0
    %2403 = vmatprep.subr.bf16.mxu0 0
    %2404 = vmatpush1.bf16.msra.mxu0 0
    %2405 = vmatprep.subr.bf16.mxu0 0
    %2406 = vmatpush1.bf16.msra.mxu0 0
    %2407 = vmatprep.subr.bf16.mxu0 0
    %2408 = vmatpush1.bf16.msra.mxu0 0
    %2409 = vmatprep.subr.bf16.mxu0 0
    %2410 = vmatpush1.bf16.msra.mxu0 0
    %2411 = vmatprep.subr.bf16.mxu0 0
    %2412 = vmatpush1.bf16.msra.mxu0 0
    %2413 = vmatprep.mubr.bf16.mxu0 0
    %2414 = vmatmul.mubr.bf16.gmra.mrb[0].mxu0 %v2376
    %v2415 = vpop.f32.mrb[0].mxu0
    %v2416 = vadd.f32 %v2369, %v2415
    %v2417 = vpop.f32.mrb[0].mxu0
    %v2418 = vpop.f32.mrb[0].mxu0
    %v2419 = vadd.f32 %v2369, %v2418
    %v2420 = vpop.f32.mrb[0].mxu0
    %2421 = vdwg.mxu0
    %v2423 = vrot.slane %v2419, 6
    %v2425 = vsel %vm1656, %v2416, %v2423
    %v2426 = vpack.c.bf16 %v2363, %v2363
    %v2429 = vunpack.c.l.b16 %v2360
    %v2430 = vunpack.c.l.b16 %v2361
    %v2431 = vpack.c.b16 %v2430, %v2429
    %v2433 = vsel %vm1667, %v2426, 0
    %v2436 = vsel %vm1671, %v2431, 0
    %2438 = vmatprep.subr.bf16.mxu0 0
    %2439 = vmatpush1.bf16.msra.mxu0 %v2436
    %2440 = vmatprep.subr.bf16.mxu0 0
    %2441 = vmatpush1.bf16.msra.mxu0 0
    %2442 = vmatprep.subr.bf16.mxu0 0
    %2443 = vmatpush1.bf16.msra.mxu0 0
    %2444 = vmatprep.subr.bf16.mxu0 0
    %2445 = vmatpush1.bf16.msra.mxu0 0
    %2446 = vmatprep.subr.bf16.mxu0 0
    %2447 = vmatpush1.bf16.msra.mxu0 0
    %2448 = vmatprep.subr.bf16.mxu0 0
    %2449 = vmatpush1.bf16.msra.mxu0 0
    %2450 = vmatprep.subr.bf16.mxu0 0
    %2451 = vmatpush1.bf16.msra.mxu0 0
    %2452 = vmatprep.subr.bf16.mxu0 0
    %2453 = vmatpush1.bf16.msra.mxu0 0
    %2454 = vmatprep.subr.bf16.mxu0 0
    %2455 = vmatpush1.bf16.msra.mxu0 0
    %2456 = vmatprep.subr.bf16.mxu0 0
    %2457 = vmatpush1.bf16.msra.mxu0 0
    %2458 = vmatprep.subr.bf16.mxu0 0
    %2459 = vmatpush1.bf16.msra.mxu0 0
    %2460 = vmatprep.subr.bf16.mxu0 0
    %2461 = vmatpush1.bf16.msra.mxu0 0
    %2462 = vmatprep.subr.bf16.mxu0 0
    %2463 = vmatpush1.bf16.msra.mxu0 0
    %2464 = vmatprep.subr.bf16.mxu0 0
    %2465 = vmatpush1.bf16.msra.mxu0 0
    %2466 = vmatprep.subr.bf16.mxu0 0
    %2467 = vmatpush1.bf16.msra.mxu0 0
    %2468 = vmatprep.subr.bf16.mxu0 0
    %2469 = vmatpush1.bf16.msra.mxu0 0
    %2470 = vmatprep.mubr.bf16.mxu0 0
    %2471 = vmatmul.mubr.bf16.gmra.mrb[0].mxu0 %v2433
    %v2472 = vpop.f32.mrb[0].mxu0
    %v2473 = vadd.f32 0.0, %v2472
    %v2474 = vpop.f32.mrb[0].mxu0
    %v2475 = vpop.f32.mrb[0].mxu0
    %v2476 = vpop.f32.mrb[0].mxu0
    %2477 = vdwg.mxu0
    %v2478 = vadd.f32 %v2425, %v2473
    %v2479 = vxor.u32 %v2478, 2147483648
    %v2480 = vmul.f32 %v2479, 1.442695
    %v2481 = vpow.pop %v2480
    %v2482 = vadd.f32 %v2481, 1.0
    %v2483 = vrcp.pop %v2482
    %v2484 = vmul.f32 1.0, %v2483
    %v2485 = vtanh.pop %v2478
    %2487 = vrot.lane.b32.xlu0 %v2364, 12
    %v2488 = vpop.permute.xlu0 %2487
    %v2490 = vmul.f32 %v2484, %v2488
    %2492 = vrot.lane.b32.xlu0 %v2485, 104
    %v2493 = vpop.permute.xlu0 %2492
    %v2495 = vmul.f32 %v2484, %v2493
    %2497 = vrot.lane.b32.xlu0 %v2495, 12
    %v2498 = vpop.permute.xlu0 %2497
    %v2500 = vadd.f32 %v2490, %v2498
    %v2501 = vtanh.pop %v2500
    %2503 = vrot.lane.b32.xlu0 %v2501, 24
    %v2504 = vpop.permute.xlu0 %2503
    %v2506 = vmul.f32 %v2484, %v2504
    %v2507 = vrot.slane %v2419, 2
    %v2509 = vsel %vm1656, %v2416, %v2507
    %v2510 = vpack.c.bf16 %v2506, %v2506
    %2512 = vrot.lane.b32.xlu0 %v2510, 92
    %v2513 = vpop.permute.xlu0 %2512
    %v2515 = vsel %vm1667, %v2513, 0
    %2517 = vmatprep.subr.bf16.mxu0 0
    %2518 = vmatpush1.bf16.msra.mxu0 %v2436
    %2519 = vmatprep.subr.bf16.mxu0 0
    %2520 = vmatpush1.bf16.msra.mxu0 0
    %2521 = vmatprep.subr.bf16.mxu0 0
    %2522 = vmatpush1.bf16.msra.mxu0 0
    %2523 = vmatprep.subr.bf16.mxu0 0
    %2524 = vmatpush1.bf16.msra.mxu0 0
    %2525 = vmatprep.subr.bf16.mxu0 0
    %2526 = vmatpush1.bf16.msra.mxu0 0
    %2527 = vmatprep.subr.bf16.mxu0 0
    %2528 = vmatpush1.bf16.msra.mxu0 0
    %2529 = vmatprep.subr.bf16.mxu0 0
    %2530 = vmatpush1.bf16.msra.mxu0 0
    %2531 = vmatprep.subr.bf16.mxu0 0
    %2532 = vmatpush1.bf16.msra.mxu0 0
    %2533 = vmatprep.subr.bf16.mxu0 0
    %2534 = vmatpush1.bf16.msra.mxu0 0
    %2535 = vmatprep.subr.bf16.mxu0 0
    %2536 = vmatpush1.bf16.msra.mxu0 0
    %2537 = vmatprep.subr.bf16.mxu0 0
    %2538 = vmatpush1.bf16.msra.mxu0 0
    %2539 = vmatprep.subr.bf16.mxu0 0
    %2540 = vmatpush1.bf16.msra.mxu0 0
    %2541 = vmatprep.subr.bf16.mxu0 0
    %2542 = vmatpush1.bf16.msra.mxu0 0
    %2543 = vmatprep.subr.bf16.mxu0 0
    %2544 = vmatpush1.bf16.msra.mxu0 0
    %2545 = vmatprep.subr.bf16.mxu0 0
    %2546 = vmatpush1.bf16.msra.mxu0 0
    %2547 = vmatprep.subr.bf16.mxu0 0
    %2548 = vmatpush1.bf16.msra.mxu0 0
    %2549 = vmatprep.mubr.bf16.mxu0 0
    %2550 = vmatmul.mubr.bf16.gmra.mrb[0].mxu0 %v2515
    %v2551 = vpop.f32.mrb[0].mxu0
    %v2552 = vadd.f32 0.0, %v2551
    %v2553 = vpop.f32.mrb[0].mxu0
    %v2554 = vpop.f32.mrb[0].mxu0
    %v2555 = vpop.f32.mrb[0].mxu0
    %2556 = vdwg.mxu0
    %v2558 = vrot.slane %v2552, 6
    %v2560 = vadd.f32 %v2509, %v2558
    %v2561 = vxor.u32 %v2560, 2147483648
    %v2562 = vmul.f32 %v2561, 1.442695
    %v2563 = vpow.pop %v2562
    %v2564 = vadd.f32 %v2563, 1.0
    %v2565 = vrcp.pop %v2564
    %v2566 = vmul.f32 1.0, %v2565
    %v2567 = vtanh.pop %v2560
    %v2569 = vrot.slane %v2500, 6
    %v2571 = vmul.f32 %v2566, %v2569
    %2573 = vrot.lane.b32.xlu0 %v2567, 104
    %v2574 = vpop.permute.xlu0 %2573
    %v2576 = vmul.f32 %v2566, %v2574
    %2578 = vrot.lane.b32.xlu0 %v2576, 12
    %v2579 = vpop.permute.xlu0 %2578
    %v2581 = vadd.f32 %v2571, %v2579
    %v2582 = vtanh.pop %v2581
    %2584 = vrot.lane.b32.xlu0 %v2582, 24
    %v2585 = vpop.permute.xlu0 %2584
    %v2587 = vmul.f32 %v2566, %v2585
    %v2588 = vpack.c.bf16 %v2587, %v2587
    %v2590 = vrot.slane %v2588, 1
    %2591 = vrot.lane.b32.xlu0 %v2590, 92
    %v2592 = vpop.permute.xlu0 %2591
    %v2594 = vsel %vm1667, %v2592, 0
    %2596 = vmatprep.subr.bf16.mxu0 0
    %2597 = vmatpush1.bf16.msra.mxu0 %v2436
    %2598 = vmatprep.subr.bf16.mxu0 0
    %2599 = vmatpush1.bf16.msra.mxu0 0
    %2600 = vmatprep.subr.bf16.mxu0 0
    %2601 = vmatpush1.bf16.msra.mxu0 0
    %2602 = vmatprep.subr.bf16.mxu0 0
    %2603 = vmatpush1.bf16.msra.mxu0 0
    %2604 = vmatprep.subr.bf16.mxu0 0
    %2605 = vmatpush1.bf16.msra.mxu0 0
    %2606 = vmatprep.subr.bf16.mxu0 0
    %2607 = vmatpush1.bf16.msra.mxu0 0
    %2608 = vmatprep.subr.bf16.mxu0 0
    %2609 = vmatpush1.bf16.msra.mxu0 0
    %2610 = vmatprep.subr.bf16.mxu0 0
    %2611 = vmatpush1.bf16.msra.mxu0 0
    %2612 = vmatprep.subr.bf16.mxu0 0
    %2613 = vmatpush1.bf16.msra.mxu0 0
    %2614 = vmatprep.subr.bf16.mxu0 0
    %2615 = vmatpush1.bf16.msra.mxu0 0
    %2616 = vmatprep.subr.bf16.mxu0 0
    %2617 = vmatpush1.bf16.msra.mxu0 0
    %2618 = vmatprep.subr.bf16.mxu0 0
    %2619 = vmatpush1.bf16.msra.mxu0 0
    %2620 = vmatprep.subr.bf16.mxu0 0
    %2621 = vmatpush1.bf16.msra.mxu0 0
    %2622 = vmatprep.subr.bf16.mxu0 0
    %2623 = vmatpush1.bf16.msra.mxu0 0
    %2624 = vmatprep.subr.bf16.mxu0 0
    %2625 = vmatpush1.bf16.msra.mxu0 0
    %2626 = vmatprep.subr.bf16.mxu0 0
    %2627 = vmatpush1.bf16.msra.mxu0 0
    %2628 = vmatprep.mubr.bf16.mxu0 0
    %2629 = vmatmul.mubr.bf16.gmra.mrb[0].mxu0 %v2594
    %v2630 = vpop.f32.mrb[0].mxu0
    %v2631 = vadd.f32 0.0, %v2630
    %v2632 = vpop.f32.mrb[0].mxu0
    %v2633 = vpop.f32.mrb[0].mxu0
    %v2634 = vpop.f32.mrb[0].mxu0
    %2635 = vdwg.mxu0
    %v2637 = vrot.slane %v2631, 4
    %v2639 = vadd.f32 %v2425, %v2637
    %v2640 = vxor.u32 %v2639, 2147483648
    %v2641 = vmul.f32 %v2640, 1.442695
    %v2642 = vpow.pop %v2641
    %v2643 = vadd.f32 %v2642, 1.0
    %v2644 = vrcp.pop %v2643
    %v2645 = vmul.f32 1.0, %v2644
    %v2646 = vtanh.pop %v2639
    %v2648 = vrot.slane %v2581, 6
    %v2650 = vmul.f32 %v2645, %v2648
    %2652 = vrot.lane.b32.xlu0 %v2646, 104
    %v2653 = vpop.permute.xlu0 %2652
    %v2655 = vmul.f32 %v2645, %v2653
    %2657 = vrot.lane.b32.xlu0 %v2655, 12
    %v2658 = vpop.permute.xlu0 %2657
    %v2660 = vadd.f32 %v2650, %v2658
    %v2661 = vtanh.pop %v2660
    %2663 = vrot.lane.b32.xlu0 %v2661, 24
    %v2664 = vpop.permute.xlu0 %2663
    %v2666 = vmul.f32 %v2645, %v2664
    %v2667 = vpack.c.bf16 %v2666, %v2666
    %v2669 = vrot.slane %v2667, 2
    %2670 = vrot.lane.b32.xlu0 %v2669, 92
    %v2671 = vpop.permute.xlu0 %2670
    %v2673 = vsel %vm1667, %v2671, 0
    %2675 = vmatprep.subr.bf16.mxu0 0
    %2676 = vmatpush1.bf16.msra.mxu0 %v2436
    %2677 = vmatprep.subr.bf16.mxu0 0
    %2678 = vmatpush1.bf16.msra.mxu0 0
    %2679 = vmatprep.subr.bf16.mxu0 0
    %2680 = vmatpush1.bf16.msra.mxu0 0
    %2681 = vmatprep.subr.bf16.mxu0 0
    %2682 = vmatpush1.bf16.msra.mxu0 0
    %2683 = vmatprep.subr.bf16.mxu0 0
    %2684 = vmatpush1.bf16.msra.mxu0 0
    %2685 = vmatprep.subr.bf16.mxu0 0
    %2686 = vmatpush1.bf16.msra.mxu0 0
    %2687 = vmatprep.subr.bf16.mxu0 0
    %2688 = vmatpush1.bf16.msra.mxu0 0
    %2689 = vmatprep.subr.bf16.mxu0 0
    %2690 = vmatpush1.bf16.msra.mxu0 0
    %2691 = vmatprep.subr.bf16.mxu0 0
    %2692 = vmatpush1.bf16.msra.mxu0 0
    %2693 = vmatprep.subr.bf16.mxu0 0
    %2694 = vmatpush1.bf16.msra.mxu0 0
    %2695 = vmatprep.subr.bf16.mxu0 0
    %2696 = vmatpush1.bf16.msra.mxu0 0
    %2697 = vmatprep.subr.bf16.mxu0 0
    %2698 = vmatpush1.bf16.msra.mxu0 0
    %2699 = vmatprep.subr.bf16.mxu0 0
    %2700 = vmatpush1.bf16.msra.mxu0 0
    %2701 = vmatprep.subr.bf16.mxu0 0
    %2702 = vmatpush1.bf16.msra.mxu0 0
    %2703 = vmatprep.subr.bf16.mxu0 0
    %2704 = vmatpush1.bf16.msra.mxu0 0
    %2705 = vmatprep.subr.bf16.mxu0 0
    %2706 = vmatpush1.bf16.msra.mxu0 0
    %2707 = vmatprep.mubr.bf16.mxu0 0
    %2708 = vmatmul.mubr.bf16.gmra.mrb[0].mxu0 %v2673
    %v2709 = vpop.f32.mrb[0].mxu0
    %v2710 = vadd.f32 0.0, %v2709
    %v2711 = vpop.f32.mrb[0].mxu0
    %v2712 = vpop.f32.mrb[0].mxu0
    %v2713 = vpop.f32.mrb[0].mxu0
    %2714 = vdwg.mxu0
    %v2716 = vrot.slane %v2710, 2
    %v2718 = vadd.f32 %v2509, %v2716
    %v2719 = vxor.u32 %v2718, 2147483648
    %v2720 = vmul.f32 %v2719, 1.442695
    %v2721 = vpow.pop %v2720
    %v2722 = vadd.f32 %v2721, 1.0
    %v2723 = vrcp.pop %v2722
    %v2724 = vmul.f32 1.0, %v2723
    %v2725 = vtanh.pop %v2718
    %v2727 = vrot.slane %v2660, 6
    %v2729 = vmul.f32 %v2724, %v2727
    %2731 = vrot.lane.b32.xlu0 %v2725, 104
    %v2732 = vpop.permute.xlu0 %2731
    %v2734 = vmul.f32 %v2724, %v2732
    %2736 = vrot.lane.b32.xlu0 %v2734, 12
    %v2737 = vpop.permute.xlu0 %2736
    %v2739 = vadd.f32 %v2729, %v2737
    %v2740 = vtanh.pop %v2739
    %2742 = vrot.lane.b32.xlu0 %v2740, 24
    %v2743 = vpop.permute.xlu0 %2742
    %v2745 = vmul.f32 %v2724, %v2743
    %v2747 = vrot.slane %v2416, 6
    %v2749 = vsel %vm1656, %v2419, %v2747
    %v2750 = vpack.c.bf16 %v2745, %v2745
    %v2752 = vrot.slane %v2750, 3
    %2753 = vrot.lane.b32.xlu0 %v2752, 92
    %v2754 = vpop.permute.xlu0 %2753
    %v2756 = vsel %vm1667, %v2754, 0
    %2758 = vmatprep.subr.bf16.mxu0 0
    %2759 = vmatpush1.bf16.msra.mxu0 %v2436
    %2760 = vmatprep.subr.bf16.mxu0 0
    %2761 = vmatpush1.bf16.msra.mxu0 0
    %2762 = vmatprep.subr.bf16.mxu0 0
    %2763 = vmatpush1.bf16.msra.mxu0 0
    %2764 = vmatprep.subr.bf16.mxu0 0
    %2765 = vmatpush1.bf16.msra.mxu0 0
    %2766 = vmatprep.subr.bf16.mxu0 0
    %2767 = vmatpush1.bf16.msra.mxu0 0
    %2768 = vmatprep.subr.bf16.mxu0 0
    %2769 = vmatpush1.bf16.msra.mxu0 0
    %2770 = vmatprep.subr.bf16.mxu0 0
    %2771 = vmatpush1.bf16.msra.mxu0 0
    %2772 = vmatprep.subr.bf16.mxu0 0
    %2773 = vmatpush1.bf16.msra.mxu0 0
    %2774 = vmatprep.subr.bf16.mxu0 0
    %2775 = vmatpush1.bf16.msra.mxu0 0
    %2776 = vmatprep.subr.bf16.mxu0 0
    %2777 = vmatpush1.bf16.msra.mxu0 0
    %2778 = vmatprep.subr.bf16.mxu0 0
    %2779 = vmatpush1.bf16.msra.mxu0 0
    %2780 = vmatprep.subr.bf16.mxu0 0
    %2781 = vmatpush1.bf16.msra.mxu0 0
    %2782 = vmatprep.subr.bf16.mxu0 0
    %2783 = vmatpush1.bf16.msra.mxu0 0
    %2784 = vmatprep.subr.bf16.mxu0 0
    %2785 = vmatpush1.bf16.msra.mxu0 0
    %2786 = vmatprep.subr.bf16.mxu0 0
    %2787 = vmatpush1.bf16.msra.mxu0 0
    %2788 = vmatprep.subr.bf16.mxu0 0
    %2789 = vmatpush1.bf16.msra.mxu0 0
    %2790 = vmatprep.mubr.bf16.mxu0 0
    %2791 = vmatmul.mubr.bf16.gmra.mrb[0].mxu0 %v2756
    %v2792 = vpop.f32.mrb[0].mxu0
    %v2793 = vadd.f32 0.0, %v2792
    %v2794 = vpop.f32.mrb[0].mxu0
    %v2795 = vpop.f32.mrb[0].mxu0
    %v2796 = vpop.f32.mrb[0].mxu0
    %2797 = vdwg.mxu0
    %v2798 = vadd.f32 %v2749, %v2793
    %v2799 = vxor.u32 %v2798, 2147483648
    %v2800 = vmul.f32 %v2799, 1.442695
    %v2801 = vpow.pop %v2800
    %v2802 = vadd.f32 %v2801, 1.0
    %v2803 = vrcp.pop %v2802
    %v2804 = vmul.f32 1.0, %v2803
    %v2805 = vtanh.pop %v2798
    %v2807 = vrot.slane %v2739, 6
    %v2809 = vmul.f32 %v2804, %v2807
    %2811 = vrot.lane.b32.xlu0 %v2805, 104
    %v2812 = vpop.permute.xlu0 %2811
    %v2814 = vmul.f32 %v2804, %v2812
    %2816 = vrot.lane.b32.xlu0 %v2814, 12
    %v2817 = vpop.permute.xlu0 %2816
    %v2819 = vadd.f32 %v2809, %v2817
    %v2820 = vtanh.pop %v2819
    %2822 = vrot.lane.b32.xlu0 %v2820, 24
    %v2823 = vpop.permute.xlu0 %2822
    %v2825 = vmul.f32 %v2804, %v2823
    %v2826 = vrot.slane %v2416, 2
    %v2828 = vsel %vm1656, %v2419, %v2826
    %v2829 = vpack.c.bf16 %v2825, %v2825
    %2831 = vrot.lane.b32.xlu0 %v2829, 92
    %v2832 = vpop.permute.xlu0 %2831
    %v2834 = vsel %vm1667, %v2832, 0
    %2836 = vmatprep.subr.bf16.mxu0 0
    %2837 = vmatpush1.bf16.msra.mxu0 %v2436
    %2838 = vmatprep.subr.bf16.mxu0 0
    %2839 = vmatpush1.bf16.msra.mxu0 0
    %2840 = vmatprep.subr.bf16.mxu0 0
    %2841 = vmatpush1.bf16.msra.mxu0 0
    %2842 = vmatprep.subr.bf16.mxu0 0
    %2843 = vmatpush1.bf16.msra.mxu0 0
    %2844 = vmatprep.subr.bf16.mxu0 0
    %2845 = vmatpush1.bf16.msra.mxu0 0
    %2846 = vmatprep.subr.bf16.mxu0 0
    %2847 = vmatpush1.bf16.msra.mxu0 0
    %2848 = vmatprep.subr.bf16.mxu0 0
    %2849 = vmatpush1.bf16.msra.mxu0 0
    %2850 = vmatprep.subr.bf16.mxu0 0
    %2851 = vmatpush1.bf16.msra.mxu0 0
    %2852 = vmatprep.subr.bf16.mxu0 0
    %2853 = vmatpush1.bf16.msra.mxu0 0
    %2854 = vmatprep.subr.bf16.mxu0 0
    %2855 = vmatpush1.bf16.msra.mxu0 0
    %2856 = vmatprep.subr.bf16.mxu0 0
    %2857 = vmatpush1.bf16.msra.mxu0 0
    %2858 = vmatprep.subr.bf16.mxu0 0
    %2859 = vmatpush1.bf16.msra.mxu0 0
    %2860 = vmatprep.subr.bf16.mxu0 0
    %2861 = vmatpush1.bf16.msra.mxu0 0
    %2862 = vmatprep.subr.bf16.mxu0 0
    %2863 = vmatpush1.bf16.msra.mxu0 0
    %2864 = vmatprep.subr.bf16.mxu0 0
    %2865 = vmatpush1.bf16.msra.mxu0 0
    %2866 = vmatprep.subr.bf16.mxu0 0
    %2867 = vmatpush1.bf16.msra.mxu0 0
    %2868 = vmatprep.mubr.bf16.mxu0 0
    %2869 = vmatmul.mubr.bf16.gmra.mrb[0].mxu0 %v2834
    %v2870 = vpop.f32.mrb[0].mxu0
    %v2871 = vadd.f32 0.0, %v2870
    %v2872 = vpop.f32.mrb[0].mxu0
    %v2873 = vpop.f32.mrb[0].mxu0
    %v2874 = vpop.f32.mrb[0].mxu0
    %2875 = vdwg.mxu0
    %v2877 = vrot.slane %v2871, 6
    %v2879 = vadd.f32 %v2828, %v2877
    %v2880 = vxor.u32 %v2879, 2147483648
    %v2881 = vmul.f32 %v2880, 1.442695
    %v2882 = vpow.pop %v2881
    %v2883 = vadd.f32 %v2882, 1.0
    %v2884 = vrcp.pop %v2883
    %v2885 = vmul.f32 1.0, %v2884
    %v2886 = vtanh.pop %v2879
    %v2888 = vrot.slane %v2819, 6
    %v2890 = vmul.f32 %v2885, %v2888
    %2892 = vrot.lane.b32.xlu0 %v2886, 104
    %v2893 = vpop.permute.xlu0 %2892
    %v2895 = vmul.f32 %v2885, %v2893
    %2897 = vrot.lane.b32.xlu0 %v2895, 12
    %v2898 = vpop.permute.xlu0 %2897
    %v2900 = vadd.f32 %v2890, %v2898
    %v2901 = vtanh.pop %v2900
    %2903 = vrot.lane.b32.xlu0 %v2901, 24
    %v2904 = vpop.permute.xlu0 %2903
    %v2906 = vmul.f32 %v2885, %v2904
    %v2907 = vpack.c.bf16 %v2906, %v2906
    %v2909 = vrot.slane %v2907, 1
    %2910 = vrot.lane.b32.xlu0 %v2909, 92
    %v2911 = vpop.permute.xlu0 %2910
    %v2913 = vsel %vm1667, %v2911, 0
    %2915 = vmatprep.subr.bf16.mxu0 0
    %2916 = vmatpush1.bf16.msra.mxu0 %v2436
    %2917 = vmatprep.subr.bf16.mxu0 0
    %2918 = vmatpush1.bf16.msra.mxu0 0
    %2919 = vmatprep.subr.bf16.mxu0 0
    %2920 = vmatpush1.bf16.msra.mxu0 0
    %2921 = vmatprep.subr.bf16.mxu0 0
    %2922 = vmatpush1.bf16.msra.mxu0 0
    %2923 = vmatprep.subr.bf16.mxu0 0
    %2924 = vmatpush1.bf16.msra.mxu0 0
    %2925 = vmatprep.subr.bf16.mxu0 0
    %2926 = vmatpush1.bf16.msra.mxu0 0
    %2927 = vmatprep.subr.bf16.mxu0 0
    %2928 = vmatpush1.bf16.msra.mxu0 0
    %2929 = vmatprep.subr.bf16.mxu0 0
    %2930 = vmatpush1.bf16.msra.mxu0 0
    %2931 = vmatprep.subr.bf16.mxu0 0
    %2932 = vmatpush1.bf16.msra.mxu0 0
    %2933 = vmatprep.subr.bf16.mxu0 0
    %2934 = vmatpush1.bf16.msra.mxu0 0
    %2935 = vmatprep.subr.bf16.mxu0 0
    %2936 = vmatpush1.bf16.msra.mxu0 0
    %2937 = vmatprep.subr.bf16.mxu0 0
    %2938 = vmatpush1.bf16.msra.mxu0 0
    %2939 = vmatprep.subr.bf16.mxu0 0
    %2940 = vmatpush1.bf16.msra.mxu0 0
    %2941 = vmatprep.subr.bf16.mxu0 0
    %2942 = vmatpush1.bf16.msra.mxu0 0
    %2943 = vmatprep.subr.bf16.mxu0 0
    %2944 = vmatpush1.bf16.msra.mxu0 0
    %2945 = vmatprep.subr.bf16.mxu0 0
    %2946 = vmatpush1.bf16.msra.mxu0 0
    %2947 = vmatprep.mubr.bf16.mxu0 0
    %2948 = vmatmul.mubr.bf16.gmra.mrb[0].mxu0 %v2913
    %v2949 = vpop.f32.mrb[0].mxu0
    %v2950 = vadd.f32 0.0, %v2949
    %v2951 = vpop.f32.mrb[0].mxu0
    %v2952 = vpop.f32.mrb[0].mxu0
    %v2953 = vpop.f32.mrb[0].mxu0
    %2954 = vdwg.mxu0
    %v2956 = vrot.slane %v2950, 4
    %v2958 = vadd.f32 %v2749, %v2956
    %v2959 = vxor.u32 %v2958, 2147483648
    %v2960 = vmul.f32 %v2959, 1.442695
    %v2961 = vpow.pop %v2960
    %v2962 = vadd.f32 %v2961, 1.0
    %v2963 = vrcp.pop %v2962
    %v2964 = vmul.f32 1.0, %v2963
    %v2965 = vtanh.pop %v2958
    %v2967 = vrot.slane %v2900, 6
    %v2969 = vmul.f32 %v2964, %v2967
    %2971 = vrot.lane.b32.xlu0 %v2965, 104
    %v2972 = vpop.permute.xlu0 %2971
    %v2974 = vmul.f32 %v2964, %v2972
    %2976 = vrot.lane.b32.xlu0 %v2974, 12
    %v2977 = vpop.permute.xlu0 %2976
    %v2979 = vadd.f32 %v2969, %v2977
    %v2980 = vtanh.pop %v2979
    %2982 = vrot.lane.b32.xlu0 %v2980, 24
    %v2983 = vpop.permute.xlu0 %2982
    %v2985 = vmul.f32 %v2964, %v2983
    %v2986 = vpack.c.bf16 %v2985, %v2985
    %v2988 = vrot.slane %v2986, 2
    %2989 = vrot.lane.b32.xlu0 %v2988, 92
    %v2990 = vpop.permute.xlu0 %2989
    %v2992 = vsel %vm1667, %v2990, 0
    %2994 = vmatprep.subr.bf16.mxu0 0
    %2995 = vmatpush1.bf16.msra.mxu0 %v2436
    %2996 = vmatprep.subr.bf16.mxu0 0
    %2997 = vmatpush1.bf16.msra.mxu0 0
    %2998 = vmatprep.subr.bf16.mxu0 0
    %2999 = vmatpush1.bf16.msra.mxu0 0
    %3000 = vmatprep.subr.bf16.mxu0 0
    %3001 = vmatpush1.bf16.msra.mxu0 0
    %3002 = vmatprep.subr.bf16.mxu0 0
    %3003 = vmatpush1.bf16.msra.mxu0 0
    %3004 = vmatprep.subr.bf16.mxu0 0
    %3005 = vmatpush1.bf16.msra.mxu0 0
    %3006 = vmatprep.subr.bf16.mxu0 0
    %3007 = vmatpush1.bf16.msra.mxu0 0
    %3008 = vmatprep.subr.bf16.mxu0 0
    %3009 = vmatpush1.bf16.msra.mxu0 0
    %3010 = vmatprep.subr.bf16.mxu0 0
    %3011 = vmatpush1.bf16.msra.mxu0 0
    %3012 = vmatprep.subr.bf16.mxu0 0
    %3013 = vmatpush1.bf16.msra.mxu0 0
    %3014 = vmatprep.subr.bf16.mxu0 0
    %3015 = vmatpush1.bf16.msra.mxu0 0
    %3016 = vmatprep.subr.bf16.mxu0 0
    %3017 = vmatpush1.bf16.msra.mxu0 0
    %3018 = vmatprep.subr.bf16.mxu0 0
    %3019 = vmatpush1.bf16.msra.mxu0 0
    %3020 = vmatprep.subr.bf16.mxu0 0
    %3021 = vmatpush1.bf16.msra.mxu0 0
    %3022 = vmatprep.subr.bf16.mxu0 0
    %3023 = vmatpush1.bf16.msra.mxu0 0
    %3024 = vmatprep.subr.bf16.mxu0 0
    %3025 = vmatpush1.bf16.msra.mxu0 0
    %3026 = vmatprep.mubr.bf16.mxu0 0
    %3027 = vmatmul.mubr.bf16.gmra.mrb[0].mxu0 %v2992
    %v3028 = vpop.f32.mrb[0].mxu0
    %v3029 = vadd.f32 0.0, %v3028
    %v3030 = vpop.f32.mrb[0].mxu0
    %v3031 = vpop.f32.mrb[0].mxu0
    %v3032 = vpop.f32.mrb[0].mxu0
    %3033 = vdwg.mxu0
    %v3035 = vrot.slane %v3029, 2
    %v3037 = vadd.f32 %v2828, %v3035
    %v3038 = vxor.u32 %v3037, 2147483648
    %v3039 = vmul.f32 %v3038, 1.442695
    %v3040 = vpow.pop %v3039
    %v3041 = vadd.f32 %v3040, 1.0
    %v3042 = vrcp.pop %v3041
    %v3043 = vmul.f32 1.0, %v3042
    %v3044 = vtanh.pop %v3037
    %v3046 = vrot.slane %v2979, 6
    %v3048 = vmul.f32 %v3043, %v3046
    %3050 = vrot.lane.b32.xlu0 %v3044, 104
    %v3051 = vpop.permute.xlu0 %3050
    %v3053 = vmul.f32 %v3043, %v3051
    %3055 = vrot.lane.b32.xlu0 %v3053, 12
    %v3056 = vpop.permute.xlu0 %3055
    %v3058 = vadd.f32 %v3048, %v3056
    %v3059 = vtanh.pop %v3058
    %3061 = vrot.lane.b32.xlu0 %v3059, 24
    %v3062 = vpop.permute.xlu0 %3061
    %v3064 = vmul.f32 %v3043, %v3062
    %v3065 = vsel %vm2302, %v2506, %v2587
    %v3066 = vsel %vm2304, %v3065, %v2666
    %v3067 = vsel %vm1671, %v3066, %v2745
    %v3068 = vsel %vm2302, %v2825, %v2906
    %v3069 = vsel %vm2304, %v3068, %v2985
    %v3070 = vsel %vm1671, %v3069, %v3064
    %v3072 = vrot.slane %v3064, 6
    %v3075 = vrot.slane %v2985, 2
    %v3078 = vrot.slane %v2906, 6
    %v3081 = vrot.slane %v2825, 2
    %v3084 = vrot.slane %v2745, 6
    %v3087 = vrot.slane %v2666, 2
    %v3090 = vrot.slane %v2587, 6
    %v3093 = vrot.slane %v2506, 2
    %v3095 = vsel %vm2302, %v3072, %v3075
    %v3096 = vsel %vm2304, %v3095, %v3078
    %v3097 = vsel %vm1671, %v3096, %v3081
    %v3098 = vsel %vm2302, %v3084, %v3087
    %v3099 = vsel %vm2304, %v3098, %v3090
    %v3100 = vsel %vm1671, %v3099, %v3093
    %3103 = vrot.lane.b32.xlu0 %v3067, 92
    %v3104 = vpop.permute.xlu0 %3103
    %3105 = vrot.lane.b32.xlu0 %v3070, 92
    %v3106 = vpop.permute.xlu0 %3105
    %3111 = vrot.lane.b32.xlu0 %v3097, 92
    %v3112 = vpop.permute.xlu0 %3111
    %3113 = vrot.lane.b32.xlu0 %v3100, 92
    %v3114 = vpop.permute.xlu0 %3113
    %v3117 = vsel %vm102, %v3104, %v3112
    %v3118 = vsel %vm102, %v3106, %v3114
    %v3119 = vld [vmem:[#allocation2 + $0x1b0] sm:$0x7]
    %v3120 = vld [vmem:[#allocation4 + $0x170] sm:$0x1]
    %v3121 = vlaneseq
    %v3122 = vshrl.u32 %v3121, 7
    %v3123 = vsub.s32 0, %v3122
    %v3124 = vrot.slane %v3120, %v3123
    %v3126 = vsel %vm106, %v3119, 0
    %3128 = vmatprep.subr.bf16.mxu0 0
    %3129 = vmatpush1.bf16.msra.mxu0 %v3126
    %3130 = vmatprep.subr.bf16.mxu0 0
    %3131 = vmatpush1.bf16.msra.mxu0 0
    %3132 = vmatprep.subr.bf16.mxu0 0
    %3133 = vmatpush1.bf16.msra.mxu0 0
    %3134 = vmatprep.subr.bf16.mxu0 0
    %3135 = vmatpush1.bf16.msra.mxu0 0
    %3136 = vmatprep.subr.bf16.mxu0 0
    %3137 = vmatpush1.bf16.msra.mxu0 0
    %3138 = vmatprep.subr.bf16.mxu0 0
    %3139 = vmatpush1.bf16.msra.mxu0 0
    %3140 = vmatprep.subr.bf16.mxu0 0
    %3141 = vmatpush1.bf16.msra.mxu0 0
    %3142 = vmatprep.subr.bf16.mxu0 0
    %3143 = vmatpush1.bf16.msra.mxu0 0
    %3144 = vmatprep.subr.bf16.mxu0 0
    %3145 = vmatpush1.bf16.msra.mxu0 0
    %3146 = vmatprep.subr.bf16.mxu0 0
    %3147 = vmatpush1.bf16.msra.mxu0 0
    %3148 = vmatprep.subr.bf16.mxu0 0
    %3149 = vmatpush1.bf16.msra.mxu0 0
    %3150 = vmatprep.subr.bf16.mxu0 0
    %3151 = vmatpush1.bf16.msra.mxu0 0
    %3152 = vmatprep.subr.bf16.mxu0 0
    %3153 = vmatpush1.bf16.msra.mxu0 0
    %3154 = vmatprep.subr.bf16.mxu0 0
    %3155 = vmatpush1.bf16.msra.mxu0 0
    %3156 = vmatprep.subr.bf16.mxu0 0
    %3157 = vmatpush1.bf16.msra.mxu0 0
    %3158 = vmatprep.subr.bf16.mxu0 0
    %3159 = vmatpush1.bf16.msra.mxu0 0
    %3160 = vmatprep.mubr.bf16.mxu0 0
    %3161 = vmatmul.mubr.bf16.gmra.mrb[0].mxu0 %v104
    %v3162 = vpop.f32.mrb[0].mxu0
    %v3163 = vadd.f32 %v3124, %v3162
    %v3164 = vpop.f32.mrb[0].mxu0
    %v3165 = vpop.f32.mrb[0].mxu0
    %v3166 = vadd.f32 %v3124, %v3165
    %v3167 = vpop.f32.mrb[0].mxu0
    %3168 = vdwg.mxu0
    %v3169 = vld [vmem:[#allocation2 + $0xb0] sm:$0xf]
    %v3170 = vld [vmem:[#allocation2 + $0xb4] sm:$0x3]
    %v3171 = vld [vmem:[#allocation4 + $0x80] sm:$0x1]
    %v3172 = vld [vmem:[#allocation2 + $0xb8] sm:$0xf]
    %v3173 = vld [vmem:[#allocation2 + $0xbc] sm:$0x3]
    %v3174 = vld [vmem:[#allocation4 + $0x88] sm:$0x1]
    %v3175 = vpack.c.bf16 %v3166, %v3163
    %v3176 = vlaneseq
    %v3177 = vshrl.u32 %v3176, 7
    %v3178 = vsub.s32 0, %v3177
    %v3179 = vrot.slane %v3171, %v3178
    %v3182 = vunpack.c.l.b16 %v3169
    %v3183 = vunpack.c.l.b16 %v3170
    %v3184 = vpack.c.b16 %v3183, %v3182
    %v3186 = vsel %vm1667, %v3175, 0
    %v3189 = vsel %vm1671, %v3184, 0
    %3191 = vmatprep.subr.bf16.mxu0 0
    %3192 = vmatpush1.bf16.msra.mxu0 %v3189
    %3193 = vmatprep.subr.bf16.mxu0 0
    %3194 = vmatpush1.bf16.msra.mxu0 0
    %3195 = vmatprep.subr.bf16.mxu0 0
    %3196 = vmatpush1.bf16.msra.mxu0 0
    %3197 = vmatprep.subr.bf16.mxu0 0
    %3198 = vmatpush1.bf16.msra.mxu0 0
    %3199 = vmatprep.subr.bf16.mxu0 0
    %3200 = vmatpush1.bf16.msra.mxu0 0
    %3201 = vmatprep.subr.bf16.mxu0 0
    %3202 = vmatpush1.bf16.msra.mxu0 0
    %3203 = vmatprep.subr.bf16.mxu0 0
    %3204 = vmatpush1.bf16.msra.mxu0 0
    %3205 = vmatprep.subr.bf16.mxu0 0
    %3206 = vmatpush1.bf16.msra.mxu0 0
    %3207 = vmatprep.subr.bf16.mxu0 0
    %3208 = vmatpush1.bf16.msra.mxu0 0
    %3209 = vmatprep.subr.bf16.mxu0 0
    %3210 = vmatpush1.bf16.msra.mxu0 0
    %3211 = vmatprep.subr.bf16.mxu0 0
    %3212 = vmatpush1.bf16.msra.mxu0 0
    %3213 = vmatprep.subr.bf16.mxu0 0
    %3214 = vmatpush1.bf16.msra.mxu0 0
    %3215 = vmatprep.subr.bf16.mxu0 0
    %3216 = vmatpush1.bf16.msra.mxu0 0
    %3217 = vmatprep.subr.bf16.mxu0 0
    %3218 = vmatpush1.bf16.msra.mxu0 0
    %3219 = vmatprep.subr.bf16.mxu0 0
    %3220 = vmatpush1.bf16.msra.mxu0 0
    %3221 = vmatprep.subr.bf16.mxu0 0
    %3222 = vmatpush1.bf16.msra.mxu0 0
    %3223 = vmatprep.mubr.bf16.mxu0 0
    %3224 = vmatmul.mubr.bf16.gmra.mrb[0].mxu0 %v3186
    %v3225 = vpop.f32.mrb[0].mxu0
    %v3226 = vadd.f32 %v3179, %v3225
    %v3227 = vpop.f32.mrb[0].mxu0
    %v3228 = vpop.f32.mrb[0].mxu0
    %v3229 = vadd.f32 %v3179, %v3228
    %v3230 = vpop.f32.mrb[0].mxu0
    %3231 = vdwg.mxu0
    %v3232 = vmul.f32 %v3226, 0.5
    %v3233 = vmul.f32 %v3229, 0.5
    %v3234 = vpack.c.bf16 %v3233, %v3232
    %v3235 = vpack.c.bf16 %v3229, %v3226
    %3237 = vrot.lane.b32.xlu0 %v3235, 116
    %v3238 = vpop.permute.xlu0 %3237
    %v3240 = vsel %vm538, %v3234, 0
    %v3243 = vsel %vm538, %v3238, 0
    %3245 = vmatprep.subr.bf16.mxu0 0
    %3246 = vmatpush1.bf16.xpose.msra.mxu0 %v3243
    %3247 = vmatprep.subr.bf16.mxu0 0
    %3248 = vmatpush1.bf16.xpose.msra.mxu0 0
    %3249 = vmatprep.subr.bf16.mxu0 0
    %3250 = vmatpush1.bf16.xpose.msra.mxu0 0
    %3251 = vmatprep.subr.bf16.mxu0 0
    %3252 = vmatpush1.bf16.xpose.msra.mxu0 0
    %3253 = vmatprep.subr.bf16.mxu0 0
    %3254 = vmatpush1.bf16.xpose.msra.mxu0 0
    %3255 = vmatprep.subr.bf16.mxu0 0
    %3256 = vmatpush1.bf16.xpose.msra.mxu0 0
    %3257 = vmatprep.subr.bf16.mxu0 0
    %3258 = vmatpush1.bf16.xpose.msra.mxu0 0
    %3259 = vmatprep.subr.bf16.mxu0 0
    %3260 = vmatpush1.bf16.xpose.msra.mxu0 0
    %3261 = vmatprep.subr.bf16.mxu0 0
    %3262 = vmatpush1.bf16.xpose.msra.mxu0 0
    %3263 = vmatprep.subr.bf16.mxu0 0
    %3264 = vmatpush1.bf16.xpose.msra.mxu0 0
    %3265 = vmatprep.subr.bf16.mxu0 0
    %3266 = vmatpush1.bf16.xpose.msra.mxu0 0
    %3267 = vmatprep.subr.bf16.mxu0 0
    %3268 = vmatpush1.bf16.xpose.msra.mxu0 0
    %3269 = vmatprep.subr.bf16.mxu0 0
    %3270 = vmatpush1.bf16.xpose.msra.mxu0 0
    %3271 = vmatprep.subr.bf16.mxu0 0
    %3272 = vmatpush1.bf16.xpose.msra.mxu0 0
    %3273 = vmatprep.subr.bf16.mxu0 0
    %3274 = vmatpush1.bf16.xpose.msra.mxu0 0
    %3275 = vmatprep.subr.bf16.mxu0 0
    %3276 = vmatpush1.bf16.xpose.msra.mxu0 0
    %3277 = vmatprep.mubr.bf16.mxu0 0
    %3278 = vmatmul.mubr.bf16.gmra.mrb[0].mxu0 %v3240
    %v3279 = vpop.f32.mrb[0].mxu0
    %v3280 = vadd.f32 %v91, %v3279
    %v3281 = vpop.f32.mrb[0].mxu0
    %v3282 = vpop.f32.mrb[0].mxu0
    %v3283 = vadd.f32 %v92, %v3282
    %v3284 = vpop.f32.mrb[0].mxu0
    %3285 = vdwg.mxu0
    %v3286 = vsel %vm206, %v3280, -inf
    %3287 = vmax.xlane.f32.xlu0 %v3286
    %v3288 = vpop.xlane.xlu0 %3287
    %v3289 = vsel %vm206, %v3283, -inf
    %3290 = vmax.xlane.f32.xlu0 %v3289
    %v3291 = vpop.xlane.xlu0 %3290
    %v3292 = vsub.f32 %v3280, %v3288
    %v3293 = vsub.f32 %v3283, %v3291
    %v3294 = vmul.f32 %v3292, 1.442695
    %v3295 = vpow.pop %v3294
    %v3296 = vmul.f32 %v3293, 1.442695
    %v3297 = vpow.pop %v3296
    %v3298 = vsel %vm206, %v3295, 0.0
    %3299 = vadd.xlane.f32.xlu0 %v3298
    %v3300 = vpop.xlane.xlu0 %3299
    %v3301 = vsel %vm206, %v3297, 0.0
    %3302 = vadd.xlane.f32.xlu0 %v3301
    %v3303 = vpop.xlane.xlu0 %3302
    %v3304 = vrcp.pop %v3300
    %v3305 = vrcp.pop %v3303
    %v3306 = vmul.f32 %v3295, %v3304
    %v3307 = vmul.f32 %v3297, %v3305
    %v3308 = vpack.c.bf16 %v3307, %v3306
    %3309 = vrot.lane.b32.xlu0 %v3235, 104
    %v3310 = vpop.permute.xlu0 %3309
    %v3313 = vsel %vm206, %v3308, 0
    %3315 = vmatprep.subr.bf16.mxu0 0
    %3316 = vmatpush1.bf16.msra.mxu0 %v3310
    %3317 = vmatprep.subr.bf16.mxu0 0
    %3318 = vmatpush1.bf16.msra.mxu0 0
    %3319 = vmatprep.subr.bf16.mxu0 0
    %3320 = vmatpush1.bf16.msra.mxu0 0
    %3321 = vmatprep.subr.bf16.mxu0 0
    %3322 = vmatpush1.bf16.msra.mxu0 0
    %3323 = vmatprep.subr.bf16.mxu0 0
    %3324 = vmatpush1.bf16.msra.mxu0 0
    %3325 = vmatprep.subr.bf16.mxu0 0
    %3326 = vmatpush1.bf16.msra.mxu0 0
    %3327 = vmatprep.subr.bf16.mxu0 0
    %3328 = vmatpush1.bf16.msra.mxu0 0
    %3329 = vmatprep.subr.bf16.mxu0 0
    %3330 = vmatpush1.bf16.msra.mxu0 0
    %3331 = vmatprep.subr.bf16.mxu0 0
    %3332 = vmatpush1.bf16.msra.mxu0 0
    %3333 = vmatprep.subr.bf16.mxu0 0
    %3334 = vmatpush1.bf16.msra.mxu0 0
    %3335 = vmatprep.subr.bf16.mxu0 0
    %3336 = vmatpush1.bf16.msra.mxu0 0
    %3337 = vmatprep.subr.bf16.mxu0 0
    %3338 = vmatpush1.bf16.msra.mxu0 0
    %3339 = vmatprep.subr.bf16.mxu0 0
    %3340 = vmatpush1.bf16.msra.mxu0 0
    %3341 = vmatprep.subr.bf16.mxu0 0
    %3342 = vmatpush1.bf16.msra.mxu0 0
    %3343 = vmatprep.subr.bf16.mxu0 0
    %3344 = vmatpush1.bf16.msra.mxu0 0
    %3345 = vmatprep.subr.bf16.mxu0 0
    %3346 = vmatpush1.bf16.msra.mxu0 0
    %3347 = vmatprep.mubr.bf16.mxu0 0
    %3348 = vmatmul.mubr.bf16.gmra.mrb[0].mxu0 %v3313
    %v3349 = vpop.f32.mrb[0].mxu0
    %v3350 = vadd.f32 0.0, %v3349
    %v3351 = vpop.f32.mrb[0].mxu0
    %v3352 = vpop.f32.mrb[0].mxu0
    %v3353 = vadd.f32 0.0, %v3352
    %v3354 = vpop.f32.mrb[0].mxu0
    %3355 = vdwg.mxu0
    %3357 = vrot.lane.b32.xlu0 %v3234, 124
    %v3358 = vpop.permute.xlu0 %3357
    %3359 = vrot.lane.b32.xlu0 %v3235, 112
    %v3360 = vpop.permute.xlu0 %3359
    %v3362 = vsel %vm538, %v3358, 0
    %v3365 = vsel %vm538, %v3360, 0
    %3367 = vmatprep.subr.bf16.mxu0 0
    %3368 = vmatpush1.bf16.xpose.msra.mxu0 %v3365
    %3369 = vmatprep.subr.bf16.mxu0 0
    %3370 = vmatpush1.bf16.xpose.msra.mxu0 0
    %3371 = vmatprep.subr.bf16.mxu0 0
    %3372 = vmatpush1.bf16.xpose.msra.mxu0 0
    %3373 = vmatprep.subr.bf16.mxu0 0
    %3374 = vmatpush1.bf16.xpose.msra.mxu0 0
    %3375 = vmatprep.subr.bf16.mxu0 0
    %3376 = vmatpush1.bf16.xpose.msra.mxu0 0
    %3377 = vmatprep.subr.bf16.mxu0 0
    %3378 = vmatpush1.bf16.xpose.msra.mxu0 0
    %3379 = vmatprep.subr.bf16.mxu0 0
    %3380 = vmatpush1.bf16.xpose.msra.mxu0 0
    %3381 = vmatprep.subr.bf16.mxu0 0
    %3382 = vmatpush1.bf16.xpose.msra.mxu0 0
    %3383 = vmatprep.subr.bf16.mxu0 0
    %3384 = vmatpush1.bf16.xpose.msra.mxu0 0
    %3385 = vmatprep.subr.bf16.mxu0 0
    %3386 = vmatpush1.bf16.xpose.msra.mxu0 0
    %3387 = vmatprep.subr.bf16.mxu0 0
    %3388 = vmatpush1.bf16.xpose.msra.mxu0 0
    %3389 = vmatprep.subr.bf16.mxu0 0
    %3390 = vmatpush1.bf16.xpose.msra.mxu0 0
    %3391 = vmatprep.subr.bf16.mxu0 0
    %3392 = vmatpush1.bf16.xpose.msra.mxu0 0
    %3393 = vmatprep.subr.bf16.mxu0 0
    %3394 = vmatpush1.bf16.xpose.msra.mxu0 0
    %3395 = vmatprep.subr.bf16.mxu0 0
    %3396 = vmatpush1.bf16.xpose.msra.mxu0 0
    %3397 = vmatprep.subr.bf16.mxu0 0
    %3398 = vmatpush1.bf16.xpose.msra.mxu0 0
    %3399 = vmatprep.mubr.bf16.mxu0 0
    %3400 = vmatmul.mubr.bf16.gmra.mrb[0].mxu0 %v3362
    %v3401 = vpop.f32.mrb[0].mxu0
    %v3402 = vadd.f32 %v91, %v3401
    %v3403 = vpop.f32.mrb[0].mxu0
    %v3404 = vpop.f32.mrb[0].mxu0
    %v3405 = vadd.f32 %v92, %v3404
    %v3406 = vpop.f32.mrb[0].mxu0
    %3407 = vdwg.mxu0
    %v3408 = vsel %vm206, %v3402, -inf
    %3409 = vmax.xlane.f32.xlu0 %v3408
    %v3410 = vpop.xlane.xlu0 %3409
    %v3411 = vsel %vm206, %v3405, -inf
    %3412 = vmax.xlane.f32.xlu0 %v3411
    %v3413 = vpop.xlane.xlu0 %3412
    %v3414 = vsub.f32 %v3402, %v3410
    %v3415 = vsub.f32 %v3405, %v3413
    %v3416 = vmul.f32 %v3414, 1.442695
    %v3417 = vpow.pop %v3416
    %v3418 = vmul.f32 %v3415, 1.442695
    %v3419 = vpow.pop %v3418
    %v3420 = vsel %vm206, %v3417, 0.0
    %3421 = vadd.xlane.f32.xlu0 %v3420
    %v3422 = vpop.xlane.xlu0 %3421
    %v3423 = vsel %vm206, %v3419, 0.0
    %3424 = vadd.xlane.f32.xlu0 %v3423
    %v3425 = vpop.xlane.xlu0 %3424
    %v3426 = vrcp.pop %v3422
    %v3427 = vrcp.pop %v3425
    %v3428 = vmul.f32 %v3417, %v3426
    %v3429 = vmul.f32 %v3419, %v3427
    %v3430 = vpack.c.bf16 %v3429, %v3428
    %3431 = vrot.lane.b32.xlu0 %v3235, 100
    %v3432 = vpop.permute.xlu0 %3431
    %v3435 = vsel %vm206, %v3430, 0
    %3437 = vmatprep.subr.bf16.mxu0 0
    %3438 = vmatpush1.bf16.msra.mxu0 %v3432
    %3439 = vmatprep.subr.bf16.mxu0 0
    %3440 = vmatpush1.bf16.msra.mxu0 0
    %3441 = vmatprep.subr.bf16.mxu0 0
    %3442 = vmatpush1.bf16.msra.mxu0 0
    %3443 = vmatprep.subr.bf16.mxu0 0
    %3444 = vmatpush1.bf16.msra.mxu0 0
    %3445 = vmatprep.subr.bf16.mxu0 0
    %3446 = vmatpush1.bf16.msra.mxu0 0
    %3447 = vmatprep.subr.bf16.mxu0 0
    %3448 = vmatpush1.bf16.msra.mxu0 0
    %3449 = vmatprep.subr.bf16.mxu0 0
    %3450 = vmatpush1.bf16.msra.mxu0 0
    %3451 = vmatprep.subr.bf16.mxu0 0
    %3452 = vmatpush1.bf16.msra.mxu0 0
    %3453 = vmatprep.subr.bf16.mxu0 0
    %3454 = vmatpush1.bf16.msra.mxu0 0
    %3455 = vmatprep.subr.bf16.mxu0 0
    %3456 = vmatpush1.bf16.msra.mxu0 0
    %3457 = vmatprep.subr.bf16.mxu0 0
    %3458 = vmatpush1.bf16.msra.mxu0 0
    %3459 = vmatprep.subr.bf16.mxu0 0
    %3460 = vmatpush1.bf16.msra.mxu0 0
    %3461 = vmatprep.subr.bf16.mxu0 0
    %3462 = vmatpush1.bf16.msra.mxu0 0
    %3463 = vmatprep.subr.bf16.mxu0 0
    %3464 = vmatpush1.bf16.msra.mxu0 0
    %3465 = vmatprep.subr.bf16.mxu0 0
    %3466 = vmatpush1.bf16.msra.mxu0 0
    %3467 = vmatprep.subr.bf16.mxu0 0
    %3468 = vmatpush1.bf16.msra.mxu0 0
    %3469 = vmatprep.mubr.bf16.mxu0 0
    %3470 = vmatmul.mubr.bf16.gmra.mrb[0].mxu0 %v3435
    %v3471 = vpop.f32.mrb[0].mxu0
    %v3472 = vadd.f32 0.0, %v3471
    %v3473 = vpop.f32.mrb[0].mxu0
    %v3474 = vpop.f32.mrb[0].mxu0
    %v3475 = vadd.f32 0.0, %v3474
    %v3476 = vpop.f32.mrb[0].mxu0
    %3477 = vdwg.mxu0
    %3478 = vrot.lane.b32.xlu0 %v3234, 120
    %v3479 = vpop.permute.xlu0 %3478
    %3480 = vrot.lane.b32.xlu0 %v3235, 108
    %v3481 = vpop.permute.xlu0 %3480
    %v3483 = vsel %vm538, %v3479, 0
    %v3486 = vsel %vm538, %v3481, 0
    %3488 = vmatprep.subr.bf16.mxu0 0
    %3489 = vmatpush1.bf16.xpose.msra.mxu0 %v3486
    %3490 = vmatprep.subr.bf16.mxu0 0
    %3491 = vmatpush1.bf16.xpose.msra.mxu0 0
    %3492 = vmatprep.subr.bf16.mxu0 0
    %3493 = vmatpush1.bf16.xpose.msra.mxu0 0
    %3494 = vmatprep.subr.bf16.mxu0 0
    %3495 = vmatpush1.bf16.xpose.msra.mxu0 0
    %3496 = vmatprep.subr.bf16.mxu0 0
    %3497 = vmatpush1.bf16.xpose.msra.mxu0 0
    %3498 = vmatprep.subr.bf16.mxu0 0
    %3499 = vmatpush1.bf16.xpose.msra.mxu0 0
    %3500 = vmatprep.subr.bf16.mxu0 0
    %3501 = vmatpush1.bf16.xpose.msra.mxu0 0
    %3502 = vmatprep.subr.bf16.mxu0 0
    %3503 = vmatpush1.bf16.xpose.msra.mxu0 0
    %3504 = vmatprep.subr.bf16.mxu0 0
    %3505 = vmatpush1.bf16.xpose.msra.mxu0 0
    %3506 = vmatprep.subr.bf16.mxu0 0
    %3507 = vmatpush1.bf16.xpose.msra.mxu0 0
    %3508 = vmatprep.subr.bf16.mxu0 0
    %3509 = vmatpush1.bf16.xpose.msra.mxu0 0
    %3510 = vmatprep.subr.bf16.mxu0 0
    %3511 = vmatpush1.bf16.xpose.msra.mxu0 0
    %3512 = vmatprep.subr.bf16.mxu0 0
    %3513 = vmatpush1.bf16.xpose.msra.mxu0 0
    %3514 = vmatprep.subr.bf16.mxu0 0
    %3515 = vmatpush1.bf16.xpose.msra.mxu0 0
    %3516 = vmatprep.subr.bf16.mxu0 0
    %3517 = vmatpush1.bf16.xpose.msra.mxu0 0
    %3518 = vmatprep.subr.bf16.mxu0 0
    %3519 = vmatpush1.bf16.xpose.msra.mxu0 0
    %3520 = vmatprep.mubr.bf16.mxu0 0
    %3521 = vmatmul.mubr.bf16.gmra.mrb[0].mxu0 %v3483
    %v3522 = vpop.f32.mrb[0].mxu0
    %v3523 = vadd.f32 %v91, %v3522
    %v3524 = vpop.f32.mrb[0].mxu0
    %v3525 = vpop.f32.mrb[0].mxu0
    %v3526 = vadd.f32 %v92, %v3525
    %v3527 = vpop.f32.mrb[0].mxu0
    %3528 = vdwg.mxu0
    %v3529 = vsel %vm206, %v3523, -inf
    %3530 = vmax.xlane.f32.xlu0 %v3529
    %v3531 = vpop.xlane.xlu0 %3530
    %v3532 = vsel %vm206, %v3526, -inf
    %3533 = vmax.xlane.f32.xlu0 %v3532
    %v3534 = vpop.xlane.xlu0 %3533
    %v3535 = vsub.f32 %v3523, %v3531
    %v3536 = vsub.f32 %v3526, %v3534
    %v3537 = vmul.f32 %v3535, 1.442695
    %v3538 = vpow.pop %v3537
    %v3539 = vmul.f32 %v3536, 1.442695
    %v3540 = vpow.pop %v3539
    %v3541 = vsel %vm206, %v3538, 0.0
    %3542 = vadd.xlane.f32.xlu0 %v3541
    %v3543 = vpop.xlane.xlu0 %3542
    %v3544 = vsel %vm206, %v3540, 0.0
    %3545 = vadd.xlane.f32.xlu0 %v3544
    %v3546 = vpop.xlane.xlu0 %3545
    %v3547 = vrcp.pop %v3543
    %v3548 = vrcp.pop %v3546
    %v3549 = vmul.f32 %v3538, %v3547
    %v3550 = vmul.f32 %v3540, %v3548
    %v3551 = vpack.c.bf16 %v3550, %v3549
    %3552 = vrot.lane.b32.xlu0 %v3235, 96
    %v3553 = vpop.permute.xlu0 %3552
    %v3556 = vsel %vm206, %v3551, 0
    %3558 = vmatprep.subr.bf16.mxu0 0
    %3559 = vmatpush1.bf16.msra.mxu0 %v3553
    %3560 = vmatprep.subr.bf16.mxu0 0
    %3561 = vmatpush1.bf16.msra.mxu0 0
    %3562 = vmatprep.subr.bf16.mxu0 0
    %3563 = vmatpush1.bf16.msra.mxu0 0
    %3564 = vmatprep.subr.bf16.mxu0 0
    %3565 = vmatpush1.bf16.msra.mxu0 0
    %3566 = vmatprep.subr.bf16.mxu0 0
    %3567 = vmatpush1.bf16.msra.mxu0 0
    %3568 = vmatprep.subr.bf16.mxu0 0
    %3569 = vmatpush1.bf16.msra.mxu0 0
    %3570 = vmatprep.subr.bf16.mxu0 0
    %3571 = vmatpush1.bf16.msra.mxu0 0
    %3572 = vmatprep.subr.bf16.mxu0 0
    %3573 = vmatpush1.bf16.msra.mxu0 0
    %3574 = vmatprep.subr.bf16.mxu0 0
    %3575 = vmatpush1.bf16.msra.mxu0 0
    %3576 = vmatprep.subr.bf16.mxu0 0
    %3577 = vmatpush1.bf16.msra.mxu0 0
    %3578 = vmatprep.subr.bf16.mxu0 0
    %3579 = vmatpush1.bf16.msra.mxu0 0
    %3580 = vmatprep.subr.bf16.mxu0 0
    %3581 = vmatpush1.bf16.msra.mxu0 0
    %3582 = vmatprep.subr.bf16.mxu0 0
    %3583 = vmatpush1.bf16.msra.mxu0 0
    %3584 = vmatprep.subr.bf16.mxu0 0
    %3585 = vmatpush1.bf16.msra.mxu0 0
    %3586 = vmatprep.subr.bf16.mxu0 0
    %3587 = vmatpush1.bf16.msra.mxu0 0
    %3588 = vmatprep.subr.bf16.mxu0 0
    %3589 = vmatpush1.bf16.msra.mxu0 0
    %3590 = vmatprep.mubr.bf16.mxu0 0
    %3591 = vmatmul.mubr.bf16.gmra.mrb[0].mxu0 %v3556
    %v3592 = vpop.f32.mrb[0].mxu0
    %v3593 = vadd.f32 0.0, %v3592
    %v3594 = vpop.f32.mrb[0].mxu0
    %v3595 = vpop.f32.mrb[0].mxu0
    %v3596 = vadd.f32 0.0, %v3595
    %v3597 = vpop.f32.mrb[0].mxu0
    %3598 = vdwg.mxu0
    %3601 = vrot.lane.b32.xlu0 %v3472, 4
    %v3602 = vpop.permute.xlu0 %3601
    %3603 = vrot.lane.b32.xlu0 %v3475, 4
    %v3604 = vpop.permute.xlu0 %3603
    %3609 = vrot.lane.b32.xlu0 %v3593, 8
    %v3610 = vpop.permute.xlu0 %3609
    %3611 = vrot.lane.b32.xlu0 %v3596, 8
    %v3612 = vpop.permute.xlu0 %3611
    %v3615 = vsel %vm538, %v3350, %v3602
    %v3616 = vsel %vm538, %v3353, %v3604
    %vm3617 = vcmask 64512
    %v3618 = vsel %vm3617, %v3615, %v3610
    %v3619 = vsel %vm3617, %v3616, %v3612
    %v3620 = vpack.c.bf16 %v3619, %v3618
    %v3621 = vlaneseq
    %v3622 = vshrl.u32 %v3621, 7
    %v3623 = vsub.s32 0, %v3622
    %v3624 = vrot.slane %v3174, %v3623
    %v3627 = vunpack.c.l.b16 %v3172
    %v3628 = vunpack.c.l.b16 %v3173
    %v3629 = vpack.c.b16 %v3628, %v3627
    %v3631 = vsel %vm1667, %v3620, 0
    %v3634 = vsel %vm1671, %v3629, 0
    %3636 = vmatprep.subr.bf16.mxu0 0
    %3637 = vmatpush1.bf16.msra.mxu0 %v3634
    %3638 = vmatprep.subr.bf16.mxu0 0
    %3639 = vmatpush1.bf16.msra.mxu0 0
    %3640 = vmatprep.subr.bf16.mxu0 0
    %3641 = vmatpush1.bf16.msra.mxu0 0
    %3642 = vmatprep.subr.bf16.mxu0 0
    %3643 = vmatpush1.bf16.msra.mxu0 0
    %3644 = vmatprep.subr.bf16.mxu0 0
    %3645 = vmatpush1.bf16.msra.mxu0 0
    %3646 = vmatprep.subr.bf16.mxu0 0
    %3647 = vmatpush1.bf16.msra.mxu0 0
    %3648 = vmatprep.subr.bf16.mxu0 0
    %3649 = vmatpush1.bf16.msra.mxu0 0
    %3650 = vmatprep.subr.bf16.mxu0 0
    %3651 = vmatpush1.bf16.msra.mxu0 0
    %3652 = vmatprep.subr.bf16.mxu0 0
    %3653 = vmatpush1.bf16.msra.mxu0 0
    %3654 = vmatprep.subr.bf16.mxu0 0
    %3655 = vmatpush1.bf16.msra.mxu0 0
    %3656 = vmatprep.subr.bf16.mxu0 0
    %3657 = vmatpush1.bf16.msra.mxu0 0
    %3658 = vmatprep.subr.bf16.mxu0 0
    %3659 = vmatpush1.bf16.msra.mxu0 0
    %3660 = vmatprep.subr.bf16.mxu0 0
    %3661 = vmatpush1.bf16.msra.mxu0 0
    %3662 = vmatprep.subr.bf16.mxu0 0
    %3663 = vmatpush1.bf16.msra.mxu0 0
    %3664 = vmatprep.subr.bf16.mxu0 0
    %3665 = vmatpush1.bf16.msra.mxu0 0
    %3666 = vmatprep.subr.bf16.mxu0 0
    %3667 = vmatpush1.bf16.msra.mxu0 0
    %3668 = vmatprep.mubr.bf16.mxu0 0
    %3669 = vmatmul.mubr.bf16.gmra.mrb[0].mxu0 %v3631
    %v3670 = vpop.f32.mrb[0].mxu0
    %v3671 = vadd.f32 %v3624, %v3670
    %v3672 = vpop.f32.mrb[0].mxu0
    %v3673 = vpop.f32.mrb[0].mxu0
    %v3674 = vadd.f32 %v3624, %v3673
    %v3675 = vpop.f32.mrb[0].mxu0
    %3676 = vdwg.mxu0
    %v3677 = vadd.f32 %v3163, %v3671
    %v3678 = vadd.f32 %v3166, %v3674
    %v3679 = vld [vmem:[#allocation4 + $0xb0] sm:$0x1]
    %v3680 = vld [vmem:[#allocation4 + $0xb8] sm:$0x1]
    %v3681 = vsel %vm1667, %v3677, 0.0
    %3682 = vadd.xlane.f32.xlu0 %v3681
    %v3683 = vpop.xlane.xlu0 %3682
    %v3684 = vsel %vm1667, %v3678, 0.0
    %3685 = vadd.xlane.f32.xlu0 %v3684
    %v3686 = vpop.xlane.xlu0 %3685
    %v3687 = vrcp.pop 12.0
    %v3688 = vmul.f32 %v3683, %v3687
    %v3689 = vmul.f32 %v3686, %v3687
    %v3690 = vsub.f32 %v3677, %v3688
    %v3691 = vsub.f32 %v3678, %v3689
    %v3692 = vmul.f32 %v3690, %v3690
    %v3693 = vmul.f32 %v3691, %v3691
    %v3694 = vsel %vm1667, %v3692, 0.0
    %3695 = vadd.xlane.f32.xlu0 %v3694
    %v3696 = vpop.xlane.xlu0 %3695
    %v3697 = vsel %vm1667, %v3693, 0.0
    %3698 = vadd.xlane.f32.xlu0 %v3697
    %v3699 = vpop.xlane.xlu0 %3698
    %v3700 = vmul.f32 %v3696, %v3687
    %v3701 = vmul.f32 %v3699, %v3687
    %v3702 = vadd.f32 %v3700, 1e-05
    %v3703 = vadd.f32 %v3701, 1e-05
    %v3704 = vrsqrt.pop %v3702
    %v3705 = vrsqrt.pop %v3703
    %v3706 = vmul.f32 %v3690, %v3704
    %v3707 = vmul.f32 %v3691, %v3705
    %v3708 = vlaneseq
    %v3709 = vshrl.u32 %v3708, 7
    %v3710 = vsub.s32 0, %v3709
    %v3711 = vrot.slane %v3679, %v3710
    %v3712 = vmul.f32 %v3706, %v3711
    %v3713 = vmul.f32 %v3707, %v3711
    %v3714 = vlaneseq
    %v3715 = vshrl.u32 %v3714, 7
    %v3716 = vsub.s32 0, %v3715
    %v3717 = vrot.slane %v3680, %v3716
    %v3718 = vadd.f32 %v3712, %v3717
    %v3719 = vadd.f32 %v3713, %v3717
    %v3720 = vld [vmem:[#allocation2 + $0xc0] sm:$0xf]
    %v3721 = vld [vmem:[#allocation2 + $0xc4] sm:$0x3]
    %v3722 = vld [vmem:[#allocation4 + $0x90] sm:$0x1]
    %v3723 = vld [vmem:[#allocation2 + $0xc8] sm:$0xf]
    %v3724 = vld [vmem:[#allocation2 + $0xcc] sm:$0x3]
    %v3725 = vld [vmem:[#allocation4 + $0x98] sm:$0x1]
    %v3726 = vpack.c.bf16 %v3719, %v3718
    %v3727 = vpack.c.bf16 %v3118, %v3117
    %v3728 = vlaneseq
    %v3729 = vshrl.u32 %v3728, 7
    %v3730 = vsub.s32 0, %v3729
    %v3731 = vrot.slane %v3722, %v3730
    %v3734 = vunpack.c.l.b16 %v3720
    %v3735 = vunpack.c.l.b16 %v3721
    %v3736 = vpack.c.b16 %v3735, %v3734
    %v3738 = vsel %vm1667, %v3726, 0
    %v3741 = vsel %vm1667, %v3727, 0
    %v3744 = vsel %vm1671, %v3736, 0
    %3746 = vmatprep.subr.bf16.mxu0 0
    %3747 = vmatpush1.bf16.msra.mxu0 %v3744
    %3748 = vmatprep.subr.bf16.mxu0 0
    %3749 = vmatpush1.bf16.msra.mxu0 0
    %3750 = vmatprep.subr.bf16.mxu0 0
    %3751 = vmatpush1.bf16.msra.mxu0 0
    %3752 = vmatprep.subr.bf16.mxu0 0
    %3753 = vmatpush1.bf16.msra.mxu0 0
    %3754 = vmatprep.subr.bf16.mxu0 0
    %3755 = vmatpush1.bf16.msra.mxu0 0
    %3756 = vmatprep.subr.bf16.mxu0 0
    %3757 = vmatpush1.bf16.msra.mxu0 0
    %3758 = vmatprep.subr.bf16.mxu0 0
    %3759 = vmatpush1.bf16.msra.mxu0 0
    %3760 = vmatprep.subr.bf16.mxu0 0
    %3761 = vmatpush1.bf16.msra.mxu0 0
    %3762 = vmatprep.subr.bf16.mxu0 0
    %3763 = vmatpush1.bf16.msra.mxu0 0
    %3764 = vmatprep.subr.bf16.mxu0 0
    %3765 = vmatpush1.bf16.msra.mxu0 0
    %3766 = vmatprep.subr.bf16.mxu0 0
    %3767 = vmatpush1.bf16.msra.mxu0 0
    %3768 = vmatprep.subr.bf16.mxu0 0
    %3769 = vmatpush1.bf16.msra.mxu0 0
    %3770 = vmatprep.subr.bf16.mxu0 0
    %3771 = vmatpush1.bf16.msra.mxu0 0
    %3772 = vmatprep.subr.bf16.mxu0 0
    %3773 = vmatpush1.bf16.msra.mxu0 0
    %3774 = vmatprep.subr.bf16.mxu0 0
    %3775 = vmatpush1.bf16.msra.mxu0 0
    %3776 = vmatprep.subr.bf16.mxu0 0
    %3777 = vmatpush1.bf16.msra.mxu0 0
    %3778 = vmatprep.mubr.bf16.mxu0 0
    %3779 = vmatmul.mubr.bf16.gmra.mrb[0].mxu0 %v3738
    %v3780 = vpop.f32.mrb[0].mxu0
    %v3781 = vadd.f32 %v3731, %v3780
    %v3782 = vpop.f32.mrb[0].mxu0
    %v3783 = vpop.f32.mrb[0].mxu0
    %v3784 = vadd.f32 %v3731, %v3783
    %v3785 = vpop.f32.mrb[0].mxu0
    %3786 = vmatprep.mubr.bf16.mxu0 0
    %3787 = vmatmul.mubr.bf16.gmra.mrb[0].mxu0 %v3741
    %v3788 = vpop.f32.mrb[0].mxu0
    %v3789 = vadd.f32 %v3731, %v3788
    %v3790 = vpop.f32.mrb[0].mxu0
    %v3791 = vpop.f32.mrb[0].mxu0
    %v3792 = vadd.f32 %v3731, %v3791
    %v3793 = vpop.f32.mrb[0].mxu0
    %3794 = vdwg.mxu0
    %v3795 = vmul.f32 %v3781, 0.5
    %v3796 = vmul.f32 %v3784, 0.5
    %v3797 = vpack.c.bf16 %v3796, %v3795
    %v3798 = vpack.c.bf16 %v3792, %v3789
    %3800 = vrot.lane.b32.xlu0 %v3798, 116
    %v3801 = vpop.permute.xlu0 %3800
    %v3803 = vsel %vm538, %v3797, 0
    %v3806 = vsel %vm538, %v3801, 0
    %3808 = vmatprep.subr.bf16.mxu0 0
    %3809 = vmatpush1.bf16.xpose.msra.mxu0 %v3806
    %3810 = vmatprep.subr.bf16.mxu0 0
    %3811 = vmatpush1.bf16.xpose.msra.mxu0 0
    %3812 = vmatprep.subr.bf16.mxu0 0
    %3813 = vmatpush1.bf16.xpose.msra.mxu0 0
    %3814 = vmatprep.subr.bf16.mxu0 0
    %3815 = vmatpush1.bf16.xpose.msra.mxu0 0
    %3816 = vmatprep.subr.bf16.mxu0 0
    %3817 = vmatpush1.bf16.xpose.msra.mxu0 0
    %3818 = vmatprep.subr.bf16.mxu0 0
    %3819 = vmatpush1.bf16.xpose.msra.mxu0 0
    %3820 = vmatprep.subr.bf16.mxu0 0
    %3821 = vmatpush1.bf16.xpose.msra.mxu0 0
    %3822 = vmatprep.subr.bf16.mxu0 0
    %3823 = vmatpush1.bf16.xpose.msra.mxu0 0
    %3824 = vmatprep.subr.bf16.mxu0 0
    %3825 = vmatpush1.bf16.xpose.msra.mxu0 0
    %3826 = vmatprep.subr.bf16.mxu0 0
    %3827 = vmatpush1.bf16.xpose.msra.mxu0 0
    %3828 = vmatprep.subr.bf16.mxu0 0
    %3829 = vmatpush1.bf16.xpose.msra.mxu0 0
    %3830 = vmatprep.subr.bf16.mxu0 0
    %3831 = vmatpush1.bf16.xpose.msra.mxu0 0
    %3832 = vmatprep.subr.bf16.mxu0 0
    %3833 = vmatpush1.bf16.xpose.msra.mxu0 0
    %3834 = vmatprep.subr.bf16.mxu0 0
    %3835 = vmatpush1.bf16.xpose.msra.mxu0 0
    %3836 = vmatprep.subr.bf16.mxu0 0
    %3837 = vmatpush1.bf16.xpose.msra.mxu0 0
    %3838 = vmatprep.subr.bf16.mxu0 0
    %3839 = vmatpush1.bf16.xpose.msra.mxu0 0
    %3840 = vmatprep.mubr.bf16.mxu0 0
    %3841 = vmatmul.mubr.bf16.gmra.mrb[0].mxu0 %v3803
    %v3842 = vpop.f32.mrb[0].mxu0
    %v3843 = vadd.f32 %v91, %v3842
    %v3844 = vpop.f32.mrb[0].mxu0
    %v3845 = vpop.f32.mrb[0].mxu0
    %v3846 = vadd.f32 %v92, %v3845
    %v3847 = vpop.f32.mrb[0].mxu0
    %3848 = vdwg.mxu0
    %v3849 = vsel %vm206, %v3843, -inf
    %3850 = vmax.xlane.f32.xlu0 %v3849
    %v3851 = vpop.xlane.xlu0 %3850
    %v3852 = vsel %vm206, %v3846, -inf
    %3853 = vmax.xlane.f32.xlu0 %v3852
    %v3854 = vpop.xlane.xlu0 %3853
    %v3855 = vsub.f32 %v3843, %v3851
    %v3856 = vsub.f32 %v3846, %v3854
    %v3857 = vmul.f32 %v3855, 1.442695
    %v3858 = vpow.pop %v3857
    %v3859 = vmul.f32 %v3856, 1.442695
    %v3860 = vpow.pop %v3859
    %v3861 = vsel %vm206, %v3858, 0.0
    %3862 = vadd.xlane.f32.xlu0 %v3861
    %v3863 = vpop.xlane.xlu0 %3862
    %v3864 = vsel %vm206, %v3860, 0.0
    %3865 = vadd.xlane.f32.xlu0 %v3864
    %v3866 = vpop.xlane.xlu0 %3865
    %v3867 = vrcp.pop %v3863
    %v3868 = vrcp.pop %v3866
    %v3869 = vmul.f32 %v3858, %v3867
    %v3870 = vmul.f32 %v3860, %v3868
    %v3871 = vpack.c.bf16 %v3870, %v3869
    %3872 = vrot.lane.b32.xlu0 %v3798, 104
    %v3873 = vpop.permute.xlu0 %3872
    %v3876 = vsel %vm206, %v3871, 0
    %3878 = vmatprep.subr.bf16.mxu0 0
    %3879 = vmatpush1.bf16.msra.mxu0 %v3873
    %3880 = vmatprep.subr.bf16.mxu0 0
    %3881 = vmatpush1.bf16.msra.mxu0 0
    %3882 = vmatprep.subr.bf16.mxu0 0
    %3883 = vmatpush1.bf16.msra.mxu0 0
    %3884 = vmatprep.subr.bf16.mxu0 0
    %3885 = vmatpush1.bf16.msra.mxu0 0
    %3886 = vmatprep.subr.bf16.mxu0 0
    %3887 = vmatpush1.bf16.msra.mxu0 0
    %3888 = vmatprep.subr.bf16.mxu0 0
    %3889 = vmatpush1.bf16.msra.mxu0 0
    %3890 = vmatprep.subr.bf16.mxu0 0
    %3891 = vmatpush1.bf16.msra.mxu0 0
    %3892 = vmatprep.subr.bf16.mxu0 0
    %3893 = vmatpush1.bf16.msra.mxu0 0
    %3894 = vmatprep.subr.bf16.mxu0 0
    %3895 = vmatpush1.bf16.msra.mxu0 0
    %3896 = vmatprep.subr.bf16.mxu0 0
    %3897 = vmatpush1.bf16.msra.mxu0 0
    %3898 = vmatprep.subr.bf16.mxu0 0
    %3899 = vmatpush1.bf16.msra.mxu0 0
    %3900 = vmatprep.subr.bf16.mxu0 0
    %3901 = vmatpush1.bf16.msra.mxu0 0
    %3902 = vmatprep.subr.bf16.mxu0 0
    %3903 = vmatpush1.bf16.msra.mxu0 0
    %3904 = vmatprep.subr.bf16.mxu0 0
    %3905 = vmatpush1.bf16.msra.mxu0 0
    %3906 = vmatprep.subr.bf16.mxu0 0
    %3907 = vmatpush1.bf16.msra.mxu0 0
    %3908 = vmatprep.subr.bf16.mxu0 0
    %3909 = vmatpush1.bf16.msra.mxu0 0
    %3910 = vmatprep.mubr.bf16.mxu0 0
    %3911 = vmatmul.mubr.bf16.gmra.mrb[0].mxu0 %v3876
    %v3912 = vpop.f32.mrb[0].mxu0
    %v3913 = vadd.f32 0.0, %v3912
    %v3914 = vpop.f32.mrb[0].mxu0
    %v3915 = vpop.f32.mrb[0].mxu0
    %v3916 = vadd.f32 0.0, %v3915
    %v3917 = vpop.f32.mrb[0].mxu0
    %3918 = vdwg.mxu0
    %3920 = vrot.lane.b32.xlu0 %v3797, 124
    %v3921 = vpop.permute.xlu0 %3920
    %3922 = vrot.lane.b32.xlu0 %v3798, 112
    %v3923 = vpop.permute.xlu0 %3922
    %v3925 = vsel %vm538, %v3921, 0
    %v3928 = vsel %vm538, %v3923, 0
    %3930 = vmatprep.subr.bf16.mxu0 0
    %3931 = vmatpush1.bf16.xpose.msra.mxu0 %v3928
    %3932 = vmatprep.subr.bf16.mxu0 0
    %3933 = vmatpush1.bf16.xpose.msra.mxu0 0
    %3934 = vmatprep.subr.bf16.mxu0 0
    %3935 = vmatpush1.bf16.xpose.msra.mxu0 0
    %3936 = vmatprep.subr.bf16.mxu0 0
    %3937 = vmatpush1.bf16.xpose.msra.mxu0 0
    %3938 = vmatprep.subr.bf16.mxu0 0
    %3939 = vmatpush1.bf16.xpose.msra.mxu0 0
    %3940 = vmatprep.subr.bf16.mxu0 0
    %3941 = vmatpush1.bf16.xpose.msra.mxu0 0
    %3942 = vmatprep.subr.bf16.mxu0 0
    %3943 = vmatpush1.bf16.xpose.msra.mxu0 0
    %3944 = vmatprep.subr.bf16.mxu0 0
    %3945 = vmatpush1.bf16.xpose.msra.mxu0 0
    %3946 = vmatprep.subr.bf16.mxu0 0
    %3947 = vmatpush1.bf16.xpose.msra.mxu0 0
    %3948 = vmatprep.subr.bf16.mxu0 0
    %3949 = vmatpush1.bf16.xpose.msra.mxu0 0
    %3950 = vmatprep.subr.bf16.mxu0 0
    %3951 = vmatpush1.bf16.xpose.msra.mxu0 0
    %3952 = vmatprep.subr.bf16.mxu0 0
    %3953 = vmatpush1.bf16.xpose.msra.mxu0 0
    %3954 = vmatprep.subr.bf16.mxu0 0
    %3955 = vmatpush1.bf16.xpose.msra.mxu0 0
    %3956 = vmatprep.subr.bf16.mxu0 0
    %3957 = vmatpush1.bf16.xpose.msra.mxu0 0
    %3958 = vmatprep.subr.bf16.mxu0 0
    %3959 = vmatpush1.bf16.xpose.msra.mxu0 0
    %3960 = vmatprep.subr.bf16.mxu0 0
    %3961 = vmatpush1.bf16.xpose.msra.mxu0 0
    %3962 = vmatprep.mubr.bf16.mxu0 0
    %3963 = vmatmul.mubr.bf16.gmra.mrb[0].mxu0 %v3925
    %v3964 = vpop.f32.mrb[0].mxu0
    %v3965 = vadd.f32 %v91, %v3964
    %v3966 = vpop.f32.mrb[0].mxu0
    %v3967 = vpop.f32.mrb[0].mxu0
    %v3968 = vadd.f32 %v92, %v3967
    %v3969 = vpop.f32.mrb[0].mxu0
    %3970 = vdwg.mxu0
    %v3971 = vsel %vm206, %v3965, -inf
    %3972 = vmax.xlane.f32.xlu0 %v3971
    %v3973 = vpop.xlane.xlu0 %3972
    %v3974 = vsel %vm206, %v3968, -inf
    %3975 = vmax.xlane.f32.xlu0 %v3974
    %v3976 = vpop.xlane.xlu0 %3975
    %v3977 = vsub.f32 %v3965, %v3973
    %v3978 = vsub.f32 %v3968, %v3976
    %v3979 = vmul.f32 %v3977, 1.442695
    %v3980 = vpow.pop %v3979
    %v3981 = vmul.f32 %v3978, 1.442695
    %v3982 = vpow.pop %v3981
    %v3983 = vsel %vm206, %v3980, 0.0
    %3984 = vadd.xlane.f32.xlu0 %v3983
    %v3985 = vpop.xlane.xlu0 %3984
    %v3986 = vsel %vm206, %v3982, 0.0
    %3987 = vadd.xlane.f32.xlu0 %v3986
    %v3988 = vpop.xlane.xlu0 %3987
    %v3989 = vrcp.pop %v3985
    %v3990 = vrcp.pop %v3988
    %v3991 = vmul.f32 %v3980, %v3989
    %v3992 = vmul.f32 %v3982, %v3990
    %v3993 = vpack.c.bf16 %v3992, %v3991
    %3994 = vrot.lane.b32.xlu0 %v3798, 100
    %v3995 = vpop.permute.xlu0 %3994
    %v3998 = vsel %vm206, %v3993, 0
    %4000 = vmatprep.subr.bf16.mxu0 0
    %4001 = vmatpush1.bf16.msra.mxu0 %v3995
    %4002 = vmatprep.subr.bf16.mxu0 0
    %4003 = vmatpush1.bf16.msra.mxu0 0
    %4004 = vmatprep.subr.bf16.mxu0 0
    %4005 = vmatpush1.bf16.msra.mxu0 0
    %4006 = vmatprep.subr.bf16.mxu0 0
    %4007 = vmatpush1.bf16.msra.mxu0 0
    %4008 = vmatprep.subr.bf16.mxu0 0
    %4009 = vmatpush1.bf16.msra.mxu0 0
    %4010 = vmatprep.subr.bf16.mxu0 0
    %4011 = vmatpush1.bf16.msra.mxu0 0
    %4012 = vmatprep.subr.bf16.mxu0 0
    %4013 = vmatpush1.bf16.msra.mxu0 0
    %4014 = vmatprep.subr.bf16.mxu0 0
    %4015 = vmatpush1.bf16.msra.mxu0 0
    %4016 = vmatprep.subr.bf16.mxu0 0
    %4017 = vmatpush1.bf16.msra.mxu0 0
    %4018 = vmatprep.subr.bf16.mxu0 0
    %4019 = vmatpush1.bf16.msra.mxu0 0
    %4020 = vmatprep.subr.bf16.mxu0 0
    %4021 = vmatpush1.bf16.msra.mxu0 0
    %4022 = vmatprep.subr.bf16.mxu0 0
    %4023 = vmatpush1.bf16.msra.mxu0 0
    %4024 = vmatprep.subr.bf16.mxu0 0
    %4025 = vmatpush1.bf16.msra.mxu0 0
    %4026 = vmatprep.subr.bf16.mxu0 0
    %4027 = vmatpush1.bf16.msra.mxu0 0
    %4028 = vmatprep.subr.bf16.mxu0 0
    %4029 = vmatpush1.bf16.msra.mxu0 0
    %4030 = vmatprep.subr.bf16.mxu0 0
    %4031 = vmatpush1.bf16.msra.mxu0 0
    %4032 = vmatprep.mubr.bf16.mxu0 0
    %4033 = vmatmul.mubr.bf16.gmra.mrb[0].mxu0 %v3998
    %v4034 = vpop.f32.mrb[0].mxu0
    %v4035 = vadd.f32 0.0, %v4034
    %v4036 = vpop.f32.mrb[0].mxu0
    %v4037 = vpop.f32.mrb[0].mxu0
    %v4038 = vadd.f32 0.0, %v4037
    %v4039 = vpop.f32.mrb[0].mxu0
    %4040 = vdwg.mxu0
    %4041 = vrot.lane.b32.xlu0 %v3797, 120
    %v4042 = vpop.permute.xlu0 %4041
    %4043 = vrot.lane.b32.xlu0 %v3798, 108
    %v4044 = vpop.permute.xlu0 %4043
    %v4046 = vsel %vm538, %v4042, 0
    %v4049 = vsel %vm538, %v4044, 0
    %4051 = vmatprep.subr.bf16.mxu0 0
    %4052 = vmatpush1.bf16.xpose.msra.mxu0 %v4049
    %4053 = vmatprep.subr.bf16.mxu0 0
    %4054 = vmatpush1.bf16.xpose.msra.mxu0 0
    %4055 = vmatprep.subr.bf16.mxu0 0
    %4056 = vmatpush1.bf16.xpose.msra.mxu0 0
    %4057 = vmatprep.subr.bf16.mxu0 0
    %4058 = vmatpush1.bf16.xpose.msra.mxu0 0
    %4059 = vmatprep.subr.bf16.mxu0 0
    %4060 = vmatpush1.bf16.xpose.msra.mxu0 0
    %4061 = vmatprep.subr.bf16.mxu0 0
    %4062 = vmatpush1.bf16.xpose.msra.mxu0 0
    %4063 = vmatprep.subr.bf16.mxu0 0
    %4064 = vmatpush1.bf16.xpose.msra.mxu0 0
    %4065 = vmatprep.subr.bf16.mxu0 0
    %4066 = vmatpush1.bf16.xpose.msra.mxu0 0
    %4067 = vmatprep.subr.bf16.mxu0 0
    %4068 = vmatpush1.bf16.xpose.msra.mxu0 0
    %4069 = vmatprep.subr.bf16.mxu0 0
    %4070 = vmatpush1.bf16.xpose.msra.mxu0 0
    %4071 = vmatprep.subr.bf16.mxu0 0
    %4072 = vmatpush1.bf16.xpose.msra.mxu0 0
    %4073 = vmatprep.subr.bf16.mxu0 0
    %4074 = vmatpush1.bf16.xpose.msra.mxu0 0
    %4075 = vmatprep.subr.bf16.mxu0 0
    %4076 = vmatpush1.bf16.xpose.msra.mxu0 0
    %4077 = vmatprep.subr.bf16.mxu0 0
    %4078 = vmatpush1.bf16.xpose.msra.mxu0 0
    %4079 = vmatprep.subr.bf16.mxu0 0
    %4080 = vmatpush1.bf16.xpose.msra.mxu0 0
    %4081 = vmatprep.subr.bf16.mxu0 0
    %4082 = vmatpush1.bf16.xpose.msra.mxu0 0
    %4083 = vmatprep.mubr.bf16.mxu0 0
    %4084 = vmatmul.mubr.bf16.gmra.mrb[0].mxu0 %v4046
    %v4085 = vpop.f32.mrb[0].mxu0
    %v4086 = vadd.f32 %v91, %v4085
    %v4087 = vpop.f32.mrb[0].mxu0
    %v4088 = vpop.f32.mrb[0].mxu0
    %v4089 = vadd.f32 %v92, %v4088
    %v4090 = vpop.f32.mrb[0].mxu0
    %4091 = vdwg.mxu0
    %v4092 = vsel %vm206, %v4086, -inf
    %4093 = vmax.xlane.f32.xlu0 %v4092
    %v4094 = vpop.xlane.xlu0 %4093
    %v4095 = vsel %vm206, %v4089, -inf
    %4096 = vmax.xlane.f32.xlu0 %v4095
    %v4097 = vpop.xlane.xlu0 %4096
    %v4098 = vsub.f32 %v4086, %v4094
    %v4099 = vsub.f32 %v4089, %v4097
    %v4100 = vmul.f32 %v4098, 1.442695
    %v4101 = vpow.pop %v4100
    %v4102 = vmul.f32 %v4099, 1.442695
    %v4103 = vpow.pop %v4102
    %v4104 = vsel %vm206, %v4101, 0.0
    %4105 = vadd.xlane.f32.xlu0 %v4104
    %v4106 = vpop.xlane.xlu0 %4105
    %v4107 = vsel %vm206, %v4103, 0.0
    %4108 = vadd.xlane.f32.xlu0 %v4107
    %v4109 = vpop.xlane.xlu0 %4108
    %v4110 = vrcp.pop %v4106
    %v4111 = vrcp.pop %v4109
    %v4112 = vmul.f32 %v4101, %v4110
    %v4113 = vmul.f32 %v4103, %v4111
    %v4114 = vpack.c.bf16 %v4113, %v4112
    %4115 = vrot.lane.b32.xlu0 %v3798, 96
    %v4116 = vpop.permute.xlu0 %4115
    %v4119 = vsel %vm206, %v4114, 0
    %4121 = vmatprep.subr.bf16.mxu0 0
    %4122 = vmatpush1.bf16.msra.mxu0 %v4116
    %4123 = vmatprep.subr.bf16.mxu0 0
    %4124 = vmatpush1.bf16.msra.mxu0 0
    %4125 = vmatprep.subr.bf16.mxu0 0
    %4126 = vmatpush1.bf16.msra.mxu0 0
    %4127 = vmatprep.subr.bf16.mxu0 0
    %4128 = vmatpush1.bf16.msra.mxu0 0
    %4129 = vmatprep.subr.bf16.mxu0 0
    %4130 = vmatpush1.bf16.msra.mxu0 0
    %4131 = vmatprep.subr.bf16.mxu0 0
    %4132 = vmatpush1.bf16.msra.mxu0 0
    %4133 = vmatprep.subr.bf16.mxu0 0
    %4134 = vmatpush1.bf16.msra.mxu0 0
    %4135 = vmatprep.subr.bf16.mxu0 0
    %4136 = vmatpush1.bf16.msra.mxu0 0
    %4137 = vmatprep.subr.bf16.mxu0 0
    %4138 = vmatpush1.bf16.msra.mxu0 0
    %4139 = vmatprep.subr.bf16.mxu0 0
    %4140 = vmatpush1.bf16.msra.mxu0 0
    %4141 = vmatprep.subr.bf16.mxu0 0
    %4142 = vmatpush1.bf16.msra.mxu0 0
    %4143 = vmatprep.subr.bf16.mxu0 0
    %4144 = vmatpush1.bf16.msra.mxu0 0
    %4145 = vmatprep.subr.bf16.mxu0 0
    %4146 = vmatpush1.bf16.msra.mxu0 0
    %4147 = vmatprep.subr.bf16.mxu0 0
    %4148 = vmatpush1.bf16.msra.mxu0 0
    %4149 = vmatprep.subr.bf16.mxu0 0
    %4150 = vmatpush1.bf16.msra.mxu0 0
    %4151 = vmatprep.subr.bf16.mxu0 0
    %4152 = vmatpush1.bf16.msra.mxu0 0
    %4153 = vmatprep.mubr.bf16.mxu0 0
    %4154 = vmatmul.mubr.bf16.gmra.mrb[0].mxu0 %v4119
    %v4155 = vpop.f32.mrb[0].mxu0
    %v4156 = vadd.f32 0.0, %v4155
    %v4157 = vpop.f32.mrb[0].mxu0
    %v4158 = vpop.f32.mrb[0].mxu0
    %v4159 = vadd.f32 0.0, %v4158
    %v4160 = vpop.f32.mrb[0].mxu0
    %4161 = vdwg.mxu0
    %4164 = vrot.lane.b32.xlu0 %v4035, 4
    %v4165 = vpop.permute.xlu0 %4164
    %4166 = vrot.lane.b32.xlu0 %v4038, 4
    %v4167 = vpop.permute.xlu0 %4166
    %4172 = vrot.lane.b32.xlu0 %v4156, 8
    %v4173 = vpop.permute.xlu0 %4172
    %4174 = vrot.lane.b32.xlu0 %v4159, 8
    %v4175 = vpop.permute.xlu0 %4174
    %v4178 = vsel %vm538, %v3913, %v4165
    %v4179 = vsel %vm538, %v3916, %v4167
    %v4180 = vsel %vm3617, %v4178, %v4173
    %v4181 = vsel %vm3617, %v4179, %v4175
    %v4182 = vpack.c.bf16 %v4181, %v4180
    %v4183 = vlaneseq
    %v4184 = vshrl.u32 %v4183, 7
    %v4185 = vsub.s32 0, %v4184
    %v4186 = vrot.slane %v3725, %v4185
    %v4189 = vunpack.c.l.b16 %v3723
    %v4190 = vunpack.c.l.b16 %v3724
    %v4191 = vpack.c.b16 %v4190, %v4189
    %v4193 = vsel %vm1667, %v4182, 0
    %v4196 = vsel %vm1671, %v4191, 0
    %4198 = vmatprep.subr.bf16.mxu0 0
    %4199 = vmatpush1.bf16.msra.mxu0 %v4196
    %4200 = vmatprep.subr.bf16.mxu0 0
    %4201 = vmatpush1.bf16.msra.mxu0 0
    %4202 = vmatprep.subr.bf16.mxu0 0
    %4203 = vmatpush1.bf16.msra.mxu0 0
    %4204 = vmatprep.subr.bf16.mxu0 0
    %4205 = vmatpush1.bf16.msra.mxu0 0
    %4206 = vmatprep.subr.bf16.mxu0 0
    %4207 = vmatpush1.bf16.msra.mxu0 0
    %4208 = vmatprep.subr.bf16.mxu0 0
    %4209 = vmatpush1.bf16.msra.mxu0 0
    %4210 = vmatprep.subr.bf16.mxu0 0
    %4211 = vmatpush1.bf16.msra.mxu0 0
    %4212 = vmatprep.subr.bf16.mxu0 0
    %4213 = vmatpush1.bf16.msra.mxu0 0
    %4214 = vmatprep.subr.bf16.mxu0 0
    %4215 = vmatpush1.bf16.msra.mxu0 0
    %4216 = vmatprep.subr.bf16.mxu0 0
    %4217 = vmatpush1.bf16.msra.mxu0 0
    %4218 = vmatprep.subr.bf16.mxu0 0
    %4219 = vmatpush1.bf16.msra.mxu0 0
    %4220 = vmatprep.subr.bf16.mxu0 0
    %4221 = vmatpush1.bf16.msra.mxu0 0
    %4222 = vmatprep.subr.bf16.mxu0 0
    %4223 = vmatpush1.bf16.msra.mxu0 0
    %4224 = vmatprep.subr.bf16.mxu0 0
    %4225 = vmatpush1.bf16.msra.mxu0 0
    %4226 = vmatprep.subr.bf16.mxu0 0
    %4227 = vmatpush1.bf16.msra.mxu0 0
    %4228 = vmatprep.subr.bf16.mxu0 0
    %4229 = vmatpush1.bf16.msra.mxu0 0
    %4230 = vmatprep.mubr.bf16.mxu0 0
    %4231 = vmatmul.mubr.bf16.gmra.mrb[0].mxu0 %v4193
    %v4232 = vpop.f32.mrb[0].mxu0
    %v4233 = vadd.f32 %v4186, %v4232
    %v4234 = vpop.f32.mrb[0].mxu0
    %v4235 = vpop.f32.mrb[0].mxu0
    %v4236 = vadd.f32 %v4186, %v4235
    %v4237 = vpop.f32.mrb[0].mxu0
    %4238 = vdwg.mxu0
    %v4239 = vadd.f32 %v3718, %v4233
    %v4240 = vadd.f32 %v3719, %v4236
    %v4241 = vld [vmem:[#allocation4 + $0xc0] sm:$0x1]
    %v4242 = vld [vmem:[#allocation4 + $0xc8] sm:$0x1]
    %v4243 = vsel %vm1667, %v4239, 0.0
    %4244 = vadd.xlane.f32.xlu0 %v4243
    %v4245 = vpop.xlane.xlu0 %4244
    %v4246 = vsel %vm1667, %v4240, 0.0
    %4247 = vadd.xlane.f32.xlu0 %v4246
    %v4248 = vpop.xlane.xlu0 %4247
    %v4249 = vmul.f32 %v4245, %v3687
    %v4250 = vmul.f32 %v4248, %v3687
    %v4251 = vsub.f32 %v4239, %v4249
    %v4252 = vsub.f32 %v4240, %v4250
    %v4253 = vmul.f32 %v4251, %v4251
    %v4254 = vmul.f32 %v4252, %v4252
    %v4255 = vsel %vm1667, %v4253, 0.0
    %4256 = vadd.xlane.f32.xlu0 %v4255
    %v4257 = vpop.xlane.xlu0 %4256
    %v4258 = vsel %vm1667, %v4254, 0.0
    %4259 = vadd.xlane.f32.xlu0 %v4258
    %v4260 = vpop.xlane.xlu0 %4259
    %v4261 = vmul.f32 %v4257, %v3687
    %v4262 = vmul.f32 %v4260, %v3687
    %v4263 = vadd.f32 %v4261, 1e-05
    %v4264 = vadd.f32 %v4262, 1e-05
    %v4265 = vrsqrt.pop %v4263
    %v4266 = vrsqrt.pop %v4264
    %v4267 = vmul.f32 %v4251, %v4265
    %v4268 = vmul.f32 %v4252, %v4266
    %v4269 = vlaneseq
    %v4270 = vshrl.u32 %v4269, 7
    %v4271 = vsub.s32 0, %v4270
    %v4272 = vrot.slane %v4241, %v4271
    %v4273 = vmul.f32 %v4267, %v4272
    %v4274 = vmul.f32 %v4268, %v4272
    %v4275 = vlaneseq
    %v4276 = vshrl.u32 %v4275, 7
    %v4277 = vsub.s32 0, %v4276
    %v4278 = vrot.slane %v4242, %v4277
    %v4279 = vadd.f32 %v4273, %v4278
    %v4280 = vadd.f32 %v4274, %v4278
    %v4281 = vld [vmem:[#allocation2 + $0xd0] sm:$0xf]
    %v4282 = vld [vmem:[#allocation2 + $0xd4] sm:$0x3]
    %v4283 = vld [vmem:[#allocation4 + $0xa0] sm:$0x1]
    %v4284 = vld [vmem:[#allocation2 + $0xd8] sm:$0xf]
    %v4285 = vld [vmem:[#allocation2 + $0xdc] sm:$0xf]
    %v4286 = vld [vmem:[#allocation2 + $0xe0] sm:$0xf]
    %v4287 = vld [vmem:[#allocation2 + $0xe4] sm:$0xf]
    %v4288 = vld [vmem:[#allocation2 + $0xe8] sm:$0xf]
    %v4289 = vld [vmem:[#allocation2 + $0xec] sm:$0xf]
    %v4290 = vld [vmem:[#allocation2 + $0xf0] sm:$0xf]
    %v4291 = vld [vmem:[#allocation2 + $0xf4] sm:$0xf]
    %v4292 = vld [vmem:[#allocation2 + $0xf8] sm:$0xf]
    %v4293 = vld [vmem:[#allocation2 + $0xfc] sm:$0xf]
    %v4294 = vld [vmem:[#allocation2 + $0x100] sm:$0xf]
    %v4295 = vld [vmem:[#allocation2 + $0x104] sm:$0xf]
    %v4296 = vld [vmem:[#allocation2 + $0x108] sm:$0xf]
    %v4297 = vld [vmem:[#allocation2 + $0x10c] sm:$0xf]
    %v4298 = vld [vmem:[#allocation2 + $0x110] sm:$0xf]
    %v4299 = vld [vmem:[#allocation2 + $0x114] sm:$0xf]
    %v4300 = vld [vmem:[#allocation4 + $0xa8] sm:$0x1]
    %v4301 = vpack.c.bf16 %v4280, %v4279
    %v4302 = vlaneseq
    %v4303 = vshrl.u32 %v4302, 7
    %v4304 = vsub.s32 0, %v4303
    %v4305 = vrot.slane %v4283, %v4304
    %v4308 = vunpack.c.l.b16 %v4281
    %v4309 = vunpack.c.l.b16 %v4282
    %v4310 = vpack.c.b16 %v4309, %v4308
    %v4312 = vsel %vm1667, %v4301, 0
    %v4315 = vsel %vm1671, %v4310, 0
    %4317 = vmatprep.subr.bf16.mxu0 0
    %4318 = vmatpush1.bf16.msra.mxu0 %v4315
    %4319 = vmatprep.subr.bf16.mxu0 0
    %4320 = vmatpush1.bf16.msra.mxu0 0
    %4321 = vmatprep.subr.bf16.mxu0 0
    %4322 = vmatpush1.bf16.msra.mxu0 0
    %4323 = vmatprep.subr.bf16.mxu0 0
    %4324 = vmatpush1.bf16.msra.mxu0 0
    %4325 = vmatprep.subr.bf16.mxu0 0
    %4326 = vmatpush1.bf16.msra.mxu0 0
    %4327 = vmatprep.subr.bf16.mxu0 0
    %4328 = vmatpush1.bf16.msra.mxu0 0
    %4329 = vmatprep.subr.bf16.mxu0 0
    %4330 = vmatpush1.bf16.msra.mxu0 0
    %4331 = vmatprep.subr.bf16.mxu0 0
    %4332 = vmatpush1.bf16.msra.mxu0 0
    %4333 = vmatprep.subr.bf16.mxu0 0
    %4334 = vmatpush1.bf16.msra.mxu0 0
    %4335 = vmatprep.subr.bf16.mxu0 0
    %4336 = vmatpush1.bf16.msra.mxu0 0
    %4337 = vmatprep.subr.bf16.mxu0 0
    %4338 = vmatpush1.bf16.msra.mxu0 0
    %4339 = vmatprep.subr.bf16.mxu0 0
    %4340 = vmatpush1.bf16.msra.mxu0 0
    %4341 = vmatprep.subr.bf16.mxu0 0
    %4342 = vmatpush1.bf16.msra.mxu0 0
    %4343 = vmatprep.subr.bf16.mxu0 0
    %4344 = vmatpush1.bf16.msra.mxu0 0
    %4345 = vmatprep.subr.bf16.mxu0 0
    %4346 = vmatpush1.bf16.msra.mxu0 0
    %4347 = vmatprep.subr.bf16.mxu0 0
    %4348 = vmatpush1.bf16.msra.mxu0 0
    %4349 = vmatprep.mubr.bf16.mxu0 0
    %4350 = vmatmul.mubr.bf16.gmra.mrb[0].mxu0 %v4312
    %v4351 = vpop.f32.mrb[0].mxu0
    %v4352 = vadd.f32 %v4305, %v4351
    %v4353 = vpop.f32.mrb[0].mxu0
    %v4354 = vpop.f32.mrb[0].mxu0
    %v4355 = vadd.f32 %v4305, %v4354
    %v4356 = vpop.f32.mrb[0].mxu0
    %4357 = vdwg.mxu0
    %v4358 = vmax.f32 %v4352, 0.0
    %v4359 = vmax.f32 %v4355, 0.0
    %v4360 = vpack.c.bf16 %v4359, %v4358
    %v4361 = vlaneseq
    %v4362 = vshrl.u32 %v4361, 7
    %v4363 = vsub.s32 0, %v4362
    %v4364 = vrot.slane %v4300, %v4363
    %v4381 = vunpack.c.l.b16 %v4284
    %v4382 = vunpack.c.l.b16 %v4285
    %v4383 = vunpack.c.l.b16 %v4286
    %v4384 = vunpack.c.l.b16 %v4287
    %v4385 = vunpack.c.l.b16 %v4288
    %v4386 = vunpack.c.l.b16 %v4289
    %v4387 = vunpack.c.l.b16 %v4290
    %v4388 = vunpack.c.l.b16 %v4291
    %v4389 = vunpack.c.l.b16 %v4292
    %v4390 = vunpack.c.l.b16 %v4293
    %v4391 = vunpack.c.l.b16 %v4294
    %v4392 = vunpack.c.l.b16 %v4295
    %v4393 = vunpack.c.l.b16 %v4296
    %v4394 = vunpack.c.l.b16 %v4297
    %v4395 = vunpack.c.l.b16 %v4298
    %v4396 = vunpack.c.l.b16 %v4299
    %v4397 = vpack.c.b16 %v4382, %v4381
    %v4398 = vpack.c.b16 %v4384, %v4383
    %v4399 = vpack.c.b16 %v4386, %v4385
    %v4400 = vpack.c.b16 %v4388, %v4387
    %v4401 = vpack.c.b16 %v4390, %v4389
    %v4402 = vpack.c.b16 %v4392, %v4391
    %v4403 = vpack.c.b16 %v4394, %v4393
    %v4404 = vpack.c.b16 %v4396, %v4395
    %4413 = vmatprep.subr.bf16.mxu0 0
    %4414 = vmatpush1.bf16.msra.mxu0 %v4397
    %4415 = vmatprep.subr.bf16.mxu0 0
    %4416 = vmatpush1.bf16.msra.mxu0 %v4398
    %4417 = vmatprep.subr.bf16.mxu0 0
    %4418 = vmatpush1.bf16.msra.mxu0 %v4399
    %4419 = vmatprep.subr.bf16.mxu0 0
    %4420 = vmatpush1.bf16.msra.mxu0 %v4400
    %4421 = vmatprep.subr.bf16.mxu0 0
    %4422 = vmatpush1.bf16.msra.mxu0 %v4401
    %4423 = vmatprep.subr.bf16.mxu0 0
    %4424 = vmatpush1.bf16.msra.mxu0 %v4402
    %4425 = vmatprep.subr.bf16.mxu0 0
    %4426 = vmatpush1.bf16.msra.mxu0 %v4403
    %4427 = vmatprep.subr.bf16.mxu0 0
    %4428 = vmatpush1.bf16.msra.mxu0 %v4404
    %4429 = vmatprep.subr.bf16.mxu0 0
    %4430 = vmatpush1.bf16.msra.mxu0 0
    %4431 = vmatprep.subr.bf16.mxu0 0
    %4432 = vmatpush1.bf16.msra.mxu0 0
    %4433 = vmatprep.subr.bf16.mxu0 0
    %4434 = vmatpush1.bf16.msra.mxu0 0
    %4435 = vmatprep.subr.bf16.mxu0 0
    %4436 = vmatpush1.bf16.msra.mxu0 0
    %4437 = vmatprep.subr.bf16.mxu0 0
    %4438 = vmatpush1.bf16.msra.mxu0 0
    %4439 = vmatprep.subr.bf16.mxu0 0
    %4440 = vmatpush1.bf16.msra.mxu0 0
    %4441 = vmatprep.subr.bf16.mxu0 0
    %4442 = vmatpush1.bf16.msra.mxu0 0
    %4443 = vmatprep.subr.bf16.mxu0 0
    %4444 = vmatpush1.bf16.msra.mxu0 0
    %4445 = vmatprep.mubr.bf16.mxu0 0
    %4446 = vmatmul.mubr.bf16.gmra.mrb[0].mxu0 %v4360
    %v4447 = vpop.f32.mrb[0].mxu0
    %v4448 = vadd.f32 %v4364, %v4447
    %v4449 = vpop.f32.mrb[0].mxu0
    %v4450 = vpop.f32.mrb[0].mxu0
    %v4451 = vadd.f32 %v4364, %v4450
    %v4452 = vpop.f32.mrb[0].mxu0
    %4453 = vdwg.mxu0
    %v4454 = vadd.f32 %v4279, %v4448
    %v4455 = vadd.f32 %v4280, %v4451
    %v4456 = vld [vmem:[#allocation4 + $0xd0] sm:$0x1]
    %v4457 = vld [vmem:[#allocation4 + $0xd8] sm:$0x1]
    %v4458 = vsel %vm1667, %v4454, 0.0
    %4459 = vadd.xlane.f32.xlu0 %v4458
    %v4460 = vpop.xlane.xlu0 %4459
    %v4461 = vsel %vm1667, %v4455, 0.0
    %4462 = vadd.xlane.f32.xlu0 %v4461
    %v4463 = vpop.xlane.xlu0 %4462
    %v4464 = vmul.f32 %v4460, %v3687
    %v4465 = vmul.f32 %v4463, %v3687
    %v4466 = vsub.f32 %v4454, %v4464
    %v4467 = vsub.f32 %v4455, %v4465
    %v4468 = vmul.f32 %v4466, %v4466
    %v4469 = vmul.f32 %v4467, %v4467
    %v4470 = vsel %vm1667, %v4468, 0.0
    %4471 = vadd.xlane.f32.xlu0 %v4470
    %v4472 = vpop.xlane.xlu0 %4471
    %v4473 = vsel %vm1667, %v4469, 0.0
    %4474 = vadd.xlane.f32.xlu0 %v4473
    %v4475 = vpop.xlane.xlu0 %4474
    %v4476 = vmul.f32 %v4472, %v3687
    %v4477 = vmul.f32 %v4475, %v3687
    %v4478 = vadd.f32 %v4476, 1e-05
    %v4479 = vadd.f32 %v4477, 1e-05
    %v4480 = vrsqrt.pop %v4478
    %v4481 = vrsqrt.pop %v4479
    %v4482 = vmul.f32 %v4466, %v4480
    %v4483 = vmul.f32 %v4467, %v4481
    %v4484 = vlaneseq
    %v4485 = vshrl.u32 %v4484, 7
    %v4486 = vsub.s32 0, %v4485
    %v4487 = vrot.slane %v4456, %v4486
    %v4488 = vmul.f32 %v4482, %v4487
    %v4489 = vmul.f32 %v4483, %v4487
    %v4490 = vlaneseq
    %v4491 = vshrl.u32 %v4490, 7
    %v4492 = vsub.s32 0, %v4491
    %v4493 = vrot.slane %v4457, %v4492
    %v4494 = vadd.f32 %v4488, %v4493
    %v4495 = vadd.f32 %v4489, %v4493
    %v4496 = vld [vmem:[#allocation2 + $0x118] sm:$0xf]
    %v4497 = vld [vmem:[#allocation2 + $0x11c] sm:$0x3]
    %v4498 = vld [vmem:[#allocation4 + $0xe0] sm:$0x1]
    %v4499 = vld [vmem:[#allocation2 + $0x120] sm:$0xf]
    %v4500 = vld [vmem:[#allocation2 + $0x124] sm:$0x3]
    %v4501 = vld [vmem:[#allocation4 + $0xe8] sm:$0x1]
    %v4502 = vpack.c.bf16 %v4495, %v4494
    %v4503 = vlaneseq
    %v4504 = vshrl.u32 %v4503, 7
    %v4505 = vsub.s32 0, %v4504
    %v4506 = vrot.slane %v4498, %v4505
    %v4509 = vunpack.c.l.b16 %v4496
    %v4510 = vunpack.c.l.b16 %v4497
    %v4511 = vpack.c.b16 %v4510, %v4509
    %v4513 = vsel %vm1667, %v4502, 0
    %v4516 = vsel %vm1671, %v4511, 0
    %4518 = vmatprep.subr.bf16.mxu0 0
    %4519 = vmatpush1.bf16.msra.mxu0 %v4516
    %4520 = vmatprep.subr.bf16.mxu0 0
    %4521 = vmatpush1.bf16.msra.mxu0 0
    %4522 = vmatprep.subr.bf16.mxu0 0
    %4523 = vmatpush1.bf16.msra.mxu0 0
    %4524 = vmatprep.subr.bf16.mxu0 0
    %4525 = vmatpush1.bf16.msra.mxu0 0
    %4526 = vmatprep.subr.bf16.mxu0 0
    %4527 = vmatpush1.bf16.msra.mxu0 0
    %4528 = vmatprep.subr.bf16.mxu0 0
    %4529 = vmatpush1.bf16.msra.mxu0 0
    %4530 = vmatprep.subr.bf16.mxu0 0
    %4531 = vmatpush1.bf16.msra.mxu0 0
    %4532 = vmatprep.subr.bf16.mxu0 0
    %4533 = vmatpush1.bf16.msra.mxu0 0
    %4534 = vmatprep.subr.bf16.mxu0 0
    %4535 = vmatpush1.bf16.msra.mxu0 0
    %4536 = vmatprep.subr.bf16.mxu0 0
    %4537 = vmatpush1.bf16.msra.mxu0 0
    %4538 = vmatprep.subr.bf16.mxu0 0
    %4539 = vmatpush1.bf16.msra.mxu0 0
    %4540 = vmatprep.subr.bf16.mxu0 0
    %4541 = vmatpush1.bf16.msra.mxu0 0
    %4542 = vmatprep.subr.bf16.mxu0 0
    %4543 = vmatpush1.bf16.msra.mxu0 0
    %4544 = vmatprep.subr.bf16.mxu0 0
    %4545 = vmatpush1.bf16.msra.mxu0 0
    %4546 = vmatprep.subr.bf16.mxu0 0
    %4547 = vmatpush1.bf16.msra.mxu0 0
    %4548 = vmatprep.subr.bf16.mxu0 0
    %4549 = vmatpush1.bf16.msra.mxu0 0
    %4550 = vmatprep.mubr.bf16.mxu0 0
    %4551 = vmatmul.mubr.bf16.gmra.mrb[0].mxu0 %v4513
    %v4552 = vpop.f32.mrb[0].mxu0
    %v4553 = vadd.f32 %v4506, %v4552
    %v4554 = vpop.f32.mrb[0].mxu0
    %v4555 = vpop.f32.mrb[0].mxu0
    %v4556 = vadd.f32 %v4506, %v4555
    %v4557 = vpop.f32.mrb[0].mxu0
    %4558 = vdwg.mxu0
    %v4559 = vmul.f32 %v4553, 0.5
    %v4560 = vmul.f32 %v4556, 0.5
    %v4561 = vpack.c.bf16 %v4560, %v4559
    %v4562 = vpack.c.bf16 %v4556, %v4553
    %4564 = vrot.lane.b32.xlu0 %v4562, 116
    %v4565 = vpop.permute.xlu0 %4564
    %v4567 = vsel %vm538, %v4561, 0
    %v4570 = vsel %vm538, %v4565, 0
    %4572 = vmatprep.subr.bf16.mxu0 0
    %4573 = vmatpush1.bf16.xpose.msra.mxu0 %v4570
    %4574 = vmatprep.subr.bf16.mxu0 0
    %4575 = vmatpush1.bf16.xpose.msra.mxu0 0
    %4576 = vmatprep.subr.bf16.mxu0 0
    %4577 = vmatpush1.bf16.xpose.msra.mxu0 0
    %4578 = vmatprep.subr.bf16.mxu0 0
    %4579 = vmatpush1.bf16.xpose.msra.mxu0 0
    %4580 = vmatprep.subr.bf16.mxu0 0
    %4581 = vmatpush1.bf16.xpose.msra.mxu0 0
    %4582 = vmatprep.subr.bf16.mxu0 0
    %4583 = vmatpush1.bf16.xpose.msra.mxu0 0
    %4584 = vmatprep.subr.bf16.mxu0 0
    %4585 = vmatpush1.bf16.xpose.msra.mxu0 0
    %4586 = vmatprep.subr.bf16.mxu0 0
    %4587 = vmatpush1.bf16.xpose.msra.mxu0 0
    %4588 = vmatprep.subr.bf16.mxu0 0
    %4589 = vmatpush1.bf16.xpose.msra.mxu0 0
    %4590 = vmatprep.subr.bf16.mxu0 0
    %4591 = vmatpush1.bf16.xpose.msra.mxu0 0
    %4592 = vmatprep.subr.bf16.mxu0 0
    %4593 = vmatpush1.bf16.xpose.msra.mxu0 0
    %4594 = vmatprep.subr.bf16.mxu0 0
    %4595 = vmatpush1.bf16.xpose.msra.mxu0 0
    %4596 = vmatprep.subr.bf16.mxu0 0
    %4597 = vmatpush1.bf16.xpose.msra.mxu0 0
    %4598 = vmatprep.subr.bf16.mxu0 0
    %4599 = vmatpush1.bf16.xpose.msra.mxu0 0
    %4600 = vmatprep.subr.bf16.mxu0 0
    %4601 = vmatpush1.bf16.xpose.msra.mxu0 0
    %4602 = vmatprep.subr.bf16.mxu0 0
    %4603 = vmatpush1.bf16.xpose.msra.mxu0 0
    %4604 = vmatprep.mubr.bf16.mxu0 0
    %4605 = vmatmul.mubr.bf16.gmra.mrb[0].mxu0 %v4567
    %v4606 = vpop.f32.mrb[0].mxu0
    %v4607 = vadd.f32 %v91, %v4606
    %v4608 = vpop.f32.mrb[0].mxu0
    %v4609 = vpop.f32.mrb[0].mxu0
    %v4610 = vadd.f32 %v92, %v4609
    %v4611 = vpop.f32.mrb[0].mxu0
    %4612 = vdwg.mxu0
    %v4613 = vsel %vm206, %v4607, -inf
    %4614 = vmax.xlane.f32.xlu0 %v4613
    %v4615 = vpop.xlane.xlu0 %4614
    %v4616 = vsel %vm206, %v4610, -inf
    %4617 = vmax.xlane.f32.xlu0 %v4616
    %v4618 = vpop.xlane.xlu0 %4617
    %v4619 = vsub.f32 %v4607, %v4615
    %v4620 = vsub.f32 %v4610, %v4618
    %v4621 = vmul.f32 %v4619, 1.442695
    %v4622 = vpow.pop %v4621
    %v4623 = vmul.f32 %v4620, 1.442695
    %v4624 = vpow.pop %v4623
    %v4625 = vsel %vm206, %v4622, 0.0
    %4626 = vadd.xlane.f32.xlu0 %v4625
    %v4627 = vpop.xlane.xlu0 %4626
    %v4628 = vsel %vm206, %v4624, 0.0
    %4629 = vadd.xlane.f32.xlu0 %v4628
    %v4630 = vpop.xlane.xlu0 %4629
    %v4631 = vrcp.pop %v4627
    %v4632 = vrcp.pop %v4630
    %v4633 = vmul.f32 %v4622, %v4631
    %v4634 = vmul.f32 %v4624, %v4632
    %v4635 = vpack.c.bf16 %v4634, %v4633
    %4636 = vrot.lane.b32.xlu0 %v4562, 104
    %v4637 = vpop.permute.xlu0 %4636
    %v4640 = vsel %vm206, %v4635, 0
    %4642 = vmatprep.subr.bf16.mxu0 0
    %4643 = vmatpush1.bf16.msra.mxu0 %v4637
    %4644 = vmatprep.subr.bf16.mxu0 0
    %4645 = vmatpush1.bf16.msra.mxu0 0
    %4646 = vmatprep.subr.bf16.mxu0 0
    %4647 = vmatpush1.bf16.msra.mxu0 0
    %4648 = vmatprep.subr.bf16.mxu0 0
    %4649 = vmatpush1.bf16.msra.mxu0 0
    %4650 = vmatprep.subr.bf16.mxu0 0
    %4651 = vmatpush1.bf16.msra.mxu0 0
    %4652 = vmatprep.subr.bf16.mxu0 0
    %4653 = vmatpush1.bf16.msra.mxu0 0
    %4654 = vmatprep.subr.bf16.mxu0 0
    %4655 = vmatpush1.bf16.msra.mxu0 0
    %4656 = vmatprep.subr.bf16.mxu0 0
    %4657 = vmatpush1.bf16.msra.mxu0 0
    %4658 = vmatprep.subr.bf16.mxu0 0
    %4659 = vmatpush1.bf16.msra.mxu0 0
    %4660 = vmatprep.subr.bf16.mxu0 0
    %4661 = vmatpush1.bf16.msra.mxu0 0
    %4662 = vmatprep.subr.bf16.mxu0 0
    %4663 = vmatpush1.bf16.msra.mxu0 0
    %4664 = vmatprep.subr.bf16.mxu0 0
    %4665 = vmatpush1.bf16.msra.mxu0 0
    %4666 = vmatprep.subr.bf16.mxu0 0
    %4667 = vmatpush1.bf16.msra.mxu0 0
    %4668 = vmatprep.subr.bf16.mxu0 0
    %4669 = vmatpush1.bf16.msra.mxu0 0
    %4670 = vmatprep.subr.bf16.mxu0 0
    %4671 = vmatpush1.bf16.msra.mxu0 0
    %4672 = vmatprep.subr.bf16.mxu0 0
    %4673 = vmatpush1.bf16.msra.mxu0 0
    %4674 = vmatprep.mubr.bf16.mxu0 0
    %4675 = vmatmul.mubr.bf16.gmra.mrb[0].mxu0 %v4640
    %v4676 = vpop.f32.mrb[0].mxu0
    %v4677 = vadd.f32 0.0, %v4676
    %v4678 = vpop.f32.mrb[0].mxu0
    %v4679 = vpop.f32.mrb[0].mxu0
    %v4680 = vadd.f32 0.0, %v4679
    %v4681 = vpop.f32.mrb[0].mxu0
    %4682 = vdwg.mxu0
    %4684 = vrot.lane.b32.xlu0 %v4561, 124
    %v4685 = vpop.permute.xlu0 %4684
    %4686 = vrot.lane.b32.xlu0 %v4562, 112
    %v4687 = vpop.permute.xlu0 %4686
    %v4689 = vsel %vm538, %v4685, 0
    %v4692 = vsel %vm538, %v4687, 0
    %4694 = vmatprep.subr.bf16.mxu0 0
    %4695 = vmatpush1.bf16.xpose.msra.mxu0 %v4692
    %4696 = vmatprep.subr.bf16.mxu0 0
    %4697 = vmatpush1.bf16.xpose.msra.mxu0 0
    %4698 = vmatprep.subr.bf16.mxu0 0
    %4699 = vmatpush1.bf16.xpose.msra.mxu0 0
    %4700 = vmatprep.subr.bf16.mxu0 0
    %4701 = vmatpush1.bf16.xpose.msra.mxu0 0
    %4702 = vmatprep.subr.bf16.mxu0 0
    %4703 = vmatpush1.bf16.xpose.msra.mxu0 0
    %4704 = vmatprep.subr.bf16.mxu0 0
    %4705 = vmatpush1.bf16.xpose.msra.mxu0 0
    %4706 = vmatprep.subr.bf16.mxu0 0
    %4707 = vmatpush1.bf16.xpose.msra.mxu0 0
    %4708 = vmatprep.subr.bf16.mxu0 0
    %4709 = vmatpush1.bf16.xpose.msra.mxu0 0
    %4710 = vmatprep.subr.bf16.mxu0 0
    %4711 = vmatpush1.bf16.xpose.msra.mxu0 0
    %4712 = vmatprep.subr.bf16.mxu0 0
    %4713 = vmatpush1.bf16.xpose.msra.mxu0 0
    %4714 = vmatprep.subr.bf16.mxu0 0
    %4715 = vmatpush1.bf16.xpose.msra.mxu0 0
    %4716 = vmatprep.subr.bf16.mxu0 0
    %4717 = vmatpush1.bf16.xpose.msra.mxu0 0
    %4718 = vmatprep.subr.bf16.mxu0 0
    %4719 = vmatpush1.bf16.xpose.msra.mxu0 0
    %4720 = vmatprep.subr.bf16.mxu0 0
    %4721 = vmatpush1.bf16.xpose.msra.mxu0 0
    %4722 = vmatprep.subr.bf16.mxu0 0
    %4723 = vmatpush1.bf16.xpose.msra.mxu0 0
    %4724 = vmatprep.subr.bf16.mxu0 0
    %4725 = vmatpush1.bf16.xpose.msra.mxu0 0
    %4726 = vmatprep.mubr.bf16.mxu0 0
    %4727 = vmatmul.mubr.bf16.gmra.mrb[0].mxu0 %v4689
    %v4728 = vpop.f32.mrb[0].mxu0
    %v4729 = vadd.f32 %v91, %v4728
    %v4730 = vpop.f32.mrb[0].mxu0
    %v4731 = vpop.f32.mrb[0].mxu0
    %v4732 = vadd.f32 %v92, %v4731
    %v4733 = vpop.f32.mrb[0].mxu0
    %4734 = vdwg.mxu0
    %v4735 = vsel %vm206, %v4729, -inf
    %4736 = vmax.xlane.f32.xlu0 %v4735
    %v4737 = vpop.xlane.xlu0 %4736
    %v4738 = vsel %vm206, %v4732, -inf
    %4739 = vmax.xlane.f32.xlu0 %v4738
    %v4740 = vpop.xlane.xlu0 %4739
    %v4741 = vsub.f32 %v4729, %v4737
    %v4742 = vsub.f32 %v4732, %v4740
    %v4743 = vmul.f32 %v4741, 1.442695
    %v4744 = vpow.pop %v4743
    %v4745 = vmul.f32 %v4742, 1.442695
    %v4746 = vpow.pop %v4745
    %v4747 = vsel %vm206, %v4744, 0.0
    %4748 = vadd.xlane.f32.xlu0 %v4747
    %v4749 = vpop.xlane.xlu0 %4748
    %v4750 = vsel %vm206, %v4746, 0.0
    %4751 = vadd.xlane.f32.xlu0 %v4750
    %v4752 = vpop.xlane.xlu0 %4751
    %v4753 = vrcp.pop %v4749
    %v4754 = vrcp.pop %v4752
    %v4755 = vmul.f32 %v4744, %v4753
    %v4756 = vmul.f32 %v4746, %v4754
    %v4757 = vpack.c.bf16 %v4756, %v4755
    %4758 = vrot.lane.b32.xlu0 %v4562, 100
    %v4759 = vpop.permute.xlu0 %4758
    %v4762 = vsel %vm206, %v4757, 0
    %4764 = vmatprep.subr.bf16.mxu0 0
    %4765 = vmatpush1.bf16.msra.mxu0 %v4759
    %4766 = vmatprep.subr.bf16.mxu0 0
    %4767 = vmatpush1.bf16.msra.mxu0 0
    %4768 = vmatprep.subr.bf16.mxu0 0
    %4769 = vmatpush1.bf16.msra.mxu0 0
    %4770 = vmatprep.subr.bf16.mxu0 0
    %4771 = vmatpush1.bf16.msra.mxu0 0
    %4772 = vmatprep.subr.bf16.mxu0 0
    %4773 = vmatpush1.bf16.msra.mxu0 0
    %4774 = vmatprep.subr.bf16.mxu0 0
    %4775 = vmatpush1.bf16.msra.mxu0 0
    %4776 = vmatprep.subr.bf16.mxu0 0
    %4777 = vmatpush1.bf16.msra.mxu0 0
    %4778 = vmatprep.subr.bf16.mxu0 0
    %4779 = vmatpush1.bf16.msra.mxu0 0
    %4780 = vmatprep.subr.bf16.mxu0 0
    %4781 = vmatpush1.bf16.msra.mxu0 0
    %4782 = vmatprep.subr.bf16.mxu0 0
    %4783 = vmatpush1.bf16.msra.mxu0 0
    %4784 = vmatprep.subr.bf16.mxu0 0
    %4785 = vmatpush1.bf16.msra.mxu0 0
    %4786 = vmatprep.subr.bf16.mxu0 0
    %4787 = vmatpush1.bf16.msra.mxu0 0
    %4788 = vmatprep.subr.bf16.mxu0 0
    %4789 = vmatpush1.bf16.msra.mxu0 0
    %4790 = vmatprep.subr.bf16.mxu0 0
    %4791 = vmatpush1.bf16.msra.mxu0 0
    %4792 = vmatprep.subr.bf16.mxu0 0
    %4793 = vmatpush1.bf16.msra.mxu0 0
    %4794 = vmatprep.subr.bf16.mxu0 0
    %4795 = vmatpush1.bf16.msra.mxu0 0
    %4796 = vmatprep.mubr.bf16.mxu0 0
    %4797 = vmatmul.mubr.bf16.gmra.mrb[0].mxu0 %v4762
    %v4798 = vpop.f32.mrb[0].mxu0
    %v4799 = vadd.f32 0.0, %v4798
    %v4800 = vpop.f32.mrb[0].mxu0
    %v4801 = vpop.f32.mrb[0].mxu0
    %v4802 = vadd.f32 0.0, %v4801
    %v4803 = vpop.f32.mrb[0].mxu0
    %4804 = vdwg.mxu0
    %4805 = vrot.lane.b32.xlu0 %v4561, 120
    %v4806 = vpop.permute.xlu0 %4805
    %4807 = vrot.lane.b32.xlu0 %v4562, 108
    %v4808 = vpop.permute.xlu0 %4807
    %v4810 = vsel %vm538, %v4806, 0
    %v4813 = vsel %vm538, %v4808, 0
    %4815 = vmatprep.subr.bf16.mxu0 0
    %4816 = vmatpush1.bf16.xpose.msra.mxu0 %v4813
    %4817 = vmatprep.subr.bf16.mxu0 0
    %4818 = vmatpush1.bf16.xpose.msra.mxu0 0
    %4819 = vmatprep.subr.bf16.mxu0 0
    %4820 = vmatpush1.bf16.xpose.msra.mxu0 0
    %4821 = vmatprep.subr.bf16.mxu0 0
    %4822 = vmatpush1.bf16.xpose.msra.mxu0 0
    %4823 = vmatprep.subr.bf16.mxu0 0
    %4824 = vmatpush1.bf16.xpose.msra.mxu0 0
    %4825 = vmatprep.subr.bf16.mxu0 0
    %4826 = vmatpush1.bf16.xpose.msra.mxu0 0
    %4827 = vmatprep.subr.bf16.mxu0 0
    %4828 = vmatpush1.bf16.xpose.msra.mxu0 0
    %4829 = vmatprep.subr.bf16.mxu0 0
    %4830 = vmatpush1.bf16.xpose.msra.mxu0 0
    %4831 = vmatprep.subr.bf16.mxu0 0
    %4832 = vmatpush1.bf16.xpose.msra.mxu0 0
    %4833 = vmatprep.subr.bf16.mxu0 0
    %4834 = vmatpush1.bf16.xpose.msra.mxu0 0
    %4835 = vmatprep.subr.bf16.mxu0 0
    %4836 = vmatpush1.bf16.xpose.msra.mxu0 0
    %4837 = vmatprep.subr.bf16.mxu0 0
    %4838 = vmatpush1.bf16.xpose.msra.mxu0 0
    %4839 = vmatprep.subr.bf16.mxu0 0
    %4840 = vmatpush1.bf16.xpose.msra.mxu0 0
    %4841 = vmatprep.subr.bf16.mxu0 0
    %4842 = vmatpush1.bf16.xpose.msra.mxu0 0
    %4843 = vmatprep.subr.bf16.mxu0 0
    %4844 = vmatpush1.bf16.xpose.msra.mxu0 0
    %4845 = vmatprep.subr.bf16.mxu0 0
    %4846 = vmatpush1.bf16.xpose.msra.mxu0 0
    %4847 = vmatprep.mubr.bf16.mxu0 0
    %4848 = vmatmul.mubr.bf16.gmra.mrb[0].mxu0 %v4810
    %v4849 = vpop.f32.mrb[0].mxu0
    %v4850 = vadd.f32 %v91, %v4849
    %v4851 = vpop.f32.mrb[0].mxu0
    %v4852 = vpop.f32.mrb[0].mxu0
    %v4853 = vadd.f32 %v92, %v4852
    %v4854 = vpop.f32.mrb[0].mxu0
    %4855 = vdwg.mxu0
    %v4856 = vsel %vm206, %v4850, -inf
    %4857 = vmax.xlane.f32.xlu0 %v4856
    %v4858 = vpop.xlane.xlu0 %4857
    %v4859 = vsel %vm206, %v4853, -inf
    %4860 = vmax.xlane.f32.xlu0 %v4859
    %v4861 = vpop.xlane.xlu0 %4860
    %v4862 = vsub.f32 %v4850, %v4858
    %v4863 = vsub.f32 %v4853, %v4861
    %v4864 = vmul.f32 %v4862, 1.442695
    %v4865 = vpow.pop %v4864
    %v4866 = vmul.f32 %v4863, 1.442695
    %v4867 = vpow.pop %v4866
    %v4868 = vsel %vm206, %v4865, 0.0
    %4869 = vadd.xlane.f32.xlu0 %v4868
    %v4870 = vpop.xlane.xlu0 %4869
    %v4871 = vsel %vm206, %v4867, 0.0
    %4872 = vadd.xlane.f32.xlu0 %v4871
    %v4873 = vpop.xlane.xlu0 %4872
    %v4874 = vrcp.pop %v4870
    %v4875 = vrcp.pop %v4873
    %v4876 = vmul.f32 %v4865, %v4874
    %v4877 = vmul.f32 %v4867, %v4875
    %v4878 = vpack.c.bf16 %v4877, %v4876
    %4879 = vrot.lane.b32.xlu0 %v4562, 96
    %v4880 = vpop.permute.xlu0 %4879
    %v4883 = vsel %vm206, %v4878, 0
    %4885 = vmatprep.subr.bf16.mxu0 0
    %4886 = vmatpush1.bf16.msra.mxu0 %v4880
    %4887 = vmatprep.subr.bf16.mxu0 0
    %4888 = vmatpush1.bf16.msra.mxu0 0
    %4889 = vmatprep.subr.bf16.mxu0 0
    %4890 = vmatpush1.bf16.msra.mxu0 0
    %4891 = vmatprep.subr.bf16.mxu0 0
    %4892 = vmatpush1.bf16.msra.mxu0 0
    %4893 = vmatprep.subr.bf16.mxu0 0
    %4894 = vmatpush1.bf16.msra.mxu0 0
    %4895 = vmatprep.subr.bf16.mxu0 0
    %4896 = vmatpush1.bf16.msra.mxu0 0
    %4897 = vmatprep.subr.bf16.mxu0 0
    %4898 = vmatpush1.bf16.msra.mxu0 0
    %4899 = vmatprep.subr.bf16.mxu0 0
    %4900 = vmatpush1.bf16.msra.mxu0 0
    %4901 = vmatprep.subr.bf16.mxu0 0
    %4902 = vmatpush1.bf16.msra.mxu0 0
    %4903 = vmatprep.subr.bf16.mxu0 0
    %4904 = vmatpush1.bf16.msra.mxu0 0
    %4905 = vmatprep.subr.bf16.mxu0 0
    %4906 = vmatpush1.bf16.msra.mxu0 0
    %4907 = vmatprep.subr.bf16.mxu0 0
    %4908 = vmatpush1.bf16.msra.mxu0 0
    %4909 = vmatprep.subr.bf16.mxu0 0
    %4910 = vmatpush1.bf16.msra.mxu0 0
    %4911 = vmatprep.subr.bf16.mxu0 0
    %4912 = vmatpush1.bf16.msra.mxu0 0
    %4913 = vmatprep.subr.bf16.mxu0 0
    %4914 = vmatpush1.bf16.msra.mxu0 0
    %4915 = vmatprep.subr.bf16.mxu0 0
    %4916 = vmatpush1.bf16.msra.mxu0 0
    %4917 = vmatprep.mubr.bf16.mxu0 0
    %4918 = vmatmul.mubr.bf16.gmra.mrb[0].mxu0 %v4883
    %v4919 = vpop.f32.mrb[0].mxu0
    %v4920 = vadd.f32 0.0, %v4919
    %v4921 = vpop.f32.mrb[0].mxu0
    %v4922 = vpop.f32.mrb[0].mxu0
    %v4923 = vadd.f32 0.0, %v4922
    %v4924 = vpop.f32.mrb[0].mxu0
    %4925 = vdwg.mxu0
    %4928 = vrot.lane.b32.xlu0 %v4799, 4
    %v4929 = vpop.permute.xlu0 %4928
    %4930 = vrot.lane.b32.xlu0 %v4802, 4
    %v4931 = vpop.permute.xlu0 %4930
    %4936 = vrot.lane.b32.xlu0 %v4920, 8
    %v4937 = vpop.permute.xlu0 %4936
    %4938 = vrot.lane.b32.xlu0 %v4923, 8
    %v4939 = vpop.permute.xlu0 %4938
    %v4942 = vsel %vm538, %v4677, %v4929
    %v4943 = vsel %vm538, %v4680, %v4931
    %v4944 = vsel %vm3617, %v4942, %v4937
    %v4945 = vsel %vm3617, %v4943, %v4939
    %v4946 = vpack.c.bf16 %v4945, %v4944
    %v4947 = vlaneseq
    %v4948 = vshrl.u32 %v4947, 7
    %v4949 = vsub.s32 0, %v4948
    %v4950 = vrot.slane %v4501, %v4949
    %v4953 = vunpack.c.l.b16 %v4499
    %v4954 = vunpack.c.l.b16 %v4500
    %v4955 = vpack.c.b16 %v4954, %v4953
    %v4957 = vsel %vm1667, %v4946, 0
    %v4960 = vsel %vm1671, %v4955, 0
    %4962 = vmatprep.subr.bf16.mxu0 0
    %4963 = vmatpush1.bf16.msra.mxu0 %v4960
    %4964 = vmatprep.subr.bf16.mxu0 0
    %4965 = vmatpush1.bf16.msra.mxu0 0
    %4966 = vmatprep.subr.bf16.mxu0 0
    %4967 = vmatpush1.bf16.msra.mxu0 0
    %4968 = vmatprep.subr.bf16.mxu0 0
    %4969 = vmatpush1.bf16.msra.mxu0 0
    %4970 = vmatprep.subr.bf16.mxu0 0
    %4971 = vmatpush1.bf16.msra.mxu0 0
    %4972 = vmatprep.subr.bf16.mxu0 0
    %4973 = vmatpush1.bf16.msra.mxu0 0
    %4974 = vmatprep.subr.bf16.mxu0 0
    %4975 = vmatpush1.bf16.msra.mxu0 0
    %4976 = vmatprep.subr.bf16.mxu0 0
    %4977 = vmatpush1.bf16.msra.mxu0 0
    %4978 = vmatprep.subr.bf16.mxu0 0
    %4979 = vmatpush1.bf16.msra.mxu0 0
    %4980 = vmatprep.subr.bf16.mxu0 0
    %4981 = vmatpush1.bf16.msra.mxu0 0
    %4982 = vmatprep.subr.bf16.mxu0 0
    %4983 = vmatpush1.bf16.msra.mxu0 0
    %4984 = vmatprep.subr.bf16.mxu0 0
    %4985 = vmatpush1.bf16.msra.mxu0 0
    %4986 = vmatprep.subr.bf16.mxu0 0
    %4987 = vmatpush1.bf16.msra.mxu0 0
    %4988 = vmatprep.subr.bf16.mxu0 0
    %4989 = vmatpush1.bf16.msra.mxu0 0
    %4990 = vmatprep.subr.bf16.mxu0 0
    %4991 = vmatpush1.bf16.msra.mxu0 0
    %4992 = vmatprep.subr.bf16.mxu0 0
    %4993 = vmatpush1.bf16.msra.mxu0 0
    %4994 = vmatprep.mubr.bf16.mxu0 0
    %4995 = vmatmul.mubr.bf16.gmra.mrb[0].mxu0 %v4957
    %v4996 = vpop.f32.mrb[0].mxu0
    %v4997 = vadd.f32 %v4950, %v4996
    %v4998 = vpop.f32.mrb[0].mxu0
    %v4999 = vpop.f32.mrb[0].mxu0
    %v5000 = vadd.f32 %v4950, %v4999
    %v5001 = vpop.f32.mrb[0].mxu0
    %5002 = vdwg.mxu0
    %v5003 = vadd.f32 %v4494, %v4997
    %v5004 = vadd.f32 %v4495, %v5000
    %v5005 = vld [vmem:[#allocation4 + $0x110] sm:$0x1]
    %v5006 = vld [vmem:[#allocation4 + $0x118] sm:$0x1]
    %v5007 = vsel %vm1667, %v5003, 0.0
    %5008 = vadd.xlane.f32.xlu0 %v5007
    %v5009 = vpop.xlane.xlu0 %5008
    %v5010 = vsel %vm1667, %v5004, 0.0
    %5011 = vadd.xlane.f32.xlu0 %v5010
    %v5012 = vpop.xlane.xlu0 %5011
    %v5013 = vmul.f32 %v5009, %v3687
    %v5014 = vmul.f32 %v5012, %v3687
    %v5015 = vsub.f32 %v5003, %v5013
    %v5016 = vsub.f32 %v5004, %v5014
    %v5017 = vmul.f32 %v5015, %v5015
    %v5018 = vmul.f32 %v5016, %v5016
    %v5019 = vsel %vm1667, %v5017, 0.0
    %5020 = vadd.xlane.f32.xlu0 %v5019
    %v5021 = vpop.xlane.xlu0 %5020
    %v5022 = vsel %vm1667, %v5018, 0.0
    %5023 = vadd.xlane.f32.xlu0 %v5022
    %v5024 = vpop.xlane.xlu0 %5023
    %v5025 = vmul.f32 %v5021, %v3687
    %v5026 = vmul.f32 %v5024, %v3687
    %v5027 = vadd.f32 %v5025, 1e-05
    %v5028 = vadd.f32 %v5026, 1e-05
    %v5029 = vrsqrt.pop %v5027
    %v5030 = vrsqrt.pop %v5028
    %v5031 = vmul.f32 %v5015, %v5029
    %v5032 = vmul.f32 %v5016, %v5030
    %v5033 = vlaneseq
    %v5034 = vshrl.u32 %v5033, 7
    %v5035 = vsub.s32 0, %v5034
    %v5036 = vrot.slane %v5005, %v5035
    %v5037 = vmul.f32 %v5031, %v5036
    %v5038 = vmul.f32 %v5032, %v5036
    %v5039 = vlaneseq
    %v5040 = vshrl.u32 %v5039, 7
    %v5041 = vsub.s32 0, %v5040
    %v5042 = vrot.slane %v5006, %v5041
    %v5043 = vadd.f32 %v5037, %v5042
    %v5044 = vadd.f32 %v5038, %v5042
    %v5045 = vld [vmem:[#allocation2 + $0x128] sm:$0xf]
    %v5046 = vld [vmem:[#allocation2 + $0x12c] sm:$0x3]
    %v5047 = vld [vmem:[#allocation4 + $0xf0] sm:$0x1]
    %v5048 = vld [vmem:[#allocation2 + $0x130] sm:$0xf]
    %v5049 = vld [vmem:[#allocation2 + $0x134] sm:$0x3]
    %v5050 = vld [vmem:[#allocation4 + $0xf8] sm:$0x1]
    %v5051 = vpack.c.bf16 %v5044, %v5043
    %v5052 = vlaneseq
    %v5053 = vshrl.u32 %v5052, 7
    %v5054 = vsub.s32 0, %v5053
    %v5055 = vrot.slane %v5047, %v5054
    %v5058 = vunpack.c.l.b16 %v5045
    %v5059 = vunpack.c.l.b16 %v5046
    %v5060 = vpack.c.b16 %v5059, %v5058
    %v5062 = vsel %vm1667, %v5051, 0
    %v5065 = vsel %vm1671, %v5060, 0
    %5067 = vmatprep.subr.bf16.mxu0 0
    %5068 = vmatpush1.bf16.msra.mxu0 %v5065
    %5069 = vmatprep.subr.bf16.mxu0 0
    %5070 = vmatpush1.bf16.msra.mxu0 0
    %5071 = vmatprep.subr.bf16.mxu0 0
    %5072 = vmatpush1.bf16.msra.mxu0 0
    %5073 = vmatprep.subr.bf16.mxu0 0
    %5074 = vmatpush1.bf16.msra.mxu0 0
    %5075 = vmatprep.subr.bf16.mxu0 0
    %5076 = vmatpush1.bf16.msra.mxu0 0
    %5077 = vmatprep.subr.bf16.mxu0 0
    %5078 = vmatpush1.bf16.msra.mxu0 0
    %5079 = vmatprep.subr.bf16.mxu0 0
    %5080 = vmatpush1.bf16.msra.mxu0 0
    %5081 = vmatprep.subr.bf16.mxu0 0
    %5082 = vmatpush1.bf16.msra.mxu0 0
    %5083 = vmatprep.subr.bf16.mxu0 0
    %5084 = vmatpush1.bf16.msra.mxu0 0
    %5085 = vmatprep.subr.bf16.mxu0 0
    %5086 = vmatpush1.bf16.msra.mxu0 0
    %5087 = vmatprep.subr.bf16.mxu0 0
    %5088 = vmatpush1.bf16.msra.mxu0 0
    %5089 = vmatprep.subr.bf16.mxu0 0
    %5090 = vmatpush1.bf16.msra.mxu0 0
    %5091 = vmatprep.subr.bf16.mxu0 0
    %5092 = vmatpush1.bf16.msra.mxu0 0
    %5093 = vmatprep.subr.bf16.mxu0 0
    %5094 = vmatpush1.bf16.msra.mxu0 0
    %5095 = vmatprep.subr.bf16.mxu0 0
    %5096 = vmatpush1.bf16.msra.mxu0 0
    %5097 = vmatprep.subr.bf16.mxu0 0
    %5098 = vmatpush1.bf16.msra.mxu0 0
    %5099 = vmatprep.mubr.bf16.mxu0 0
    %5100 = vmatmul.mubr.bf16.gmra.mrb[0].mxu0 %v5062
    %v5101 = vpop.f32.mrb[0].mxu0
    %v5102 = vadd.f32 %v5055, %v5101
    %v5103 = vpop.f32.mrb[0].mxu0
    %v5104 = vpop.f32.mrb[0].mxu0
    %v5105 = vadd.f32 %v5055, %v5104
    %v5106 = vpop.f32.mrb[0].mxu0
    %5107 = vmatprep.mubr.bf16.mxu0 0
    %5108 = vmatmul.mubr.bf16.gmra.mrb[0].mxu0 %v3741
    %v5109 = vpop.f32.mrb[0].mxu0
    %v5110 = vadd.f32 %v5055, %v5109
    %v5111 = vpop.f32.mrb[0].mxu0
    %v5112 = vpop.f32.mrb[0].mxu0
    %v5113 = vadd.f32 %v5055, %v5112
    %v5114 = vpop.f32.mrb[0].mxu0
    %5115 = vdwg.mxu0
    %v5116 = vmul.f32 %v5102, 0.5
    %v5117 = vmul.f32 %v5105, 0.5
    %v5118 = vpack.c.bf16 %v5117, %v5116
    %v5119 = vpack.c.bf16 %v5113, %v5110
    %5121 = vrot.lane.b32.xlu0 %v5119, 116
    %v5122 = vpop.permute.xlu0 %5121
    %v5124 = vsel %vm538, %v5118, 0
    %v5127 = vsel %vm538, %v5122, 0
    %5129 = vmatprep.subr.bf16.mxu0 0
    %5130 = vmatpush1.bf16.xpose.msra.mxu0 %v5127
    %5131 = vmatprep.subr.bf16.mxu0 0
    %5132 = vmatpush1.bf16.xpose.msra.mxu0 0
    %5133 = vmatprep.subr.bf16.mxu0 0
    %5134 = vmatpush1.bf16.xpose.msra.mxu0 0
    %5135 = vmatprep.subr.bf16.mxu0 0
    %5136 = vmatpush1.bf16.xpose.msra.mxu0 0
    %5137 = vmatprep.subr.bf16.mxu0 0
    %5138 = vmatpush1.bf16.xpose.msra.mxu0 0
    %5139 = vmatprep.subr.bf16.mxu0 0
    %5140 = vmatpush1.bf16.xpose.msra.mxu0 0
    %5141 = vmatprep.subr.bf16.mxu0 0
    %5142 = vmatpush1.bf16.xpose.msra.mxu0 0
    %5143 = vmatprep.subr.bf16.mxu0 0
    %5144 = vmatpush1.bf16.xpose.msra.mxu0 0
    %5145 = vmatprep.subr.bf16.mxu0 0
    %5146 = vmatpush1.bf16.xpose.msra.mxu0 0
    %5147 = vmatprep.subr.bf16.mxu0 0
    %5148 = vmatpush1.bf16.xpose.msra.mxu0 0
    %5149 = vmatprep.subr.bf16.mxu0 0
    %5150 = vmatpush1.bf16.xpose.msra.mxu0 0
    %5151 = vmatprep.subr.bf16.mxu0 0
    %5152 = vmatpush1.bf16.xpose.msra.mxu0 0
    %5153 = vmatprep.subr.bf16.mxu0 0
    %5154 = vmatpush1.bf16.xpose.msra.mxu0 0
    %5155 = vmatprep.subr.bf16.mxu0 0
    %5156 = vmatpush1.bf16.xpose.msra.mxu0 0
    %5157 = vmatprep.subr.bf16.mxu0 0
    %5158 = vmatpush1.bf16.xpose.msra.mxu0 0
    %5159 = vmatprep.subr.bf16.mxu0 0
    %5160 = vmatpush1.bf16.xpose.msra.mxu0 0
    %5161 = vmatprep.mubr.bf16.mxu0 0
    %5162 = vmatmul.mubr.bf16.gmra.mrb[0].mxu0 %v5124
    %v5163 = vpop.f32.mrb[0].mxu0
    %v5164 = vadd.f32 %v91, %v5163
    %v5165 = vpop.f32.mrb[0].mxu0
    %v5166 = vpop.f32.mrb[0].mxu0
    %v5167 = vadd.f32 %v92, %v5166
    %v5168 = vpop.f32.mrb[0].mxu0
    %5169 = vdwg.mxu0
    %v5170 = vsel %vm206, %v5164, -inf
    %5171 = vmax.xlane.f32.xlu0 %v5170
    %v5172 = vpop.xlane.xlu0 %5171
    %v5173 = vsel %vm206, %v5167, -inf
    %5174 = vmax.xlane.f32.xlu0 %v5173
    %v5175 = vpop.xlane.xlu0 %5174
    %v5176 = vsub.f32 %v5164, %v5172
    %v5177 = vsub.f32 %v5167, %v5175
    %v5178 = vmul.f32 %v5176, 1.442695
    %v5179 = vpow.pop %v5178
    %v5180 = vmul.f32 %v5177, 1.442695
    %v5181 = vpow.pop %v5180
    %v5182 = vsel %vm206, %v5179, 0.0
    %5183 = vadd.xlane.f32.xlu0 %v5182
    %v5184 = vpop.xlane.xlu0 %5183
    %v5185 = vsel %vm206, %v5181, 0.0
    %5186 = vadd.xlane.f32.xlu0 %v5185
    %v5187 = vpop.xlane.xlu0 %5186
    %v5188 = vrcp.pop %v5184
    %v5189 = vrcp.pop %v5187
    %v5190 = vmul.f32 %v5179, %v5188
    %v5191 = vmul.f32 %v5181, %v5189
    %v5192 = vpack.c.bf16 %v5191, %v5190
    %5193 = vrot.lane.b32.xlu0 %v5119, 104
    %v5194 = vpop.permute.xlu0 %5193
    %v5197 = vsel %vm206, %v5192, 0
    %5199 = vmatprep.subr.bf16.mxu0 0
    %5200 = vmatpush1.bf16.msra.mxu0 %v5194
    %5201 = vmatprep.subr.bf16.mxu0 0
    %5202 = vmatpush1.bf16.msra.mxu0 0
    %5203 = vmatprep.subr.bf16.mxu0 0
    %5204 = vmatpush1.bf16.msra.mxu0 0
    %5205 = vmatprep.subr.bf16.mxu0 0
    %5206 = vmatpush1.bf16.msra.mxu0 0
    %5207 = vmatprep.subr.bf16.mxu0 0
    %5208 = vmatpush1.bf16.msra.mxu0 0
    %5209 = vmatprep.subr.bf16.mxu0 0
    %5210 = vmatpush1.bf16.msra.mxu0 0
    %5211 = vmatprep.subr.bf16.mxu0 0
    %5212 = vmatpush1.bf16.msra.mxu0 0
    %5213 = vmatprep.subr.bf16.mxu0 0
    %5214 = vmatpush1.bf16.msra.mxu0 0
    %5215 = vmatprep.subr.bf16.mxu0 0
    %5216 = vmatpush1.bf16.msra.mxu0 0
    %5217 = vmatprep.subr.bf16.mxu0 0
    %5218 = vmatpush1.bf16.msra.mxu0 0
    %5219 = vmatprep.subr.bf16.mxu0 0
    %5220 = vmatpush1.bf16.msra.mxu0 0
    %5221 = vmatprep.subr.bf16.mxu0 0
    %5222 = vmatpush1.bf16.msra.mxu0 0
    %5223 = vmatprep.subr.bf16.mxu0 0
    %5224 = vmatpush1.bf16.msra.mxu0 0
    %5225 = vmatprep.subr.bf16.mxu0 0
    %5226 = vmatpush1.bf16.msra.mxu0 0
    %5227 = vmatprep.subr.bf16.mxu0 0
    %5228 = vmatpush1.bf16.msra.mxu0 0
    %5229 = vmatprep.subr.bf16.mxu0 0
    %5230 = vmatpush1.bf16.msra.mxu0 0
    %5231 = vmatprep.mubr.bf16.mxu0 0
    %5232 = vmatmul.mubr.bf16.gmra.mrb[0].mxu0 %v5197
    %v5233 = vpop.f32.mrb[0].mxu0
    %v5234 = vadd.f32 0.0, %v5233
    %v5235 = vpop.f32.mrb[0].mxu0
    %v5236 = vpop.f32.mrb[0].mxu0
    %v5237 = vadd.f32 0.0, %v5236
    %v5238 = vpop.f32.mrb[0].mxu0
    %5239 = vdwg.mxu0
    %5241 = vrot.lane.b32.xlu0 %v5118, 124
    %v5242 = vpop.permute.xlu0 %5241
    %5243 = vrot.lane.b32.xlu0 %v5119, 112
    %v5244 = vpop.permute.xlu0 %5243
    %v5246 = vsel %vm538, %v5242, 0
    %v5249 = vsel %vm538, %v5244, 0
    %5251 = vmatprep.subr.bf16.mxu0 0
    %5252 = vmatpush1.bf16.xpose.msra.mxu0 %v5249
    %5253 = vmatprep.subr.bf16.mxu0 0
    %5254 = vmatpush1.bf16.xpose.msra.mxu0 0
    %5255 = vmatprep.subr.bf16.mxu0 0
    %5256 = vmatpush1.bf16.xpose.msra.mxu0 0
    %5257 = vmatprep.subr.bf16.mxu0 0
    %5258 = vmatpush1.bf16.xpose.msra.mxu0 0
    %5259 = vmatprep.subr.bf16.mxu0 0
    %5260 = vmatpush1.bf16.xpose.msra.mxu0 0
    %5261 = vmatprep.subr.bf16.mxu0 0
    %5262 = vmatpush1.bf16.xpose.msra.mxu0 0
    %5263 = vmatprep.subr.bf16.mxu0 0
    %5264 = vmatpush1.bf16.xpose.msra.mxu0 0
    %5265 = vmatprep.subr.bf16.mxu0 0
    %5266 = vmatpush1.bf16.xpose.msra.mxu0 0
    %5267 = vmatprep.subr.bf16.mxu0 0
    %5268 = vmatpush1.bf16.xpose.msra.mxu0 0
    %5269 = vmatprep.subr.bf16.mxu0 0
    %5270 = vmatpush1.bf16.xpose.msra.mxu0 0
    %5271 = vmatprep.subr.bf16.mxu0 0
    %5272 = vmatpush1.bf16.xpose.msra.mxu0 0
    %5273 = vmatprep.subr.bf16.mxu0 0
    %5274 = vmatpush1.bf16.xpose.msra.mxu0 0
    %5275 = vmatprep.subr.bf16.mxu0 0
    %5276 = vmatpush1.bf16.xpose.msra.mxu0 0
    %5277 = vmatprep.subr.bf16.mxu0 0
    %5278 = vmatpush1.bf16.xpose.msra.mxu0 0
    %5279 = vmatprep.subr.bf16.mxu0 0
    %5280 = vmatpush1.bf16.xpose.msra.mxu0 0
    %5281 = vmatprep.subr.bf16.mxu0 0
    %5282 = vmatpush1.bf16.xpose.msra.mxu0 0
    %5283 = vmatprep.mubr.bf16.mxu0 0
    %5284 = vmatmul.mubr.bf16.gmra.mrb[0].mxu0 %v5246
    %v5285 = vpop.f32.mrb[0].mxu0
    %v5286 = vadd.f32 %v91, %v5285
    %v5287 = vpop.f32.mrb[0].mxu0
    %v5288 = vpop.f32.mrb[0].mxu0
    %v5289 = vadd.f32 %v92, %v5288
    %v5290 = vpop.f32.mrb[0].mxu0
    %5291 = vdwg.mxu0
    %v5292 = vsel %vm206, %v5286, -inf
    %5293 = vmax.xlane.f32.xlu0 %v5292
    %v5294 = vpop.xlane.xlu0 %5293
    %v5295 = vsel %vm206, %v5289, -inf
    %5296 = vmax.xlane.f32.xlu0 %v5295
    %v5297 = vpop.xlane.xlu0 %5296
    %v5298 = vsub.f32 %v5286, %v5294
    %v5299 = vsub.f32 %v5289, %v5297
    %v5300 = vmul.f32 %v5298, 1.442695
    %v5301 = vpow.pop %v5300
    %v5302 = vmul.f32 %v5299, 1.442695
    %v5303 = vpow.pop %v5302
    %v5304 = vsel %vm206, %v5301, 0.0
    %5305 = vadd.xlane.f32.xlu0 %v5304
    %v5306 = vpop.xlane.xlu0 %5305
    %v5307 = vsel %vm206, %v5303, 0.0
    %5308 = vadd.xlane.f32.xlu0 %v5307
    %v5309 = vpop.xlane.xlu0 %5308
    %v5310 = vrcp.pop %v5306
    %v5311 = vrcp.pop %v5309
    %v5312 = vmul.f32 %v5301, %v5310
    %v5313 = vmul.f32 %v5303, %v5311
    %v5314 = vpack.c.bf16 %v5313, %v5312
    %5315 = vrot.lane.b32.xlu0 %v5119, 100
    %v5316 = vpop.permute.xlu0 %5315
    %v5319 = vsel %vm206, %v5314, 0
    %5321 = vmatprep.subr.bf16.mxu0 0
    %5322 = vmatpush1.bf16.msra.mxu0 %v5316
    %5323 = vmatprep.subr.bf16.mxu0 0
    %5324 = vmatpush1.bf16.msra.mxu0 0
    %5325 = vmatprep.subr.bf16.mxu0 0
    %5326 = vmatpush1.bf16.msra.mxu0 0
    %5327 = vmatprep.subr.bf16.mxu0 0
    %5328 = vmatpush1.bf16.msra.mxu0 0
    %5329 = vmatprep.subr.bf16.mxu0 0
    %5330 = vmatpush1.bf16.msra.mxu0 0
    %5331 = vmatprep.subr.bf16.mxu0 0
    %5332 = vmatpush1.bf16.msra.mxu0 0
    %5333 = vmatprep.subr.bf16.mxu0 0
    %5334 = vmatpush1.bf16.msra.mxu0 0
    %5335 = vmatprep.subr.bf16.mxu0 0
    %5336 = vmatpush1.bf16.msra.mxu0 0
    %5337 = vmatprep.subr.bf16.mxu0 0
    %5338 = vmatpush1.bf16.msra.mxu0 0
    %5339 = vmatprep.subr.bf16.mxu0 0
    %5340 = vmatpush1.bf16.msra.mxu0 0
    %5341 = vmatprep.subr.bf16.mxu0 0
    %5342 = vmatpush1.bf16.msra.mxu0 0
    %5343 = vmatprep.subr.bf16.mxu0 0
    %5344 = vmatpush1.bf16.msra.mxu0 0
    %5345 = vmatprep.subr.bf16.mxu0 0
    %5346 = vmatpush1.bf16.msra.mxu0 0
    %5347 = vmatprep.subr.bf16.mxu0 0
    %5348 = vmatpush1.bf16.msra.mxu0 0
    %5349 = vmatprep.subr.bf16.mxu0 0
    %5350 = vmatpush1.bf16.msra.mxu0 0
    %5351 = vmatprep.subr.bf16.mxu0 0
    %5352 = vmatpush1.bf16.msra.mxu0 0
    %5353 = vmatprep.mubr.bf16.mxu0 0
    %5354 = vmatmul.mubr.bf16.gmra.mrb[0].mxu0 %v5319
    %v5355 = vpop.f32.mrb[0].mxu0
    %v5356 = vadd.f32 0.0, %v5355
    %v5357 = vpop.f32.mrb[0].mxu0
    %v5358 = vpop.f32.mrb[0].mxu0
    %v5359 = vadd.f32 0.0, %v5358
    %v5360 = vpop.f32.mrb[0].mxu0
    %5361 = vdwg.mxu0
    %5362 = vrot.lane.b32.xlu0 %v5118, 120
    %v5363 = vpop.permute.xlu0 %5362
    %5364 = vrot.lane.b32.xlu0 %v5119, 108
    %v5365 = vpop.permute.xlu0 %5364
    %v5367 = vsel %vm538, %v5363, 0
    %v5370 = vsel %vm538, %v5365, 0
    %5372 = vmatprep.subr.bf16.mxu0 0
    %5373 = vmatpush1.bf16.xpose.msra.mxu0 %v5370
    %5374 = vmatprep.subr.bf16.mxu0 0
    %5375 = vmatpush1.bf16.xpose.msra.mxu0 0
    %5376 = vmatprep.subr.bf16.mxu0 0
    %5377 = vmatpush1.bf16.xpose.msra.mxu0 0
    %5378 = vmatprep.subr.bf16.mxu0 0
    %5379 = vmatpush1.bf16.xpose.msra.mxu0 0
    %5380 = vmatprep.subr.bf16.mxu0 0
    %5381 = vmatpush1.bf16.xpose.msra.mxu0 0
    %5382 = vmatprep.subr.bf16.mxu0 0
    %5383 = vmatpush1.bf16.xpose.msra.mxu0 0
    %5384 = vmatprep.subr.bf16.mxu0 0
    %5385 = vmatpush1.bf16.xpose.msra.mxu0 0
    %5386 = vmatprep.subr.bf16.mxu0 0
    %5387 = vmatpush1.bf16.xpose.msra.mxu0 0
    %5388 = vmatprep.subr.bf16.mxu0 0
    %5389 = vmatpush1.bf16.xpose.msra.mxu0 0
    %5390 = vmatprep.subr.bf16.mxu0 0
    %5391 = vmatpush1.bf16.xpose.msra.mxu0 0
    %5392 = vmatprep.subr.bf16.mxu0 0
    %5393 = vmatpush1.bf16.xpose.msra.mxu0 0
    %5394 = vmatprep.subr.bf16.mxu0 0
    %5395 = vmatpush1.bf16.xpose.msra.mxu0 0
    %5396 = vmatprep.subr.bf16.mxu0 0
    %5397 = vmatpush1.bf16.xpose.msra.mxu0 0
    %5398 = vmatprep.subr.bf16.mxu0 0
    %5399 = vmatpush1.bf16.xpose.msra.mxu0 0
    %5400 = vmatprep.subr.bf16.mxu0 0
    %5401 = vmatpush1.bf16.xpose.msra.mxu0 0
    %5402 = vmatprep.subr.bf16.mxu0 0
    %5403 = vmatpush1.bf16.xpose.msra.mxu0 0
    %5404 = vmatprep.mubr.bf16.mxu0 0
    %5405 = vmatmul.mubr.bf16.gmra.mrb[0].mxu0 %v5367
    %v5406 = vpop.f32.mrb[0].mxu0
    %v5407 = vadd.f32 %v91, %v5406
    %v5408 = vpop.f32.mrb[0].mxu0
    %v5409 = vpop.f32.mrb[0].mxu0
    %v5410 = vadd.f32 %v92, %v5409
    %v5411 = vpop.f32.mrb[0].mxu0
    %5412 = vdwg.mxu0
    %v5413 = vsel %vm206, %v5407, -inf
    %5414 = vmax.xlane.f32.xlu0 %v5413
    %v5415 = vpop.xlane.xlu0 %5414
    %v5416 = vsel %vm206, %v5410, -inf
    %5417 = vmax.xlane.f32.xlu0 %v5416
    %v5418 = vpop.xlane.xlu0 %5417
    %v5419 = vsub.f32 %v5407, %v5415
    %v5420 = vsub.f32 %v5410, %v5418
    %v5421 = vmul.f32 %v5419, 1.442695
    %v5422 = vpow.pop %v5421
    %v5423 = vmul.f32 %v5420, 1.442695
    %v5424 = vpow.pop %v5423
    %v5425 = vsel %vm206, %v5422, 0.0
    %5426 = vadd.xlane.f32.xlu0 %v5425
    %v5427 = vpop.xlane.xlu0 %5426
    %v5428 = vsel %vm206, %v5424, 0.0
    %5429 = vadd.xlane.f32.xlu0 %v5428
    %v5430 = vpop.xlane.xlu0 %5429
    %v5431 = vrcp.pop %v5427
    %v5432 = vrcp.pop %v5430
    %v5433 = vmul.f32 %v5422, %v5431
    %v5434 = vmul.f32 %v5424, %v5432
    %v5435 = vpack.c.bf16 %v5434, %v5433
    %5436 = vrot.lane.b32.xlu0 %v5119, 96
    %v5437 = vpop.permute.xlu0 %5436
    %v5440 = vsel %vm206, %v5435, 0
    %5442 = vmatprep.subr.bf16.mxu0 0
    %5443 = vmatpush1.bf16.msra.mxu0 %v5437
    %5444 = vmatprep.subr.bf16.mxu0 0
    %5445 = vmatpush1.bf16.msra.mxu0 0
    %5446 = vmatprep.subr.bf16.mxu0 0
    %5447 = vmatpush1.bf16.msra.mxu0 0
    %5448 = vmatprep.subr.bf16.mxu0 0
    %5449 = vmatpush1.bf16.msra.mxu0 0
    %5450 = vmatprep.subr.bf16.mxu0 0
    %5451 = vmatpush1.bf16.msra.mxu0 0
    %5452 = vmatprep.subr.bf16.mxu0 0
    %5453 = vmatpush1.bf16.msra.mxu0 0
    %5454 = vmatprep.subr.bf16.mxu0 0
    %5455 = vmatpush1.bf16.msra.mxu0 0
    %5456 = vmatprep.subr.bf16.mxu0 0
    %5457 = vmatpush1.bf16.msra.mxu0 0
    %5458 = vmatprep.subr.bf16.mxu0 0
    %5459 = vmatpush1.bf16.msra.mxu0 0
    %5460 = vmatprep.subr.bf16.mxu0 0
    %5461 = vmatpush1.bf16.msra.mxu0 0
    %5462 = vmatprep.subr.bf16.mxu0 0
    %5463 = vmatpush1.bf16.msra.mxu0 0
    %5464 = vmatprep.subr.bf16.mxu0 0
    %5465 = vmatpush1.bf16.msra.mxu0 0
    %5466 = vmatprep.subr.bf16.mxu0 0
    %5467 = vmatpush1.bf16.msra.mxu0 0
    %5468 = vmatprep.subr.bf16.mxu0 0
    %5469 = vmatpush1.bf16.msra.mxu0 0
    %5470 = vmatprep.subr.bf16.mxu0 0
    %5471 = vmatpush1.bf16.msra.mxu0 0
    %5472 = vmatprep.subr.bf16.mxu0 0
    %5473 = vmatpush1.bf16.msra.mxu0 0
    %5474 = vmatprep.mubr.bf16.mxu0 0
    %5475 = vmatmul.mubr.bf16.gmra.mrb[0].mxu0 %v5440
    %v5476 = vpop.f32.mrb[0].mxu0
    %v5477 = vadd.f32 0.0, %v5476
    %v5478 = vpop.f32.mrb[0].mxu0
    %v5479 = vpop.f32.mrb[0].mxu0
    %v5480 = vadd.f32 0.0, %v5479
    %v5481 = vpop.f32.mrb[0].mxu0
    %5482 = vdwg.mxu0
    %5485 = vrot.lane.b32.xlu0 %v5356, 4
    %v5486 = vpop.permute.xlu0 %5485
    %5487 = vrot.lane.b32.xlu0 %v5359, 4
    %v5488 = vpop.permute.xlu0 %5487
    %5493 = vrot.lane.b32.xlu0 %v5477, 8
    %v5494 = vpop.permute.xlu0 %5493
    %5495 = vrot.lane.b32.xlu0 %v5480, 8
    %v5496 = vpop.permute.xlu0 %5495
    %v5499 = vsel %vm538, %v5234, %v5486
    %v5500 = vsel %vm538, %v5237, %v5488
    %v5501 = vsel %vm3617, %v5499, %v5494
    %v5502 = vsel %vm3617, %v5500, %v5496
    %v5503 = vpack.c.bf16 %v5502, %v5501
    %v5504 = vlaneseq
    %v5505 = vshrl.u32 %v5504, 7
    %v5506 = vsub.s32 0, %v5505
    %v5507 = vrot.slane %v5050, %v5506
    %v5510 = vunpack.c.l.b16 %v5048
    %v5511 = vunpack.c.l.b16 %v5049
    %v5512 = vpack.c.b16 %v5511, %v5510
    %v5514 = vsel %vm1667, %v5503, 0
    %v5517 = vsel %vm1671, %v5512, 0
    %5519 = vmatprep.subr.bf16.mxu0 0
    %5520 = vmatpush1.bf16.msra.mxu0 %v5517
    %5521 = vmatprep.subr.bf16.mxu0 0
    %5522 = vmatpush1.bf16.msra.mxu0 0
    %5523 = vmatprep.subr.bf16.mxu0 0
    %5524 = vmatpush1.bf16.msra.mxu0 0
    %5525 = vmatprep.subr.bf16.mxu0 0
    %5526 = vmatpush1.bf16.msra.mxu0 0
    %5527 = vmatprep.subr.bf16.mxu0 0
    %5528 = vmatpush1.bf16.msra.mxu0 0
    %5529 = vmatprep.subr.bf16.mxu0 0
    %5530 = vmatpush1.bf16.msra.mxu0 0
    %5531 = vmatprep.subr.bf16.mxu0 0
    %5532 = vmatpush1.bf16.msra.mxu0 0
    %5533 = vmatprep.subr.bf16.mxu0 0
    %5534 = vmatpush1.bf16.msra.mxu0 0
    %5535 = vmatprep.subr.bf16.mxu0 0
    %5536 = vmatpush1.bf16.msra.mxu0 0
    %5537 = vmatprep.subr.bf16.mxu0 0
    %5538 = vmatpush1.bf16.msra.mxu0 0
    %5539 = vmatprep.subr.bf16.mxu0 0
    %5540 = vmatpush1.bf16.msra.mxu0 0
    %5541 = vmatprep.subr.bf16.mxu0 0
    %5542 = vmatpush1.bf16.msra.mxu0 0
    %5543 = vmatprep.subr.bf16.mxu0 0
    %5544 = vmatpush1.bf16.msra.mxu0 0
    %5545 = vmatprep.subr.bf16.mxu0 0
    %5546 = vmatpush1.bf16.msra.mxu0 0
    %5547 = vmatprep.subr.bf16.mxu0 0
    %5548 = vmatpush1.bf16.msra.mxu0 0
    %5549 = vmatprep.subr.bf16.mxu0 0
    %5550 = vmatpush1.bf16.msra.mxu0 0
    %5551 = vmatprep.mubr.bf16.mxu0 0
    %5552 = vmatmul.mubr.bf16.gmra.mrb[0].mxu0 %v5514
    %v5553 = vpop.f32.mrb[0].mxu0
    %v5554 = vadd.f32 %v5507, %v5553
    %v5555 = vpop.f32.mrb[0].mxu0
    %v5556 = vpop.f32.mrb[0].mxu0
    %v5557 = vadd.f32 %v5507, %v5556
    %v5558 = vpop.f32.mrb[0].mxu0
    %5559 = vdwg.mxu0
    %v5560 = vadd.f32 %v5043, %v5554
    %v5561 = vadd.f32 %v5044, %v5557
    %v5562 = vld [vmem:[#allocation4 + $0x120] sm:$0x1]
    %v5563 = vld [vmem:[#allocation4 + $0x128] sm:$0x1]
    %v5564 = vsel %vm1667, %v5560, 0.0
    %5565 = vadd.xlane.f32.xlu0 %v5564
    %v5566 = vpop.xlane.xlu0 %5565
    %v5567 = vsel %vm1667, %v5561, 0.0
    %5568 = vadd.xlane.f32.xlu0 %v5567
    %v5569 = vpop.xlane.xlu0 %5568
    %v5570 = vmul.f32 %v5566, %v3687
    %v5571 = vmul.f32 %v5569, %v3687
    %v5572 = vsub.f32 %v5560, %v5570
    %v5573 = vsub.f32 %v5561, %v5571
    %v5574 = vmul.f32 %v5572, %v5572
    %v5575 = vmul.f32 %v5573, %v5573
    %v5576 = vsel %vm1667, %v5574, 0.0
    %5577 = vadd.xlane.f32.xlu0 %v5576
    %v5578 = vpop.xlane.xlu0 %5577
    %v5579 = vsel %vm1667, %v5575, 0.0
    %5580 = vadd.xlane.f32.xlu0 %v5579
    %v5581 = vpop.xlane.xlu0 %5580
    %v5582 = vmul.f32 %v5578, %v3687
    %v5583 = vmul.f32 %v5581, %v3687
    %v5584 = vadd.f32 %v5582, 1e-05
    %v5585 = vadd.f32 %v5583, 1e-05
    %v5586 = vrsqrt.pop %v5584
    %v5587 = vrsqrt.pop %v5585
    %v5588 = vmul.f32 %v5572, %v5586
    %v5589 = vmul.f32 %v5573, %v5587
    %v5590 = vlaneseq
    %v5591 = vshrl.u32 %v5590, 7
    %v5592 = vsub.s32 0, %v5591
    %v5593 = vrot.slane %v5562, %v5592
    %v5594 = vmul.f32 %v5588, %v5593
    %v5595 = vmul.f32 %v5589, %v5593
    %v5596 = vlaneseq
    %v5597 = vshrl.u32 %v5596, 7
    %v5598 = vsub.s32 0, %v5597
    %v5599 = vrot.slane %v5563, %v5598
    %v5600 = vadd.f32 %v5594, %v5599
    %v5601 = vadd.f32 %v5595, %v5599
    %v5602 = vld [vmem:[#allocation2 + $0x138] sm:$0xf]
    %v5603 = vld [vmem:[#allocation2 + $0x13c] sm:$0x3]
    %v5604 = vld [vmem:[#allocation4 + $0x100] sm:$0x1]
    %v5605 = vld [vmem:[#allocation2 + $0x140] sm:$0xf]
    %v5606 = vld [vmem:[#allocation2 + $0x144] sm:$0xf]
    %v5607 = vld [vmem:[#allocation2 + $0x148] sm:$0xf]
    %v5608 = vld [vmem:[#allocation2 + $0x14c] sm:$0xf]
    %v5609 = vld [vmem:[#allocation2 + $0x150] sm:$0xf]
    %v5610 = vld [vmem:[#allocation2 + $0x154] sm:$0xf]
    %v5611 = vld [vmem:[#allocation2 + $0x158] sm:$0xf]
    %v5612 = vld [vmem:[#allocation2 + $0x15c] sm:$0xf]
    %v5613 = vld [vmem:[#allocation2 + $0x160] sm:$0xf]
    %v5614 = vld [vmem:[#allocation2 + $0x164] sm:$0xf]
    %v5615 = vld [vmem:[#allocation2 + $0x168] sm:$0xf]
    %v5616 = vld [vmem:[#allocation2 + $0x16c] sm:$0xf]
    %v5617 = vld [vmem:[#allocation2 + $0x170] sm:$0xf]
    %v5618 = vld [vmem:[#allocation2 + $0x174] sm:$0xf]
    %v5619 = vld [vmem:[#allocation2 + $0x178] sm:$0xf]
    %v5620 = vld [vmem:[#allocation2 + $0x17c] sm:$0xf]
    %v5621 = vld [vmem:[#allocation4 + $0x108] sm:$0x1]
    %v5622 = vpack.c.bf16 %v5601, %v5600
    %v5623 = vlaneseq
    %v5624 = vshrl.u32 %v5623, 7
    %v5625 = vsub.s32 0, %v5624
    %v5626 = vrot.slane %v5604, %v5625
    %v5629 = vunpack.c.l.b16 %v5602
    %v5630 = vunpack.c.l.b16 %v5603
    %v5631 = vpack.c.b16 %v5630, %v5629
    %v5633 = vsel %vm1667, %v5622, 0
    %v5636 = vsel %vm1671, %v5631, 0
    %5638 = vmatprep.subr.bf16.mxu0 0
    %5639 = vmatpush1.bf16.msra.mxu0 %v5636
    %5640 = vmatprep.subr.bf16.mxu0 0
    %5641 = vmatpush1.bf16.msra.mxu0 0
    %5642 = vmatprep.subr.bf16.mxu0 0
    %5643 = vmatpush1.bf16.msra.mxu0 0
    %5644 = vmatprep.subr.bf16.mxu0 0
    %5645 = vmatpush1.bf16.msra.mxu0 0
    %5646 = vmatprep.subr.bf16.mxu0 0
    %5647 = vmatpush1.bf16.msra.mxu0 0
    %5648 = vmatprep.subr.bf16.mxu0 0
    %5649 = vmatpush1.bf16.msra.mxu0 0
    %5650 = vmatprep.subr.bf16.mxu0 0
    %5651 = vmatpush1.bf16.msra.mxu0 0
    %5652 = vmatprep.subr.bf16.mxu0 0
    %5653 = vmatpush1.bf16.msra.mxu0 0
    %5654 = vmatprep.subr.bf16.mxu0 0
    %5655 = vmatpush1.bf16.msra.mxu0 0
    %5656 = vmatprep.subr.bf16.mxu0 0
    %5657 = vmatpush1.bf16.msra.mxu0 0
    %5658 = vmatprep.subr.bf16.mxu0 0
    %5659 = vmatpush1.bf16.msra.mxu0 0
    %5660 = vmatprep.subr.bf16.mxu0 0
    %5661 = vmatpush1.bf16.msra.mxu0 0
    %5662 = vmatprep.subr.bf16.mxu0 0
    %5663 = vmatpush1.bf16.msra.mxu0 0
    %5664 = vmatprep.subr.bf16.mxu0 0
    %5665 = vmatpush1.bf16.msra.mxu0 0
    %5666 = vmatprep.subr.bf16.mxu0 0
    %5667 = vmatpush1.bf16.msra.mxu0 0
    %5668 = vmatprep.subr.bf16.mxu0 0
    %5669 = vmatpush1.bf16.msra.mxu0 0
    %5670 = vmatprep.mubr.bf16.mxu0 0
    %5671 = vmatmul.mubr.bf16.gmra.mrb[0].mxu0 %v5633
    %v5672 = vpop.f32.mrb[0].mxu0
    %v5673 = vadd.f32 %v5626, %v5672
    %v5674 = vpop.f32.mrb[0].mxu0
    %v5675 = vpop.f32.mrb[0].mxu0
    %v5676 = vadd.f32 %v5626, %v5675
    %v5677 = vpop.f32.mrb[0].mxu0
    %5678 = vdwg.mxu0
    %v5679 = vmax.f32 %v5673, 0.0
    %v5680 = vmax.f32 %v5676, 0.0
    %v5681 = vpack.c.bf16 %v5680, %v5679
    %v5682 = vlaneseq
    %v5683 = vshrl.u32 %v5682, 7
    %v5684 = vsub.s32 0, %v5683
    %v5685 = vrot.slane %v5621, %v5684
    %v5702 = vunpack.c.l.b16 %v5605
    %v5703 = vunpack.c.l.b16 %v5606
    %v5704 = vunpack.c.l.b16 %v5607
    %v5705 = vunpack.c.l.b16 %v5608
    %v5706 = vunpack.c.l.b16 %v5609
    %v5707 = vunpack.c.l.b16 %v5610
    %v5708 = vunpack.c.l.b16 %v5611
    %v5709 = vunpack.c.l.b16 %v5612
    %v5710 = vunpack.c.l.b16 %v5613
    %v5711 = vunpack.c.l.b16 %v5614
    %v5712 = vunpack.c.l.b16 %v5615
    %v5713 = vunpack.c.l.b16 %v5616
    %v5714 = vunpack.c.l.b16 %v5617
    %v5715 = vunpack.c.l.b16 %v5618
    %v5716 = vunpack.c.l.b16 %v5619
    %v5717 = vunpack.c.l.b16 %v5620
    %v5718 = vpack.c.b16 %v5703, %v5702
    %v5719 = vpack.c.b16 %v5705, %v5704
    %v5720 = vpack.c.b16 %v5707, %v5706
    %v5721 = vpack.c.b16 %v5709, %v5708
    %v5722 = vpack.c.b16 %v5711, %v5710
    %v5723 = vpack.c.b16 %v5713, %v5712
    %v5724 = vpack.c.b16 %v5715, %v5714
    %v5725 = vpack.c.b16 %v5717, %v5716
    %5734 = vmatprep.subr.bf16.mxu0 0
    %5735 = vmatpush1.bf16.msra.mxu0 %v5718
    %5736 = vmatprep.subr.bf16.mxu0 0
    %5737 = vmatpush1.bf16.msra.mxu0 %v5719
    %5738 = vmatprep.subr.bf16.mxu0 0
    %5739 = vmatpush1.bf16.msra.mxu0 %v5720
    %5740 = vmatprep.subr.bf16.mxu0 0
    %5741 = vmatpush1.bf16.msra.mxu0 %v5721
    %5742 = vmatprep.subr.bf16.mxu0 0
    %5743 = vmatpush1.bf16.msra.mxu0 %v5722
    %5744 = vmatprep.subr.bf16.mxu0 0
    %5745 = vmatpush1.bf16.msra.mxu0 %v5723
    %5746 = vmatprep.subr.bf16.mxu0 0
    %5747 = vmatpush1.bf16.msra.mxu0 %v5724
    %5748 = vmatprep.subr.bf16.mxu0 0
    %5749 = vmatpush1.bf16.msra.mxu0 %v5725
    %5750 = vmatprep.subr.bf16.mxu0 0
    %5751 = vmatpush1.bf16.msra.mxu0 0
    %5752 = vmatprep.subr.bf16.mxu0 0
    %5753 = vmatpush1.bf16.msra.mxu0 0
    %5754 = vmatprep.subr.bf16.mxu0 0
    %5755 = vmatpush1.bf16.msra.mxu0 0
    %5756 = vmatprep.subr.bf16.mxu0 0
    %5757 = vmatpush1.bf16.msra.mxu0 0
    %5758 = vmatprep.subr.bf16.mxu0 0
    %5759 = vmatpush1.bf16.msra.mxu0 0
    %5760 = vmatprep.subr.bf16.mxu0 0
    %5761 = vmatpush1.bf16.msra.mxu0 0
    %5762 = vmatprep.subr.bf16.mxu0 0
    %5763 = vmatpush1.bf16.msra.mxu0 0
    %5764 = vmatprep.subr.bf16.mxu0 0
    %5765 = vmatpush1.bf16.msra.mxu0 0
    %5766 = vmatprep.mubr.bf16.mxu0 0
    %5767 = vmatmul.mubr.bf16.gmra.mrb[0].mxu0 %v5681
    %v5768 = vpop.f32.mrb[0].mxu0
    %v5769 = vadd.f32 %v5685, %v5768
    %v5770 = vpop.f32.mrb[0].mxu0
    %v5771 = vpop.f32.mrb[0].mxu0
    %v5772 = vadd.f32 %v5685, %v5771
    %v5773 = vpop.f32.mrb[0].mxu0
    %5774 = vdwg.mxu0
    %v5775 = vadd.f32 %v5600, %v5769
    %v5776 = vadd.f32 %v5601, %v5772
    %v5777 = vld [vmem:[#allocation4 + $0x130] sm:$0x1]
    %v5778 = vld [vmem:[#allocation4 + $0x138] sm:$0x1]
    %v5779 = vsel %vm1667, %v5775, 0.0
    %5780 = vadd.xlane.f32.xlu0 %v5779
    %v5781 = vpop.xlane.xlu0 %5780
    %v5782 = vsel %vm1667, %v5776, 0.0
    %5783 = vadd.xlane.f32.xlu0 %v5782
    %v5784 = vpop.xlane.xlu0 %5783
    %v5785 = vmul.f32 %v5781, %v3687
    %v5786 = vmul.f32 %v5784, %v3687
    %v5787 = vsub.f32 %v5775, %v5785
    %v5788 = vsub.f32 %v5776, %v5786
    %v5789 = vmul.f32 %v5787, %v5787
    %v5790 = vmul.f32 %v5788, %v5788
    %v5791 = vsel %vm1667, %v5789, 0.0
    %5792 = vadd.xlane.f32.xlu0 %v5791
    %v5793 = vpop.xlane.xlu0 %5792
    %v5794 = vsel %vm1667, %v5790, 0.0
    %5795 = vadd.xlane.f32.xlu0 %v5794
    %v5796 = vpop.xlane.xlu0 %5795
    %v5797 = vmul.f32 %v5793, %v3687
    %v5798 = vmul.f32 %v5796, %v3687
    %v5799 = vadd.f32 %v5797, 1e-05
    %v5800 = vadd.f32 %v5798, 1e-05
    %v5801 = vrsqrt.pop %v5799
    %v5802 = vrsqrt.pop %v5800
    %v5803 = vmul.f32 %v5787, %v5801
    %v5804 = vmul.f32 %v5788, %v5802
    %v5805 = vlaneseq
    %v5806 = vshrl.u32 %v5805, 7
    %v5807 = vsub.s32 0, %v5806
    %v5808 = vrot.slane %v5777, %v5807
    %v5809 = vmul.f32 %v5803, %v5808
    %v5810 = vmul.f32 %v5804, %v5808
    %v5811 = vlaneseq
    %v5812 = vshrl.u32 %v5811, 7
    %v5813 = vsub.s32 0, %v5812
    %v5814 = vrot.slane %v5778, %v5813
    %v5815 = vadd.f32 %v5809, %v5814
    %v5816 = vadd.f32 %v5810, %v5814
    %v5817 = vld [vmem:[#allocation2 + $0x1a0] sm:$0xf]
    %v5818 = vld [vmem:[#allocation2 + $0x1a4] sm:$0x3]
    %v5819 = vld [vmem:[#allocation4 + $0x150] sm:$0x3f]
    %v5820 = vld [vmem:[#allocation4 + $0x158] sm:$0x1]
    %v5821 = vld [vmem:[%s3 + $0x20] sm:$0x3]
    %v5822 = vld [vmem:[%s3 + $0x28] sm:$0x3]
    %v5823 = vpack.c.bf16 %v5816, %v5815
    %v5824 = vlaneseq
    %v5825 = vshrl.u32 %v5824, 7
    %v5826 = vsub.s32 0, %v5825
    %v5827 = vrot.slane %v5820, %v5826
    %v5830 = vunpack.c.l.b16 %v5817
    %v5831 = vunpack.c.l.b16 %v5818
    %v5832 = vpack.c.b16 %v5831, %v5830
    %v5834 = vsel %vm1667, %v5823, 0
    %v5837 = vsel %vm1671, %v5832, 0
    %5839 = vmatprep.subr.bf16.mxu0 0
    %5840 = vmatpush1.bf16.msra.mxu0 %v5837
    %5841 = vmatprep.subr.bf16.mxu0 0
    %5842 = vmatpush1.bf16.msra.mxu0 0
    %5843 = vmatprep.subr.bf16.mxu0 0
    %5844 = vmatpush1.bf16.msra.mxu0 0
    %5845 = vmatprep.subr.bf16.mxu0 0
    %5846 = vmatpush1.bf16.msra.mxu0 0
    %5847 = vmatprep.subr.bf16.mxu0 0
    %5848 = vmatpush1.bf16.msra.mxu0 0
    %5849 = vmatprep.subr.bf16.mxu0 0
    %5850 = vmatpush1.bf16.msra.mxu0 0
    %5851 = vmatprep.subr.bf16.mxu0 0
    %5852 = vmatpush1.bf16.msra.mxu0 0
    %5853 = vmatprep.subr.bf16.mxu0 0
    %5854 = vmatpush1.bf16.msra.mxu0 0
    %5855 = vmatprep.subr.bf16.mxu0 0
    %5856 = vmatpush1.bf16.msra.mxu0 0
    %5857 = vmatprep.subr.bf16.mxu0 0
    %5858 = vmatpush1.bf16.msra.mxu0 0
    %5859 = vmatprep.subr.bf16.mxu0 0
    %5860 = vmatpush1.bf16.msra.mxu0 0
    %5861 = vmatprep.subr.bf16.mxu0 0
    %5862 = vmatpush1.bf16.msra.mxu0 0
    %5863 = vmatprep.subr.bf16.mxu0 0
    %5864 = vmatpush1.bf16.msra.mxu0 0
    %5865 = vmatprep.subr.bf16.mxu0 0
    %5866 = vmatpush1.bf16.msra.mxu0 0
    %5867 = vmatprep.subr.bf16.mxu0 0
    %5868 = vmatpush1.bf16.msra.mxu0 0
    %5869 = vmatprep.subr.bf16.mxu0 0
    %5870 = vmatpush1.bf16.msra.mxu0 0
    %5871 = vmatprep.mubr.bf16.mxu0 0
    %5872 = vmatmul.mubr.bf16.gmra.mrb[0].mxu0 %v5834
    %v5873 = vpop.f32.mrb[0].mxu0
    %v5874 = vadd.f32 %v5827, %v5873
    %v5875 = vpop.f32.mrb[0].mxu0
    %v5876 = vpop.f32.mrb[0].mxu0
    %v5877 = vadd.f32 %v5827, %v5876
    %v5878 = vpop.f32.mrb[0].mxu0
    %5879 = vdwg.mxu0
    %5881 = vset.pattern.permute.xlu0 0
    %5882 = vperm.xlu0 %5881, %v5821
    %v5883 = vpop.permute.xlu0 %5882
    %v5885 = vlaneseq
    %v5886 = vshrl.u32 %v5885, 7
    %v5887 = vsub.s32 0, %v5886
    %v5888 = vrot.slane %v5819, %v5887
    %v5889 = vmul.f32 %v5883, %v5888
    %5890 = vset.pattern.permute.xlu0 1
    %5891 = vperm.xlu0 %5890, %v5821
    %v5892 = vpop.permute.xlu0 %5891
    %v5894 = vlaneseq
    %v5895 = vshrl.u32 %v5894, 7
    %v5896 = vsub.s32 1, %v5895
    %v5897 = vrot.slane %v5819, %v5896
    %v5898 = vmul.f32 %v5892, %v5897
    %v5899 = vadd.f32 %v5889, %v5898
    %5900 = vset.pattern.permute.xlu0 2
    %5901 = vperm.xlu0 %5900, %v5821
    %v5902 = vpop.permute.xlu0 %5901
    %v5904 = vlaneseq
    %v5905 = vshrl.u32 %v5904, 7
    %v5906 = vsub.s32 2, %v5905
    %v5907 = vrot.slane %v5819, %v5906
    %v5908 = vmul.f32 %v5902, %v5907
    %v5909 = vadd.f32 %v5899, %v5908
    %5910 = vset.pattern.permute.xlu0 3
    %5911 = vperm.xlu0 %5910, %v5821
    %v5912 = vpop.permute.xlu0 %5911
    %v5914 = vlaneseq
    %v5915 = vshrl.u32 %v5914, 7
    %v5916 = vsub.s32 3, %v5915
    %v5917 = vrot.slane %v5819, %v5916
    %v5918 = vmul.f32 %v5912, %v5917
    %v5919 = vadd.f32 %v5909, %v5918
    %5920 = vset.pattern.permute.xlu0 4
    %5921 = vperm.xlu0 %5920, %v5821
    %v5922 = vpop.permute.xlu0 %5921
    %v5924 = vlaneseq
    %v5925 = vshrl.u32 %v5924, 7
    %v5926 = vsub.s32 4, %v5925
    %v5927 = vrot.slane %v5819, %v5926
    %v5928 = vmul.f32 %v5922, %v5927
    %v5929 = vadd.f32 %v5919, %v5928
    %5930 = vset.pattern.permute.xlu0 5
    %5931 = vperm.xlu0 %5930, %v5821
    %v5932 = vpop.permute.xlu0 %5931
    %v5934 = vlaneseq
    %v5935 = vshrl.u32 %v5934, 7
    %v5936 = vsub.s32 5, %v5935
    %v5937 = vrot.slane %v5819, %v5936
    %v5938 = vmul.f32 %v5932, %v5937
    %v5939 = vadd.f32 %v5929, %v5938
    %v5940 = vadd.f32 %v5874, %v5939
    %v5941 = vxor.u32 %v5940, 2147483648
    %v5942 = vmul.f32 %v5941, 1.442695
    %v5943 = vpow.pop %v5942
    %v5944 = vadd.f32 %v5943, 1.0
    %v5945 = vrcp.pop %v5944
    %v5946 = vmul.f32 1.0, %v5945
    %v5947 = vtanh.pop %v5940
    %5949 = vrot.lane.b32.xlu0 %v5822, 6
    %v5950 = vpop.permute.xlu0 %5949
    %v5952 = vmul.f32 %v5946, %v5950
    %5954 = vrot.lane.b32.xlu0 %v5947, 116
    %v5955 = vpop.permute.xlu0 %5954
    %v5957 = vmul.f32 %v5946, %v5955
    %5959 = vrot.lane.b32.xlu0 %v5957, 6
    %v5960 = vpop.permute.xlu0 %5959
    %v5962 = vadd.f32 %v5952, %v5960
    %v5963 = vtanh.pop %v5962
    %5965 = vrot.lane.b32.xlu0 %v5963, 12
    %v5966 = vpop.permute.xlu0 %5965
    %v5968 = vmul.f32 %v5946, %v5966
    %5970 = vset.pattern.permute.xlu0 18
    %5971 = vperm.xlu0 %5970, %v5968
    %v5972 = vpop.permute.xlu0 %5971
    %v5974 = vmul.f32 %v5972, %v5888
    %5975 = vset.pattern.permute.xlu0 19
    %5976 = vperm.xlu0 %5975, %v5968
    %v5977 = vpop.permute.xlu0 %5976
    %v5979 = vmul.f32 %v5977, %v5897
    %v5980 = vadd.f32 %v5974, %v5979
    %5981 = vset.pattern.permute.xlu0 20
    %5982 = vperm.xlu0 %5981, %v5968
    %v5983 = vpop.permute.xlu0 %5982
    %v5985 = vmul.f32 %v5983, %v5907
    %v5986 = vadd.f32 %v5980, %v5985
    %5987 = vset.pattern.permute.xlu0 21
    %5988 = vperm.xlu0 %5987, %v5968
    %v5989 = vpop.permute.xlu0 %5988
    %v5991 = vmul.f32 %v5989, %v5917
    %v5992 = vadd.f32 %v5986, %v5991
    %5993 = vset.pattern.permute.xlu0 22
    %5994 = vperm.xlu0 %5993, %v5968
    %v5995 = vpop.permute.xlu0 %5994
    %v5997 = vmul.f32 %v5995, %v5927
    %v5998 = vadd.f32 %v5992, %v5997
    %5999 = vset.pattern.permute.xlu0 23
    %6000 = vperm.xlu0 %5999, %v5968
    %v6001 = vpop.permute.xlu0 %6000
    %v6003 = vmul.f32 %v6001, %v5937
    %v6004 = vadd.f32 %v5998, %v6003
    %v6006 = vrot.slane %v6004, 6
    %v6008 = vadd.f32 %v5874, %v6006
    %v6009 = vxor.u32 %v6008, 2147483648
    %v6010 = vmul.f32 %v6009, 1.442695
    %v6011 = vpow.pop %v6010
    %v6012 = vadd.f32 %v6011, 1.0
    %v6013 = vrcp.pop %v6012
    %v6014 = vmul.f32 1.0, %v6013
    %v6015 = vtanh.pop %v6008
    %v6017 = vrot.slane %v5962, 6
    %v6019 = vmul.f32 %v6014, %v6017
    %6021 = vrot.lane.b32.xlu0 %v6015, 116
    %v6022 = vpop.permute.xlu0 %6021
    %v6024 = vmul.f32 %v6014, %v6022
    %6026 = vrot.lane.b32.xlu0 %v6024, 6
    %v6027 = vpop.permute.xlu0 %6026
    %v6029 = vadd.f32 %v6019, %v6027
    %v6030 = vtanh.pop %v6029
    %6032 = vrot.lane.b32.xlu0 %v6030, 12
    %v6033 = vpop.permute.xlu0 %6032
    %v6035 = vmul.f32 %v6014, %v6033
    %6037 = vset.pattern.permute.xlu0 18
    %6038 = vperm.xlu0 %6037, %v6035
    %v6039 = vpop.permute.xlu0 %6038
    %v6041 = vmul.f32 %v6039, %v5888
    %6042 = vset.pattern.permute.xlu0 19
    %6043 = vperm.xlu0 %6042, %v6035
    %v6044 = vpop.permute.xlu0 %6043
    %v6046 = vmul.f32 %v6044, %v5897
    %v6047 = vadd.f32 %v6041, %v6046
    %6048 = vset.pattern.permute.xlu0 20
    %6049 = vperm.xlu0 %6048, %v6035
    %v6050 = vpop.permute.xlu0 %6049
    %v6052 = vmul.f32 %v6050, %v5907
    %v6053 = vadd.f32 %v6047, %v6052
    %6054 = vset.pattern.permute.xlu0 21
    %6055 = vperm.xlu0 %6054, %v6035
    %v6056 = vpop.permute.xlu0 %6055
    %v6058 = vmul.f32 %v6056, %v5917
    %v6059 = vadd.f32 %v6053, %v6058
    %6060 = vset.pattern.permute.xlu0 22
    %6061 = vperm.xlu0 %6060, %v6035
    %v6062 = vpop.permute.xlu0 %6061
    %v6064 = vmul.f32 %v6062, %v5927
    %v6065 = vadd.f32 %v6059, %v6064
    %6066 = vset.pattern.permute.xlu0 23
    %6067 = vperm.xlu0 %6066, %v6035
    %v6068 = vpop.permute.xlu0 %6067
    %v6070 = vmul.f32 %v6068, %v5937
    %v6071 = vadd.f32 %v6065, %v6070
    %v6073 = vrot.slane %v6071, 6
    %v6075 = vadd.f32 %v5874, %v6073
    %v6076 = vxor.u32 %v6075, 2147483648
    %v6077 = vmul.f32 %v6076, 1.442695
    %v6078 = vpow.pop %v6077
    %v6079 = vadd.f32 %v6078, 1.0
    %v6080 = vrcp.pop %v6079
    %v6081 = vmul.f32 1.0, %v6080
    %v6082 = vtanh.pop %v6075
    %v6084 = vrot.slane %v6029, 6
    %v6086 = vmul.f32 %v6081, %v6084
    %6088 = vrot.lane.b32.xlu0 %v6082, 116
    %v6089 = vpop.permute.xlu0 %6088
    %v6091 = vmul.f32 %v6081, %v6089
    %6093 = vrot.lane.b32.xlu0 %v6091, 6
    %v6094 = vpop.permute.xlu0 %6093
    %v6096 = vadd.f32 %v6086, %v6094
    %v6097 = vtanh.pop %v6096
    %6099 = vrot.lane.b32.xlu0 %v6097, 12
    %v6100 = vpop.permute.xlu0 %6099
    %v6102 = vmul.f32 %v6081, %v6100
    %6104 = vset.pattern.permute.xlu0 18
    %6105 = vperm.xlu0 %6104, %v6102
    %v6106 = vpop.permute.xlu0 %6105
    %v6108 = vmul.f32 %v6106, %v5888
    %6109 = vset.pattern.permute.xlu0 19
    %6110 = vperm.xlu0 %6109, %v6102
    %v6111 = vpop.permute.xlu0 %6110
    %v6113 = vmul.f32 %v6111, %v5897
    %v6114 = vadd.f32 %v6108, %v6113
    %6115 = vset.pattern.permute.xlu0 20
    %6116 = vperm.xlu0 %6115, %v6102
    %v6117 = vpop.permute.xlu0 %6116
    %v6119 = vmul.f32 %v6117, %v5907
    %v6120 = vadd.f32 %v6114, %v6119
    %6121 = vset.pattern.permute.xlu0 21
    %6122 = vperm.xlu0 %6121, %v6102
    %v6123 = vpop.permute.xlu0 %6122
    %v6125 = vmul.f32 %v6123, %v5917
    %v6126 = vadd.f32 %v6120, %v6125
    %6127 = vset.pattern.permute.xlu0 22
    %6128 = vperm.xlu0 %6127, %v6102
    %v6129 = vpop.permute.xlu0 %6128
    %v6131 = vmul.f32 %v6129, %v5927
    %v6132 = vadd.f32 %v6126, %v6131
    %6133 = vset.pattern.permute.xlu0 23
    %6134 = vperm.xlu0 %6133, %v6102
    %v6135 = vpop.permute.xlu0 %6134
    %v6137 = vmul.f32 %v6135, %v5937
    %v6138 = vadd.f32 %v6132, %v6137
    %v6140 = vrot.slane %v6138, 6
    %v6142 = vadd.f32 %v5874, %v6140
    %v6143 = vxor.u32 %v6142, 2147483648
    %v6144 = vmul.f32 %v6143, 1.442695
    %v6145 = vpow.pop %v6144
    %v6146 = vadd.f32 %v6145, 1.0
    %v6147 = vrcp.pop %v6146
    %v6148 = vmul.f32 1.0, %v6147
    %v6149 = vtanh.pop %v6142
    %v6151 = vrot.slane %v6096, 6
    %v6153 = vmul.f32 %v6148, %v6151
    %6155 = vrot.lane.b32.xlu0 %v6149, 116
    %v6156 = vpop.permute.xlu0 %6155
    %v6158 = vmul.f32 %v6148, %v6156
    %6160 = vrot.lane.b32.xlu0 %v6158, 6
    %v6161 = vpop.permute.xlu0 %6160
    %v6163 = vadd.f32 %v6153, %v6161
    %v6164 = vtanh.pop %v6163
    %6166 = vrot.lane.b32.xlu0 %v6164, 12
    %v6167 = vpop.permute.xlu0 %6166
    %v6169 = vmul.f32 %v6148, %v6167
    %6171 = vset.pattern.permute.xlu0 18
    %6172 = vperm.xlu0 %6171, %v6169
    %v6173 = vpop.permute.xlu0 %6172
    %v6175 = vmul.f32 %v6173, %v5888
    %6176 = vset.pattern.permute.xlu0 19
    %6177 = vperm.xlu0 %6176, %v6169
    %v6178 = vpop.permute.xlu0 %6177
    %v6180 = vmul.f32 %v6178, %v5897
    %v6181 = vadd.f32 %v6175, %v6180
    %6182 = vset.pattern.permute.xlu0 20
    %6183 = vperm.xlu0 %6182, %v6169
    %v6184 = vpop.permute.xlu0 %6183
    %v6186 = vmul.f32 %v6184, %v5907
    %v6187 = vadd.f32 %v6181, %v6186
    %6188 = vset.pattern.permute.xlu0 21
    %6189 = vperm.xlu0 %6188, %v6169
    %v6190 = vpop.permute.xlu0 %6189
    %v6192 = vmul.f32 %v6190, %v5917
    %v6193 = vadd.f32 %v6187, %v6192
    %6194 = vset.pattern.permute.xlu0 22
    %6195 = vperm.xlu0 %6194, %v6169
    %v6196 = vpop.permute.xlu0 %6195
    %v6198 = vmul.f32 %v6196, %v5927
    %v6199 = vadd.f32 %v6193, %v6198
    %6200 = vset.pattern.permute.xlu0 23
    %6201 = vperm.xlu0 %6200, %v6169
    %v6202 = vpop.permute.xlu0 %6201
    %v6204 = vmul.f32 %v6202, %v5937
    %v6205 = vadd.f32 %v6199, %v6204
    %v6207 = vrot.slane %v6205, 6
    %v6209 = vadd.f32 %v5877, %v6207
    %v6210 = vxor.u32 %v6209, 2147483648
    %v6211 = vmul.f32 %v6210, 1.442695
    %v6212 = vpow.pop %v6211
    %v6213 = vadd.f32 %v6212, 1.0
    %v6214 = vrcp.pop %v6213
    %v6215 = vmul.f32 1.0, %v6214
    %v6216 = vtanh.pop %v6209
    %v6218 = vrot.slane %v6163, 6
    %v6220 = vmul.f32 %v6215, %v6218
    %6222 = vrot.lane.b32.xlu0 %v6216, 116
    %v6223 = vpop.permute.xlu0 %6222
    %v6225 = vmul.f32 %v6215, %v6223
    %6227 = vrot.lane.b32.xlu0 %v6225, 6
    %v6228 = vpop.permute.xlu0 %6227
    %v6230 = vadd.f32 %v6220, %v6228
    %v6231 = vtanh.pop %v6230
    %6233 = vrot.lane.b32.xlu0 %v6231, 12
    %v6234 = vpop.permute.xlu0 %6233
    %v6236 = vmul.f32 %v6215, %v6234
    %6238 = vset.pattern.permute.xlu0 18
    %6239 = vperm.xlu0 %6238, %v6236
    %v6240 = vpop.permute.xlu0 %6239
    %v6242 = vmul.f32 %v6240, %v5888
    %6243 = vset.pattern.permute.xlu0 19
    %6244 = vperm.xlu0 %6243, %v6236
    %v6245 = vpop.permute.xlu0 %6244
    %v6247 = vmul.f32 %v6245, %v5897
    %v6248 = vadd.f32 %v6242, %v6247
    %6249 = vset.pattern.permute.xlu0 20
    %6250 = vperm.xlu0 %6249, %v6236
    %v6251 = vpop.permute.xlu0 %6250
    %v6253 = vmul.f32 %v6251, %v5907
    %v6254 = vadd.f32 %v6248, %v6253
    %6255 = vset.pattern.permute.xlu0 21
    %6256 = vperm.xlu0 %6255, %v6236
    %v6257 = vpop.permute.xlu0 %6256
    %v6259 = vmul.f32 %v6257, %v5917
    %v6260 = vadd.f32 %v6254, %v6259
    %6261 = vset.pattern.permute.xlu0 22
    %6262 = vperm.xlu0 %6261, %v6236
    %v6263 = vpop.permute.xlu0 %6262
    %v6265 = vmul.f32 %v6263, %v5927
    %v6266 = vadd.f32 %v6260, %v6265
    %6267 = vset.pattern.permute.xlu0 23
    %6268 = vperm.xlu0 %6267, %v6236
    %v6269 = vpop.permute.xlu0 %6268
    %v6271 = vmul.f32 %v6269, %v5937
    %v6272 = vadd.f32 %v6266, %v6271
    %v6274 = vrot.slane %v6272, 6
    %v6276 = vadd.f32 %v5877, %v6274
    %v6277 = vxor.u32 %v6276, 2147483648
    %v6278 = vmul.f32 %v6277, 1.442695
    %v6279 = vpow.pop %v6278
    %v6280 = vadd.f32 %v6279, 1.0
    %v6281 = vrcp.pop %v6280
    %v6282 = vmul.f32 1.0, %v6281
    %v6283 = vtanh.pop %v6276
    %v6285 = vrot.slane %v6230, 6
    %v6287 = vmul.f32 %v6282, %v6285
    %6289 = vrot.lane.b32.xlu0 %v6283, 116
    %v6290 = vpop.permute.xlu0 %6289
    %v6292 = vmul.f32 %v6282, %v6290
    %6294 = vrot.lane.b32.xlu0 %v6292, 6
    %v6295 = vpop.permute.xlu0 %6294
    %v6297 = vadd.f32 %v6287, %v6295
    %v6298 = vtanh.pop %v6297
    %6300 = vrot.lane.b32.xlu0 %v6298, 12
    %v6301 = vpop.permute.xlu0 %6300
    %v6303 = vmul.f32 %v6282, %v6301
    %6305 = vset.pattern.permute.xlu0 18
    %6306 = vperm.xlu0 %6305, %v6303
    %v6307 = vpop.permute.xlu0 %6306
    %v6309 = vmul.f32 %v6307, %v5888
    %6310 = vset.pattern.permute.xlu0 19
    %6311 = vperm.xlu0 %6310, %v6303
    %v6312 = vpop.permute.xlu0 %6311
    %v6314 = vmul.f32 %v6312, %v5897
    %v6315 = vadd.f32 %v6309, %v6314
    %6316 = vset.pattern.permute.xlu0 20
    %6317 = vperm.xlu0 %6316, %v6303
    %v6318 = vpop.permute.xlu0 %6317
    %v6320 = vmul.f32 %v6318, %v5907
    %v6321 = vadd.f32 %v6315, %v6320
    %6322 = vset.pattern.permute.xlu0 21
    %6323 = vperm.xlu0 %6322, %v6303
    %v6324 = vpop.permute.xlu0 %6323
    %v6326 = vmul.f32 %v6324, %v5917
    %v6327 = vadd.f32 %v6321, %v6326
    %6328 = vset.pattern.permute.xlu0 22
    %6329 = vperm.xlu0 %6328, %v6303
    %v6330 = vpop.permute.xlu0 %6329
    %v6332 = vmul.f32 %v6330, %v5927
    %v6333 = vadd.f32 %v6327, %v6332
    %6334 = vset.pattern.permute.xlu0 23
    %6335 = vperm.xlu0 %6334, %v6303
    %v6336 = vpop.permute.xlu0 %6335
    %v6338 = vmul.f32 %v6336, %v5937
    %v6339 = vadd.f32 %v6333, %v6338
    %v6341 = vrot.slane %v6339, 6
    %v6343 = vadd.f32 %v5877, %v6341
    %v6344 = vxor.u32 %v6343, 2147483648
    %v6345 = vmul.f32 %v6344, 1.442695
    %v6346 = vpow.pop %v6345
    %v6347 = vadd.f32 %v6346, 1.0
    %v6348 = vrcp.pop %v6347
    %v6349 = vmul.f32 1.0, %v6348
    %v6350 = vtanh.pop %v6343
    %v6352 = vrot.slane %v6297, 6
    %v6354 = vmul.f32 %v6349, %v6352
    %6356 = vrot.lane.b32.xlu0 %v6350, 116
    %v6357 = vpop.permute.xlu0 %6356
    %v6359 = vmul.f32 %v6349, %v6357
    %6361 = vrot.lane.b32.xlu0 %v6359, 6
    %v6362 = vpop.permute.xlu0 %6361
    %v6364 = vadd.f32 %v6354, %v6362
    %v6365 = vtanh.pop %v6364
    %6367 = vrot.lane.b32.xlu0 %v6365, 12
    %v6368 = vpop.permute.xlu0 %6367
    %v6370 = vmul.f32 %v6349, %v6368
    %6372 = vset.pattern.permute.xlu0 18
    %6373 = vperm.xlu0 %6372, %v6370
    %v6374 = vpop.permute.xlu0 %6373
    %v6376 = vmul.f32 %v6374, %v5888
    %6377 = vset.pattern.permute.xlu0 19
    %6378 = vperm.xlu0 %6377, %v6370
    %v6379 = vpop.permute.xlu0 %6378
    %v6381 = vmul.f32 %v6379, %v5897
    %v6382 = vadd.f32 %v6376, %v6381
    %6383 = vset.pattern.permute.xlu0 20
    %6384 = vperm.xlu0 %6383, %v6370
    %v6385 = vpop.permute.xlu0 %6384
    %v6387 = vmul.f32 %v6385, %v5907
    %v6388 = vadd.f32 %v6382, %v6387
    %6389 = vset.pattern.permute.xlu0 21
    %6390 = vperm.xlu0 %6389, %v6370
    %v6391 = vpop.permute.xlu0 %6390
    %v6393 = vmul.f32 %v6391, %v5917
    %v6394 = vadd.f32 %v6388, %v6393
    %6395 = vset.pattern.permute.xlu0 22
    %6396 = vperm.xlu0 %6395, %v6370
    %v6397 = vpop.permute.xlu0 %6396
    %v6399 = vmul.f32 %v6397, %v5927
    %v6400 = vadd.f32 %v6394, %v6399
    %6401 = vset.pattern.permute.xlu0 23
    %6402 = vperm.xlu0 %6401, %v6370
    %v6403 = vpop.permute.xlu0 %6402
    %v6405 = vmul.f32 %v6403, %v5937
    %v6406 = vadd.f32 %v6400, %v6405
    %v6408 = vrot.slane %v6406, 6
    %v6410 = vadd.f32 %v5877, %v6408
    %v6411 = vxor.u32 %v6410, 2147483648
    %v6412 = vmul.f32 %v6411, 1.442695
    %v6413 = vpow.pop %v6412
    %v6414 = vadd.f32 %v6413, 1.0
    %v6415 = vrcp.pop %v6414
    %v6416 = vmul.f32 1.0, %v6415
    %v6417 = vtanh.pop %v6410
    %v6419 = vrot.slane %v6364, 6
    %v6421 = vmul.f32 %v6416, %v6419
    %6423 = vrot.lane.b32.xlu0 %v6417, 116
    %v6424 = vpop.permute.xlu0 %6423
    %v6426 = vmul.f32 %v6416, %v6424
    %6428 = vrot.lane.b32.xlu0 %v6426, 6
    %v6429 = vpop.permute.xlu0 %6428
    %v6431 = vadd.f32 %v6421, %v6429
    %v6432 = vtanh.pop %v6431
    %6434 = vrot.lane.b32.xlu0 %v6432, 12
    %v6435 = vpop.permute.xlu0 %6434
    %v6437 = vmul.f32 %v6416, %v6435
    %v6438 = vsel %vm2302, %v5968, %v6035
    %v6439 = vsel %vm2304, %v6438, %v6102
    %v6440 = vsel %vm1671, %v6439, %v6169
    %v6441 = vsel %vm2302, %v6236, %v6303
    %v6442 = vsel %vm2304, %v6441, %v6370
    %v6443 = vsel %vm1671, %v6442, %v6437
    %v6444 = vld [vmem:[#allocation2 + $0x1a8] sm:$0x7]
    %v6445 = vld [vmem:[#allocation4 + $0x160] sm:$0x3f]
    %v6446 = vld [vmem:[#allocation4 + $0x168] sm:$0x1]
    %v6447 = vld [vmem:[%s3 + $0x30] sm:$0x3]
    %v6448 = vld [vmem:[%s3 + $0x38] sm:$0x3]
    %v6449 = vpack.c.bf16 %v6443, %v6440
    %v6450 = vlaneseq
    %v6451 = vshrl.u32 %v6450, 7
    %v6452 = vsub.s32 0, %v6451
    %v6453 = vrot.slane %v6446, %v6452
    %6455 = vrot.lane.b32.xlu0 %v6449, 110
    %v6456 = vpop.permute.xlu0 %6455
    %v6458 = vsel %vm102, %v6456, 0
    %v6461 = vsel %vm106, %v6444, 0
    %6463 = vmatprep.subr.bf16.mxu0 0
    %6464 = vmatpush1.bf16.msra.mxu0 %v6461
    %6465 = vmatprep.subr.bf16.mxu0 0
    %6466 = vmatpush1.bf16.msra.mxu0 0
    %6467 = vmatprep.subr.bf16.mxu0 0
    %6468 = vmatpush1.bf16.msra.mxu0 0
    %6469 = vmatprep.subr.bf16.mxu0 0
    %6470 = vmatpush1.bf16.msra.mxu0 0
    %6471 = vmatprep.subr.bf16.mxu0 0
    %6472 = vmatpush1.bf16.msra.mxu0 0
    %6473 = vmatprep.subr.bf16.mxu0 0
    %6474 = vmatpush1.bf16.msra.mxu0 0
    %6475 = vmatprep.subr.bf16.mxu0 0
    %6476 = vmatpush1.bf16.msra.mxu0 0
    %6477 = vmatprep.subr.bf16.mxu0 0
    %6478 = vmatpush1.bf16.msra.mxu0 0
    %6479 = vmatprep.subr.bf16.mxu0 0
    %6480 = vmatpush1.bf16.msra.mxu0 0
    %6481 = vmatprep.subr.bf16.mxu0 0
    %6482 = vmatpush1.bf16.msra.mxu0 0
    %6483 = vmatprep.subr.bf16.mxu0 0
    %6484 = vmatpush1.bf16.msra.mxu0 0
    %6485 = vmatprep.subr.bf16.mxu0 0
    %6486 = vmatpush1.bf16.msra.mxu0 0
    %6487 = vmatprep.subr.bf16.mxu0 0
    %6488 = vmatpush1.bf16.msra.mxu0 0
    %6489 = vmatprep.subr.bf16.mxu0 0
    %6490 = vmatpush1.bf16.msra.mxu0 0
    %6491 = vmatprep.subr.bf16.mxu0 0
    %6492 = vmatpush1.bf16.msra.mxu0 0
    %6493 = vmatprep.subr.bf16.mxu0 0
    %6494 = vmatpush1.bf16.msra.mxu0 0
    %6495 = vmatprep.mubr.bf16.mxu0 0
    %6496 = vmatmul.mubr.bf16.gmra.mrb[0].mxu0 %v6458
    %v6497 = vpop.f32.mrb[0].mxu0
    %v6498 = vadd.f32 %v6453, %v6497
    %v6499 = vpop.f32.mrb[0].mxu0
    %v6500 = vpop.f32.mrb[0].mxu0
    %v6501 = vadd.f32 %v6453, %v6500
    %v6502 = vpop.f32.mrb[0].mxu0
    %6503 = vdwg.mxu0
    %6505 = vset.pattern.permute.xlu0 0
    %6506 = vperm.xlu0 %6505, %v6447
    %v6507 = vpop.permute.xlu0 %6506
    %v6509 = vlaneseq
    %v6510 = vshrl.u32 %v6509, 7
    %v6511 = vsub.s32 0, %v6510
    %v6512 = vrot.slane %v6445, %v6511
    %v6513 = vmul.f32 %v6507, %v6512
    %6514 = vset.pattern.permute.xlu0 1
    %6515 = vperm.xlu0 %6514, %v6447
    %v6516 = vpop.permute.xlu0 %6515
    %v6518 = vlaneseq
    %v6519 = vshrl.u32 %v6518, 7
    %v6520 = vsub.s32 1, %v6519
    %v6521 = vrot.slane %v6445, %v6520
    %v6522 = vmul.f32 %v6516, %v6521
    %v6523 = vadd.f32 %v6513, %v6522
    %6524 = vset.pattern.permute.xlu0 2
    %6525 = vperm.xlu0 %6524, %v6447
    %v6526 = vpop.permute.xlu0 %6525
    %v6528 = vlaneseq
    %v6529 = vshrl.u32 %v6528, 7
    %v6530 = vsub.s32 2, %v6529
    %v6531 = vrot.slane %v6445, %v6530
    %v6532 = vmul.f32 %v6526, %v6531
    %v6533 = vadd.f32 %v6523, %v6532
    %6534 = vset.pattern.permute.xlu0 3
    %6535 = vperm.xlu0 %6534, %v6447
    %v6536 = vpop.permute.xlu0 %6535
    %v6538 = vlaneseq
    %v6539 = vshrl.u32 %v6538, 7
    %v6540 = vsub.s32 3, %v6539
    %v6541 = vrot.slane %v6445, %v6540
    %v6542 = vmul.f32 %v6536, %v6541
    %v6543 = vadd.f32 %v6533, %v6542
    %6544 = vset.pattern.permute.xlu0 4
    %6545 = vperm.xlu0 %6544, %v6447
    %v6546 = vpop.permute.xlu0 %6545
    %v6548 = vlaneseq
    %v6549 = vshrl.u32 %v6548, 7
    %v6550 = vsub.s32 4, %v6549
    %v6551 = vrot.slane %v6445, %v6550
    %v6552 = vmul.f32 %v6546, %v6551
    %v6553 = vadd.f32 %v6543, %v6552
    %6554 = vset.pattern.permute.xlu0 5
    %6555 = vperm.xlu0 %6554, %v6447
    %v6556 = vpop.permute.xlu0 %6555
    %v6558 = vlaneseq
    %v6559 = vshrl.u32 %v6558, 7
    %v6560 = vsub.s32 5, %v6559
    %v6561 = vrot.slane %v6445, %v6560
    %v6562 = vmul.f32 %v6556, %v6561
    %v6563 = vadd.f32 %v6553, %v6562
    %v6564 = vadd.f32 %v6498, %v6563
    %v6565 = vxor.u32 %v6564, 2147483648
    %v6566 = vmul.f32 %v6565, 1.442695
    %v6567 = vpow.pop %v6566
    %v6568 = vadd.f32 %v6567, 1.0
    %v6569 = vrcp.pop %v6568
    %v6570 = vmul.f32 1.0, %v6569
    %v6571 = vtanh.pop %v6564
    %6573 = vrot.lane.b32.xlu0 %v6448, 6
    %v6574 = vpop.permute.xlu0 %6573
    %v6576 = vmul.f32 %v6570, %v6574
    %6578 = vrot.lane.b32.xlu0 %v6571, 116
    %v6579 = vpop.permute.xlu0 %6578
    %v6581 = vmul.f32 %v6570, %v6579
    %6583 = vrot.lane.b32.xlu0 %v6581, 6
    %v6584 = vpop.permute.xlu0 %6583
    %v6586 = vadd.f32 %v6576, %v6584
    %v6587 = vtanh.pop %v6586
    %6589 = vrot.lane.b32.xlu0 %v6587, 12
    %v6590 = vpop.permute.xlu0 %6589
    %v6592 = vmul.f32 %v6570, %v6590
    %6594 = vset.pattern.permute.xlu0 18
    %6595 = vperm.xlu0 %6594, %v6592
    %v6596 = vpop.permute.xlu0 %6595
    %v6598 = vmul.f32 %v6596, %v6512
    %6599 = vset.pattern.permute.xlu0 19
    %6600 = vperm.xlu0 %6599, %v6592
    %v6601 = vpop.permute.xlu0 %6600
    %v6603 = vmul.f32 %v6601, %v6521
    %v6604 = vadd.f32 %v6598, %v6603
    %6605 = vset.pattern.permute.xlu0 20
    %6606 = vperm.xlu0 %6605, %v6592
    %v6607 = vpop.permute.xlu0 %6606
    %v6609 = vmul.f32 %v6607, %v6531
    %v6610 = vadd.f32 %v6604, %v6609
    %6611 = vset.pattern.permute.xlu0 21
    %6612 = vperm.xlu0 %6611, %v6592
    %v6613 = vpop.permute.xlu0 %6612
    %v6615 = vmul.f32 %v6613, %v6541
    %v6616 = vadd.f32 %v6610, %v6615
    %6617 = vset.pattern.permute.xlu0 22
    %6618 = vperm.xlu0 %6617, %v6592
    %v6619 = vpop.permute.xlu0 %6618
    %v6621 = vmul.f32 %v6619, %v6551
    %v6622 = vadd.f32 %v6616, %v6621
    %6623 = vset.pattern.permute.xlu0 23
    %6624 = vperm.xlu0 %6623, %v6592
    %v6625 = vpop.permute.xlu0 %6624
    %v6627 = vmul.f32 %v6625, %v6561
    %v6628 = vadd.f32 %v6622, %v6627
    %v6630 = vrot.slane %v6628, 6
    %v6632 = vadd.f32 %v6498, %v6630
    %v6633 = vxor.u32 %v6632, 2147483648
    %v6634 = vmul.f32 %v6633, 1.442695
    %v6635 = vpow.pop %v6634
    %v6636 = vadd.f32 %v6635, 1.0
    %v6637 = vrcp.pop %v6636
    %v6638 = vmul.f32 1.0, %v6637
    %v6639 = vtanh.pop %v6632
    %v6641 = vrot.slane %v6586, 6
    %v6643 = vmul.f32 %v6638, %v6641
    %6645 = vrot.lane.b32.xlu0 %v6639, 116
    %v6646 = vpop.permute.xlu0 %6645
    %v6648 = vmul.f32 %v6638, %v6646
    %6650 = vrot.lane.b32.xlu0 %v6648, 6
    %v6651 = vpop.permute.xlu0 %6650
    %v6653 = vadd.f32 %v6643, %v6651
    %v6654 = vtanh.pop %v6653
    %6656 = vrot.lane.b32.xlu0 %v6654, 12
    %v6657 = vpop.permute.xlu0 %6656
    %v6659 = vmul.f32 %v6638, %v6657
    %6661 = vset.pattern.permute.xlu0 18
    %6662 = vperm.xlu0 %6661, %v6659
    %v6663 = vpop.permute.xlu0 %6662
    %v6665 = vmul.f32 %v6663, %v6512
    %6666 = vset.pattern.permute.xlu0 19
    %6667 = vperm.xlu0 %6666, %v6659
    %v6668 = vpop.permute.xlu0 %6667
    %v6670 = vmul.f32 %v6668, %v6521
    %v6671 = vadd.f32 %v6665, %v6670
    %6672 = vset.pattern.permute.xlu0 20
    %6673 = vperm.xlu0 %6672, %v6659
    %v6674 = vpop.permute.xlu0 %6673
    %v6676 = vmul.f32 %v6674, %v6531
    %v6677 = vadd.f32 %v6671, %v6676
    %6678 = vset.pattern.permute.xlu0 21
    %6679 = vperm.xlu0 %6678, %v6659
    %v6680 = vpop.permute.xlu0 %6679
    %v6682 = vmul.f32 %v6680, %v6541
    %v6683 = vadd.f32 %v6677, %v6682
    %6684 = vset.pattern.permute.xlu0 22
    %6685 = vperm.xlu0 %6684, %v6659
    %v6686 = vpop.permute.xlu0 %6685
    %v6688 = vmul.f32 %v6686, %v6551
    %v6689 = vadd.f32 %v6683, %v6688
    %6690 = vset.pattern.permute.xlu0 23
    %6691 = vperm.xlu0 %6690, %v6659
    %v6692 = vpop.permute.xlu0 %6691
    %v6694 = vmul.f32 %v6692, %v6561
    %v6695 = vadd.f32 %v6689, %v6694
    %v6697 = vrot.slane %v6695, 6
    %v6699 = vadd.f32 %v6498, %v6697
    %v6700 = vxor.u32 %v6699, 2147483648
    %v6701 = vmul.f32 %v6700, 1.442695
    %v6702 = vpow.pop %v6701
    %v6703 = vadd.f32 %v6702, 1.0
    %v6704 = vrcp.pop %v6703
    %v6705 = vmul.f32 1.0, %v6704
    %v6706 = vtanh.pop %v6699
    %v6708 = vrot.slane %v6653, 6
    %v6710 = vmul.f32 %v6705, %v6708
    %6712 = vrot.lane.b32.xlu0 %v6706, 116
    %v6713 = vpop.permute.xlu0 %6712
    %v6715 = vmul.f32 %v6705, %v6713
    %6717 = vrot.lane.b32.xlu0 %v6715, 6
    %v6718 = vpop.permute.xlu0 %6717
    %v6720 = vadd.f32 %v6710, %v6718
    %v6721 = vtanh.pop %v6720
    %6723 = vrot.lane.b32.xlu0 %v6721, 12
    %v6724 = vpop.permute.xlu0 %6723
    %v6726 = vmul.f32 %v6705, %v6724
    %6728 = vset.pattern.permute.xlu0 18
    %6729 = vperm.xlu0 %6728, %v6726
    %v6730 = vpop.permute.xlu0 %6729
    %v6732 = vmul.f32 %v6730, %v6512
    %6733 = vset.pattern.permute.xlu0 19
    %6734 = vperm.xlu0 %6733, %v6726
    %v6735 = vpop.permute.xlu0 %6734
    %v6737 = vmul.f32 %v6735, %v6521
    %v6738 = vadd.f32 %v6732, %v6737
    %6739 = vset.pattern.permute.xlu0 20
    %6740 = vperm.xlu0 %6739, %v6726
    %v6741 = vpop.permute.xlu0 %6740
    %v6743 = vmul.f32 %v6741, %v6531
    %v6744 = vadd.f32 %v6738, %v6743
    %6745 = vset.pattern.permute.xlu0 21
    %6746 = vperm.xlu0 %6745, %v6726
    %v6747 = vpop.permute.xlu0 %6746
    %v6749 = vmul.f32 %v6747, %v6541
    %v6750 = vadd.f32 %v6744, %v6749
    %6751 = vset.pattern.permute.xlu0 22
    %6752 = vperm.xlu0 %6751, %v6726
    %v6753 = vpop.permute.xlu0 %6752
    %v6755 = vmul.f32 %v6753, %v6551
    %v6756 = vadd.f32 %v6750, %v6755
    %6757 = vset.pattern.permute.xlu0 23
    %6758 = vperm.xlu0 %6757, %v6726
    %v6759 = vpop.permute.xlu0 %6758
    %v6761 = vmul.f32 %v6759, %v6561
    %v6762 = vadd.f32 %v6756, %v6761
    %v6764 = vrot.slane %v6762, 6
    %v6766 = vadd.f32 %v6498, %v6764
    %v6767 = vxor.u32 %v6766, 2147483648
    %v6768 = vmul.f32 %v6767, 1.442695
    %v6769 = vpow.pop %v6768
    %v6770 = vadd.f32 %v6769, 1.0
    %v6771 = vrcp.pop %v6770
    %v6772 = vmul.f32 1.0, %v6771
    %v6773 = vtanh.pop %v6766
    %v6775 = vrot.slane %v6720, 6
    %v6777 = vmul.f32 %v6772, %v6775
    %6779 = vrot.lane.b32.xlu0 %v6773, 116
    %v6780 = vpop.permute.xlu0 %6779
    %v6782 = vmul.f32 %v6772, %v6780
    %6784 = vrot.lane.b32.xlu0 %v6782, 6
    %v6785 = vpop.permute.xlu0 %6784
    %v6787 = vadd.f32 %v6777, %v6785
    %v6788 = vtanh.pop %v6787
    %6790 = vrot.lane.b32.xlu0 %v6788, 12
    %v6791 = vpop.permute.xlu0 %6790
    %v6793 = vmul.f32 %v6772, %v6791
    %6795 = vset.pattern.permute.xlu0 18
    %6796 = vperm.xlu0 %6795, %v6793
    %v6797 = vpop.permute.xlu0 %6796
    %v6799 = vmul.f32 %v6797, %v6512
    %6800 = vset.pattern.permute.xlu0 19
    %6801 = vperm.xlu0 %6800, %v6793
    %v6802 = vpop.permute.xlu0 %6801
    %v6804 = vmul.f32 %v6802, %v6521
    %v6805 = vadd.f32 %v6799, %v6804
    %6806 = vset.pattern.permute.xlu0 20
    %6807 = vperm.xlu0 %6806, %v6793
    %v6808 = vpop.permute.xlu0 %6807
    %v6810 = vmul.f32 %v6808, %v6531
    %v6811 = vadd.f32 %v6805, %v6810
    %6812 = vset.pattern.permute.xlu0 21
    %6813 = vperm.xlu0 %6812, %v6793
    %v6814 = vpop.permute.xlu0 %6813
    %v6816 = vmul.f32 %v6814, %v6541
    %v6817 = vadd.f32 %v6811, %v6816
    %6818 = vset.pattern.permute.xlu0 22
    %6819 = vperm.xlu0 %6818, %v6793
    %v6820 = vpop.permute.xlu0 %6819
    %v6822 = vmul.f32 %v6820, %v6551
    %v6823 = vadd.f32 %v6817, %v6822
    %6824 = vset.pattern.permute.xlu0 23
    %6825 = vperm.xlu0 %6824, %v6793
    %v6826 = vpop.permute.xlu0 %6825
    %v6828 = vmul.f32 %v6826, %v6561
    %v6829 = vadd.f32 %v6823, %v6828
    %v6831 = vrot.slane %v6829, 6
    %v6833 = vadd.f32 %v6501, %v6831
    %v6834 = vxor.u32 %v6833, 2147483648
    %v6835 = vmul.f32 %v6834, 1.442695
    %v6836 = vpow.pop %v6835
    %v6837 = vadd.f32 %v6836, 1.0
    %v6838 = vrcp.pop %v6837
    %v6839 = vmul.f32 1.0, %v6838
    %v6840 = vtanh.pop %v6833
    %v6842 = vrot.slane %v6787, 6
    %v6844 = vmul.f32 %v6839, %v6842
    %6846 = vrot.lane.b32.xlu0 %v6840, 116
    %v6847 = vpop.permute.xlu0 %6846
    %v6849 = vmul.f32 %v6839, %v6847
    %6851 = vrot.lane.b32.xlu0 %v6849, 6
    %v6852 = vpop.permute.xlu0 %6851
    %v6854 = vadd.f32 %v6844, %v6852
    %v6855 = vtanh.pop %v6854
    %6857 = vrot.lane.b32.xlu0 %v6855, 12
    %v6858 = vpop.permute.xlu0 %6857
    %v6860 = vmul.f32 %v6839, %v6858
    %6862 = vset.pattern.permute.xlu0 18
    %6863 = vperm.xlu0 %6862, %v6860
    %v6864 = vpop.permute.xlu0 %6863
    %v6866 = vmul.f32 %v6864, %v6512
    %6867 = vset.pattern.permute.xlu0 19
    %6868 = vperm.xlu0 %6867, %v6860
    %v6869 = vpop.permute.xlu0 %6868
    %v6871 = vmul.f32 %v6869, %v6521
    %v6872 = vadd.f32 %v6866, %v6871
    %6873 = vset.pattern.permute.xlu0 20
    %6874 = vperm.xlu0 %6873, %v6860
    %v6875 = vpop.permute.xlu0 %6874
    %v6877 = vmul.f32 %v6875, %v6531
    %v6878 = vadd.f32 %v6872, %v6877
    %6879 = vset.pattern.permute.xlu0 21
    %6880 = vperm.xlu0 %6879, %v6860
    %v6881 = vpop.permute.xlu0 %6880
    %v6883 = vmul.f32 %v6881, %v6541
    %v6884 = vadd.f32 %v6878, %v6883
    %6885 = vset.pattern.permute.xlu0 22
    %6886 = vperm.xlu0 %6885, %v6860
    %v6887 = vpop.permute.xlu0 %6886
    %v6889 = vmul.f32 %v6887, %v6551
    %v6890 = vadd.f32 %v6884, %v6889
    %6891 = vset.pattern.permute.xlu0 23
    %6892 = vperm.xlu0 %6891, %v6860
    %v6893 = vpop.permute.xlu0 %6892
    %v6895 = vmul.f32 %v6893, %v6561
    %v6896 = vadd.f32 %v6890, %v6895
    %v6898 = vrot.slane %v6896, 6
    %v6900 = vadd.f32 %v6501, %v6898
    %v6901 = vxor.u32 %v6900, 2147483648
    %v6902 = vmul.f32 %v6901, 1.442695
    %v6903 = vpow.pop %v6902
    %v6904 = vadd.f32 %v6903, 1.0
    %v6905 = vrcp.pop %v6904
    %v6906 = vmul.f32 1.0, %v6905
    %v6907 = vtanh.pop %v6900
    %v6909 = vrot.slane %v6854, 6
    %v6911 = vmul.f32 %v6906, %v6909
    %6913 = vrot.lane.b32.xlu0 %v6907, 116
    %v6914 = vpop.permute.xlu0 %6913
    %v6916 = vmul.f32 %v6906, %v6914
    %6918 = vrot.lane.b32.xlu0 %v6916, 6
    %v6919 = vpop.permute.xlu0 %6918
    %v6921 = vadd.f32 %v6911, %v6919
    %v6922 = vtanh.pop %v6921
    %6924 = vrot.lane.b32.xlu0 %v6922, 12
    %v6925 = vpop.permute.xlu0 %6924
    %v6927 = vmul.f32 %v6906, %v6925
    %6929 = vset.pattern.permute.xlu0 18
    %6930 = vperm.xlu0 %6929, %v6927
    %v6931 = vpop.permute.xlu0 %6930
    %v6933 = vmul.f32 %v6931, %v6512
    %6934 = vset.pattern.permute.xlu0 19
    %6935 = vperm.xlu0 %6934, %v6927
    %v6936 = vpop.permute.xlu0 %6935
    %v6938 = vmul.f32 %v6936, %v6521
    %v6939 = vadd.f32 %v6933, %v6938
    %6940 = vset.pattern.permute.xlu0 20
    %6941 = vperm.xlu0 %6940, %v6927
    %v6942 = vpop.permute.xlu0 %6941
    %v6944 = vmul.f32 %v6942, %v6531
    %v6945 = vadd.f32 %v6939, %v6944
    %6946 = vset.pattern.permute.xlu0 21
    %6947 = vperm.xlu0 %6946, %v6927
    %v6948 = vpop.permute.xlu0 %6947
    %v6950 = vmul.f32 %v6948, %v6541
    %v6951 = vadd.f32 %v6945, %v6950
    %6952 = vset.pattern.permute.xlu0 22
    %6953 = vperm.xlu0 %6952, %v6927
    %v6954 = vpop.permute.xlu0 %6953
    %v6956 = vmul.f32 %v6954, %v6551
    %v6957 = vadd.f32 %v6951, %v6956
    %6958 = vset.pattern.permute.xlu0 23
    %6959 = vperm.xlu0 %6958, %v6927
    %v6960 = vpop.permute.xlu0 %6959
    %v6962 = vmul.f32 %v6960, %v6561
    %v6963 = vadd.f32 %v6957, %v6962
    %v6965 = vrot.slane %v6963, 6
    %v6967 = vadd.f32 %v6501, %v6965
    %v6968 = vxor.u32 %v6967, 2147483648
    %v6969 = vmul.f32 %v6968, 1.442695
    %v6970 = vpow.pop %v6969
    %v6971 = vadd.f32 %v6970, 1.0
    %v6972 = vrcp.pop %v6971
    %v6973 = vmul.f32 1.0, %v6972
    %v6974 = vtanh.pop %v6967
    %v6976 = vrot.slane %v6921, 6
    %v6978 = vmul.f32 %v6973, %v6976
    %6980 = vrot.lane.b32.xlu0 %v6974, 116
    %v6981 = vpop.permute.xlu0 %6980
    %v6983 = vmul.f32 %v6973, %v6981
    %6985 = vrot.lane.b32.xlu0 %v6983, 6
    %v6986 = vpop.permute.xlu0 %6985
    %v6988 = vadd.f32 %v6978, %v6986
    %v6989 = vtanh.pop %v6988
    %6991 = vrot.lane.b32.xlu0 %v6989, 12
    %v6992 = vpop.permute.xlu0 %6991
    %v6994 = vmul.f32 %v6973, %v6992
    %6996 = vset.pattern.permute.xlu0 18
    %6997 = vperm.xlu0 %6996, %v6994
    %v6998 = vpop.permute.xlu0 %6997
    %v7000 = vmul.f32 %v6998, %v6512
    %7001 = vset.pattern.permute.xlu0 19
    %7002 = vperm.xlu0 %7001, %v6994
    %v7003 = vpop.permute.xlu0 %7002
    %v7005 = vmul.f32 %v7003, %v6521
    %v7006 = vadd.f32 %v7000, %v7005
    %7007 = vset.pattern.permute.xlu0 20
    %7008 = vperm.xlu0 %7007, %v6994
    %v7009 = vpop.permute.xlu0 %7008
    %v7011 = vmul.f32 %v7009, %v6531
    %v7012 = vadd.f32 %v7006, %v7011
    %7013 = vset.pattern.permute.xlu0 21
    %7014 = vperm.xlu0 %7013, %v6994
    %v7015 = vpop.permute.xlu0 %7014
    %v7017 = vmul.f32 %v7015, %v6541
    %v7018 = vadd.f32 %v7012, %v7017
    %7019 = vset.pattern.permute.xlu0 22
    %7020 = vperm.xlu0 %7019, %v6994
    %v7021 = vpop.permute.xlu0 %7020
    %v7023 = vmul.f32 %v7021, %v6551
    %v7024 = vadd.f32 %v7018, %v7023
    %7025 = vset.pattern.permute.xlu0 23
    %7026 = vperm.xlu0 %7025, %v6994
    %v7027 = vpop.permute.xlu0 %7026
    %v7029 = vmul.f32 %v7027, %v6561
    %v7030 = vadd.f32 %v7024, %v7029
    %v7032 = vrot.slane %v7030, 6
    %v7034 = vadd.f32 %v6501, %v7032
    %v7035 = vxor.u32 %v7034, 2147483648
    %v7036 = vmul.f32 %v7035, 1.442695
    %v7037 = vpow.pop %v7036
    %v7038 = vadd.f32 %v7037, 1.0
    %v7039 = vrcp.pop %v7038
    %v7040 = vmul.f32 1.0, %v7039
    %v7041 = vtanh.pop %v7034
    %v7043 = vrot.slane %v6988, 6
    %v7045 = vmul.f32 %v7040, %v7043
    %7047 = vrot.lane.b32.xlu0 %v7041, 116
    %v7048 = vpop.permute.xlu0 %7047
    %v7050 = vmul.f32 %v7040, %v7048
    %7052 = vrot.lane.b32.xlu0 %v7050, 6
    %v7053 = vpop.permute.xlu0 %7052
    %v7055 = vadd.f32 %v7045, %v7053
    %v7056 = vtanh.pop %v7055
    %7058 = vrot.lane.b32.xlu0 %v7056, 12
    %v7059 = vpop.permute.xlu0 %7058
    %v7061 = vmul.f32 %v7040, %v7059
    %v7062 = vsel %vm2302, %v6592, %v6659
    %v7063 = vsel %vm2304, %v7062, %v6726
    %v7064 = vsel %vm1671, %v7063, %v6793
    %v7065 = vsel %vm2302, %v6860, %v6927
    %v7066 = vsel %vm2304, %v7065, %v6994
    %v7067 = vsel %vm1671, %v7066, %v7061
    %7070 = vrot.lane.b32.xlu0 %v46, 18
    %v7071 = vpop.permute.xlu0 %7070
    %7072 = vrot.lane.b32.xlu0 %v47, 18
    %v7073 = vpop.permute.xlu0 %7072
    %v7076 = vadd.f32 %v7064, %v7071
    %v7077 = vadd.f32 %v7067, %v7073
    %v7078 = vld [vmem:[#allocation2 + $0x1b8] sm:$0x7]
    %v7079 = vpack.c.bf16 %v7077, %v7076
    %v7080 = vld [vmem:[#allocation4 + $0x178] sm:$0x1]
    %v7081 = vlaneseq
    %v7082 = vshrl.u32 %v7081, 7
    %v7083 = vsub.s32 0, %v7082
    %v7084 = vrot.slane %v7080, %v7083
    %7086 = vrot.lane.b32.xlu0 %v7079, 110
    %v7087 = vpop.permute.xlu0 %7086
    %v7089 = vsel %vm102, %v7087, 0
    %v7092 = vsel %vm106, %v7078, 0
    %7094 = vmatprep.subr.bf16.mxu0 0
    %7095 = vmatpush1.bf16.msra.mxu0 %v7092
    %7096 = vmatprep.subr.bf16.mxu0 0
    %7097 = vmatpush1.bf16.msra.mxu0 0
    %7098 = vmatprep.subr.bf16.mxu0 0
    %7099 = vmatpush1.bf16.msra.mxu0 0
    %7100 = vmatprep.subr.bf16.mxu0 0
    %7101 = vmatpush1.bf16.msra.mxu0 0
    %7102 = vmatprep.subr.bf16.mxu0 0
    %7103 = vmatpush1.bf16.msra.mxu0 0
    %7104 = vmatprep.subr.bf16.mxu0 0
    %7105 = vmatpush1.bf16.msra.mxu0 0
    %7106 = vmatprep.subr.bf16.mxu0 0
    %7107 = vmatpush1.bf16.msra.mxu0 0
    %7108 = vmatprep.subr.bf16.mxu0 0
    %7109 = vmatpush1.bf16.msra.mxu0 0
    %7110 = vmatprep.subr.bf16.mxu0 0
    %7111 = vmatpush1.bf16.msra.mxu0 0
    %7112 = vmatprep.subr.bf16.mxu0 0
    %7113 = vmatpush1.bf16.msra.mxu0 0
    %7114 = vmatprep.subr.bf16.mxu0 0
    %7115 = vmatpush1.bf16.msra.mxu0 0
    %7116 = vmatprep.subr.bf16.mxu0 0
    %7117 = vmatpush1.bf16.msra.mxu0 0
    %7118 = vmatprep.subr.bf16.mxu0 0
    %7119 = vmatpush1.bf16.msra.mxu0 0
    %7120 = vmatprep.subr.bf16.mxu0 0
    %7121 = vmatpush1.bf16.msra.mxu0 0
    %7122 = vmatprep.subr.bf16.mxu0 0
    %7123 = vmatpush1.bf16.msra.mxu0 0
    %7124 = vmatprep.subr.bf16.mxu0 0
    %7125 = vmatpush1.bf16.msra.mxu0 0
    %7126 = vmatprep.mubr.bf16.mxu0 0
    %7127 = vmatmul.mubr.bf16.gmra.mrb[0].mxu0 %v7089
    %v7128 = vpop.f32.mrb[0].mxu0
    %v7129 = vadd.f32 %v7084, %v7128
    %v7130 = vpop.f32.mrb[0].mxu0
    %v7131 = vpop.f32.mrb[0].mxu0
    %v7132 = vadd.f32 %v7084, %v7131
    %v7133 = vpop.f32.mrb[0].mxu0
    %7134 = vdwg.mxu0
    %7135 = vst.msk [vmem:[%s4] sm:$0xff] %vm102, %v7129
    %7136 = vst.msk [vmem:[%s4 + $0x8] sm:$0xff] %vm102, %v7132
    // Predicated region
    $region26: #{forward.1} parent=1 // pred_check
      _
    $region27: #{forward.1} parent=1 // pred_check_branch
      %7138 = sbr.rel (0) target = $region29
    $region28: #{forward.1} parent=1 // pred_region
      _
    $region29: #{forward.1} parent=1 // pred_fallthru
      _
    // Predicated region
    $region30: #{forward.1} parent=1 // pred_check
      _
    $region31: #{forward.1} parent=1 // pred_check_branch
      %7140 = sbr.rel (0) target = $region33
    $region32: #{forward.1} parent=1 // pred_region
      _
    $region33: #{forward.1} parent=1 // pred_fallthru
      _
    %7141 = vsyncpa [#allocation3], 1
    %7142 = vsyncpa [#allocation5], 1

</llo_original>
